<compile_context>
chip_gen: v6e
topology: v6e:2x2x1
jax: 0.10.0
libtpu: 0.0.40
codegen_flags: <defaults>
</compile_context>

<pallas_src>
import math

import jax
import jax.numpy as jnp
from jax.experimental import pallas as pl
from jax.experimental.pallas import tpu as pltpu


# -----------------------------------------------------------------------------
# in-kernel helpers (traced into the kernel)
# -----------------------------------------------------------------------------
def _dot(a, b):
    return jnp.dot(a, b, preferred_element_type=jnp.float32)


def _softmax(x):
    # exact division: every softmax here feeds a returned output
    m = jnp.max(x, axis=-1, keepdims=True)
    e = jnp.exp(x - m)
    return e / jnp.sum(e, axis=-1, keepdims=True)


def _layer_norm(x, gamma, beta, eps=1e-5):
    mu = jnp.mean(x, axis=-1, keepdims=True)
    var = jnp.mean((x - mu) ** 2, axis=-1, keepdims=True)
    return (x - mu) * jax.lax.rsqrt(var + eps) * gamma + beta


def _flatten_rows(a, n_rows):
    """(B, n_rows, C) -> (B, n_rows*C) via lane concatenation (no tiled-dim reshape)."""
    return jnp.concatenate([a[:, i, :] for i in range(n_rows)], axis=-1)


# -----------------------------------------------------------------------------
# fused forward kernel factory (one pallas_call, grid=(1,), batch folded in M)
# -----------------------------------------------------------------------------
def _make_kernel(*, B, S, Fin, D, H, L, R, use_pos, misc_w):
    dh = D // H
    scale = 1.0 / math.sqrt(dh)
    inv_h = 1.0 / float(H)
    BS = B * S

    def kernel(*refs):
        idx = 0
        x_ref = refs[idx]; idx += 1
        pe_ref = None
        if use_pos:
            pe_ref = refs[idx]; idx += 1
        (in_w, in_b, wqkv, bqkv, wo, bo, ln1g, ln1b,
         w1, b1, w2, b2, ln2g, ln2b,
         gwq, gbq, gwkv, gbkv, gwo, gbo,
         hw1, hb1, hw2, hb2, wfi, bfi,
         attn_ref, misc_ref) = refs[idx:]

        # input projection on the batch-folded activation: (B*S, Fin) @ (Fin, D)
        x = _dot(x_ref[...], in_w[...]) + in_b[...]                # (BS, D)
        if use_pos:
            x = x + pe_ref[...]

        attn_flat_layers = []

        # ---- transformer encoder layers --------------------------------------
        for l in range(L):
            # packed QKV projection: one MXU push, N = 3*D, M = B*S
            qkv = _dot(x, wqkv[l]) + bqkv[l]                       # (BS, 3D)
            attn_sum = jnp.zeros((B, S, S), jnp.float32)
            ctx_heads = []
            for h in range(H):
                qh = qkv[:, h * dh:(h + 1) * dh].reshape(B, S, dh)
                kh = qkv[:, D + h * dh:D + (h + 1) * dh].reshape(B, S, dh)
                vh = qkv[:, 2 * D + h * dh:2 * D + (h + 1) * dh].reshape(B, S, dh)
                s = jnp.einsum("bqd,bkd->bqk", qh, kh,
                               preferred_element_type=jnp.float32) * scale
                a = _softmax(s)                                    # (B, S, S)
                attn_sum = attn_sum + a
                ctx_heads.append(jnp.einsum("bqk,bkd->bqd", a, vh,
                                            preferred_element_type=jnp.float32))
            # per-layer attention map (mean over heads), flattened lane-dense
            attn_flat_layers.append(_flatten_rows(attn_sum * inv_h, S))   # (B, S*S)

            # concat heads -> single output projection (one MXU push, M = B*S)
            ctx = jnp.concatenate(ctx_heads, axis=-1).reshape(BS, D)
            o = _dot(ctx, wo[l]) + bo[l]
            x = _layer_norm(x + o, ln1g[l], ln1b[l])

            # FFN: x = x + LayerNorm(W2 relu(W1 x))  (LN is inside the Sequential)
            hdn = jnp.maximum(_dot(x, w1[l]) + b1[l], 0.0)          # (BS, 4D)
            y = _dot(hdn, w2[l]) + b2[l]
            x = x + _layer_norm(y, ln2g[l], ln2b[l])

        # one lane-dense store for all per-layer attention maps: (B, L*S*S)
        attn_ref[...] = jnp.concatenate(attn_flat_layers, axis=-1)

        # ---- global attention (batched over B, packed KV projection) ---------
        x3 = x.reshape(B, S, D)
        gq = jnp.mean(x3, axis=1)                                   # (B, D)
        q = _dot(gq, gwq[...]) + gbq[...]                           # (B, D)
        kv = _dot(x, gwkv[...]) + gbkv[...]                         # (BS, 2D)
        gattn = jnp.zeros((B, 1, S), jnp.float32)
        gctx_heads = []
        for h in range(H):
            qh = q[:, h * dh:(h + 1) * dh].reshape(B, 1, dh)
            kh = kv[:, h * dh:(h + 1) * dh].reshape(B, S, dh)
            vh = kv[:, D + h * dh:D + (h + 1) * dh].reshape(B, S, dh)
            s = jnp.einsum("bqd,bkd->bqk", qh, kh,
                           preferred_element_type=jnp.float32) * scale   # (B, 1, S)
            a = _softmax(s)
            gattn = gattn + a
            gctx_heads.append(jnp.einsum("bqk,bkd->bqd", a, vh,
                                         preferred_element_type=jnp.float32))
        gattn = (gattn * inv_h).reshape(B, S)                       # (B, S)
        gctx = jnp.concatenate(gctx_heads, axis=-1).reshape(B, D)
        g = _dot(gctx, gwo[...]) + gbo[...]                         # (B, D)

        # ---- classifier head + feature importance (batched over B) -----------
        hdn = jnp.maximum(_dot(g, hw1[...]) + hb1[...], 0.0)        # (B, D//2)
        logits = _dot(hdn, hw2[...]) + hb2[...]                     # (B, R)
        probs = _softmax(logits)
        fi = jax.nn.sigmoid(_dot(g, wfi[...]) + bfi[...])           # (B, Fin)

        # pack every small output into one zero-padded lane-dense (B, misc_w) row
        pieces = [gattn, g, logits, probs, fi]
        pad = misc_w - (S + D + 2 * R + Fin)
        if pad:
            pieces.append(jnp.zeros((B, pad), jnp.float32))
        misc_ref[...] = jnp.concatenate(pieces, axis=-1)

    return kernel


# -----------------------------------------------------------------------------
# forward wrapper (single pallas_call)
# -----------------------------------------------------------------------------
_WEIGHT_NAMES = ("in_w", "in_b", "wqkv", "bqkv", "wo", "bo", "ln1_g", "ln1_b",
                 "w1", "b1", "w2", "b2", "ln2_g", "ln2_b",
                 "gwq", "gbq", "gwkv", "gbkv", "gwo", "gbo",
                 "hw1", "hb1", "hw2", "hb2", "wfi", "bfi")


def transformer_regime_classifier_forward(params, x, temporal_position=None):
    B, S, Fin = x.shape
    D = params["d_model"]
    H = params["n_heads"]
    L = params["n_layers"]
    R = params["n_regimes"]
    use_pos = temporal_position is not None

    misc_n = S + D + 2 * R + Fin
    misc_w = ((misc_n + 127) // 128) * 128

    args = [x.astype(jnp.float32).reshape(B * S, Fin)]
    if use_pos:
        # pe only enters the argument list (and VMEM) when it is actually used
        args.append(jnp.tile(params["pos_encoding"][0, :S, :], (B, 1)))
    args += [params[name] for name in _WEIGHT_NAMES]

    def full_spec(a):
        nd = a.ndim
        return pl.BlockSpec(a.shape, lambda i, _nd=nd: (0,) * _nd)

    out_shape = [
        jax.ShapeDtypeStruct((B, L * S * S), jnp.float32),   # packed attention maps
        jax.ShapeDtypeStruct((B, misc_w), jnp.float32),      # packed small outputs
    ]
    out_specs = [
        pl.BlockSpec((B, L * S * S), lambda i: (0, 0)),
        pl.BlockSpec((B, misc_w), lambda i: (0, 0)),
    ]

    kernel = _make_kernel(B=B, S=S, Fin=Fin, D=D, H=H, L=L, R=R,
                          use_pos=use_pos, misc_w=misc_w)

    # NOTE: batch is folded into the matmul M dim, so there is no batch grid
    # left to shard across v7x's two TensorCores; at these shapes the kernel is
    # issue-bound and a single core is the right call.  If the model grows,
    # move the layer loop onto an "arbitrary" grid axis with layer-indexed
    # weight BlockSpecs so only one layer's weights are VMEM-resident.
    attn_flat, misc = pl.pallas_call(
        kernel,
        grid=(1,),
        in_specs=[full_spec(a) for a in args],
        out_specs=out_specs,
        out_shape=out_shape,
        compiler_params=pltpu.CompilerParams(
            dimension_semantics=("arbitrary",),
            vmem_limit_bytes=32 * 1024 * 1024,
        ),
    )(*args)

    attn = attn_flat.reshape(B, L, S, S)
    off = 0
    gattn = misc[:, off:off + S]; off += S
    grep = misc[:, off:off + D]; off += D
    logits = misc[:, off:off + R]; off += R
    probs = misc[:, off:off + R]; off += R
    fi = misc[:, off:off + Fin]

    # TODO(synk): all Dropout layers are identity here (eval-mode forward).
    return {
        "regime_probabilities": probs,
        "regime_logits": logits,
        "attention_maps": [attn[:, l] for l in range(L)],
        "global_attention": gattn,
        "feature_importance": fi,
        "global_representation": grep,
    }


# -----------------------------------------------------------------------------
# parameter construction: PyTorch-style init, packed on the host into the
# kernel-ready layout (pre-transposed, QKV / KV concatenated).
# -----------------------------------------------------------------------------
def _init_linear(key, in_f, out_f):
    kw, kb = jax.random.split(key)
    bound = 1.0 / math.sqrt(in_f)
    W = jax.random.uniform(kw, (out_f, in_f), jnp.float32, -bound, bound)
    b = jax.random.uniform(kb, (out_f,), jnp.float32, -bound, bound)
    return W, b


def _positional_encoding(max_len, d_model):
    position = jnp.arange(max_len, dtype=jnp.float32)[:, None]
    div_term = jnp.exp(
        jnp.arange(0, d_model, 2, dtype=jnp.float32) * -(math.log(10000.0) / d_model))
    pe = jnp.zeros((max_len, d_model), jnp.float32)
    pe = pe.at[:, 0::2].set(jnp.sin(position * div_term))
    pe = pe.at[:, 1::2].set(jnp.cos(position * div_term))
    return pe[None]


def init_params(key, input_dim, d_model, n_heads, n_layers, n_regimes):
    D = d_model
    keys = iter(jax.random.split(key, 8 * n_layers + 16))
    p = {"d_model": D, "n_heads": n_heads, "n_layers": n_layers,
         "input_dim": input_dim, "n_regimes": n_regimes}

    W, b = _init_linear(next(keys), input_dim, D)
    p["in_w"], p["in_b"] = W.T, b[None, :]
    p["pos_encoding"] = _positional_encoding(1000, D)

    wqkv, bqkv, wo, bo = [], [], [], []
    ln1g, ln1b, w1, b1, w2, b2, ln2g, ln2b = [], [], [], [], [], [], [], []
    for _ in range(n_layers):
        Wq, Bq = _init_linear(next(keys), D, D)
        Wk, Bk = _init_linear(next(keys), D, D)
        Wv, Bv = _init_linear(next(keys), D, D)
        Wo, Bo = _init_linear(next(keys), D, D)
        wqkv.append(jnp.concatenate([Wq.T, Wk.T, Wv.T], axis=1))   # (D, 3D)
        bqkv.append(jnp.concatenate([Bq, Bk, Bv])[None, :])        # (1, 3D)
        wo.append(Wo.T)
        bo.append(Bo[None, :])
        ln1g.append(jnp.ones((1, D), jnp.float32))
        ln1b.append(jnp.zeros((1, D), jnp.float32))
        W1, B1 = _init_linear(next(keys), D, 4 * D)
        W2, B2 = _init_linear(next(keys), 4 * D, D)
        w1.append(W1.T); b1.append(B1[None, :])
        w2.append(W2.T); b2.append(B2[None, :])
        ln2g.append(jnp.ones((1, D), jnp.float32))
        ln2b.append(jnp.zeros((1, D), jnp.float32))

    st = lambda xs: jnp.stack(xs, axis=0)
    p.update(wqkv=st(wqkv), bqkv=st(bqkv), wo=st(wo), bo=st(bo),
             ln1_g=st(ln1g), ln1_b=st(ln1b), w1=st(w1), b1=st(b1),
             w2=st(w2), b2=st(b2), ln2_g=st(ln2g), ln2_b=st(ln2b))

    # nn.MultiheadAttention: in_proj xavier_uniform_, in_proj_bias = 0,
    # out_proj default Linear weight init, out_proj.bias = 0.
    xav = math.sqrt(6.0 / (D + 3 * D))
    Win = jax.random.uniform(next(keys), (3 * D, D), jnp.float32, -xav, xav)
    Wout, _ = _init_linear(next(keys), D, D)
    p["gwq"], p["gbq"] = Win[0:D].T, jnp.zeros((1, D), jnp.float32)
    p["gwkv"] = jnp.concatenate([Win[D:2 * D].T, Win[2 * D:3 * D].T], axis=1)  # (D, 2D)
    p["gbkv"] = jnp.zeros((1, 2 * D), jnp.float32)
    p["gwo"], p["gbo"] = Wout.T, jnp.zeros((1, D), jnp.float32)

    W, b = _init_linear(next(keys), D, D // 2)
    p["hw1"], p["hb1"] = W.T, b[None, :]
    W, b = _init_linear(next(keys), D // 2, n_regimes)
    p["hw2"], p["hb2"] = W.T, b[None, :]
    W, b = _init_linear(next(keys), D, input_dim)
    p["wfi"], p["bfi"] = W.T, b[None, :]
    return p


# -----------------------------------------------------------------------------
# demo
# -----------------------------------------------------------------------------
if __name__ == "__main__":
    B, S = 2, 8              # batch, n_symbols (sequence length)
    input_dim = 16           # n_features
    d_model, n_heads, n_layers, n_regimes = 32, 4, 2, 4

    key = jax.random.PRNGKey(0)
    k_x, k_p = jax.random.split(key)
    x = jax.random.normal(k_x, (B, S, input_dim), jnp.float32)
    params = init_params(k_p, input_dim, d_model, n_heads, n_layers, n_regimes)

    out = transformer_regime_classifier_forward(params, x, temporal_position=None)
    jax.block_until_ready(out)

    assert out["regime_probabilities"].shape == (B, n_regimes)
    assert out["regime_logits"].shape == (B, n_regimes)
    assert out["global_attention"].shape == (B, S)
    assert out["feature_importance"].shape == (B, input_dim)
    assert out["global_representation"].shape == (B, d_model)
    assert len(out["attention_maps"]) == n_layers
    assert out["attention_maps"][0].shape == (B, S, S)
    assert bool(jnp.all(jnp.isfinite(out["regime_probabilities"])))

    print("KERNEL_OK")
</pallas_src>

<mosaic_0001>
module attributes {stable_mosaic.version = 11 : i64} {
  func.func @kernel(%arg0: i32, %arg1: memref<16x16xf32, #tpu.memory_space<vmem>>, %arg2: memref<16x32xf32, #tpu.memory_space<vmem>>, %arg3: memref<1x32xf32, #tpu.memory_space<vmem>>, %arg4: memref<2x32x96xf32, #tpu.memory_space<vmem>>, %arg5: memref<2x1x96xf32, #tpu.memory_space<vmem>>, %arg6: memref<2x32x32xf32, #tpu.memory_space<vmem>>, %arg7: memref<2x1x32xf32, #tpu.memory_space<vmem>>, %arg8: memref<2x1x32xf32, #tpu.memory_space<vmem>>, %arg9: memref<2x1x32xf32, #tpu.memory_space<vmem>>, %arg10: memref<2x32x128xf32, #tpu.memory_space<vmem>>, %arg11: memref<2x1x128xf32, #tpu.memory_space<vmem>>, %arg12: memref<2x128x32xf32, #tpu.memory_space<vmem>>, %arg13: memref<2x1x32xf32, #tpu.memory_space<vmem>>, %arg14: memref<2x1x32xf32, #tpu.memory_space<vmem>>, %arg15: memref<2x1x32xf32, #tpu.memory_space<vmem>>, %arg16: memref<32x32xf32, #tpu.memory_space<vmem>>, %arg17: memref<1x32xf32, #tpu.memory_space<vmem>>, %arg18: memref<32x64xf32, #tpu.memory_space<vmem>>, %arg19: memref<1x64xf32, #tpu.memory_space<vmem>>, %arg20: memref<32x32xf32, #tpu.memory_space<vmem>>, %arg21: memref<1x32xf32, #tpu.memory_space<vmem>>, %arg22: memref<32x16xf32, #tpu.memory_space<vmem>>, %arg23: memref<1x16xf32, #tpu.memory_space<vmem>>, %arg24: memref<16x4xf32, #tpu.memory_space<vmem>>, %arg25: memref<1x4xf32, #tpu.memory_space<vmem>>, %arg26: memref<32x16xf32, #tpu.memory_space<vmem>>, %arg27: memref<1x16xf32, #tpu.memory_space<vmem>>, %arg28: memref<2x128xf32, #tpu.memory_space<vmem>>, %arg29: memref<2x128xf32, #tpu.memory_space<vmem>>) attributes {dimension_semantics = [#tpu.dimension_semantics<arbitrary>], iteration_bounds = array<i64: 1>, scalar_prefetch = 0 : i64, scratch_operands = 0 : i64, tpu.core_type = #tpu.core_type<tc>, window_params = [{pipeline_mode = #tpu.pipeline_mode<synchronous>, transform_indices = @transform_0, window_bounds = array<i64: 16, 16>}, {pipeline_mode = #tpu.pipeline_mode<synchronous>, transform_indices = @transform_1, window_bounds = array<i64: 16, 32>}, {pipeline_mode = #tpu.pipeline_mode<synchronous>, transform_indices = @transform_2, window_bounds = array<i64: 1, 32>}, {pipeline_mode = #tpu.pipeline_mode<synchronous>, transform_indices = @transform_3, window_bounds = array<i64: 2, 32, 96>}, {pipeline_mode = #tpu.pipeline_mode<synchronous>, transform_indices = @transform_4, window_bounds = array<i64: 2, 1, 96>}, {pipeline_mode = #tpu.pipeline_mode<synchronous>, transform_indices = @transform_5, window_bounds = array<i64: 2, 32, 32>}, {pipeline_mode = #tpu.pipeline_mode<synchronous>, transform_indices = @transform_6, window_bounds = array<i64: 2, 1, 32>}, {pipeline_mode = #tpu.pipeline_mode<synchronous>, transform_indices = @transform_7, window_bounds = array<i64: 2, 1, 32>}, {pipeline_mode = #tpu.pipeline_mode<synchronous>, transform_indices = @transform_8, window_bounds = array<i64: 2, 1, 32>}, {pipeline_mode = #tpu.pipeline_mode<synchronous>, transform_indices = @transform_9, window_bounds = array<i64: 2, 32, 128>}, {pipeline_mode = #tpu.pipeline_mode<synchronous>, transform_indices = @transform_10, window_bounds = array<i64: 2, 1, 128>}, {pipeline_mode = #tpu.pipeline_mode<synchronous>, transform_indices = @transform_11, window_bounds = array<i64: 2, 128, 32>}, {pipeline_mode = #tpu.pipeline_mode<synchronous>, transform_indices = @transform_12, window_bounds = array<i64: 2, 1, 32>}, {pipeline_mode = #tpu.pipeline_mode<synchronous>, transform_indices = @transform_13, window_bounds = array<i64: 2, 1, 32>}, {pipeline_mode = #tpu.pipeline_mode<synchronous>, transform_indices = @transform_14, window_bounds = array<i64: 2, 1, 32>}, {pipeline_mode = #tpu.pipeline_mode<synchronous>, transform_indices = @transform_15, window_bounds = array<i64: 32, 32>}, {pipeline_mode = #tpu.pipeline_mode<synchronous>, transform_indices = @transform_16, window_bounds = array<i64: 1, 32>}, {pipeline_mode = #tpu.pipeline_mode<synchronous>, transform_indices = @transform_17, window_bounds = array<i64: 32, 64>}, {pipeline_mode = #tpu.pipeline_mode<synchronous>, transform_indices = @transform_18, window_bounds = array<i64: 1, 64>}, {pipeline_mode = #tpu.pipeline_mode<synchronous>, transform_indices = @transform_19, window_bounds = array<i64: 32, 32>}, {pipeline_mode = #tpu.pipeline_mode<synchronous>, transform_indices = @transform_20, window_bounds = array<i64: 1, 32>}, {pipeline_mode = #tpu.pipeline_mode<synchronous>, transform_indices = @transform_21, window_bounds = array<i64: 32, 16>}, {pipeline_mode = #tpu.pipeline_mode<synchronous>, transform_indices = @transform_22, window_bounds = array<i64: 1, 16>}, {pipeline_mode = #tpu.pipeline_mode<synchronous>, transform_indices = @transform_23, window_bounds = array<i64: 16, 4>}, {pipeline_mode = #tpu.pipeline_mode<synchronous>, transform_indices = @transform_24, window_bounds = array<i64: 1, 4>}, {pipeline_mode = #tpu.pipeline_mode<synchronous>, transform_indices = @transform_25, window_bounds = array<i64: 32, 16>}, {pipeline_mode = #tpu.pipeline_mode<synchronous>, transform_indices = @transform_26, window_bounds = array<i64: 1, 16>}, {pipeline_mode = #tpu.pipeline_mode<synchronous>, transform_indices = @transform_27, window_bounds = array<i64: 2, 128>}, {pipeline_mode = #tpu.pipeline_mode<synchronous>, transform_indices = @transform_28, window_bounds = array<i64: 2, 128>}]} {
    %c0 = arith.constant 0 : index
    %c0_0 = arith.constant 0 : index
    %0 = vector.load %arg1[%c0, %c0_0] : memref<16x16xf32, #tpu.memory_space<vmem>>, vector<16x16xf32>
    %c0_1 = arith.constant 0 : index
    %c0_2 = arith.constant 0 : index
    %1 = vector.load %arg2[%c0_1, %c0_2] : memref<16x32xf32, #tpu.memory_space<vmem>>, vector<16x32xf32>
    %cst = arith.constant dense<0.000000e+00> : vector<16x32xf32>
    %2 = tpu.matmul %0, %1, %cst {dimension_numbers = #tpu.dot_dimension_numbers<[1], [0], [0], [1], [0, 0, 1, 1], [], []>} : vector<16x16xf32>, vector<16x32xf32>, vector<16x32xf32> -> vector<16x32xf32>
    %c0_3 = arith.constant 0 : index
    %c0_4 = arith.constant 0 : index
    %3 = vector.load %arg3[%c0_3, %c0_4] : memref<1x32xf32, #tpu.memory_space<vmem>>, vector<1x32xf32>
    %4 = vector.broadcast %3 : vector<1x32xf32> to vector<16x32xf32>
    %5 = arith.addf %2, %4 : vector<16x32xf32>
    %c0_5 = arith.constant 0 : index
    %c0_6 = arith.constant 0 : index
    %c0_7 = arith.constant 0 : index
    %6 = vector.load %arg4[%c0_5, %c0_6, %c0_7] : memref<2x32x96xf32, #tpu.memory_space<vmem>>, vector<1x32x96xf32>
    %7 = vector.shape_cast %6 : vector<1x32x96xf32> to vector<32x96xf32>
    %cst_8 = arith.constant dense<0.000000e+00> : vector<16x96xf32>
    %8 = tpu.matmul %5, %7, %cst_8 {dimension_numbers = #tpu.dot_dimension_numbers<[1], [0], [0], [1], [0, 0, 1, 1], [], []>} : vector<16x32xf32>, vector<32x96xf32>, vector<16x96xf32> -> vector<16x96xf32>
    %c0_9 = arith.constant 0 : index
    %c0_10 = arith.constant 0 : index
    %c0_11 = arith.constant 0 : index
    %9 = vector.load %arg5[%c0_9, %c0_10, %c0_11] : memref<2x1x96xf32, #tpu.memory_space<vmem>>, vector<1x1x96xf32>
    %10 = vector.shape_cast %9 : vector<1x1x96xf32> to vector<1x96xf32>
    %11 = vector.broadcast %10 : vector<1x96xf32> to vector<16x96xf32>
    %12 = arith.addf %8, %11 : vector<16x96xf32>
    %cst_12 = arith.constant 0.000000e+00 : f32
    %13 = vector.broadcast %cst_12 : f32 to vector<2x8x8xf32>
    %14 = vector.extract_strided_slice %12 {offsets = [0, 0], sizes = [16, 8], strides = [1, 1]} : vector<16x96xf32> to vector<16x8xf32>
    %15 = vector.shape_cast %14 : vector<16x8xf32> to vector<2x8x8xf32>
    %16 = vector.extract_strided_slice %12 {offsets = [0, 32], sizes = [16, 8], strides = [1, 1]} : vector<16x96xf32> to vector<16x8xf32>
    %17 = vector.shape_cast %16 : vector<16x8xf32> to vector<2x8x8xf32>
    %18 = vector.extract_strided_slice %12 {offsets = [0, 64], sizes = [16, 8], strides = [1, 1]} : vector<16x96xf32> to vector<16x8xf32>
    %19 = vector.shape_cast %18 : vector<16x8xf32> to vector<2x8x8xf32>
    "tpu.trace_start"() <{level = 10 : i32, message = "bqd,bkd->bqk"}> : () -> ()
    %cst_13 = arith.constant dense<0.000000e+00> : vector<2x8x8xf32>
    %20 = tpu.matmul %15, %17, %cst_13 {dimension_numbers = #tpu.dot_dimension_numbers<[2], [2], [1], [1], [0, 0, 0, 1, 1, 1], [0], [0]>} : vector<2x8x8xf32>, vector<2x8x8xf32>, vector<2x8x8xf32> -> vector<2x8x8xf32>
    "tpu.trace_stop"() : () -> ()
    %cst_14 = arith.constant 0.353553385 : f32
    %21 = vector.broadcast %cst_14 : f32 to vector<2x8x8xf32>
    %22 = arith.mulf %20, %21 : vector<2x8x8xf32>
    %cst_15 = arith.constant dense<0xFF800000> : vector<2x8xf32>
    %23 = vector.multi_reduction <maximumf>, %22, %cst_15 [2] : vector<2x8x8xf32> to vector<2x8xf32>
    %24 = vector.shape_cast %23 : vector<2x8xf32> to vector<2x8x1xf32>
    %25 = vector.broadcast %24 : vector<2x8x1xf32> to vector<2x8x8xf32>
    %26 = arith.subf %22, %25 : vector<2x8x8xf32>
    %27 = math.exp %26 : vector<2x8x8xf32>
    %cst_16 = arith.constant dense<0.000000e+00> : vector<2x8xf32>
    %28 = vector.multi_reduction <add>, %27, %cst_16 [2] : vector<2x8x8xf32> to vector<2x8xf32>
    %29 = vector.shape_cast %28 : vector<2x8xf32> to vector<2x8x1xf32>
    %30 = vector.broadcast %29 : vector<2x8x1xf32> to vector<2x8x8xf32>
    %31 = arith.divf %27, %30 : vector<2x8x8xf32>
    %32 = arith.addf %13, %31 : vector<2x8x8xf32>
    "tpu.trace_start"() <{level = 10 : i32, message = "bqk,bkd->bqd"}> : () -> ()
    %cst_17 = arith.constant dense<0.000000e+00> : vector<2x8x8xf32>
    %33 = tpu.matmul %31, %19, %cst_17 {dimension_numbers = #tpu.dot_dimension_numbers<[2], [1], [1], [2], [0, 0, 0, 1, 1, 2], [0], [0]>} : vector<2x8x8xf32>, vector<2x8x8xf32>, vector<2x8x8xf32> -> vector<2x8x8xf32>
    "tpu.trace_stop"() : () -> ()
    %34 = vector.extract_strided_slice %12 {offsets = [0, 8], sizes = [16, 8], strides = [1, 1]} : vector<16x96xf32> to vector<16x8xf32>
    %35 = vector.shape_cast %34 : vector<16x8xf32> to vector<2x8x8xf32>
    %36 = vector.extract_strided_slice %12 {offsets = [0, 40], sizes = [16, 8], strides = [1, 1]} : vector<16x96xf32> to vector<16x8xf32>
    %37 = vector.shape_cast %36 : vector<16x8xf32> to vector<2x8x8xf32>
    %38 = vector.extract_strided_slice %12 {offsets = [0, 72], sizes = [16, 8], strides = [1, 1]} : vector<16x96xf32> to vector<16x8xf32>
    %39 = vector.shape_cast %38 : vector<16x8xf32> to vector<2x8x8xf32>
    "tpu.trace_start"() <{level = 10 : i32, message = "bqd,bkd->bqk"}> : () -> ()
    %cst_18 = arith.constant dense<0.000000e+00> : vector<2x8x8xf32>
    %40 = tpu.matmul %35, %37, %cst_18 {dimension_numbers = #tpu.dot_dimension_numbers<[2], [2], [1], [1], [0, 0, 0, 1, 1, 1], [0], [0]>} : vector<2x8x8xf32>, vector<2x8x8xf32>, vector<2x8x8xf32> -> vector<2x8x8xf32>
    "tpu.trace_stop"() : () -> ()
    %cst_19 = arith.constant 0.353553385 : f32
    %41 = vector.broadcast %cst_19 : f32 to vector<2x8x8xf32>
    %42 = arith.mulf %40, %41 : vector<2x8x8xf32>
    %cst_20 = arith.constant dense<0xFF800000> : vector<2x8xf32>
    %43 = vector.multi_reduction <maximumf>, %42, %cst_20 [2] : vector<2x8x8xf32> to vector<2x8xf32>
    %44 = vector.shape_cast %43 : vector<2x8xf32> to vector<2x8x1xf32>
    %45 = vector.broadcast %44 : vector<2x8x1xf32> to vector<2x8x8xf32>
    %46 = arith.subf %42, %45 : vector<2x8x8xf32>
    %47 = math.exp %46 : vector<2x8x8xf32>
    %cst_21 = arith.constant dense<0.000000e+00> : vector<2x8xf32>
    %48 = vector.multi_reduction <add>, %47, %cst_21 [2] : vector<2x8x8xf32> to vector<2x8xf32>
    %49 = vector.shape_cast %48 : vector<2x8xf32> to vector<2x8x1xf32>
    %50 = vector.broadcast %49 : vector<2x8x1xf32> to vector<2x8x8xf32>
    %51 = arith.divf %47, %50 : vector<2x8x8xf32>
    %52 = arith.addf %32, %51 : vector<2x8x8xf32>
    "tpu.trace_start"() <{level = 10 : i32, message = "bqk,bkd->bqd"}> : () -> ()
    %cst_22 = arith.constant dense<0.000000e+00> : vector<2x8x8xf32>
    %53 = tpu.matmul %51, %39, %cst_22 {dimension_numbers = #tpu.dot_dimension_numbers<[2], [1], [1], [2], [0, 0, 0, 1, 1, 2], [0], [0]>} : vector<2x8x8xf32>, vector<2x8x8xf32>, vector<2x8x8xf32> -> vector<2x8x8xf32>
    "tpu.trace_stop"() : () -> ()
    %54 = vector.extract_strided_slice %12 {offsets = [0, 16], sizes = [16, 8], strides = [1, 1]} : vector<16x96xf32> to vector<16x8xf32>
    %55 = vector.shape_cast %54 : vector<16x8xf32> to vector<2x8x8xf32>
    %56 = vector.extract_strided_slice %12 {offsets = [0, 48], sizes = [16, 8], strides = [1, 1]} : vector<16x96xf32> to vector<16x8xf32>
    %57 = vector.shape_cast %56 : vector<16x8xf32> to vector<2x8x8xf32>
    %58 = vector.extract_strided_slice %12 {offsets = [0, 80], sizes = [16, 8], strides = [1, 1]} : vector<16x96xf32> to vector<16x8xf32>
    %59 = vector.shape_cast %58 : vector<16x8xf32> to vector<2x8x8xf32>
    "tpu.trace_start"() <{level = 10 : i32, message = "bqd,bkd->bqk"}> : () -> ()
    %cst_23 = arith.constant dense<0.000000e+00> : vector<2x8x8xf32>
    %60 = tpu.matmul %55, %57, %cst_23 {dimension_numbers = #tpu.dot_dimension_numbers<[2], [2], [1], [1], [0, 0, 0, 1, 1, 1], [0], [0]>} : vector<2x8x8xf32>, vector<2x8x8xf32>, vector<2x8x8xf32> -> vector<2x8x8xf32>
    "tpu.trace_stop"() : () -> ()
    %cst_24 = arith.constant 0.353553385 : f32
    %61 = vector.broadcast %cst_24 : f32 to vector<2x8x8xf32>
    %62 = arith.mulf %60, %61 : vector<2x8x8xf32>
    %cst_25 = arith.constant dense<0xFF800000> : vector<2x8xf32>
    %63 = vector.multi_reduction <maximumf>, %62, %cst_25 [2] : vector<2x8x8xf32> to vector<2x8xf32>
    %64 = vector.shape_cast %63 : vector<2x8xf32> to vector<2x8x1xf32>
    %65 = vector.broadcast %64 : vector<2x8x1xf32> to vector<2x8x8xf32>
    %66 = arith.subf %62, %65 : vector<2x8x8xf32>
    %67 = math.exp %66 : vector<2x8x8xf32>
    %cst_26 = arith.constant dense<0.000000e+00> : vector<2x8xf32>
    %68 = vector.multi_reduction <add>, %67, %cst_26 [2] : vector<2x8x8xf32> to vector<2x8xf32>
    %69 = vector.shape_cast %68 : vector<2x8xf32> to vector<2x8x1xf32>
    %70 = vector.broadcast %69 : vector<2x8x1xf32> to vector<2x8x8xf32>
    %71 = arith.divf %67, %70 : vector<2x8x8xf32>
    %72 = arith.addf %52, %71 : vector<2x8x8xf32>
    "tpu.trace_start"() <{level = 10 : i32, message = "bqk,bkd->bqd"}> : () -> ()
    %cst_27 = arith.constant dense<0.000000e+00> : vector<2x8x8xf32>
    %73 = tpu.matmul %71, %59, %cst_27 {dimension_numbers = #tpu.dot_dimension_numbers<[2], [1], [1], [2], [0, 0, 0, 1, 1, 2], [0], [0]>} : vector<2x8x8xf32>, vector<2x8x8xf32>, vector<2x8x8xf32> -> vector<2x8x8xf32>
    "tpu.trace_stop"() : () -> ()
    %74 = vector.extract_strided_slice %12 {offsets = [0, 24], sizes = [16, 8], strides = [1, 1]} : vector<16x96xf32> to vector<16x8xf32>
    %75 = vector.shape_cast %74 : vector<16x8xf32> to vector<2x8x8xf32>
    %76 = vector.extract_strided_slice %12 {offsets = [0, 56], sizes = [16, 8], strides = [1, 1]} : vector<16x96xf32> to vector<16x8xf32>
    %77 = vector.shape_cast %76 : vector<16x8xf32> to vector<2x8x8xf32>
    %78 = vector.extract_strided_slice %12 {offsets = [0, 88], sizes = [16, 8], strides = [1, 1]} : vector<16x96xf32> to vector<16x8xf32>
    %79 = vector.shape_cast %78 : vector<16x8xf32> to vector<2x8x8xf32>
    "tpu.trace_start"() <{level = 10 : i32, message = "bqd,bkd->bqk"}> : () -> ()
    %cst_28 = arith.constant dense<0.000000e+00> : vector<2x8x8xf32>
    %80 = tpu.matmul %75, %77, %cst_28 {dimension_numbers = #tpu.dot_dimension_numbers<[2], [2], [1], [1], [0, 0, 0, 1, 1, 1], [0], [0]>} : vector<2x8x8xf32>, vector<2x8x8xf32>, vector<2x8x8xf32> -> vector<2x8x8xf32>
    "tpu.trace_stop"() : () -> ()
    %cst_29 = arith.constant 0.353553385 : f32
    %81 = vector.broadcast %cst_29 : f32 to vector<2x8x8xf32>
    %82 = arith.mulf %80, %81 : vector<2x8x8xf32>
    %cst_30 = arith.constant dense<0xFF800000> : vector<2x8xf32>
    %83 = vector.multi_reduction <maximumf>, %82, %cst_30 [2] : vector<2x8x8xf32> to vector<2x8xf32>
    %84 = vector.shape_cast %83 : vector<2x8xf32> to vector<2x8x1xf32>
    %85 = vector.broadcast %84 : vector<2x8x1xf32> to vector<2x8x8xf32>
    %86 = arith.subf %82, %85 : vector<2x8x8xf32>
    %87 = math.exp %86 : vector<2x8x8xf32>
    %cst_31 = arith.constant dense<0.000000e+00> : vector<2x8xf32>
    %88 = vector.multi_reduction <add>, %87, %cst_31 [2] : vector<2x8x8xf32> to vector<2x8xf32>
    %89 = vector.shape_cast %88 : vector<2x8xf32> to vector<2x8x1xf32>
    %90 = vector.broadcast %89 : vector<2x8x1xf32> to vector<2x8x8xf32>
    %91 = arith.divf %87, %90 : vector<2x8x8xf32>
    %92 = arith.addf %72, %91 : vector<2x8x8xf32>
    "tpu.trace_start"() <{level = 10 : i32, message = "bqk,bkd->bqd"}> : () -> ()
    %cst_32 = arith.constant dense<0.000000e+00> : vector<2x8x8xf32>
    %93 = tpu.matmul %91, %79, %cst_32 {dimension_numbers = #tpu.dot_dimension_numbers<[2], [1], [1], [2], [0, 0, 0, 1, 1, 2], [0], [0]>} : vector<2x8x8xf32>, vector<2x8x8xf32>, vector<2x8x8xf32> -> vector<2x8x8xf32>
    "tpu.trace_stop"() : () -> ()
    %cst_33 = arith.constant 2.500000e-01 : f32
    %94 = vector.broadcast %cst_33 : f32 to vector<2x8x8xf32>
    %95 = arith.mulf %92, %94 : vector<2x8x8xf32>
    %96 = vector.extract_strided_slice %95 {offsets = [0, 0, 0], sizes = [2, 1, 8], strides = [1, 1, 1]} : vector<2x8x8xf32> to vector<2x1x8xf32>
    %97 = vector.shape_cast %96 : vector<2x1x8xf32> to vector<2x8xf32>
    %98 = vector.extract_strided_slice %95 {offsets = [0, 1, 0], sizes = [2, 1, 8], strides = [1, 1, 1]} : vector<2x8x8xf32> to vector<2x1x8xf32>
    %99 = vector.shape_cast %98 : vector<2x1x8xf32> to vector<2x8xf32>
    %100 = vector.extract_strided_slice %95 {offsets = [0, 2, 0], sizes = [2, 1, 8], strides = [1, 1, 1]} : vector<2x8x8xf32> to vector<2x1x8xf32>
    %101 = vector.shape_cast %100 : vector<2x1x8xf32> to vector<2x8xf32>
    %102 = vector.extract_strided_slice %95 {offsets = [0, 3, 0], sizes = [2, 1, 8], strides = [1, 1, 1]} : vector<2x8x8xf32> to vector<2x1x8xf32>
    %103 = vector.shape_cast %102 : vector<2x1x8xf32> to vector<2x8xf32>
    %104 = vector.extract_strided_slice %95 {offsets = [0, 4, 0], sizes = [2, 1, 8], strides = [1, 1, 1]} : vector<2x8x8xf32> to vector<2x1x8xf32>
    %105 = vector.shape_cast %104 : vector<2x1x8xf32> to vector<2x8xf32>
    %106 = vector.extract_strided_slice %95 {offsets = [0, 5, 0], sizes = [2, 1, 8], strides = [1, 1, 1]} : vector<2x8x8xf32> to vector<2x1x8xf32>
    %107 = vector.shape_cast %106 : vector<2x1x8xf32> to vector<2x8xf32>
    %108 = vector.extract_strided_slice %95 {offsets = [0, 6, 0], sizes = [2, 1, 8], strides = [1, 1, 1]} : vector<2x8x8xf32> to vector<2x1x8xf32>
    %109 = vector.shape_cast %108 : vector<2x1x8xf32> to vector<2x8xf32>
    %110 = vector.extract_strided_slice %95 {offsets = [0, 7, 0], sizes = [2, 1, 8], strides = [1, 1, 1]} : vector<2x8x8xf32> to vector<2x1x8xf32>
    %111 = vector.shape_cast %110 : vector<2x1x8xf32> to vector<2x8xf32>
    %112 = tpu.concatenate %97, %99, %101, %103, %105, %107, %109, %111 in 1 : vector<2x8xf32>, vector<2x8xf32>, vector<2x8xf32>, vector<2x8xf32>, vector<2x8xf32>, vector<2x8xf32>, vector<2x8xf32>, vector<2x8xf32> -> vector<2x64xf32>
    %113 = tpu.concatenate %33, %53, %73, %93 in 2 : vector<2x8x8xf32>, vector<2x8x8xf32>, vector<2x8x8xf32>, vector<2x8x8xf32> -> vector<2x8x32xf32>
    %114 = vector.shape_cast %113 : vector<2x8x32xf32> to vector<16x32xf32>
    %c0_34 = arith.constant 0 : index
    %c0_35 = arith.constant 0 : index
    %c0_36 = arith.constant 0 : index
    %115 = vector.load %arg6[%c0_34, %c0_35, %c0_36] : memref<2x32x32xf32, #tpu.memory_space<vmem>>, vector<1x32x32xf32>
    %116 = vector.shape_cast %115 : vector<1x32x32xf32> to vector<32x32xf32>
    %cst_37 = arith.constant dense<0.000000e+00> : vector<16x32xf32>
    %117 = tpu.matmul %114, %116, %cst_37 {dimension_numbers = #tpu.dot_dimension_numbers<[1], [0], [0], [1], [0, 0, 1, 1], [], []>} : vector<16x32xf32>, vector<32x32xf32>, vector<16x32xf32> -> vector<16x32xf32>
    %c0_38 = arith.constant 0 : index
    %c0_39 = arith.constant 0 : index
    %c0_40 = arith.constant 0 : index
    %118 = vector.load %arg7[%c0_38, %c0_39, %c0_40] : memref<2x1x32xf32, #tpu.memory_space<vmem>>, vector<1x1x32xf32>
    %119 = vector.shape_cast %118 : vector<1x1x32xf32> to vector<1x32xf32>
    %120 = vector.broadcast %119 : vector<1x32xf32> to vector<16x32xf32>
    %121 = arith.addf %117, %120 : vector<16x32xf32>
    %122 = arith.addf %5, %121 : vector<16x32xf32>
    %c0_41 = arith.constant 0 : index
    %c0_42 = arith.constant 0 : index
    %c0_43 = arith.constant 0 : index
    %123 = vector.load %arg8[%c0_41, %c0_42, %c0_43] : memref<2x1x32xf32, #tpu.memory_space<vmem>>, vector<1x1x32xf32>
    %124 = vector.shape_cast %123 : vector<1x1x32xf32> to vector<1x32xf32>
    %c0_44 = arith.constant 0 : index
    %c0_45 = arith.constant 0 : index
    %c0_46 = arith.constant 0 : index
    %125 = vector.load %arg9[%c0_44, %c0_45, %c0_46] : memref<2x1x32xf32, #tpu.memory_space<vmem>>, vector<1x1x32xf32>
    %126 = vector.shape_cast %125 : vector<1x1x32xf32> to vector<1x32xf32>
    %cst_47 = arith.constant dense<0.000000e+00> : vector<16xf32>
    %127 = vector.multi_reduction <add>, %122, %cst_47 [1] : vector<16x32xf32> to vector<16xf32>
    %128 = vector.shape_cast %127 : vector<16xf32> to vector<16x1xf32>
    %cst_48 = arith.constant 3.200000e+01 : f32
    %129 = vector.broadcast %cst_48 : f32 to vector<16x1xf32>
    %130 = arith.divf %128, %129 : vector<16x1xf32>
    %131 = vector.broadcast %130 : vector<16x1xf32> to vector<16x32xf32>
    %132 = arith.subf %122, %131 : vector<16x32xf32>
    %133 = arith.mulf %132, %132 : vector<16x32xf32>
    %cst_49 = arith.constant dense<0.000000e+00> : vector<16xf32>
    %134 = vector.multi_reduction <add>, %133, %cst_49 [1] : vector<16x32xf32> to vector<16xf32>
    %135 = vector.shape_cast %134 : vector<16xf32> to vector<16x1xf32>
    %cst_50 = arith.constant 3.200000e+01 : f32
    %136 = vector.broadcast %cst_50 : f32 to vector<16x1xf32>
    %137 = arith.divf %135, %136 : vector<16x1xf32>
    %138 = vector.broadcast %130 : vector<16x1xf32> to vector<16x32xf32>
    %139 = arith.subf %122, %138 : vector<16x32xf32>
    %cst_51 = arith.constant 9.99999974E-6 : f32
    %140 = vector.broadcast %cst_51 : f32 to vector<16x1xf32>
    %141 = arith.addf %137, %140 : vector<16x1xf32>
    %142 = math.rsqrt %141 : vector<16x1xf32>
    %143 = vector.broadcast %142 : vector<16x1xf32> to vector<16x32xf32>
    %144 = arith.mulf %139, %143 : vector<16x32xf32>
    %145 = vector.broadcast %124 : vector<1x32xf32> to vector<16x32xf32>
    %146 = arith.mulf %144, %145 : vector<16x32xf32>
    %147 = vector.broadcast %126 : vector<1x32xf32> to vector<16x32xf32>
    %148 = arith.addf %146, %147 : vector<16x32xf32>
    %c0_52 = arith.constant 0 : index
    %c0_53 = arith.constant 0 : index
    %c0_54 = arith.constant 0 : index
    %149 = vector.load %arg10[%c0_52, %c0_53, %c0_54] : memref<2x32x128xf32, #tpu.memory_space<vmem>>, vector<1x32x128xf32>
    %150 = vector.shape_cast %149 : vector<1x32x128xf32> to vector<32x128xf32>
    %cst_55 = arith.constant dense<0.000000e+00> : vector<16x128xf32>
    %151 = tpu.matmul %148, %150, %cst_55 {dimension_numbers = #tpu.dot_dimension_numbers<[1], [0], [0], [1], [0, 0, 1, 1], [], []>} : vector<16x32xf32>, vector<32x128xf32>, vector<16x128xf32> -> vector<16x128xf32>
    %c0_56 = arith.constant 0 : index
    %c0_57 = arith.constant 0 : index
    %c0_58 = arith.constant 0 : index
    %152 = vector.load %arg11[%c0_56, %c0_57, %c0_58] : memref<2x1x128xf32, #tpu.memory_space<vmem>>, vector<1x1x128xf32>
    %153 = vector.shape_cast %152 : vector<1x1x128xf32> to vector<1x128xf32>
    %154 = vector.broadcast %153 : vector<1x128xf32> to vector<16x128xf32>
    %155 = arith.addf %151, %154 : vector<16x128xf32>
    %cst_59 = arith.constant 0.000000e+00 : f32
    %156 = vector.broadcast %cst_59 : f32 to vector<16x128xf32>
    %157 = arith.maximumf %155, %156 : vector<16x128xf32>
    %c0_60 = arith.constant 0 : index
    %c0_61 = arith.constant 0 : index
    %c0_62 = arith.constant 0 : index
    %158 = vector.load %arg12[%c0_60, %c0_61, %c0_62] : memref<2x128x32xf32, #tpu.memory_space<vmem>>, vector<1x128x32xf32>
    %159 = vector.shape_cast %158 : vector<1x128x32xf32> to vector<128x32xf32>
    %cst_63 = arith.constant dense<0.000000e+00> : vector<16x32xf32>
    %160 = tpu.matmul %157, %159, %cst_63 {dimension_numbers = #tpu.dot_dimension_numbers<[1], [0], [0], [1], [0, 0, 1, 1], [], []>} : vector<16x128xf32>, vector<128x32xf32>, vector<16x32xf32> -> vector<16x32xf32>
    %c0_64 = arith.constant 0 : index
    %c0_65 = arith.constant 0 : index
    %c0_66 = arith.constant 0 : index
    %161 = vector.load %arg13[%c0_64, %c0_65, %c0_66] : memref<2x1x32xf32, #tpu.memory_space<vmem>>, vector<1x1x32xf32>
    %162 = vector.shape_cast %161 : vector<1x1x32xf32> to vector<1x32xf32>
    %163 = vector.broadcast %162 : vector<1x32xf32> to vector<16x32xf32>
    %164 = arith.addf %160, %163 : vector<16x32xf32>
    %c0_67 = arith.constant 0 : index
    %c0_68 = arith.constant 0 : index
    %c0_69 = arith.constant 0 : index
    %165 = vector.load %arg14[%c0_67, %c0_68, %c0_69] : memref<2x1x32xf32, #tpu.memory_space<vmem>>, vector<1x1x32xf32>
    %166 = vector.shape_cast %165 : vector<1x1x32xf32> to vector<1x32xf32>
    %c0_70 = arith.constant 0 : index
    %c0_71 = arith.constant 0 : index
    %c0_72 = arith.constant 0 : index
    %167 = vector.load %arg15[%c0_70, %c0_71, %c0_72] : memref<2x1x32xf32, #tpu.memory_space<vmem>>, vector<1x1x32xf32>
    %168 = vector.shape_cast %167 : vector<1x1x32xf32> to vector<1x32xf32>
    %cst_73 = arith.constant dense<0.000000e+00> : vector<16xf32>
    %169 = vector.multi_reduction <add>, %164, %cst_73 [1] : vector<16x32xf32> to vector<16xf32>
    %170 = vector.shape_cast %169 : vector<16xf32> to vector<16x1xf32>
    %cst_74 = arith.constant 3.200000e+01 : f32
    %171 = vector.broadcast %cst_74 : f32 to vector<16x1xf32>
    %172 = arith.divf %170, %171 : vector<16x1xf32>
    %173 = vector.broadcast %172 : vector<16x1xf32> to vector<16x32xf32>
    %174 = arith.subf %164, %173 : vector<16x32xf32>
    %175 = arith.mulf %174, %174 : vector<16x32xf32>
    %cst_75 = arith.constant dense<0.000000e+00> : vector<16xf32>
    %176 = vector.multi_reduction <add>, %175, %cst_75 [1] : vector<16x32xf32> to vector<16xf32>
    %177 = vector.shape_cast %176 : vector<16xf32> to vector<16x1xf32>
    %cst_76 = arith.constant 3.200000e+01 : f32
    %178 = vector.broadcast %cst_76 : f32 to vector<16x1xf32>
    %179 = arith.divf %177, %178 : vector<16x1xf32>
    %180 = vector.broadcast %172 : vector<16x1xf32> to vector<16x32xf32>
    %181 = arith.subf %164, %180 : vector<16x32xf32>
    %cst_77 = arith.constant 9.99999974E-6 : f32
    %182 = vector.broadcast %cst_77 : f32 to vector<16x1xf32>
    %183 = arith.addf %179, %182 : vector<16x1xf32>
    %184 = math.rsqrt %183 : vector<16x1xf32>
    %185 = vector.broadcast %184 : vector<16x1xf32> to vector<16x32xf32>
    %186 = arith.mulf %181, %185 : vector<16x32xf32>
    %187 = vector.broadcast %166 : vector<1x32xf32> to vector<16x32xf32>
    %188 = arith.mulf %186, %187 : vector<16x32xf32>
    %189 = vector.broadcast %168 : vector<1x32xf32> to vector<16x32xf32>
    %190 = arith.addf %188, %189 : vector<16x32xf32>
    %191 = arith.addf %148, %190 : vector<16x32xf32>
    %c1 = arith.constant 1 : index
    %c0_78 = arith.constant 0 : index
    %c0_79 = arith.constant 0 : index
    %192 = vector.load %arg4[%c1, %c0_78, %c0_79] : memref<2x32x96xf32, #tpu.memory_space<vmem>>, vector<1x32x96xf32>
    %193 = vector.shape_cast %192 : vector<1x32x96xf32> to vector<32x96xf32>
    %cst_80 = arith.constant dense<0.000000e+00> : vector<16x96xf32>
    %194 = tpu.matmul %191, %193, %cst_80 {dimension_numbers = #tpu.dot_dimension_numbers<[1], [0], [0], [1], [0, 0, 1, 1], [], []>} : vector<16x32xf32>, vector<32x96xf32>, vector<16x96xf32> -> vector<16x96xf32>
    %c1_81 = arith.constant 1 : index
    %c0_82 = arith.constant 0 : index
    %c0_83 = arith.constant 0 : index
    %195 = vector.load %arg5[%c1_81, %c0_82, %c0_83] : memref<2x1x96xf32, #tpu.memory_space<vmem>>, vector<1x1x96xf32>
    %196 = vector.shape_cast %195 : vector<1x1x96xf32> to vector<1x96xf32>
    %197 = vector.broadcast %196 : vector<1x96xf32> to vector<16x96xf32>
    %198 = arith.addf %194, %197 : vector<16x96xf32>
    %cst_84 = arith.constant 0.000000e+00 : f32
    %199 = vector.broadcast %cst_84 : f32 to vector<2x8x8xf32>
    %200 = vector.extract_strided_slice %198 {offsets = [0, 0], sizes = [16, 8], strides = [1, 1]} : vector<16x96xf32> to vector<16x8xf32>
    %201 = vector.shape_cast %200 : vector<16x8xf32> to vector<2x8x8xf32>
    %202 = vector.extract_strided_slice %198 {offsets = [0, 32], sizes = [16, 8], strides = [1, 1]} : vector<16x96xf32> to vector<16x8xf32>
    %203 = vector.shape_cast %202 : vector<16x8xf32> to vector<2x8x8xf32>
    %204 = vector.extract_strided_slice %198 {offsets = [0, 64], sizes = [16, 8], strides = [1, 1]} : vector<16x96xf32> to vector<16x8xf32>
    %205 = vector.shape_cast %204 : vector<16x8xf32> to vector<2x8x8xf32>
    "tpu.trace_start"() <{level = 10 : i32, message = "bqd,bkd->bqk"}> : () -> ()
    %cst_85 = arith.constant dense<0.000000e+00> : vector<2x8x8xf32>
    %206 = tpu.matmul %201, %203, %cst_85 {dimension_numbers = #tpu.dot_dimension_numbers<[2], [2], [1], [1], [0, 0, 0, 1, 1, 1], [0], [0]>} : vector<2x8x8xf32>, vector<2x8x8xf32>, vector<2x8x8xf32> -> vector<2x8x8xf32>
    "tpu.trace_stop"() : () -> ()
    %cst_86 = arith.constant 0.353553385 : f32
    %207 = vector.broadcast %cst_86 : f32 to vector<2x8x8xf32>
    %208 = arith.mulf %206, %207 : vector<2x8x8xf32>
    %cst_87 = arith.constant dense<0xFF800000> : vector<2x8xf32>
    %209 = vector.multi_reduction <maximumf>, %208, %cst_87 [2] : vector<2x8x8xf32> to vector<2x8xf32>
    %210 = vector.shape_cast %209 : vector<2x8xf32> to vector<2x8x1xf32>
    %211 = vector.broadcast %210 : vector<2x8x1xf32> to vector<2x8x8xf32>
    %212 = arith.subf %208, %211 : vector<2x8x8xf32>
    %213 = math.exp %212 : vector<2x8x8xf32>
    %cst_88 = arith.constant dense<0.000000e+00> : vector<2x8xf32>
    %214 = vector.multi_reduction <add>, %213, %cst_88 [2] : vector<2x8x8xf32> to vector<2x8xf32>
    %215 = vector.shape_cast %214 : vector<2x8xf32> to vector<2x8x1xf32>
    %216 = vector.broadcast %215 : vector<2x8x1xf32> to vector<2x8x8xf32>
    %217 = arith.divf %213, %216 : vector<2x8x8xf32>
    %218 = arith.addf %199, %217 : vector<2x8x8xf32>
    "tpu.trace_start"() <{level = 10 : i32, message = "bqk,bkd->bqd"}> : () -> ()
    %cst_89 = arith.constant dense<0.000000e+00> : vector<2x8x8xf32>
    %219 = tpu.matmul %217, %205, %cst_89 {dimension_numbers = #tpu.dot_dimension_numbers<[2], [1], [1], [2], [0, 0, 0, 1, 1, 2], [0], [0]>} : vector<2x8x8xf32>, vector<2x8x8xf32>, vector<2x8x8xf32> -> vector<2x8x8xf32>
    "tpu.trace_stop"() : () -> ()
    %220 = vector.extract_strided_slice %198 {offsets = [0, 8], sizes = [16, 8], strides = [1, 1]} : vector<16x96xf32> to vector<16x8xf32>
    %221 = vector.shape_cast %220 : vector<16x8xf32> to vector<2x8x8xf32>
    %222 = vector.extract_strided_slice %198 {offsets = [0, 40], sizes = [16, 8], strides = [1, 1]} : vector<16x96xf32> to vector<16x8xf32>
    %223 = vector.shape_cast %222 : vector<16x8xf32> to vector<2x8x8xf32>
    %224 = vector.extract_strided_slice %198 {offsets = [0, 72], sizes = [16, 8], strides = [1, 1]} : vector<16x96xf32> to vector<16x8xf32>
    %225 = vector.shape_cast %224 : vector<16x8xf32> to vector<2x8x8xf32>
    "tpu.trace_start"() <{level = 10 : i32, message = "bqd,bkd->bqk"}> : () -> ()
    %cst_90 = arith.constant dense<0.000000e+00> : vector<2x8x8xf32>
    %226 = tpu.matmul %221, %223, %cst_90 {dimension_numbers = #tpu.dot_dimension_numbers<[2], [2], [1], [1], [0, 0, 0, 1, 1, 1], [0], [0]>} : vector<2x8x8xf32>, vector<2x8x8xf32>, vector<2x8x8xf32> -> vector<2x8x8xf32>
    "tpu.trace_stop"() : () -> ()
    %cst_91 = arith.constant 0.353553385 : f32
    %227 = vector.broadcast %cst_91 : f32 to vector<2x8x8xf32>
    %228 = arith.mulf %226, %227 : vector<2x8x8xf32>
    %cst_92 = arith.constant dense<0xFF800000> : vector<2x8xf32>
    %229 = vector.multi_reduction <maximumf>, %228, %cst_92 [2] : vector<2x8x8xf32> to vector<2x8xf32>
    %230 = vector.shape_cast %229 : vector<2x8xf32> to vector<2x8x1xf32>
    %231 = vector.broadcast %230 : vector<2x8x1xf32> to vector<2x8x8xf32>
    %232 = arith.subf %228, %231 : vector<2x8x8xf32>
    %233 = math.exp %232 : vector<2x8x8xf32>
    %cst_93 = arith.constant dense<0.000000e+00> : vector<2x8xf32>
    %234 = vector.multi_reduction <add>, %233, %cst_93 [2] : vector<2x8x8xf32> to vector<2x8xf32>
    %235 = vector.shape_cast %234 : vector<2x8xf32> to vector<2x8x1xf32>
    %236 = vector.broadcast %235 : vector<2x8x1xf32> to vector<2x8x8xf32>
    %237 = arith.divf %233, %236 : vector<2x8x8xf32>
    %238 = arith.addf %218, %237 : vector<2x8x8xf32>
    "tpu.trace_start"() <{level = 10 : i32, message = "bqk,bkd->bqd"}> : () -> ()
    %cst_94 = arith.constant dense<0.000000e+00> : vector<2x8x8xf32>
    %239 = tpu.matmul %237, %225, %cst_94 {dimension_numbers = #tpu.dot_dimension_numbers<[2], [1], [1], [2], [0, 0, 0, 1, 1, 2], [0], [0]>} : vector<2x8x8xf32>, vector<2x8x8xf32>, vector<2x8x8xf32> -> vector<2x8x8xf32>
    "tpu.trace_stop"() : () -> ()
    %240 = vector.extract_strided_slice %198 {offsets = [0, 16], sizes = [16, 8], strides = [1, 1]} : vector<16x96xf32> to vector<16x8xf32>
    %241 = vector.shape_cast %240 : vector<16x8xf32> to vector<2x8x8xf32>
    %242 = vector.extract_strided_slice %198 {offsets = [0, 48], sizes = [16, 8], strides = [1, 1]} : vector<16x96xf32> to vector<16x8xf32>
    %243 = vector.shape_cast %242 : vector<16x8xf32> to vector<2x8x8xf32>
    %244 = vector.extract_strided_slice %198 {offsets = [0, 80], sizes = [16, 8], strides = [1, 1]} : vector<16x96xf32> to vector<16x8xf32>
    %245 = vector.shape_cast %244 : vector<16x8xf32> to vector<2x8x8xf32>
    "tpu.trace_start"() <{level = 10 : i32, message = "bqd,bkd->bqk"}> : () -> ()
    %cst_95 = arith.constant dense<0.000000e+00> : vector<2x8x8xf32>
    %246 = tpu.matmul %241, %243, %cst_95 {dimension_numbers = #tpu.dot_dimension_numbers<[2], [2], [1], [1], [0, 0, 0, 1, 1, 1], [0], [0]>} : vector<2x8x8xf32>, vector<2x8x8xf32>, vector<2x8x8xf32> -> vector<2x8x8xf32>
    "tpu.trace_stop"() : () -> ()
    %cst_96 = arith.constant 0.353553385 : f32
    %247 = vector.broadcast %cst_96 : f32 to vector<2x8x8xf32>
    %248 = arith.mulf %246, %247 : vector<2x8x8xf32>
    %cst_97 = arith.constant dense<0xFF800000> : vector<2x8xf32>
    %249 = vector.multi_reduction <maximumf>, %248, %cst_97 [2] : vector<2x8x8xf32> to vector<2x8xf32>
    %250 = vector.shape_cast %249 : vector<2x8xf32> to vector<2x8x1xf32>
    %251 = vector.broadcast %250 : vector<2x8x1xf32> to vector<2x8x8xf32>
    %252 = arith.subf %248, %251 : vector<2x8x8xf32>
    %253 = math.exp %252 : vector<2x8x8xf32>
    %cst_98 = arith.constant dense<0.000000e+00> : vector<2x8xf32>
    %254 = vector.multi_reduction <add>, %253, %cst_98 [2] : vector<2x8x8xf32> to vector<2x8xf32>
    %255 = vector.shape_cast %254 : vector<2x8xf32> to vector<2x8x1xf32>
    %256 = vector.broadcast %255 : vector<2x8x1xf32> to vector<2x8x8xf32>
    %257 = arith.divf %253, %256 : vector<2x8x8xf32>
    %258 = arith.addf %238, %257 : vector<2x8x8xf32>
    "tpu.trace_start"() <{level = 10 : i32, message = "bqk,bkd->bqd"}> : () -> ()
    %cst_99 = arith.constant dense<0.000000e+00> : vector<2x8x8xf32>
    %259 = tpu.matmul %257, %245, %cst_99 {dimension_numbers = #tpu.dot_dimension_numbers<[2], [1], [1], [2], [0, 0, 0, 1, 1, 2], [0], [0]>} : vector<2x8x8xf32>, vector<2x8x8xf32>, vector<2x8x8xf32> -> vector<2x8x8xf32>
    "tpu.trace_stop"() : () -> ()
    %260 = vector.extract_strided_slice %198 {offsets = [0, 24], sizes = [16, 8], strides = [1, 1]} : vector<16x96xf32> to vector<16x8xf32>
    %261 = vector.shape_cast %260 : vector<16x8xf32> to vector<2x8x8xf32>
    %262 = vector.extract_strided_slice %198 {offsets = [0, 56], sizes = [16, 8], strides = [1, 1]} : vector<16x96xf32> to vector<16x8xf32>
    %263 = vector.shape_cast %262 : vector<16x8xf32> to vector<2x8x8xf32>
    %264 = vector.extract_strided_slice %198 {offsets = [0, 88], sizes = [16, 8], strides = [1, 1]} : vector<16x96xf32> to vector<16x8xf32>
    %265 = vector.shape_cast %264 : vector<16x8xf32> to vector<2x8x8xf32>
    "tpu.trace_start"() <{level = 10 : i32, message = "bqd,bkd->bqk"}> : () -> ()
    %cst_100 = arith.constant dense<0.000000e+00> : vector<2x8x8xf32>
    %266 = tpu.matmul %261, %263, %cst_100 {dimension_numbers = #tpu.dot_dimension_numbers<[2], [2], [1], [1], [0, 0, 0, 1, 1, 1], [0], [0]>} : vector<2x8x8xf32>, vector<2x8x8xf32>, vector<2x8x8xf32> -> vector<2x8x8xf32>
    "tpu.trace_stop"() : () -> ()
    %cst_101 = arith.constant 0.353553385 : f32
    %267 = vector.broadcast %cst_101 : f32 to vector<2x8x8xf32>
    %268 = arith.mulf %266, %267 : vector<2x8x8xf32>
    %cst_102 = arith.constant dense<0xFF800000> : vector<2x8xf32>
    %269 = vector.multi_reduction <maximumf>, %268, %cst_102 [2] : vector<2x8x8xf32> to vector<2x8xf32>
    %270 = vector.shape_cast %269 : vector<2x8xf32> to vector<2x8x1xf32>
    %271 = vector.broadcast %270 : vector<2x8x1xf32> to vector<2x8x8xf32>
    %272 = arith.subf %268, %271 : vector<2x8x8xf32>
    %273 = math.exp %272 : vector<2x8x8xf32>
    %cst_103 = arith.constant dense<0.000000e+00> : vector<2x8xf32>
    %274 = vector.multi_reduction <add>, %273, %cst_103 [2] : vector<2x8x8xf32> to vector<2x8xf32>
    %275 = vector.shape_cast %274 : vector<2x8xf32> to vector<2x8x1xf32>
    %276 = vector.broadcast %275 : vector<2x8x1xf32> to vector<2x8x8xf32>
    %277 = arith.divf %273, %276 : vector<2x8x8xf32>
    %278 = arith.addf %258, %277 : vector<2x8x8xf32>
    "tpu.trace_start"() <{level = 10 : i32, message = "bqk,bkd->bqd"}> : () -> ()
    %cst_104 = arith.constant dense<0.000000e+00> : vector<2x8x8xf32>
    %279 = tpu.matmul %277, %265, %cst_104 {dimension_numbers = #tpu.dot_dimension_numbers<[2], [1], [1], [2], [0, 0, 0, 1, 1, 2], [0], [0]>} : vector<2x8x8xf32>, vector<2x8x8xf32>, vector<2x8x8xf32> -> vector<2x8x8xf32>
    "tpu.trace_stop"() : () -> ()
    %cst_105 = arith.constant 2.500000e-01 : f32
    %280 = vector.broadcast %cst_105 : f32 to vector<2x8x8xf32>
    %281 = arith.mulf %278, %280 : vector<2x8x8xf32>
    %282 = vector.extract_strided_slice %281 {offsets = [0, 0, 0], sizes = [2, 1, 8], strides = [1, 1, 1]} : vector<2x8x8xf32> to vector<2x1x8xf32>
    %283 = vector.shape_cast %282 : vector<2x1x8xf32> to vector<2x8xf32>
    %284 = vector.extract_strided_slice %281 {offsets = [0, 1, 0], sizes = [2, 1, 8], strides = [1, 1, 1]} : vector<2x8x8xf32> to vector<2x1x8xf32>
    %285 = vector.shape_cast %284 : vector<2x1x8xf32> to vector<2x8xf32>
    %286 = vector.extract_strided_slice %281 {offsets = [0, 2, 0], sizes = [2, 1, 8], strides = [1, 1, 1]} : vector<2x8x8xf32> to vector<2x1x8xf32>
    %287 = vector.shape_cast %286 : vector<2x1x8xf32> to vector<2x8xf32>
    %288 = vector.extract_strided_slice %281 {offsets = [0, 3, 0], sizes = [2, 1, 8], strides = [1, 1, 1]} : vector<2x8x8xf32> to vector<2x1x8xf32>
    %289 = vector.shape_cast %288 : vector<2x1x8xf32> to vector<2x8xf32>
    %290 = vector.extract_strided_slice %281 {offsets = [0, 4, 0], sizes = [2, 1, 8], strides = [1, 1, 1]} : vector<2x8x8xf32> to vector<2x1x8xf32>
    %291 = vector.shape_cast %290 : vector<2x1x8xf32> to vector<2x8xf32>
    %292 = vector.extract_strided_slice %281 {offsets = [0, 5, 0], sizes = [2, 1, 8], strides = [1, 1, 1]} : vector<2x8x8xf32> to vector<2x1x8xf32>
    %293 = vector.shape_cast %292 : vector<2x1x8xf32> to vector<2x8xf32>
    %294 = vector.extract_strided_slice %281 {offsets = [0, 6, 0], sizes = [2, 1, 8], strides = [1, 1, 1]} : vector<2x8x8xf32> to vector<2x1x8xf32>
    %295 = vector.shape_cast %294 : vector<2x1x8xf32> to vector<2x8xf32>
    %296 = vector.extract_strided_slice %281 {offsets = [0, 7, 0], sizes = [2, 1, 8], strides = [1, 1, 1]} : vector<2x8x8xf32> to vector<2x1x8xf32>
    %297 = vector.shape_cast %296 : vector<2x1x8xf32> to vector<2x8xf32>
    %298 = tpu.concatenate %283, %285, %287, %289, %291, %293, %295, %297 in 1 : vector<2x8xf32>, vector<2x8xf32>, vector<2x8xf32>, vector<2x8xf32>, vector<2x8xf32>, vector<2x8xf32>, vector<2x8xf32>, vector<2x8xf32> -> vector<2x64xf32>
    %299 = tpu.concatenate %219, %239, %259, %279 in 2 : vector<2x8x8xf32>, vector<2x8x8xf32>, vector<2x8x8xf32>, vector<2x8x8xf32> -> vector<2x8x32xf32>
    %300 = vector.shape_cast %299 : vector<2x8x32xf32> to vector<16x32xf32>
    %c1_106 = arith.constant 1 : index
    %c0_107 = arith.constant 0 : index
    %c0_108 = arith.constant 0 : index
    %301 = vector.load %arg6[%c1_106, %c0_107, %c0_108] : memref<2x32x32xf32, #tpu.memory_space<vmem>>, vector<1x32x32xf32>
    %302 = vector.shape_cast %301 : vector<1x32x32xf32> to vector<32x32xf32>
    %cst_109 = arith.constant dense<0.000000e+00> : vector<16x32xf32>
    %303 = tpu.matmul %300, %302, %cst_109 {dimension_numbers = #tpu.dot_dimension_numbers<[1], [0], [0], [1], [0, 0, 1, 1], [], []>} : vector<16x32xf32>, vector<32x32xf32>, vector<16x32xf32> -> vector<16x32xf32>
    %c1_110 = arith.constant 1 : index
    %c0_111 = arith.constant 0 : index
    %c0_112 = arith.constant 0 : index
    %304 = vector.load %arg7[%c1_110, %c0_111, %c0_112] : memref<2x1x32xf32, #tpu.memory_space<vmem>>, vector<1x1x32xf32>
    %305 = vector.shape_cast %304 : vector<1x1x32xf32> to vector<1x32xf32>
    %306 = vector.broadcast %305 : vector<1x32xf32> to vector<16x32xf32>
    %307 = arith.addf %303, %306 : vector<16x32xf32>
    %308 = arith.addf %191, %307 : vector<16x32xf32>
    %c1_113 = arith.constant 1 : index
    %c0_114 = arith.constant 0 : index
    %c0_115 = arith.constant 0 : index
    %309 = vector.load %arg8[%c1_113, %c0_114, %c0_115] : memref<2x1x32xf32, #tpu.memory_space<vmem>>, vector<1x1x32xf32>
    %310 = vector.shape_cast %309 : vector<1x1x32xf32> to vector<1x32xf32>
    %c1_116 = arith.constant 1 : index
    %c0_117 = arith.constant 0 : index
    %c0_118 = arith.constant 0 : index
    %311 = vector.load %arg9[%c1_116, %c0_117, %c0_118] : memref<2x1x32xf32, #tpu.memory_space<vmem>>, vector<1x1x32xf32>
    %312 = vector.shape_cast %311 : vector<1x1x32xf32> to vector<1x32xf32>
    %cst_119 = arith.constant dense<0.000000e+00> : vector<16xf32>
    %313 = vector.multi_reduction <add>, %308, %cst_119 [1] : vector<16x32xf32> to vector<16xf32>
    %314 = vector.shape_cast %313 : vector<16xf32> to vector<16x1xf32>
    %cst_120 = arith.constant 3.200000e+01 : f32
    %315 = vector.broadcast %cst_120 : f32 to vector<16x1xf32>
    %316 = arith.divf %314, %315 : vector<16x1xf32>
    %317 = vector.broadcast %316 : vector<16x1xf32> to vector<16x32xf32>
    %318 = arith.subf %308, %317 : vector<16x32xf32>
    %319 = arith.mulf %318, %318 : vector<16x32xf32>
    %cst_121 = arith.constant dense<0.000000e+00> : vector<16xf32>
    %320 = vector.multi_reduction <add>, %319, %cst_121 [1] : vector<16x32xf32> to vector<16xf32>
    %321 = vector.shape_cast %320 : vector<16xf32> to vector<16x1xf32>
    %cst_122 = arith.constant 3.200000e+01 : f32
    %322 = vector.broadcast %cst_122 : f32 to vector<16x1xf32>
    %323 = arith.divf %321, %322 : vector<16x1xf32>
    %324 = vector.broadcast %316 : vector<16x1xf32> to vector<16x32xf32>
    %325 = arith.subf %308, %324 : vector<16x32xf32>
    %cst_123 = arith.constant 9.99999974E-6 : f32
    %326 = vector.broadcast %cst_123 : f32 to vector<16x1xf32>
    %327 = arith.addf %323, %326 : vector<16x1xf32>
    %328 = math.rsqrt %327 : vector<16x1xf32>
    %329 = vector.broadcast %328 : vector<16x1xf32> to vector<16x32xf32>
    %330 = arith.mulf %325, %329 : vector<16x32xf32>
    %331 = vector.broadcast %310 : vector<1x32xf32> to vector<16x32xf32>
    %332 = arith.mulf %330, %331 : vector<16x32xf32>
    %333 = vector.broadcast %312 : vector<1x32xf32> to vector<16x32xf32>
    %334 = arith.addf %332, %333 : vector<16x32xf32>
    %c1_124 = arith.constant 1 : index
    %c0_125 = arith.constant 0 : index
    %c0_126 = arith.constant 0 : index
    %335 = vector.load %arg10[%c1_124, %c0_125, %c0_126] : memref<2x32x128xf32, #tpu.memory_space<vmem>>, vector<1x32x128xf32>
    %336 = vector.shape_cast %335 : vector<1x32x128xf32> to vector<32x128xf32>
    %cst_127 = arith.constant dense<0.000000e+00> : vector<16x128xf32>
    %337 = tpu.matmul %334, %336, %cst_127 {dimension_numbers = #tpu.dot_dimension_numbers<[1], [0], [0], [1], [0, 0, 1, 1], [], []>} : vector<16x32xf32>, vector<32x128xf32>, vector<16x128xf32> -> vector<16x128xf32>
    %c1_128 = arith.constant 1 : index
    %c0_129 = arith.constant 0 : index
    %c0_130 = arith.constant 0 : index
    %338 = vector.load %arg11[%c1_128, %c0_129, %c0_130] : memref<2x1x128xf32, #tpu.memory_space<vmem>>, vector<1x1x128xf32>
    %339 = vector.shape_cast %338 : vector<1x1x128xf32> to vector<1x128xf32>
    %340 = vector.broadcast %339 : vector<1x128xf32> to vector<16x128xf32>
    %341 = arith.addf %337, %340 : vector<16x128xf32>
    %cst_131 = arith.constant 0.000000e+00 : f32
    %342 = vector.broadcast %cst_131 : f32 to vector<16x128xf32>
    %343 = arith.maximumf %341, %342 : vector<16x128xf32>
    %c1_132 = arith.constant 1 : index
    %c0_133 = arith.constant 0 : index
    %c0_134 = arith.constant 0 : index
    %344 = vector.load %arg12[%c1_132, %c0_133, %c0_134] : memref<2x128x32xf32, #tpu.memory_space<vmem>>, vector<1x128x32xf32>
    %345 = vector.shape_cast %344 : vector<1x128x32xf32> to vector<128x32xf32>
    %cst_135 = arith.constant dense<0.000000e+00> : vector<16x32xf32>
    %346 = tpu.matmul %343, %345, %cst_135 {dimension_numbers = #tpu.dot_dimension_numbers<[1], [0], [0], [1], [0, 0, 1, 1], [], []>} : vector<16x128xf32>, vector<128x32xf32>, vector<16x32xf32> -> vector<16x32xf32>
    %c1_136 = arith.constant 1 : index
    %c0_137 = arith.constant 0 : index
    %c0_138 = arith.constant 0 : index
    %347 = vector.load %arg13[%c1_136, %c0_137, %c0_138] : memref<2x1x32xf32, #tpu.memory_space<vmem>>, vector<1x1x32xf32>
    %348 = vector.shape_cast %347 : vector<1x1x32xf32> to vector<1x32xf32>
    %349 = vector.broadcast %348 : vector<1x32xf32> to vector<16x32xf32>
    %350 = arith.addf %346, %349 : vector<16x32xf32>
    %c1_139 = arith.constant 1 : index
    %c0_140 = arith.constant 0 : index
    %c0_141 = arith.constant 0 : index
    %351 = vector.load %arg14[%c1_139, %c0_140, %c0_141] : memref<2x1x32xf32, #tpu.memory_space<vmem>>, vector<1x1x32xf32>
    %352 = vector.shape_cast %351 : vector<1x1x32xf32> to vector<1x32xf32>
    %c1_142 = arith.constant 1 : index
    %c0_143 = arith.constant 0 : index
    %c0_144 = arith.constant 0 : index
    %353 = vector.load %arg15[%c1_142, %c0_143, %c0_144] : memref<2x1x32xf32, #tpu.memory_space<vmem>>, vector<1x1x32xf32>
    %354 = vector.shape_cast %353 : vector<1x1x32xf32> to vector<1x32xf32>
    %cst_145 = arith.constant dense<0.000000e+00> : vector<16xf32>
    %355 = vector.multi_reduction <add>, %350, %cst_145 [1] : vector<16x32xf32> to vector<16xf32>
    %356 = vector.shape_cast %355 : vector<16xf32> to vector<16x1xf32>
    %cst_146 = arith.constant 3.200000e+01 : f32
    %357 = vector.broadcast %cst_146 : f32 to vector<16x1xf32>
    %358 = arith.divf %356, %357 : vector<16x1xf32>
    %359 = vector.broadcast %358 : vector<16x1xf32> to vector<16x32xf32>
    %360 = arith.subf %350, %359 : vector<16x32xf32>
    %361 = arith.mulf %360, %360 : vector<16x32xf32>
    %cst_147 = arith.constant dense<0.000000e+00> : vector<16xf32>
    %362 = vector.multi_reduction <add>, %361, %cst_147 [1] : vector<16x32xf32> to vector<16xf32>
    %363 = vector.shape_cast %362 : vector<16xf32> to vector<16x1xf32>
    %cst_148 = arith.constant 3.200000e+01 : f32
    %364 = vector.broadcast %cst_148 : f32 to vector<16x1xf32>
    %365 = arith.divf %363, %364 : vector<16x1xf32>
    %366 = vector.broadcast %358 : vector<16x1xf32> to vector<16x32xf32>
    %367 = arith.subf %350, %366 : vector<16x32xf32>
    %cst_149 = arith.constant 9.99999974E-6 : f32
    %368 = vector.broadcast %cst_149 : f32 to vector<16x1xf32>
    %369 = arith.addf %365, %368 : vector<16x1xf32>
    %370 = math.rsqrt %369 : vector<16x1xf32>
    %371 = vector.broadcast %370 : vector<16x1xf32> to vector<16x32xf32>
    %372 = arith.mulf %367, %371 : vector<16x32xf32>
    %373 = vector.broadcast %352 : vector<1x32xf32> to vector<16x32xf32>
    %374 = arith.mulf %372, %373 : vector<16x32xf32>
    %375 = vector.broadcast %354 : vector<1x32xf32> to vector<16x32xf32>
    %376 = arith.addf %374, %375 : vector<16x32xf32>
    %377 = arith.addf %334, %376 : vector<16x32xf32>
    %378 = tpu.concatenate %112, %298 in 1 : vector<2x64xf32>, vector<2x64xf32> -> vector<2x128xf32>
    %c0_150 = arith.constant 0 : index
    %c0_151 = arith.constant 0 : index
    %379 = vector.load %arg28[%c0_150, %c0_151] : memref<2x128xf32, #tpu.memory_space<vmem>>, vector<2x128xf32>
    tpu.vector_store %arg28[%c0_150, %c0_151], %378 {strides = array<i32>} : memref<2x128xf32, #tpu.memory_space<vmem>>, vector<2x128xf32>,
    %380 = vector.shape_cast %377 : vector<16x32xf32> to vector<2x8x32xf32>
    %cst_152 = arith.constant dense<0.000000e+00> : vector<2x32xf32>
    %381 = vector.multi_reduction <add>, %380, %cst_152 [1] : vector<2x8x32xf32> to vector<2x32xf32>
    %cst_153 = arith.constant 8.000000e+00 : f32
    %382 = vector.broadcast %cst_153 : f32 to vector<2x32xf32>
    %383 = arith.divf %381, %382 : vector<2x32xf32>
    %c0_154 = arith.constant 0 : index
    %c0_155 = arith.constant 0 : index
    %384 = vector.load %arg16[%c0_154, %c0_155] : memref<32x32xf32, #tpu.memory_space<vmem>>, vector<32x32xf32>
    %cst_156 = arith.constant dense<0.000000e+00> : vector<2x32xf32>
    %385 = tpu.matmul %383, %384, %cst_156 {dimension_numbers = #tpu.dot_dimension_numbers<[1], [0], [0], [1], [0, 0, 1, 1], [], []>} : vector<2x32xf32>, vector<32x32xf32>, vector<2x32xf32> -> vector<2x32xf32>
    %c0_157 = arith.constant 0 : index
    %c0_158 = arith.constant 0 : index
    %386 = vector.load %arg17[%c0_157, %c0_158] : memref<1x32xf32, #tpu.memory_space<vmem>>, vector<1x32xf32>
    %387 = vector.broadcast %386 : vector<1x32xf32> to vector<2x32xf32>
    %388 = arith.addf %385, %387 : vector<2x32xf32>
    %c0_159 = arith.constant 0 : index
    %c0_160 = arith.constant 0 : index
    %389 = vector.load %arg18[%c0_159, %c0_160] : memref<32x64xf32, #tpu.memory_space<vmem>>, vector<32x64xf32>
    %cst_161 = arith.constant dense<0.000000e+00> : vector<16x64xf32>
    %390 = tpu.matmul %377, %389, %cst_161 {dimension_numbers = #tpu.dot_dimension_numbers<[1], [0], [0], [1], [0, 0, 1, 1], [], []>} : vector<16x32xf32>, vector<32x64xf32>, vector<16x64xf32> -> vector<16x64xf32>
    %c0_162 = arith.constant 0 : index
    %c0_163 = arith.constant 0 : index
    %391 = vector.load %arg19[%c0_162, %c0_163] : memref<1x64xf32, #tpu.memory_space<vmem>>, vector<1x64xf32>
    %392 = vector.broadcast %391 : vector<1x64xf32> to vector<16x64xf32>
    %393 = arith.addf %390, %392 : vector<16x64xf32>
    %cst_164 = arith.constant 0.000000e+00 : f32
    %394 = vector.broadcast %cst_164 : f32 to vector<2x1x8xf32>
    %395 = vector.extract_strided_slice %388 {offsets = [0, 0], sizes = [2, 8], strides = [1, 1]} : vector<2x32xf32> to vector<2x8xf32>
    %396 = vector.shape_cast %395 : vector<2x8xf32> to vector<2x1x8xf32>
    %397 = vector.extract_strided_slice %393 {offsets = [0, 0], sizes = [16, 8], strides = [1, 1]} : vector<16x64xf32> to vector<16x8xf32>
    %398 = vector.shape_cast %397 : vector<16x8xf32> to vector<2x8x8xf32>
    %399 = vector.extract_strided_slice %393 {offsets = [0, 32], sizes = [16, 8], strides = [1, 1]} : vector<16x64xf32> to vector<16x8xf32>
    %400 = vector.shape_cast %399 : vector<16x8xf32> to vector<2x8x8xf32>
    "tpu.trace_start"() <{level = 10 : i32, message = "bqd,bkd->bqk"}> : () -> ()
    %cst_165 = arith.constant dense<0.000000e+00> : vector<2x1x8xf32>
    %401 = tpu.matmul %396, %398, %cst_165 {dimension_numbers = #tpu.dot_dimension_numbers<[2], [2], [1], [1], [0, 0, 0, 1, 1, 1], [0], [0]>} : vector<2x1x8xf32>, vector<2x8x8xf32>, vector<2x1x8xf32> -> vector<2x1x8xf32>
    "tpu.trace_stop"() : () -> ()
    %cst_166 = arith.constant 0.353553385 : f32
    %402 = vector.broadcast %cst_166 : f32 to vector<2x1x8xf32>
    %403 = arith.mulf %401, %402 : vector<2x1x8xf32>
    %cst_167 = arith.constant dense<0xFF800000> : vector<2x1xf32>
    %404 = vector.multi_reduction <maximumf>, %403, %cst_167 [2] : vector<2x1x8xf32> to vector<2x1xf32>
    %405 = vector.shape_cast %404 : vector<2x1xf32> to vector<2x1x1xf32>
    %406 = vector.broadcast %405 : vector<2x1x1xf32> to vector<2x1x8xf32>
    %407 = arith.subf %403, %406 : vector<2x1x8xf32>
    %408 = math.exp %407 : vector<2x1x8xf32>
    %cst_168 = arith.constant dense<0.000000e+00> : vector<2x1xf32>
    %409 = vector.multi_reduction <add>, %408, %cst_168 [2] : vector<2x1x8xf32> to vector<2x1xf32>
    %410 = vector.shape_cast %409 : vector<2x1xf32> to vector<2x1x1xf32>
    %411 = vector.broadcast %410 : vector<2x1x1xf32> to vector<2x1x8xf32>
    %412 = arith.divf %408, %411 : vector<2x1x8xf32>
    %413 = arith.addf %394, %412 : vector<2x1x8xf32>
    "tpu.trace_start"() <{level = 10 : i32, message = "bqk,bkd->bqd"}> : () -> ()
    %cst_169 = arith.constant dense<0.000000e+00> : vector<2x1x8xf32>
    %414 = tpu.matmul %412, %400, %cst_169 {dimension_numbers = #tpu.dot_dimension_numbers<[2], [1], [1], [2], [0, 0, 0, 1, 1, 2], [0], [0]>} : vector<2x1x8xf32>, vector<2x8x8xf32>, vector<2x1x8xf32> -> vector<2x1x8xf32>
    "tpu.trace_stop"() : () -> ()
    %415 = vector.extract_strided_slice %388 {offsets = [0, 8], sizes = [2, 8], strides = [1, 1]} : vector<2x32xf32> to vector<2x8xf32>
    %416 = vector.shape_cast %415 : vector<2x8xf32> to vector<2x1x8xf32>
    %417 = vector.extract_strided_slice %393 {offsets = [0, 8], sizes = [16, 8], strides = [1, 1]} : vector<16x64xf32> to vector<16x8xf32>
    %418 = vector.shape_cast %417 : vector<16x8xf32> to vector<2x8x8xf32>
    %419 = vector.extract_strided_slice %393 {offsets = [0, 40], sizes = [16, 8], strides = [1, 1]} : vector<16x64xf32> to vector<16x8xf32>
    %420 = vector.shape_cast %419 : vector<16x8xf32> to vector<2x8x8xf32>
    "tpu.trace_start"() <{level = 10 : i32, message = "bqd,bkd->bqk"}> : () -> ()
    %cst_170 = arith.constant dense<0.000000e+00> : vector<2x1x8xf32>
    %421 = tpu.matmul %416, %418, %cst_170 {dimension_numbers = #tpu.dot_dimension_numbers<[2], [2], [1], [1], [0, 0, 0, 1, 1, 1], [0], [0]>} : vector<2x1x8xf32>, vector<2x8x8xf32>, vector<2x1x8xf32> -> vector<2x1x8xf32>
    "tpu.trace_stop"() : () -> ()
    %cst_171 = arith.constant 0.353553385 : f32
    %422 = vector.broadcast %cst_171 : f32 to vector<2x1x8xf32>
    %423 = arith.mulf %421, %422 : vector<2x1x8xf32>
    %cst_172 = arith.constant dense<0xFF800000> : vector<2x1xf32>
    %424 = vector.multi_reduction <maximumf>, %423, %cst_172 [2] : vector<2x1x8xf32> to vector<2x1xf32>
    %425 = vector.shape_cast %424 : vector<2x1xf32> to vector<2x1x1xf32>
    %426 = vector.broadcast %425 : vector<2x1x1xf32> to vector<2x1x8xf32>
    %427 = arith.subf %423, %426 : vector<2x1x8xf32>
    %428 = math.exp %427 : vector<2x1x8xf32>
    %cst_173 = arith.constant dense<0.000000e+00> : vector<2x1xf32>
    %429 = vector.multi_reduction <add>, %428, %cst_173 [2] : vector<2x1x8xf32> to vector<2x1xf32>
    %430 = vector.shape_cast %429 : vector<2x1xf32> to vector<2x1x1xf32>
    %431 = vector.broadcast %430 : vector<2x1x1xf32> to vector<2x1x8xf32>
    %432 = arith.divf %428, %431 : vector<2x1x8xf32>
    %433 = arith.addf %413, %432 : vector<2x1x8xf32>
    "tpu.trace_start"() <{level = 10 : i32, message = "bqk,bkd->bqd"}> : () -> ()
    %cst_174 = arith.constant dense<0.000000e+00> : vector<2x1x8xf32>
    %434 = tpu.matmul %432, %420, %cst_174 {dimension_numbers = #tpu.dot_dimension_numbers<[2], [1], [1], [2], [0, 0, 0, 1, 1, 2], [0], [0]>} : vector<2x1x8xf32>, vector<2x8x8xf32>, vector<2x1x8xf32> -> vector<2x1x8xf32>
    "tpu.trace_stop"() : () -> ()
    %435 = vector.extract_strided_slice %388 {offsets = [0, 16], sizes = [2, 8], strides = [1, 1]} : vector<2x32xf32> to vector<2x8xf32>
    %436 = vector.shape_cast %435 : vector<2x8xf32> to vector<2x1x8xf32>
    %437 = vector.extract_strided_slice %393 {offsets = [0, 16], sizes = [16, 8], strides = [1, 1]} : vector<16x64xf32> to vector<16x8xf32>
    %438 = vector.shape_cast %437 : vector<16x8xf32> to vector<2x8x8xf32>
    %439 = vector.extract_strided_slice %393 {offsets = [0, 48], sizes = [16, 8], strides = [1, 1]} : vector<16x64xf32> to vector<16x8xf32>
    %440 = vector.shape_cast %439 : vector<16x8xf32> to vector<2x8x8xf32>
    "tpu.trace_start"() <{level = 10 : i32, message = "bqd,bkd->bqk"}> : () -> ()
    %cst_175 = arith.constant dense<0.000000e+00> : vector<2x1x8xf32>
    %441 = tpu.matmul %436, %438, %cst_175 {dimension_numbers = #tpu.dot_dimension_numbers<[2], [2], [1], [1], [0, 0, 0, 1, 1, 1], [0], [0]>} : vector<2x1x8xf32>, vector<2x8x8xf32>, vector<2x1x8xf32> -> vector<2x1x8xf32>
    "tpu.trace_stop"() : () -> ()
    %cst_176 = arith.constant 0.353553385 : f32
    %442 = vector.broadcast %cst_176 : f32 to vector<2x1x8xf32>
    %443 = arith.mulf %441, %442 : vector<2x1x8xf32>
    %cst_177 = arith.constant dense<0xFF800000> : vector<2x1xf32>
    %444 = vector.multi_reduction <maximumf>, %443, %cst_177 [2] : vector<2x1x8xf32> to vector<2x1xf32>
    %445 = vector.shape_cast %444 : vector<2x1xf32> to vector<2x1x1xf32>
    %446 = vector.broadcast %445 : vector<2x1x1xf32> to vector<2x1x8xf32>
    %447 = arith.subf %443, %446 : vector<2x1x8xf32>
    %448 = math.exp %447 : vector<2x1x8xf32>
    %cst_178 = arith.constant dense<0.000000e+00> : vector<2x1xf32>
    %449 = vector.multi_reduction <add>, %448, %cst_178 [2] : vector<2x1x8xf32> to vector<2x1xf32>
    %450 = vector.shape_cast %449 : vector<2x1xf32> to vector<2x1x1xf32>
    %451 = vector.broadcast %450 : vector<2x1x1xf32> to vector<2x1x8xf32>
    %452 = arith.divf %448, %451 : vector<2x1x8xf32>
    %453 = arith.addf %433, %452 : vector<2x1x8xf32>
    "tpu.trace_start"() <{level = 10 : i32, message = "bqk,bkd->bqd"}> : () -> ()
    %cst_179 = arith.constant dense<0.000000e+00> : vector<2x1x8xf32>
    %454 = tpu.matmul %452, %440, %cst_179 {dimension_numbers = #tpu.dot_dimension_numbers<[2], [1], [1], [2], [0, 0, 0, 1, 1, 2], [0], [0]>} : vector<2x1x8xf32>, vector<2x8x8xf32>, vector<2x1x8xf32> -> vector<2x1x8xf32>
    "tpu.trace_stop"() : () -> ()
    %455 = vector.extract_strided_slice %388 {offsets = [0, 24], sizes = [2, 8], strides = [1, 1]} : vector<2x32xf32> to vector<2x8xf32>
    %456 = vector.shape_cast %455 : vector<2x8xf32> to vector<2x1x8xf32>
    %457 = vector.extract_strided_slice %393 {offsets = [0, 24], sizes = [16, 8], strides = [1, 1]} : vector<16x64xf32> to vector<16x8xf32>
    %458 = vector.shape_cast %457 : vector<16x8xf32> to vector<2x8x8xf32>
    %459 = vector.extract_strided_slice %393 {offsets = [0, 56], sizes = [16, 8], strides = [1, 1]} : vector<16x64xf32> to vector<16x8xf32>
    %460 = vector.shape_cast %459 : vector<16x8xf32> to vector<2x8x8xf32>
    "tpu.trace_start"() <{level = 10 : i32, message = "bqd,bkd->bqk"}> : () -> ()
    %cst_180 = arith.constant dense<0.000000e+00> : vector<2x1x8xf32>
    %461 = tpu.matmul %456, %458, %cst_180 {dimension_numbers = #tpu.dot_dimension_numbers<[2], [2], [1], [1], [0, 0, 0, 1, 1, 1], [0], [0]>} : vector<2x1x8xf32>, vector<2x8x8xf32>, vector<2x1x8xf32> -> vector<2x1x8xf32>
    "tpu.trace_stop"() : () -> ()
    %cst_181 = arith.constant 0.353553385 : f32
    %462 = vector.broadcast %cst_181 : f32 to vector<2x1x8xf32>
    %463 = arith.mulf %461, %462 : vector<2x1x8xf32>
    %cst_182 = arith.constant dense<0xFF800000> : vector<2x1xf32>
    %464 = vector.multi_reduction <maximumf>, %463, %cst_182 [2] : vector<2x1x8xf32> to vector<2x1xf32>
    %465 = vector.shape_cast %464 : vector<2x1xf32> to vector<2x1x1xf32>
    %466 = vector.broadcast %465 : vector<2x1x1xf32> to vector<2x1x8xf32>
    %467 = arith.subf %463, %466 : vector<2x1x8xf32>
    %468 = math.exp %467 : vector<2x1x8xf32>
    %cst_183 = arith.constant dense<0.000000e+00> : vector<2x1xf32>
    %469 = vector.multi_reduction <add>, %468, %cst_183 [2] : vector<2x1x8xf32> to vector<2x1xf32>
    %470 = vector.shape_cast %469 : vector<2x1xf32> to vector<2x1x1xf32>
    %471 = vector.broadcast %470 : vector<2x1x1xf32> to vector<2x1x8xf32>
    %472 = arith.divf %468, %471 : vector<2x1x8xf32>
    %473 = arith.addf %453, %472 : vector<2x1x8xf32>
    "tpu.trace_start"() <{level = 10 : i32, message = "bqk,bkd->bqd"}> : () -> ()
    %cst_184 = arith.constant dense<0.000000e+00> : vector<2x1x8xf32>
    %474 = tpu.matmul %472, %460, %cst_184 {dimension_numbers = #tpu.dot_dimension_numbers<[2], [1], [1], [2], [0, 0, 0, 1, 1, 2], [0], [0]>} : vector<2x1x8xf32>, vector<2x8x8xf32>, vector<2x1x8xf32> -> vector<2x1x8xf32>
    "tpu.trace_stop"() : () -> ()
    %cst_185 = arith.constant 2.500000e-01 : f32
    %475 = vector.broadcast %cst_185 : f32 to vector<2x1x8xf32>
    %476 = arith.mulf %473, %475 : vector<2x1x8xf32>
    %477 = vector.shape_cast %476 : vector<2x1x8xf32> to vector<2x8xf32>
    %478 = tpu.concatenate %414, %434, %454, %474 in 2 : vector<2x1x8xf32>, vector<2x1x8xf32>, vector<2x1x8xf32>, vector<2x1x8xf32> -> vector<2x1x32xf32>
    %479 = vector.shape_cast %478 : vector<2x1x32xf32> to vector<2x32xf32>
    %c0_186 = arith.constant 0 : index
    %c0_187 = arith.constant 0 : index
    %480 = vector.load %arg20[%c0_186, %c0_187] : memref<32x32xf32, #tpu.memory_space<vmem>>, vector<32x32xf32>
    %cst_188 = arith.constant dense<0.000000e+00> : vector<2x32xf32>
    %481 = tpu.matmul %479, %480, %cst_188 {dimension_numbers = #tpu.dot_dimension_numbers<[1], [0], [0], [1], [0, 0, 1, 1], [], []>} : vector<2x32xf32>, vector<32x32xf32>, vector<2x32xf32> -> vector<2x32xf32>
    %c0_189 = arith.constant 0 : index
    %c0_190 = arith.constant 0 : index
    %482 = vector.load %arg21[%c0_189, %c0_190] : memref<1x32xf32, #tpu.memory_space<vmem>>, vector<1x32xf32>
    %483 = vector.broadcast %482 : vector<1x32xf32> to vector<2x32xf32>
    %484 = arith.addf %481, %483 : vector<2x32xf32>
    %c0_191 = arith.constant 0 : index
    %c0_192 = arith.constant 0 : index
    %485 = vector.load %arg22[%c0_191, %c0_192] : memref<32x16xf32, #tpu.memory_space<vmem>>, vector<32x16xf32>
    %cst_193 = arith.constant dense<0.000000e+00> : vector<2x16xf32>
    %486 = tpu.matmul %484, %485, %cst_193 {dimension_numbers = #tpu.dot_dimension_numbers<[1], [0], [0], [1], [0, 0, 1, 1], [], []>} : vector<2x32xf32>, vector<32x16xf32>, vector<2x16xf32> -> vector<2x16xf32>
    %c0_194 = arith.constant 0 : index
    %c0_195 = arith.constant 0 : index
    %487 = vector.load %arg23[%c0_194, %c0_195] : memref<1x16xf32, #tpu.memory_space<vmem>>, vector<1x16xf32>
    %488 = vector.broadcast %487 : vector<1x16xf32> to vector<2x16xf32>
    %489 = arith.addf %486, %488 : vector<2x16xf32>
    %cst_196 = arith.constant 0.000000e+00 : f32
    %490 = vector.broadcast %cst_196 : f32 to vector<2x16xf32>
    %491 = arith.maximumf %489, %490 : vector<2x16xf32>
    %c0_197 = arith.constant 0 : index
    %c0_198 = arith.constant 0 : index
    %492 = vector.load %arg24[%c0_197, %c0_198] : memref<16x4xf32, #tpu.memory_space<vmem>>, vector<16x4xf32>
    %cst_199 = arith.constant dense<0.000000e+00> : vector<2x4xf32>
    %493 = tpu.matmul %491, %492, %cst_199 {dimension_numbers = #tpu.dot_dimension_numbers<[1], [0], [0], [1], [0, 0, 1, 1], [], []>} : vector<2x16xf32>, vector<16x4xf32>, vector<2x4xf32> -> vector<2x4xf32>
    %c0_200 = arith.constant 0 : index
    %c0_201 = arith.constant 0 : index
    %494 = vector.load %arg25[%c0_200, %c0_201] : memref<1x4xf32, #tpu.memory_space<vmem>>, vector<1x4xf32>
    %495 = vector.broadcast %494 : vector<1x4xf32> to vector<2x4xf32>
    %496 = arith.addf %493, %495 : vector<2x4xf32>
    %cst_202 = arith.constant dense<0xFF800000> : vector<2xf32>
    %497 = vector.multi_reduction <maximumf>, %496, %cst_202 [1] : vector<2x4xf32> to vector<2xf32>
    %498 = vector.shape_cast %497 : vector<2xf32> to vector<2x1xf32>
    %499 = vector.broadcast %498 : vector<2x1xf32> to vector<2x4xf32>
    %500 = arith.subf %496, %499 : vector<2x4xf32>
    %501 = math.exp %500 : vector<2x4xf32>
    %cst_203 = arith.constant dense<0.000000e+00> : vector<2xf32>
    %502 = vector.multi_reduction <add>, %501, %cst_203 [1] : vector<2x4xf32> to vector<2xf32>
    %503 = vector.shape_cast %502 : vector<2xf32> to vector<2x1xf32>
    %504 = vector.broadcast %503 : vector<2x1xf32> to vector<2x4xf32>
    %505 = arith.divf %501, %504 : vector<2x4xf32>
    %c0_204 = arith.constant 0 : index
    %c0_205 = arith.constant 0 : index
    %506 = vector.load %arg26[%c0_204, %c0_205] : memref<32x16xf32, #tpu.memory_space<vmem>>, vector<32x16xf32>
    %cst_206 = arith.constant dense<0.000000e+00> : vector<2x16xf32>
    %507 = tpu.matmul %484, %506, %cst_206 {dimension_numbers = #tpu.dot_dimension_numbers<[1], [0], [0], [1], [0, 0, 1, 1], [], []>} : vector<2x32xf32>, vector<32x16xf32>, vector<2x16xf32> -> vector<2x16xf32>
    %c0_207 = arith.constant 0 : index
    %c0_208 = arith.constant 0 : index
    %508 = vector.load %arg27[%c0_207, %c0_208] : memref<1x16xf32, #tpu.memory_space<vmem>>, vector<1x16xf32>
    %509 = vector.broadcast %508 : vector<1x16xf32> to vector<2x16xf32>
    %510 = arith.addf %507, %509 : vector<2x16xf32>
    %511 = arith.negf %510 : vector<2x16xf32>
    %512 = math.exp %511 : vector<2x16xf32>
    %cst_209 = arith.constant 1.000000e+00 : f32
    %513 = vector.broadcast %cst_209 : f32 to vector<2x16xf32>
    %514 = arith.addf %513, %512 : vector<2x16xf32>
    %515 = arith.divf %513, %514 : vector<2x16xf32>
    %cst_210 = arith.constant 0.000000e+00 : f32
    %516 = vector.broadcast %cst_210 : f32 to vector<2x64xf32>
    %517 = tpu.concatenate %477, %484, %496, %505, %515, %516 in 1 : vector<2x8xf32>, vector<2x32xf32>, vector<2x4xf32>, vector<2x4xf32>, vector<2x16xf32>, vector<2x64xf32> -> vector<2x128xf32>
    %c0_211 = arith.constant 0 : index
    %c0_212 = arith.constant 0 : index
    %518 = vector.load %arg29[%c0_211, %c0_212] : memref<2x128xf32, #tpu.memory_space<vmem>>, vector<2x128xf32>
    tpu.vector_store %arg29[%c0_211, %c0_212], %517 {strides = array<i32>} : memref<2x128xf32, #tpu.memory_space<vmem>>, vector<2x128xf32>,
    return
  }
  func.func @transform_0(%arg0: i32) -> (i32, i32) {
    %c0_i32 = arith.constant 0 : i32
    %c0_i32_0 = arith.constant 0 : i32
    %c0_i32_1 = arith.constant 0 : i32
    return %c0_i32, %c0_i32_0 : i32, i32
  }
  func.func @transform_1(%arg0: i32) -> (i32, i32) {
    %c0_i32 = arith.constant 0 : i32
    %c0_i32_0 = arith.constant 0 : i32
    %c0_i32_1 = arith.constant 0 : i32
    return %c0_i32, %c0_i32_0 : i32, i32
  }
  func.func @transform_2(%arg0: i32) -> (i32, i32) {
    %c0_i32 = arith.constant 0 : i32
    %c0_i32_0 = arith.constant 0 : i32
    %c0_i32_1 = arith.constant 0 : i32
    return %c0_i32, %c0_i32_0 : i32, i32
  }
  func.func @transform_3(%arg0: i32) -> (i32, i32, i32) {
    %c0_i32 = arith.constant 0 : i32
    %c0_i32_0 = arith.constant 0 : i32
    %c0_i32_1 = arith.constant 0 : i32
    %c0_i32_2 = arith.constant 0 : i32
    return %c0_i32, %c0_i32_0, %c0_i32_1 : i32, i32, i32
  }
  func.func @transform_4(%arg0: i32) -> (i32, i32, i32) {
    %c0_i32 = arith.constant 0 : i32
    %c0_i32_0 = arith.constant 0 : i32
    %c0_i32_1 = arith.constant 0 : i32
    %c0_i32_2 = arith.constant 0 : i32
    return %c0_i32, %c0_i32_0, %c0_i32_1 : i32, i32, i32
  }
  func.func @transform_5(%arg0: i32) -> (i32, i32, i32) {
    %c0_i32 = arith.constant 0 : i32
    %c0_i32_0 = arith.constant 0 : i32
    %c0_i32_1 = arith.constant 0 : i32
    %c0_i32_2 = arith.constant 0 : i32
    return %c0_i32, %c0_i32_0, %c0_i32_1 : i32, i32, i32
  }
  func.func @transform_6(%arg0: i32) -> (i32, i32, i32) {
    %c0_i32 = arith.constant 0 : i32
    %c0_i32_0 = arith.constant 0 : i32
    %c0_i32_1 = arith.constant 0 : i32
    %c0_i32_2 = arith.constant 0 : i32
    return %c0_i32, %c0_i32_0, %c0_i32_1 : i32, i32, i32
  }
  func.func @transform_7(%arg0: i32) -> (i32, i32, i32) {
    %c0_i32 = arith.constant 0 : i32
    %c0_i32_0 = arith.constant 0 : i32
    %c0_i32_1 = arith.constant 0 : i32
    %c0_i32_2 = arith.constant 0 : i32
    return %c0_i32, %c0_i32_0, %c0_i32_1 : i32, i32, i32
  }
  func.func @transform_8(%arg0: i32) -> (i32, i32, i32) {
    %c0_i32 = arith.constant 0 : i32
    %c0_i32_0 = arith.constant 0 : i32
    %c0_i32_1 = arith.constant 0 : i32
    %c0_i32_2 = arith.constant 0 : i32
    return %c0_i32, %c0_i32_0, %c0_i32_1 : i32, i32, i32
  }
  func.func @transform_9(%arg0: i32) -> (i32, i32, i32) {
    %c0_i32 = arith.constant 0 : i32
    %c0_i32_0 = arith.constant 0 : i32
    %c0_i32_1 = arith.constant 0 : i32
    %c0_i32_2 = arith.constant 0 : i32
    return %c0_i32, %c0_i32_0, %c0_i32_1 : i32, i32, i32
  }
  func.func @transform_10(%arg0: i32) -> (i32, i32, i32) {
    %c0_i32 = arith.constant 0 : i32
    %c0_i32_0 = arith.constant 0 : i32
    %c0_i32_1 = arith.constant 0 : i32
    %c0_i32_2 = arith.constant 0 : i32
    return %c0_i32, %c0_i32_0, %c0_i32_1 : i32, i32, i32
  }
  func.func @transform_11(%arg0: i32) -> (i32, i32, i32) {
    %c0_i32 = arith.constant 0 : i32
    %c0_i32_0 = arith.constant 0 : i32
    %c0_i32_1 = arith.constant 0 : i32
    %c0_i32_2 = arith.constant 0 : i32
    return %c0_i32, %c0_i32_0, %c0_i32_1 : i32, i32, i32
  }
  func.func @transform_12(%arg0: i32) -> (i32, i32, i32) {
    %c0_i32 = arith.constant 0 : i32
    %c0_i32_0 = arith.constant 0 : i32
    %c0_i32_1 = arith.constant 0 : i32
    %c0_i32_2 = arith.constant 0 : i32
    return %c0_i32, %c0_i32_0, %c0_i32_1 : i32, i32, i32
  }
  func.func @transform_13(%arg0: i32) -> (i32, i32, i32) {
    %c0_i32 = arith.constant 0 : i32
    %c0_i32_0 = arith.constant 0 : i32
    %c0_i32_1 = arith.constant 0 : i32
    %c0_i32_2 = arith.constant 0 : i32
    return %c0_i32, %c0_i32_0, %c0_i32_1 : i32, i32, i32
  }
  func.func @transform_14(%arg0: i32) -> (i32, i32, i32) {
    %c0_i32 = arith.constant 0 : i32
    %c0_i32_0 = arith.constant 0 : i32
    %c0_i32_1 = arith.constant 0 : i32
    %c0_i32_2 = arith.constant 0 : i32
    return %c0_i32, %c0_i32_0, %c0_i32_1 : i32, i32, i32
  }
  func.func @transform_15(%arg0: i32) -> (i32, i32) {
    %c0_i32 = arith.constant 0 : i32
    %c0_i32_0 = arith.constant 0 : i32
    %c0_i32_1 = arith.constant 0 : i32
    return %c0_i32, %c0_i32_0 : i32, i32
  }
  func.func @transform_16(%arg0: i32) -> (i32, i32) {
    %c0_i32 = arith.constant 0 : i32
    %c0_i32_0 = arith.constant 0 : i32
    %c0_i32_1 = arith.constant 0 : i32
    return %c0_i32, %c0_i32_0 : i32, i32
  }
  func.func @transform_17(%arg0: i32) -> (i32, i32) {
    %c0_i32 = arith.constant 0 : i32
    %c0_i32_0 = arith.constant 0 : i32
    %c0_i32_1 = arith.constant 0 : i32
    return %c0_i32, %c0_i32_0 : i32, i32
  }
  func.func @transform_18(%arg0: i32) -> (i32, i32) {
    %c0_i32 = arith.constant 0 : i32
    %c0_i32_0 = arith.constant 0 : i32
    %c0_i32_1 = arith.constant 0 : i32
    return %c0_i32, %c0_i32_0 : i32, i32
  }
  func.func @transform_19(%arg0: i32) -> (i32, i32) {
    %c0_i32 = arith.constant 0 : i32
    %c0_i32_0 = arith.constant 0 : i32
    %c0_i32_1 = arith.constant 0 : i32
    return %c0_i32, %c0_i32_0 : i32, i32
  }
  func.func @transform_20(%arg0: i32) -> (i32, i32) {
    %c0_i32 = arith.constant 0 : i32
    %c0_i32_0 = arith.constant 0 : i32
    %c0_i32_1 = arith.constant 0 : i32
    return %c0_i32, %c0_i32_0 : i32, i32
  }
  func.func @transform_21(%arg0: i32) -> (i32, i32) {
    %c0_i32 = arith.constant 0 : i32
    %c0_i32_0 = arith.constant 0 : i32
    %c0_i32_1 = arith.constant 0 : i32
    return %c0_i32, %c0_i32_0 : i32, i32
  }
  func.func @transform_22(%arg0: i32) -> (i32, i32) {
    %c0_i32 = arith.constant 0 : i32
    %c0_i32_0 = arith.constant 0 : i32
    %c0_i32_1 = arith.constant 0 : i32
    return %c0_i32, %c0_i32_0 : i32, i32
  }
  func.func @transform_23(%arg0: i32) -> (i32, i32) {
    %c0_i32 = arith.constant 0 : i32
    %c0_i32_0 = arith.constant 0 : i32
    %c0_i32_1 = arith.constant 0 : i32
    return %c0_i32, %c0_i32_0 : i32, i32
  }
  func.func @transform_24(%arg0: i32) -> (i32, i32) {
    %c0_i32 = arith.constant 0 : i32
    %c0_i32_0 = arith.constant 0 : i32
    %c0_i32_1 = arith.constant 0 : i32
    return %c0_i32, %c0_i32_0 : i32, i32
  }
  func.func @transform_25(%arg0: i32) -> (i32, i32) {
    %c0_i32 = arith.constant 0 : i32
    %c0_i32_0 = arith.constant 0 : i32
    %c0_i32_1 = arith.constant 0 : i32
    return %c0_i32, %c0_i32_0 : i32, i32
  }
  func.func @transform_26(%arg0: i32) -> (i32, i32) {
    %c0_i32 = arith.constant 0 : i32
    %c0_i32_0 = arith.constant 0 : i32
    %c0_i32_1 = arith.constant 0 : i32
    return %c0_i32, %c0_i32_0 : i32, i32
  }
  func.func @transform_27(%arg0: i32) -> (i32, i32) {
    %c0_i32 = arith.constant 0 : i32
    %c0_i32_0 = arith.constant 0 : i32
    %c0_i32_1 = arith.constant 0 : i32
    return %c0_i32, %c0_i32_0 : i32, i32
  }
  func.func @transform_28(%arg0: i32) -> (i32, i32) {
    %c0_i32 = arith.constant 0 : i32
    %c0_i32_0 = arith.constant 0 : i32
    %c0_i32_1 = arith.constant 0 : i32
    return %c0_i32, %c0_i32_0 : i32, i32
  }
}

</mosaic_0001>

<llo_original>
// kernel: tpu_custom_call.1
$region0: #{tpu_custom_call.1}
  #allocation0 [shape = 'u32[]', space=smem, size = 0x4, offset = 0x4, fixed_abs, tag = 'smem constant byte address 0x4 - core index']
  #allocation1 [shape = 'u32[144,128]{1,0:T(1,128)}', space=vmem, size = 0x12000, scoped, tag = 'internal scratch']
  %s0 = inlined_call_operand.vmem [shape: f32[16,16], index: 0, kind: input, shape index: {}]
  %s1 = inlined_call_operand.vmem [shape: f32[16,32], index: 1, kind: input, shape index: {}]
  %s2 = inlined_call_operand.vmem [shape: f32[1,32], index: 2, kind: input, shape index: {}]
  %s3 = inlined_call_operand.vmem [shape: f32[2,32,96], index: 3, kind: input, shape index: {}]
  %s4 = inlined_call_operand.vmem [shape: f32[2,1,96], index: 4, kind: input, shape index: {}]
  %s5 = inlined_call_operand.vmem [shape: f32[2,32,32], index: 5, kind: input, shape index: {}]
  %s6 = inlined_call_operand.vmem [shape: f32[2,1,32], index: 6, kind: input, shape index: {}]
  %s7 = inlined_call_operand.vmem [shape: f32[2,1,32], index: 7, kind: input, shape index: {}]
  %s8 = inlined_call_operand.vmem [shape: f32[2,1,32], index: 8, kind: input, shape index: {}]
  %s9 = inlined_call_operand.vmem [shape: f32[2,32,128], index: 9, kind: input, shape index: {}]
  %s10 = inlined_call_operand.vmem [shape: f32[2,1,128], index: 10, kind: input, shape index: {}]
  %s11 = inlined_call_operand.vmem [shape: f32[2,128,32], index: 11, kind: input, shape index: {}]
  %s12 = inlined_call_operand.vmem [shape: f32[2,1,32], index: 12, kind: input, shape index: {}]
  %s13 = inlined_call_operand.vmem [shape: f32[2,1,32], index: 13, kind: input, shape index: {}]
  %s14 = inlined_call_operand.vmem [shape: f32[2,1,32], index: 14, kind: input, shape index: {}]
  %s15 = inlined_call_operand.vmem [shape: f32[32,32], index: 15, kind: input, shape index: {}]
  %s16 = inlined_call_operand.vmem [shape: f32[1,32], index: 16, kind: input, shape index: {}]
  %s17 = inlined_call_operand.vmem [shape: f32[32,64], index: 17, kind: input, shape index: {}]
  %s18 = inlined_call_operand.vmem [shape: f32[1,64], index: 18, kind: input, shape index: {}]
  %s19 = inlined_call_operand.vmem [shape: f32[32,32], index: 19, kind: input, shape index: {}]
  %s20 = inlined_call_operand.vmem [shape: f32[1,32], index: 20, kind: input, shape index: {}]
  %s21 = inlined_call_operand.vmem [shape: f32[32,16], index: 21, kind: input, shape index: {}]
  %s22 = inlined_call_operand.vmem [shape: f32[1,16], index: 22, kind: input, shape index: {}]
  %s23 = inlined_call_operand.vmem [shape: f32[16,4], index: 23, kind: input, shape index: {}]
  %s24 = inlined_call_operand.vmem [shape: f32[1,4], index: 24, kind: input, shape index: {}]
  %s25 = inlined_call_operand.vmem [shape: f32[32,16], index: 25, kind: input, shape index: {}]
  %s26 = inlined_call_operand.vmem [shape: f32[1,16], index: 26, kind: input, shape index: {}]
  %s27 = inlined_call_operand.hbm [shape: f32[2,128], index: 27, kind: output, shape index: {0}]
  %s28 = inlined_call_operand.hbm [shape: f32[2,128], index: 28, kind: output, shape index: {1}]
  %29 = xla_tuple %s27, %s28
  %s30 = sld [smem:[#allocation0]]
  $region126: #{tpu_custom_call.1} parent=0
    _
  %s32 = ssub.s32 1, %s30
  %s33 = scalar_select 0, %s32, %s30
  $region1: #{tpu_custom_call.1} parent=0
    #allocation2 [shape = 'u8[1024]{0}', space=vmem, size = 0x400, scoped, tag = 'output window, operand 0, single buffered']
    #allocation3 [shape = 's32[1]{0}', space=sflag, size = 0x4, scoped, tag = 'scoped memory for tpu_custom_call.1']
    #allocation4 [shape = 'u8[1024]{0}', space=vmem, size = 0x400, scoped, tag = 'output window, operand 1, single buffered']
    #allocation5 [shape = 's32[1]{0}', space=sflag, size = 0x4, scoped, tag = 'scoped memory for tpu_custom_call.1']
    %34 = vsyncpa [#allocation3], 0
    %35 = vsyncpa [#allocation5], 0
    // Predicated region
    $region2: #{tpu_custom_call.1} parent=1 // pred_check
      _
    $region3: #{tpu_custom_call.1} parent=1 // pred_check_branch
      %37 = sbr.rel (0) target = $region5
    $region4: #{tpu_custom_call.1} parent=1 // pred_region
      _
    $region5: #{tpu_custom_call.1} parent=1 // pred_fallthru
      _
    // Predicated region
    $region6: #{tpu_custom_call.1} parent=1 // pred_check
      _
    $region7: #{tpu_custom_call.1} parent=1 // pred_check_branch
      %39 = sbr.rel (0) target = $region9
    $region8: #{tpu_custom_call.1} parent=1 // pred_region
      _
    $region9: #{tpu_custom_call.1} parent=1 // pred_fallthru
      _
    // Predicated region
    $region10: #{tpu_custom_call.1} parent=1 // pred_check
      _
    $region11: #{tpu_custom_call.1} parent=1 // pred_check_branch
      %41 = sbr.rel (0) target = $region13
    $region12: #{tpu_custom_call.1} parent=1 // pred_region
      _
    $region13: #{tpu_custom_call.1} parent=1 // pred_fallthru
      _
    // Predicated region
    $region14: #{tpu_custom_call.1} parent=1 // pred_check
      _
    $region15: #{tpu_custom_call.1} parent=1 // pred_check_branch
      %43 = sbr.rel (0) target = $region17
    $region16: #{tpu_custom_call.1} parent=1 // pred_region
      _
    $region17: #{tpu_custom_call.1} parent=1 // pred_fallthru
      _
    // Predicated region
    $region18: #{tpu_custom_call.1} parent=1 // pred_check
      _
    $region19: #{tpu_custom_call.1} parent=1 // pred_check_branch
      %45 = sbr.rel (0) target = $region21
    $region20: #{tpu_custom_call.1} parent=1 // pred_region
      _
    $region21: #{tpu_custom_call.1} parent=1 // pred_fallthru
      _
    // Predicated region
    $region22: #{tpu_custom_call.1} parent=1 // pred_check
      _
    $region23: #{tpu_custom_call.1} parent=1 // pred_check_branch
      %47 = sbr.rel (0) target = $region25
    $region24: #{tpu_custom_call.1} parent=1 // pred_region
      _
    $region25: #{tpu_custom_call.1} parent=1 // pred_fallthru
      _
    // Predicated region
    $region26: #{tpu_custom_call.1} parent=1 // pred_check
      _
    $region27: #{tpu_custom_call.1} parent=1 // pred_check_branch
      %49 = sbr.rel (0) target = $region29
    $region28: #{tpu_custom_call.1} parent=1 // pred_region
      _
    $region29: #{tpu_custom_call.1} parent=1 // pred_fallthru
      _
    // Predicated region
    $region30: #{tpu_custom_call.1} parent=1 // pred_check
      _
    $region31: #{tpu_custom_call.1} parent=1 // pred_check_branch
      %51 = sbr.rel (0) target = $region33
    $region32: #{tpu_custom_call.1} parent=1 // pred_region
      _
    $region33: #{tpu_custom_call.1} parent=1 // pred_fallthru
      _
    // Predicated region
    $region34: #{tpu_custom_call.1} parent=1 // pred_check
      _
    $region35: #{tpu_custom_call.1} parent=1 // pred_check_branch
      %53 = sbr.rel (0) target = $region37
    $region36: #{tpu_custom_call.1} parent=1 // pred_region
      _
    $region37: #{tpu_custom_call.1} parent=1 // pred_fallthru
      _
    // Predicated region
    $region38: #{tpu_custom_call.1} parent=1 // pred_check
      _
    $region39: #{tpu_custom_call.1} parent=1 // pred_check_branch
      %55 = sbr.rel (0) target = $region41
    $region40: #{tpu_custom_call.1} parent=1 // pred_region
      _
    $region41: #{tpu_custom_call.1} parent=1 // pred_fallthru
      _
    // Predicated region
    $region42: #{tpu_custom_call.1} parent=1 // pred_check
      _
    $region43: #{tpu_custom_call.1} parent=1 // pred_check_branch
      %57 = sbr.rel (0) target = $region45
    $region44: #{tpu_custom_call.1} parent=1 // pred_region
      _
    $region45: #{tpu_custom_call.1} parent=1 // pred_fallthru
      _
    // Predicated region
    $region46: #{tpu_custom_call.1} parent=1 // pred_check
      _
    $region47: #{tpu_custom_call.1} parent=1 // pred_check_branch
      %59 = sbr.rel (0) target = $region49
    $region48: #{tpu_custom_call.1} parent=1 // pred_region
      _
    $region49: #{tpu_custom_call.1} parent=1 // pred_fallthru
      _
    // Predicated region
    $region50: #{tpu_custom_call.1} parent=1 // pred_check
      _
    $region51: #{tpu_custom_call.1} parent=1 // pred_check_branch
      %61 = sbr.rel (0) target = $region53
    $region52: #{tpu_custom_call.1} parent=1 // pred_region
      _
    $region53: #{tpu_custom_call.1} parent=1 // pred_fallthru
      _
    // Predicated region
    $region54: #{tpu_custom_call.1} parent=1 // pred_check
      _
    $region55: #{tpu_custom_call.1} parent=1 // pred_check_branch
      %63 = sbr.rel (0) target = $region57
    $region56: #{tpu_custom_call.1} parent=1 // pred_region
      _
    $region57: #{tpu_custom_call.1} parent=1 // pred_fallthru
      _
    // Predicated region
    $region58: #{tpu_custom_call.1} parent=1 // pred_check
      _
    $region59: #{tpu_custom_call.1} parent=1 // pred_check_branch
      %65 = sbr.rel (0) target = $region61
    $region60: #{tpu_custom_call.1} parent=1 // pred_region
      _
    $region61: #{tpu_custom_call.1} parent=1 // pred_fallthru
      _
    // Predicated region
    $region62: #{tpu_custom_call.1} parent=1 // pred_check
      _
    $region63: #{tpu_custom_call.1} parent=1 // pred_check_branch
      %67 = sbr.rel (0) target = $region65
    $region64: #{tpu_custom_call.1} parent=1 // pred_region
      _
    $region65: #{tpu_custom_call.1} parent=1 // pred_fallthru
      _
    // Predicated region
    $region66: #{tpu_custom_call.1} parent=1 // pred_check
      _
    $region67: #{tpu_custom_call.1} parent=1 // pred_check_branch
      %69 = sbr.rel (0) target = $region69
    $region68: #{tpu_custom_call.1} parent=1 // pred_region
      _
    $region69: #{tpu_custom_call.1} parent=1 // pred_fallthru
      _
    // Predicated region
    $region70: #{tpu_custom_call.1} parent=1 // pred_check
      _
    $region71: #{tpu_custom_call.1} parent=1 // pred_check_branch
      %71 = sbr.rel (0) target = $region73
    $region72: #{tpu_custom_call.1} parent=1 // pred_region
      _
    $region73: #{tpu_custom_call.1} parent=1 // pred_fallthru
      _
    // Predicated region
    $region74: #{tpu_custom_call.1} parent=1 // pred_check
      _
    $region75: #{tpu_custom_call.1} parent=1 // pred_check_branch
      %73 = sbr.rel (0) target = $region77
    $region76: #{tpu_custom_call.1} parent=1 // pred_region
      _
    $region77: #{tpu_custom_call.1} parent=1 // pred_fallthru
      _
    // Predicated region
    $region78: #{tpu_custom_call.1} parent=1 // pred_check
      _
    $region79: #{tpu_custom_call.1} parent=1 // pred_check_branch
      %75 = sbr.rel (0) target = $region81
    $region80: #{tpu_custom_call.1} parent=1 // pred_region
      _
    $region81: #{tpu_custom_call.1} parent=1 // pred_fallthru
      _
    // Predicated region
    $region82: #{tpu_custom_call.1} parent=1 // pred_check
      _
    $region83: #{tpu_custom_call.1} parent=1 // pred_check_branch
      %77 = sbr.rel (0) target = $region85
    $region84: #{tpu_custom_call.1} parent=1 // pred_region
      _
    $region85: #{tpu_custom_call.1} parent=1 // pred_fallthru
      _
    // Predicated region
    $region86: #{tpu_custom_call.1} parent=1 // pred_check
      _
    $region87: #{tpu_custom_call.1} parent=1 // pred_check_branch
      %79 = sbr.rel (0) target = $region89
    $region88: #{tpu_custom_call.1} parent=1 // pred_region
      _
    $region89: #{tpu_custom_call.1} parent=1 // pred_fallthru
      _
    // Predicated region
    $region90: #{tpu_custom_call.1} parent=1 // pred_check
      _
    $region91: #{tpu_custom_call.1} parent=1 // pred_check_branch
      %81 = sbr.rel (0) target = $region93
    $region92: #{tpu_custom_call.1} parent=1 // pred_region
      _
    $region93: #{tpu_custom_call.1} parent=1 // pred_fallthru
      _
    // Predicated region
    $region94: #{tpu_custom_call.1} parent=1 // pred_check
      _
    $region95: #{tpu_custom_call.1} parent=1 // pred_check_branch
      %83 = sbr.rel (0) target = $region97
    $region96: #{tpu_custom_call.1} parent=1 // pred_region
      _
    $region97: #{tpu_custom_call.1} parent=1 // pred_fallthru
      _
    // Predicated region
    $region98: #{tpu_custom_call.1} parent=1 // pred_check
      _
    $region99: #{tpu_custom_call.1} parent=1 // pred_check_branch
      %85 = sbr.rel (0) target = $region101
    $region100: #{tpu_custom_call.1} parent=1 // pred_region
      _
    $region101: #{tpu_custom_call.1} parent=1 // pred_fallthru
      _
    // Predicated region
    $region102: #{tpu_custom_call.1} parent=1 // pred_check
      _
    $region103: #{tpu_custom_call.1} parent=1 // pred_check_branch
      %87 = sbr.rel (0) target = $region105
    $region104: #{tpu_custom_call.1} parent=1 // pred_region
      _
    $region105: #{tpu_custom_call.1} parent=1 // pred_fallthru
      _
    // Predicated region
    $region106: #{tpu_custom_call.1} parent=1 // pred_check
      _
    $region107: #{tpu_custom_call.1} parent=1 // pred_check_branch
      %89 = sbr.rel (0) target = $region109
    $region108: #{tpu_custom_call.1} parent=1 // pred_region
      _
    $region109: #{tpu_custom_call.1} parent=1 // pred_fallthru
      _
    %v90 = vld [vmem:[%s0] sm:$0xff]
    %v91 = vld [vmem:[%s0 + $0x8] sm:$0xff]
    %v92 = vld [vmem:[%s1] sm:$0xff]
    %v93 = vld [vmem:[%s1 + $0x8] sm:$0xff]
    %v94 = vld [vmem:[%s2] sm:$0x1]
    %v96 = vlaneseq
    %v97 = vshrl.u32 %v96, 7
    %v98 = vsub.s32 0, %v97
    %v99 = vrot.slane %v94, %v98
    %vm101 = vcmask 130048
    %v103 = vsel %vm101, %v90, 0
    %v106 = vsel %vm101, %v91, 0
    %108 = vmatprep.subr.mxu0 0.0
    %109 = vmatpush1.msra.mxu0 0.0
    %110 = vmatprep.subr.mxu0 0.0
    %111 = vmatpush1.msra.mxu0 0.0
    %112 = vmatprep.subr.mxu0 0.0
    %113 = vmatpush1.msra.mxu0 0.0
    %114 = vmatprep.subr.mxu0 0.0
    %115 = vmatpush1.msra.mxu0 0.0
    %116 = vmatprep.subr.mxu0 0.0
    %117 = vmatpush1.msra.mxu0 0.0
    %118 = vmatprep.subr.mxu0 0.0
    %119 = vmatpush1.msra.mxu0 0.0
    %120 = vmatprep.subr.mxu0 0.0
    %121 = vmatpush1.msra.mxu0 0.0
    %122 = vmatprep.subr.mxu0 0.0
    %123 = vmatpush1.msra.mxu0 0.0
    %124 = vmatprep.subr.mxu0 0.0
    %125 = vmatpush1.msra.mxu0 0.0
    %126 = vmatprep.subr.mxu0 0.0
    %127 = vmatpush1.msra.mxu0 0.0
    %128 = vmatprep.subr.mxu0 0.0
    %129 = vmatpush1.msra.mxu0 0.0
    %130 = vmatprep.subr.mxu0 0.0
    %131 = vmatpush1.msra.mxu0 0.0
    %132 = vmatprep.subr.mxu0 0.0
    %133 = vmatpush1.msra.mxu0 0.0
    %134 = vmatprep.subr.mxu0 0.0
    %135 = vmatpush1.msra.mxu0 0.0
    %136 = vmatprep.subr.mxu0 0.0
    %137 = vmatpush1.msra.mxu0 %v93
    %138 = vmatprep.subr.mxu0 0.0
    %139 = vmatpush1.msra.mxu0 %v92
    %140 = vmatprep.subr.mxu0 0.0
    %141 = vmatpush2.msra.mxu0 0.0
    %142 = vmatprep.subr.mxu0 0.0
    %143 = vmatpush2.msra.mxu0 0.0
    %144 = vmatprep.subr.mxu0 0.0
    %145 = vmatpush2.msra.mxu0 0.0
    %146 = vmatprep.subr.mxu0 0.0
    %147 = vmatpush2.msra.mxu0 0.0
    %148 = vmatprep.subr.mxu0 0.0
    %149 = vmatpush2.msra.mxu0 0.0
    %150 = vmatprep.subr.mxu0 0.0
    %151 = vmatpush2.msra.mxu0 0.0
    %152 = vmatprep.subr.mxu0 0.0
    %153 = vmatpush2.msra.mxu0 0.0
    %154 = vmatprep.subr.mxu0 0.0
    %155 = vmatpush2.msra.mxu0 0.0
    %156 = vmatprep.subr.mxu0 0.0
    %157 = vmatpush2.msra.mxu0 0.0
    %158 = vmatprep.subr.mxu0 0.0
    %159 = vmatpush2.msra.mxu0 0.0
    %160 = vmatprep.subr.mxu0 0.0
    %161 = vmatpush2.msra.mxu0 0.0
    %162 = vmatprep.subr.mxu0 0.0
    %163 = vmatpush2.msra.mxu0 0.0
    %164 = vmatprep.subr.mxu0 0.0
    %165 = vmatpush2.msra.mxu0 0.0
    %166 = vmatprep.subr.mxu0 0.0
    %167 = vmatpush2.msra.mxu0 0.0
    %168 = vmatprep.subr.mxu0 0.0
    %169 = vmatpush2.msra.mxu0 0.0
    %170 = vmatprep.subr.mxu0 0.0
    %171 = vmatpush2.msra.mxu0 0.0
    %172 = vmatprep.mubr.f32.mxu0 0.0
    %173 = vmatmul.mubr.f32.gmra.mxu0 %v103
    %v174 = vpop.f32.mrf.mxu0
    %v175 = vadd.f32 %v99, %v174
    %v176 = vpop.f32.mrf.mxu0
    %177 = vmatprep.mubr.f32.mxu0 0.0
    %178 = vmatmul.mubr.f32.gmra.mxu0 %v106
    %v179 = vpop.f32.mrf.mxu0
    %v180 = vadd.f32 %v99, %v179
    %v181 = vpop.f32.mrf.mxu0
    %182 = vdwg.mxu0
    %v183 = vld [vmem:[%s3] sm:$0xff]
    %v184 = vld [vmem:[%s3 + $0x8] sm:$0xff]
    %v185 = vld [vmem:[%s3 + $0x10] sm:$0xff]
    %v186 = vld [vmem:[%s3 + $0x18] sm:$0xff]
    %v187 = vld [vmem:[%s4] sm:$0x1]
    %v189 = vlaneseq
    %v190 = vshrl.u32 %v189, 7
    %v191 = vsub.s32 0, %v190
    %v192 = vrot.slane %v187, %v191
    %vm194 = vcmask 261120
    %v196 = vsel %vm194, %v175, 0
    %v199 = vsel %vm194, %v180, 0
    %201 = vmatprep.subr.mxu0 0.0
    %202 = vmatpush1.msra.mxu0 0.0
    %203 = vmatprep.subr.mxu0 0.0
    %204 = vmatpush1.msra.mxu0 0.0
    %205 = vmatprep.subr.mxu0 0.0
    %206 = vmatpush1.msra.mxu0 0.0
    %207 = vmatprep.subr.mxu0 0.0
    %208 = vmatpush1.msra.mxu0 0.0
    %209 = vmatprep.subr.mxu0 0.0
    %210 = vmatpush1.msra.mxu0 0.0
    %211 = vmatprep.subr.mxu0 0.0
    %212 = vmatpush1.msra.mxu0 0.0
    %213 = vmatprep.subr.mxu0 0.0
    %214 = vmatpush1.msra.mxu0 0.0
    %215 = vmatprep.subr.mxu0 0.0
    %216 = vmatpush1.msra.mxu0 0.0
    %217 = vmatprep.subr.mxu0 0.0
    %218 = vmatpush1.msra.mxu0 0.0
    %219 = vmatprep.subr.mxu0 0.0
    %220 = vmatpush1.msra.mxu0 0.0
    %221 = vmatprep.subr.mxu0 0.0
    %222 = vmatpush1.msra.mxu0 0.0
    %223 = vmatprep.subr.mxu0 0.0
    %224 = vmatpush1.msra.mxu0 0.0
    %225 = vmatprep.subr.mxu0 0.0
    %226 = vmatpush1.msra.mxu0 %v186
    %227 = vmatprep.subr.mxu0 0.0
    %228 = vmatpush1.msra.mxu0 %v185
    %229 = vmatprep.subr.mxu0 0.0
    %230 = vmatpush1.msra.mxu0 %v184
    %231 = vmatprep.subr.mxu0 0.0
    %232 = vmatpush1.msra.mxu0 %v183
    %233 = vmatprep.subr.mxu0 0.0
    %234 = vmatpush2.msra.mxu0 0.0
    %235 = vmatprep.subr.mxu0 0.0
    %236 = vmatpush2.msra.mxu0 0.0
    %237 = vmatprep.subr.mxu0 0.0
    %238 = vmatpush2.msra.mxu0 0.0
    %239 = vmatprep.subr.mxu0 0.0
    %240 = vmatpush2.msra.mxu0 0.0
    %241 = vmatprep.subr.mxu0 0.0
    %242 = vmatpush2.msra.mxu0 0.0
    %243 = vmatprep.subr.mxu0 0.0
    %244 = vmatpush2.msra.mxu0 0.0
    %245 = vmatprep.subr.mxu0 0.0
    %246 = vmatpush2.msra.mxu0 0.0
    %247 = vmatprep.subr.mxu0 0.0
    %248 = vmatpush2.msra.mxu0 0.0
    %249 = vmatprep.subr.mxu0 0.0
    %250 = vmatpush2.msra.mxu0 0.0
    %251 = vmatprep.subr.mxu0 0.0
    %252 = vmatpush2.msra.mxu0 0.0
    %253 = vmatprep.subr.mxu0 0.0
    %254 = vmatpush2.msra.mxu0 0.0
    %255 = vmatprep.subr.mxu0 0.0
    %256 = vmatpush2.msra.mxu0 0.0
    %257 = vmatprep.subr.mxu0 0.0
    %258 = vmatpush2.msra.mxu0 0.0
    %259 = vmatprep.subr.mxu0 0.0
    %260 = vmatpush2.msra.mxu0 0.0
    %261 = vmatprep.subr.mxu0 0.0
    %262 = vmatpush2.msra.mxu0 0.0
    %263 = vmatprep.subr.mxu0 0.0
    %264 = vmatpush2.msra.mxu0 0.0
    %265 = vmatprep.mubr.f32.mxu0 0.0
    %266 = vmatmul.mubr.f32.gmra.mxu0 %v196
    %v267 = vpop.f32.mrf.mxu0
    %v268 = vadd.f32 %v192, %v267
    %v269 = vpop.f32.mrf.mxu0
    %270 = vmatprep.mubr.f32.mxu0 0.0
    %271 = vmatmul.mubr.f32.gmra.mxu0 %v199
    %v272 = vpop.f32.mrf.mxu0
    %v273 = vadd.f32 %v192, %v272
    %v274 = vpop.f32.mrf.mxu0
    %275 = vdwg.mxu0
    %277 = vrot.lane.b32.xlu0 %v268, 96
    %v278 = vpop.permute.xlu0 %277
    %vm279 = vcmask 64512
    %v280 = vsel %vm279, %v268, 0
    %v282 = vsel %vm279, %v278, 0
    %284 = vmatprep.subr.mxu0 0.0
    %285 = vmatpush1.xpose.msra.mxu0 0.0
    %286 = vmatprep.subr.mxu0 0.0
    %287 = vmatpush1.xpose.msra.mxu0 0.0
    %288 = vmatprep.subr.mxu0 0.0
    %289 = vmatpush1.xpose.msra.mxu0 0.0
    %290 = vmatprep.subr.mxu0 0.0
    %291 = vmatpush1.xpose.msra.mxu0 0.0
    %292 = vmatprep.subr.mxu0 0.0
    %293 = vmatpush1.xpose.msra.mxu0 0.0
    %294 = vmatprep.subr.mxu0 0.0
    %295 = vmatpush1.xpose.msra.mxu0 0.0
    %296 = vmatprep.subr.mxu0 0.0
    %297 = vmatpush1.xpose.msra.mxu0 0.0
    %298 = vmatprep.subr.mxu0 0.0
    %299 = vmatpush1.xpose.msra.mxu0 0.0
    %300 = vmatprep.subr.mxu0 0.0
    %301 = vmatpush1.xpose.msra.mxu0 0.0
    %302 = vmatprep.subr.mxu0 0.0
    %303 = vmatpush1.xpose.msra.mxu0 0.0
    %304 = vmatprep.subr.mxu0 0.0
    %305 = vmatpush1.xpose.msra.mxu0 0.0
    %306 = vmatprep.subr.mxu0 0.0
    %307 = vmatpush1.xpose.msra.mxu0 0.0
    %308 = vmatprep.subr.mxu0 0.0
    %309 = vmatpush1.xpose.msra.mxu0 0.0
    %310 = vmatprep.subr.mxu0 0.0
    %311 = vmatpush1.xpose.msra.mxu0 0.0
    %312 = vmatprep.subr.mxu0 0.0
    %313 = vmatpush1.xpose.msra.mxu0 0.0
    %314 = vmatprep.subr.mxu0 0.0
    %315 = vmatpush1.xpose.msra.mxu0 %v282
    %316 = vmatprep.subr.mxu0 0.0
    %317 = vmatpush2.xpose.msra.mxu0 0.0
    %318 = vmatprep.subr.mxu0 0.0
    %319 = vmatpush2.xpose.msra.mxu0 0.0
    %320 = vmatprep.subr.mxu0 0.0
    %321 = vmatpush2.xpose.msra.mxu0 0.0
    %322 = vmatprep.subr.mxu0 0.0
    %323 = vmatpush2.xpose.msra.mxu0 0.0
    %324 = vmatprep.subr.mxu0 0.0
    %325 = vmatpush2.xpose.msra.mxu0 0.0
    %326 = vmatprep.subr.mxu0 0.0
    %327 = vmatpush2.xpose.msra.mxu0 0.0
    %328 = vmatprep.subr.mxu0 0.0
    %329 = vmatpush2.xpose.msra.mxu0 0.0
    %330 = vmatprep.subr.mxu0 0.0
    %331 = vmatpush2.xpose.msra.mxu0 0.0
    %332 = vmatprep.subr.mxu0 0.0
    %333 = vmatpush2.xpose.msra.mxu0 0.0
    %334 = vmatprep.subr.mxu0 0.0
    %335 = vmatpush2.xpose.msra.mxu0 0.0
    %336 = vmatprep.subr.mxu0 0.0
    %337 = vmatpush2.xpose.msra.mxu0 0.0
    %338 = vmatprep.subr.mxu0 0.0
    %339 = vmatpush2.xpose.msra.mxu0 0.0
    %340 = vmatprep.subr.mxu0 0.0
    %341 = vmatpush2.xpose.msra.mxu0 0.0
    %342 = vmatprep.subr.mxu0 0.0
    %343 = vmatpush2.xpose.msra.mxu0 0.0
    %344 = vmatprep.subr.mxu0 0.0
    %345 = vmatpush2.xpose.msra.mxu0 0.0
    %346 = vmatprep.subr.mxu0 0.0
    %347 = vmatpush2.xpose.msra.mxu0 0.0
    %348 = vmatprep.mubr.f32.mxu0 0.0
    %349 = vmatmul.mubr.f32.gmra.mxu0 %v280
    %v350 = vpop.f32.mrf.mxu0
    %v351 = vadd.f32 0.0, %v350
    %v352 = vpop.f32.mrf.mxu0
    %353 = vdwg.mxu0
    %355 = vrot.lane.b32.xlu0 %v273, 96
    %v356 = vpop.permute.xlu0 %355
    %v357 = vsel %vm279, %v273, 0
    %v359 = vsel %vm279, %v356, 0
    %361 = vmatprep.subr.mxu0 0.0
    %362 = vmatpush1.xpose.msra.mxu0 0.0
    %363 = vmatprep.subr.mxu0 0.0
    %364 = vmatpush1.xpose.msra.mxu0 0.0
    %365 = vmatprep.subr.mxu0 0.0
    %366 = vmatpush1.xpose.msra.mxu0 0.0
    %367 = vmatprep.subr.mxu0 0.0
    %368 = vmatpush1.xpose.msra.mxu0 0.0
    %369 = vmatprep.subr.mxu0 0.0
    %370 = vmatpush1.xpose.msra.mxu0 0.0
    %371 = vmatprep.subr.mxu0 0.0
    %372 = vmatpush1.xpose.msra.mxu0 0.0
    %373 = vmatprep.subr.mxu0 0.0
    %374 = vmatpush1.xpose.msra.mxu0 0.0
    %375 = vmatprep.subr.mxu0 0.0
    %376 = vmatpush1.xpose.msra.mxu0 0.0
    %377 = vmatprep.subr.mxu0 0.0
    %378 = vmatpush1.xpose.msra.mxu0 0.0
    %379 = vmatprep.subr.mxu0 0.0
    %380 = vmatpush1.xpose.msra.mxu0 0.0
    %381 = vmatprep.subr.mxu0 0.0
    %382 = vmatpush1.xpose.msra.mxu0 0.0
    %383 = vmatprep.subr.mxu0 0.0
    %384 = vmatpush1.xpose.msra.mxu0 0.0
    %385 = vmatprep.subr.mxu0 0.0
    %386 = vmatpush1.xpose.msra.mxu0 0.0
    %387 = vmatprep.subr.mxu0 0.0
    %388 = vmatpush1.xpose.msra.mxu0 0.0
    %389 = vmatprep.subr.mxu0 0.0
    %390 = vmatpush1.xpose.msra.mxu0 0.0
    %391 = vmatprep.subr.mxu0 0.0
    %392 = vmatpush1.xpose.msra.mxu0 %v359
    %393 = vmatprep.subr.mxu0 0.0
    %394 = vmatpush2.xpose.msra.mxu0 0.0
    %395 = vmatprep.subr.mxu0 0.0
    %396 = vmatpush2.xpose.msra.mxu0 0.0
    %397 = vmatprep.subr.mxu0 0.0
    %398 = vmatpush2.xpose.msra.mxu0 0.0
    %399 = vmatprep.subr.mxu0 0.0
    %400 = vmatpush2.xpose.msra.mxu0 0.0
    %401 = vmatprep.subr.mxu0 0.0
    %402 = vmatpush2.xpose.msra.mxu0 0.0
    %403 = vmatprep.subr.mxu0 0.0
    %404 = vmatpush2.xpose.msra.mxu0 0.0
    %405 = vmatprep.subr.mxu0 0.0
    %406 = vmatpush2.xpose.msra.mxu0 0.0
    %407 = vmatprep.subr.mxu0 0.0
    %408 = vmatpush2.xpose.msra.mxu0 0.0
    %409 = vmatprep.subr.mxu0 0.0
    %410 = vmatpush2.xpose.msra.mxu0 0.0
    %411 = vmatprep.subr.mxu0 0.0
    %412 = vmatpush2.xpose.msra.mxu0 0.0
    %413 = vmatprep.subr.mxu0 0.0
    %414 = vmatpush2.xpose.msra.mxu0 0.0
    %415 = vmatprep.subr.mxu0 0.0
    %416 = vmatpush2.xpose.msra.mxu0 0.0
    %417 = vmatprep.subr.mxu0 0.0
    %418 = vmatpush2.xpose.msra.mxu0 0.0
    %419 = vmatprep.subr.mxu0 0.0
    %420 = vmatpush2.xpose.msra.mxu0 0.0
    %421 = vmatprep.subr.mxu0 0.0
    %422 = vmatpush2.xpose.msra.mxu0 0.0
    %423 = vmatprep.subr.mxu0 0.0
    %424 = vmatpush2.xpose.msra.mxu0 0.0
    %425 = vmatprep.mubr.f32.mxu0 0.0
    %426 = vmatmul.mubr.f32.gmra.mxu0 %v357
    %v427 = vpop.f32.mrf.mxu0
    %v428 = vadd.f32 0.0, %v427
    %v429 = vpop.f32.mrf.mxu0
    %430 = vdwg.mxu0
    %v431 = vmul.f32 %v351, 0.35355338
    %v432 = vmul.f32 %v428, 0.35355338
    %v433 = vsel %vm279, %v431, -inf
    %434 = vmax.xlane.f32.xlu0 %v433
    %v435 = vpop.xlane.xlu0 %434
    %v436 = vsel %vm279, %v432, -inf
    %437 = vmax.xlane.f32.xlu0 %v436
    %v438 = vpop.xlane.xlu0 %437
    %v439 = vsub.f32 %v431, %v435
    %v440 = vsub.f32 %v432, %v438
    %v441 = vmul.f32 %v439, 1.442695
    %v442 = vpow.pop %v441
    %v443 = vmul.f32 %v440, 1.442695
    %v444 = vpow.pop %v443
    %v445 = vsel %vm279, %v442, 0.0
    %446 = vadd.xlane.f32.xlu0 %v445
    %v447 = vpop.xlane.xlu0 %446
    %v448 = vsel %vm279, %v444, 0.0
    %449 = vadd.xlane.f32.xlu0 %v448
    %v450 = vpop.xlane.xlu0 %449
    %v451 = vrcp.pop %v447
    %v452 = vmul.f32 %v442, %v451
    %v453 = vrcp.pop %v450
    %v454 = vmul.f32 %v444, %v453
    %v455 = vadd.f32 %v452, 0.0
    %v456 = vadd.f32 %v454, 0.0
    %457 = vrot.lane.b32.xlu0 %v268, 64
    %v458 = vpop.permute.xlu0 %457
    %v461 = vsel %vm279, %v452, 0
    %463 = vmatprep.subr.mxu0 0.0
    %464 = vmatpush1.msra.mxu0 0.0
    %465 = vmatprep.subr.mxu0 0.0
    %466 = vmatpush1.msra.mxu0 0.0
    %467 = vmatprep.subr.mxu0 0.0
    %468 = vmatpush1.msra.mxu0 0.0
    %469 = vmatprep.subr.mxu0 0.0
    %470 = vmatpush1.msra.mxu0 0.0
    %471 = vmatprep.subr.mxu0 0.0
    %472 = vmatpush1.msra.mxu0 0.0
    %473 = vmatprep.subr.mxu0 0.0
    %474 = vmatpush1.msra.mxu0 0.0
    %475 = vmatprep.subr.mxu0 0.0
    %476 = vmatpush1.msra.mxu0 0.0
    %477 = vmatprep.subr.mxu0 0.0
    %478 = vmatpush1.msra.mxu0 0.0
    %479 = vmatprep.subr.mxu0 0.0
    %480 = vmatpush1.msra.mxu0 0.0
    %481 = vmatprep.subr.mxu0 0.0
    %482 = vmatpush1.msra.mxu0 0.0
    %483 = vmatprep.subr.mxu0 0.0
    %484 = vmatpush1.msra.mxu0 0.0
    %485 = vmatprep.subr.mxu0 0.0
    %486 = vmatpush1.msra.mxu0 0.0
    %487 = vmatprep.subr.mxu0 0.0
    %488 = vmatpush1.msra.mxu0 0.0
    %489 = vmatprep.subr.mxu0 0.0
    %490 = vmatpush1.msra.mxu0 0.0
    %491 = vmatprep.subr.mxu0 0.0
    %492 = vmatpush1.msra.mxu0 0.0
    %493 = vmatprep.subr.mxu0 0.0
    %494 = vmatpush1.msra.mxu0 %v458
    %495 = vmatprep.subr.mxu0 0.0
    %496 = vmatpush2.msra.mxu0 0.0
    %497 = vmatprep.subr.mxu0 0.0
    %498 = vmatpush2.msra.mxu0 0.0
    %499 = vmatprep.subr.mxu0 0.0
    %500 = vmatpush2.msra.mxu0 0.0
    %501 = vmatprep.subr.mxu0 0.0
    %502 = vmatpush2.msra.mxu0 0.0
    %503 = vmatprep.subr.mxu0 0.0
    %504 = vmatpush2.msra.mxu0 0.0
    %505 = vmatprep.subr.mxu0 0.0
    %506 = vmatpush2.msra.mxu0 0.0
    %507 = vmatprep.subr.mxu0 0.0
    %508 = vmatpush2.msra.mxu0 0.0
    %509 = vmatprep.subr.mxu0 0.0
    %510 = vmatpush2.msra.mxu0 0.0
    %511 = vmatprep.subr.mxu0 0.0
    %512 = vmatpush2.msra.mxu0 0.0
    %513 = vmatprep.subr.mxu0 0.0
    %514 = vmatpush2.msra.mxu0 0.0
    %515 = vmatprep.subr.mxu0 0.0
    %516 = vmatpush2.msra.mxu0 0.0
    %517 = vmatprep.subr.mxu0 0.0
    %518 = vmatpush2.msra.mxu0 0.0
    %519 = vmatprep.subr.mxu0 0.0
    %520 = vmatpush2.msra.mxu0 0.0
    %521 = vmatprep.subr.mxu0 0.0
    %522 = vmatpush2.msra.mxu0 0.0
    %523 = vmatprep.subr.mxu0 0.0
    %524 = vmatpush2.msra.mxu0 0.0
    %525 = vmatprep.subr.mxu0 0.0
    %526 = vmatpush2.msra.mxu0 0.0
    %527 = vmatprep.mubr.f32.mxu0 0.0
    %528 = vmatmul.mubr.f32.gmra.mxu0 %v461
    %v529 = vpop.f32.mrf.mxu0
    %v530 = vadd.f32 0.0, %v529
    %v531 = vpop.f32.mrf.mxu0
    %532 = vdwg.mxu0
    %533 = vrot.lane.b32.xlu0 %v273, 64
    %v534 = vpop.permute.xlu0 %533
    %v537 = vsel %vm279, %v454, 0
    %539 = vmatprep.subr.mxu0 0.0
    %540 = vmatpush1.msra.mxu0 0.0
    %541 = vmatprep.subr.mxu0 0.0
    %542 = vmatpush1.msra.mxu0 0.0
    %543 = vmatprep.subr.mxu0 0.0
    %544 = vmatpush1.msra.mxu0 0.0
    %545 = vmatprep.subr.mxu0 0.0
    %546 = vmatpush1.msra.mxu0 0.0
    %547 = vmatprep.subr.mxu0 0.0
    %548 = vmatpush1.msra.mxu0 0.0
    %549 = vmatprep.subr.mxu0 0.0
    %550 = vmatpush1.msra.mxu0 0.0
    %551 = vmatprep.subr.mxu0 0.0
    %552 = vmatpush1.msra.mxu0 0.0
    %553 = vmatprep.subr.mxu0 0.0
    %554 = vmatpush1.msra.mxu0 0.0
    %555 = vmatprep.subr.mxu0 0.0
    %556 = vmatpush1.msra.mxu0 0.0
    %557 = vmatprep.subr.mxu0 0.0
    %558 = vmatpush1.msra.mxu0 0.0
    %559 = vmatprep.subr.mxu0 0.0
    %560 = vmatpush1.msra.mxu0 0.0
    %561 = vmatprep.subr.mxu0 0.0
    %562 = vmatpush1.msra.mxu0 0.0
    %563 = vmatprep.subr.mxu0 0.0
    %564 = vmatpush1.msra.mxu0 0.0
    %565 = vmatprep.subr.mxu0 0.0
    %566 = vmatpush1.msra.mxu0 0.0
    %567 = vmatprep.subr.mxu0 0.0
    %568 = vmatpush1.msra.mxu0 0.0
    %569 = vmatprep.subr.mxu0 0.0
    %570 = vmatpush1.msra.mxu0 %v534
    %571 = vmatprep.subr.mxu0 0.0
    %572 = vmatpush2.msra.mxu0 0.0
    %573 = vmatprep.subr.mxu0 0.0
    %574 = vmatpush2.msra.mxu0 0.0
    %575 = vmatprep.subr.mxu0 0.0
    %576 = vmatpush2.msra.mxu0 0.0
    %577 = vmatprep.subr.mxu0 0.0
    %578 = vmatpush2.msra.mxu0 0.0
    %579 = vmatprep.subr.mxu0 0.0
    %580 = vmatpush2.msra.mxu0 0.0
    %581 = vmatprep.subr.mxu0 0.0
    %582 = vmatpush2.msra.mxu0 0.0
    %583 = vmatprep.subr.mxu0 0.0
    %584 = vmatpush2.msra.mxu0 0.0
    %585 = vmatprep.subr.mxu0 0.0
    %586 = vmatpush2.msra.mxu0 0.0
    %587 = vmatprep.subr.mxu0 0.0
    %588 = vmatpush2.msra.mxu0 0.0
    %589 = vmatprep.subr.mxu0 0.0
    %590 = vmatpush2.msra.mxu0 0.0
    %591 = vmatprep.subr.mxu0 0.0
    %592 = vmatpush2.msra.mxu0 0.0
    %593 = vmatprep.subr.mxu0 0.0
    %594 = vmatpush2.msra.mxu0 0.0
    %595 = vmatprep.subr.mxu0 0.0
    %596 = vmatpush2.msra.mxu0 0.0
    %597 = vmatprep.subr.mxu0 0.0
    %598 = vmatpush2.msra.mxu0 0.0
    %599 = vmatprep.subr.mxu0 0.0
    %600 = vmatpush2.msra.mxu0 0.0
    %601 = vmatprep.subr.mxu0 0.0
    %602 = vmatpush2.msra.mxu0 0.0
    %603 = vmatprep.mubr.f32.mxu0 0.0
    %604 = vmatmul.mubr.f32.gmra.mxu0 %v537
    %v605 = vpop.f32.mrf.mxu0
    %v606 = vadd.f32 0.0, %v605
    %v607 = vpop.f32.mrf.mxu0
    %608 = vdwg.mxu0
    %609 = vrot.lane.b32.xlu0 %v268, 120
    %v610 = vpop.permute.xlu0 %609
    %611 = vrot.lane.b32.xlu0 %v268, 88
    %v612 = vpop.permute.xlu0 %611
    %v613 = vsel %vm279, %v610, 0
    %v615 = vsel %vm279, %v612, 0
    %617 = vmatprep.subr.mxu0 0.0
    %618 = vmatpush1.xpose.msra.mxu0 0.0
    %619 = vmatprep.subr.mxu0 0.0
    %620 = vmatpush1.xpose.msra.mxu0 0.0
    %621 = vmatprep.subr.mxu0 0.0
    %622 = vmatpush1.xpose.msra.mxu0 0.0
    %623 = vmatprep.subr.mxu0 0.0
    %624 = vmatpush1.xpose.msra.mxu0 0.0
    %625 = vmatprep.subr.mxu0 0.0
    %626 = vmatpush1.xpose.msra.mxu0 0.0
    %627 = vmatprep.subr.mxu0 0.0
    %628 = vmatpush1.xpose.msra.mxu0 0.0
    %629 = vmatprep.subr.mxu0 0.0
    %630 = vmatpush1.xpose.msra.mxu0 0.0
    %631 = vmatprep.subr.mxu0 0.0
    %632 = vmatpush1.xpose.msra.mxu0 0.0
    %633 = vmatprep.subr.mxu0 0.0
    %634 = vmatpush1.xpose.msra.mxu0 0.0
    %635 = vmatprep.subr.mxu0 0.0
    %636 = vmatpush1.xpose.msra.mxu0 0.0
    %637 = vmatprep.subr.mxu0 0.0
    %638 = vmatpush1.xpose.msra.mxu0 0.0
    %639 = vmatprep.subr.mxu0 0.0
    %640 = vmatpush1.xpose.msra.mxu0 0.0
    %641 = vmatprep.subr.mxu0 0.0
    %642 = vmatpush1.xpose.msra.mxu0 0.0
    %643 = vmatprep.subr.mxu0 0.0
    %644 = vmatpush1.xpose.msra.mxu0 0.0
    %645 = vmatprep.subr.mxu0 0.0
    %646 = vmatpush1.xpose.msra.mxu0 0.0
    %647 = vmatprep.subr.mxu0 0.0
    %648 = vmatpush1.xpose.msra.mxu0 %v615
    %649 = vmatprep.subr.mxu0 0.0
    %650 = vmatpush2.xpose.msra.mxu0 0.0
    %651 = vmatprep.subr.mxu0 0.0
    %652 = vmatpush2.xpose.msra.mxu0 0.0
    %653 = vmatprep.subr.mxu0 0.0
    %654 = vmatpush2.xpose.msra.mxu0 0.0
    %655 = vmatprep.subr.mxu0 0.0
    %656 = vmatpush2.xpose.msra.mxu0 0.0
    %657 = vmatprep.subr.mxu0 0.0
    %658 = vmatpush2.xpose.msra.mxu0 0.0
    %659 = vmatprep.subr.mxu0 0.0
    %660 = vmatpush2.xpose.msra.mxu0 0.0
    %661 = vmatprep.subr.mxu0 0.0
    %662 = vmatpush2.xpose.msra.mxu0 0.0
    %663 = vmatprep.subr.mxu0 0.0
    %664 = vmatpush2.xpose.msra.mxu0 0.0
    %665 = vmatprep.subr.mxu0 0.0
    %666 = vmatpush2.xpose.msra.mxu0 0.0
    %667 = vmatprep.subr.mxu0 0.0
    %668 = vmatpush2.xpose.msra.mxu0 0.0
    %669 = vmatprep.subr.mxu0 0.0
    %670 = vmatpush2.xpose.msra.mxu0 0.0
    %671 = vmatprep.subr.mxu0 0.0
    %672 = vmatpush2.xpose.msra.mxu0 0.0
    %673 = vmatprep.subr.mxu0 0.0
    %674 = vmatpush2.xpose.msra.mxu0 0.0
    %675 = vmatprep.subr.mxu0 0.0
    %676 = vmatpush2.xpose.msra.mxu0 0.0
    %677 = vmatprep.subr.mxu0 0.0
    %678 = vmatpush2.xpose.msra.mxu0 0.0
    %679 = vmatprep.subr.mxu0 0.0
    %680 = vmatpush2.xpose.msra.mxu0 0.0
    %681 = vmatprep.mubr.f32.mxu0 0.0
    %682 = vmatmul.mubr.f32.gmra.mxu0 %v613
    %v683 = vpop.f32.mrf.mxu0
    %v684 = vadd.f32 0.0, %v683
    %v685 = vpop.f32.mrf.mxu0
    %686 = vdwg.mxu0
    %687 = vrot.lane.b32.xlu0 %v273, 120
    %v688 = vpop.permute.xlu0 %687
    %689 = vrot.lane.b32.xlu0 %v273, 88
    %v690 = vpop.permute.xlu0 %689
    %v691 = vsel %vm279, %v688, 0
    %v693 = vsel %vm279, %v690, 0
    %695 = vmatprep.subr.mxu0 0.0
    %696 = vmatpush1.xpose.msra.mxu0 0.0
    %697 = vmatprep.subr.mxu0 0.0
    %698 = vmatpush1.xpose.msra.mxu0 0.0
    %699 = vmatprep.subr.mxu0 0.0
    %700 = vmatpush1.xpose.msra.mxu0 0.0
    %701 = vmatprep.subr.mxu0 0.0
    %702 = vmatpush1.xpose.msra.mxu0 0.0
    %703 = vmatprep.subr.mxu0 0.0
    %704 = vmatpush1.xpose.msra.mxu0 0.0
    %705 = vmatprep.subr.mxu0 0.0
    %706 = vmatpush1.xpose.msra.mxu0 0.0
    %707 = vmatprep.subr.mxu0 0.0
    %708 = vmatpush1.xpose.msra.mxu0 0.0
    %709 = vmatprep.subr.mxu0 0.0
    %710 = vmatpush1.xpose.msra.mxu0 0.0
    %711 = vmatprep.subr.mxu0 0.0
    %712 = vmatpush1.xpose.msra.mxu0 0.0
    %713 = vmatprep.subr.mxu0 0.0
    %714 = vmatpush1.xpose.msra.mxu0 0.0
    %715 = vmatprep.subr.mxu0 0.0
    %716 = vmatpush1.xpose.msra.mxu0 0.0
    %717 = vmatprep.subr.mxu0 0.0
    %718 = vmatpush1.xpose.msra.mxu0 0.0
    %719 = vmatprep.subr.mxu0 0.0
    %720 = vmatpush1.xpose.msra.mxu0 0.0
    %721 = vmatprep.subr.mxu0 0.0
    %722 = vmatpush1.xpose.msra.mxu0 0.0
    %723 = vmatprep.subr.mxu0 0.0
    %724 = vmatpush1.xpose.msra.mxu0 0.0
    %725 = vmatprep.subr.mxu0 0.0
    %726 = vmatpush1.xpose.msra.mxu0 %v693
    %727 = vmatprep.subr.mxu0 0.0
    %728 = vmatpush2.xpose.msra.mxu0 0.0
    %729 = vmatprep.subr.mxu0 0.0
    %730 = vmatpush2.xpose.msra.mxu0 0.0
    %731 = vmatprep.subr.mxu0 0.0
    %732 = vmatpush2.xpose.msra.mxu0 0.0
    %733 = vmatprep.subr.mxu0 0.0
    %734 = vmatpush2.xpose.msra.mxu0 0.0
    %735 = vmatprep.subr.mxu0 0.0
    %736 = vmatpush2.xpose.msra.mxu0 0.0
    %737 = vmatprep.subr.mxu0 0.0
    %738 = vmatpush2.xpose.msra.mxu0 0.0
    %739 = vmatprep.subr.mxu0 0.0
    %740 = vmatpush2.xpose.msra.mxu0 0.0
    %741 = vmatprep.subr.mxu0 0.0
    %742 = vmatpush2.xpose.msra.mxu0 0.0
    %743 = vmatprep.subr.mxu0 0.0
    %744 = vmatpush2.xpose.msra.mxu0 0.0
    %745 = vmatprep.subr.mxu0 0.0
    %746 = vmatpush2.xpose.msra.mxu0 0.0
    %747 = vmatprep.subr.mxu0 0.0
    %748 = vmatpush2.xpose.msra.mxu0 0.0
    %749 = vmatprep.subr.mxu0 0.0
    %750 = vmatpush2.xpose.msra.mxu0 0.0
    %751 = vmatprep.subr.mxu0 0.0
    %752 = vmatpush2.xpose.msra.mxu0 0.0
    %753 = vmatprep.subr.mxu0 0.0
    %754 = vmatpush2.xpose.msra.mxu0 0.0
    %755 = vmatprep.subr.mxu0 0.0
    %756 = vmatpush2.xpose.msra.mxu0 0.0
    %757 = vmatprep.subr.mxu0 0.0
    %758 = vmatpush2.xpose.msra.mxu0 0.0
    %759 = vmatprep.mubr.f32.mxu0 0.0
    %760 = vmatmul.mubr.f32.gmra.mxu0 %v691
    %v761 = vpop.f32.mrf.mxu0
    %v762 = vadd.f32 0.0, %v761
    %v763 = vpop.f32.mrf.mxu0
    %764 = vdwg.mxu0
    %v765 = vmul.f32 %v684, 0.35355338
    %v766 = vmul.f32 %v762, 0.35355338
    %v767 = vsel %vm279, %v765, -inf
    %768 = vmax.xlane.f32.xlu0 %v767
    %v769 = vpop.xlane.xlu0 %768
    %v770 = vsel %vm279, %v766, -inf
    %771 = vmax.xlane.f32.xlu0 %v770
    %v772 = vpop.xlane.xlu0 %771
    %v773 = vsub.f32 %v765, %v769
    %v774 = vsub.f32 %v766, %v772
    %v775 = vmul.f32 %v773, 1.442695
    %v776 = vpow.pop %v775
    %v777 = vmul.f32 %v774, 1.442695
    %v778 = vpow.pop %v777
    %v779 = vsel %vm279, %v776, 0.0
    %780 = vadd.xlane.f32.xlu0 %v779
    %v781 = vpop.xlane.xlu0 %780
    %v782 = vsel %vm279, %v778, 0.0
    %783 = vadd.xlane.f32.xlu0 %v782
    %v784 = vpop.xlane.xlu0 %783
    %v785 = vrcp.pop %v781
    %v786 = vmul.f32 %v776, %v785
    %v787 = vrcp.pop %v784
    %v788 = vmul.f32 %v778, %v787
    %v789 = vadd.f32 %v455, %v786
    %v790 = vadd.f32 %v456, %v788
    %791 = vrot.lane.b32.xlu0 %v268, 56
    %v792 = vpop.permute.xlu0 %791
    %v795 = vsel %vm279, %v786, 0
    %797 = vmatprep.subr.mxu0 0.0
    %798 = vmatpush1.msra.mxu0 0.0
    %799 = vmatprep.subr.mxu0 0.0
    %800 = vmatpush1.msra.mxu0 0.0
    %801 = vmatprep.subr.mxu0 0.0
    %802 = vmatpush1.msra.mxu0 0.0
    %803 = vmatprep.subr.mxu0 0.0
    %804 = vmatpush1.msra.mxu0 0.0
    %805 = vmatprep.subr.mxu0 0.0
    %806 = vmatpush1.msra.mxu0 0.0
    %807 = vmatprep.subr.mxu0 0.0
    %808 = vmatpush1.msra.mxu0 0.0
    %809 = vmatprep.subr.mxu0 0.0
    %810 = vmatpush1.msra.mxu0 0.0
    %811 = vmatprep.subr.mxu0 0.0
    %812 = vmatpush1.msra.mxu0 0.0
    %813 = vmatprep.subr.mxu0 0.0
    %814 = vmatpush1.msra.mxu0 0.0
    %815 = vmatprep.subr.mxu0 0.0
    %816 = vmatpush1.msra.mxu0 0.0
    %817 = vmatprep.subr.mxu0 0.0
    %818 = vmatpush1.msra.mxu0 0.0
    %819 = vmatprep.subr.mxu0 0.0
    %820 = vmatpush1.msra.mxu0 0.0
    %821 = vmatprep.subr.mxu0 0.0
    %822 = vmatpush1.msra.mxu0 0.0
    %823 = vmatprep.subr.mxu0 0.0
    %824 = vmatpush1.msra.mxu0 0.0
    %825 = vmatprep.subr.mxu0 0.0
    %826 = vmatpush1.msra.mxu0 0.0
    %827 = vmatprep.subr.mxu0 0.0
    %828 = vmatpush1.msra.mxu0 %v792
    %829 = vmatprep.subr.mxu0 0.0
    %830 = vmatpush2.msra.mxu0 0.0
    %831 = vmatprep.subr.mxu0 0.0
    %832 = vmatpush2.msra.mxu0 0.0
    %833 = vmatprep.subr.mxu0 0.0
    %834 = vmatpush2.msra.mxu0 0.0
    %835 = vmatprep.subr.mxu0 0.0
    %836 = vmatpush2.msra.mxu0 0.0
    %837 = vmatprep.subr.mxu0 0.0
    %838 = vmatpush2.msra.mxu0 0.0
    %839 = vmatprep.subr.mxu0 0.0
    %840 = vmatpush2.msra.mxu0 0.0
    %841 = vmatprep.subr.mxu0 0.0
    %842 = vmatpush2.msra.mxu0 0.0
    %843 = vmatprep.subr.mxu0 0.0
    %844 = vmatpush2.msra.mxu0 0.0
    %845 = vmatprep.subr.mxu0 0.0
    %846 = vmatpush2.msra.mxu0 0.0
    %847 = vmatprep.subr.mxu0 0.0
    %848 = vmatpush2.msra.mxu0 0.0
    %849 = vmatprep.subr.mxu0 0.0
    %850 = vmatpush2.msra.mxu0 0.0
    %851 = vmatprep.subr.mxu0 0.0
    %852 = vmatpush2.msra.mxu0 0.0
    %853 = vmatprep.subr.mxu0 0.0
    %854 = vmatpush2.msra.mxu0 0.0
    %855 = vmatprep.subr.mxu0 0.0
    %856 = vmatpush2.msra.mxu0 0.0
    %857 = vmatprep.subr.mxu0 0.0
    %858 = vmatpush2.msra.mxu0 0.0
    %859 = vmatprep.subr.mxu0 0.0
    %860 = vmatpush2.msra.mxu0 0.0
    %861 = vmatprep.mubr.f32.mxu0 0.0
    %862 = vmatmul.mubr.f32.gmra.mxu0 %v795
    %v863 = vpop.f32.mrf.mxu0
    %v864 = vadd.f32 0.0, %v863
    %v865 = vpop.f32.mrf.mxu0
    %866 = vdwg.mxu0
    %867 = vrot.lane.b32.xlu0 %v273, 56
    %v868 = vpop.permute.xlu0 %867
    %v871 = vsel %vm279, %v788, 0
    %873 = vmatprep.subr.mxu0 0.0
    %874 = vmatpush1.msra.mxu0 0.0
    %875 = vmatprep.subr.mxu0 0.0
    %876 = vmatpush1.msra.mxu0 0.0
    %877 = vmatprep.subr.mxu0 0.0
    %878 = vmatpush1.msra.mxu0 0.0
    %879 = vmatprep.subr.mxu0 0.0
    %880 = vmatpush1.msra.mxu0 0.0
    %881 = vmatprep.subr.mxu0 0.0
    %882 = vmatpush1.msra.mxu0 0.0
    %883 = vmatprep.subr.mxu0 0.0
    %884 = vmatpush1.msra.mxu0 0.0
    %885 = vmatprep.subr.mxu0 0.0
    %886 = vmatpush1.msra.mxu0 0.0
    %887 = vmatprep.subr.mxu0 0.0
    %888 = vmatpush1.msra.mxu0 0.0
    %889 = vmatprep.subr.mxu0 0.0
    %890 = vmatpush1.msra.mxu0 0.0
    %891 = vmatprep.subr.mxu0 0.0
    %892 = vmatpush1.msra.mxu0 0.0
    %893 = vmatprep.subr.mxu0 0.0
    %894 = vmatpush1.msra.mxu0 0.0
    %895 = vmatprep.subr.mxu0 0.0
    %896 = vmatpush1.msra.mxu0 0.0
    %897 = vmatprep.subr.mxu0 0.0
    %898 = vmatpush1.msra.mxu0 0.0
    %899 = vmatprep.subr.mxu0 0.0
    %900 = vmatpush1.msra.mxu0 0.0
    %901 = vmatprep.subr.mxu0 0.0
    %902 = vmatpush1.msra.mxu0 0.0
    %903 = vmatprep.subr.mxu0 0.0
    %904 = vmatpush1.msra.mxu0 %v868
    %905 = vmatprep.subr.mxu0 0.0
    %906 = vmatpush2.msra.mxu0 0.0
    %907 = vmatprep.subr.mxu0 0.0
    %908 = vmatpush2.msra.mxu0 0.0
    %909 = vmatprep.subr.mxu0 0.0
    %910 = vmatpush2.msra.mxu0 0.0
    %911 = vmatprep.subr.mxu0 0.0
    %912 = vmatpush2.msra.mxu0 0.0
    %913 = vmatprep.subr.mxu0 0.0
    %914 = vmatpush2.msra.mxu0 0.0
    %915 = vmatprep.subr.mxu0 0.0
    %916 = vmatpush2.msra.mxu0 0.0
    %917 = vmatprep.subr.mxu0 0.0
    %918 = vmatpush2.msra.mxu0 0.0
    %919 = vmatprep.subr.mxu0 0.0
    %920 = vmatpush2.msra.mxu0 0.0
    %921 = vmatprep.subr.mxu0 0.0
    %922 = vmatpush2.msra.mxu0 0.0
    %923 = vmatprep.subr.mxu0 0.0
    %924 = vmatpush2.msra.mxu0 0.0
    %925 = vmatprep.subr.mxu0 0.0
    %926 = vmatpush2.msra.mxu0 0.0
    %927 = vmatprep.subr.mxu0 0.0
    %928 = vmatpush2.msra.mxu0 0.0
    %929 = vmatprep.subr.mxu0 0.0
    %930 = vmatpush2.msra.mxu0 0.0
    %931 = vmatprep.subr.mxu0 0.0
    %932 = vmatpush2.msra.mxu0 0.0
    %933 = vmatprep.subr.mxu0 0.0
    %934 = vmatpush2.msra.mxu0 0.0
    %935 = vmatprep.subr.mxu0 0.0
    %936 = vmatpush2.msra.mxu0 0.0
    %937 = vmatprep.mubr.f32.mxu0 0.0
    %938 = vmatmul.mubr.f32.gmra.mxu0 %v871
    %v939 = vpop.f32.mrf.mxu0
    %v940 = vadd.f32 0.0, %v939
    %v941 = vpop.f32.mrf.mxu0
    %942 = vdwg.mxu0
    %943 = vrot.lane.b32.xlu0 %v268, 112
    %v944 = vpop.permute.xlu0 %943
    %945 = vrot.lane.b32.xlu0 %v268, 80
    %v946 = vpop.permute.xlu0 %945
    %v947 = vsel %vm279, %v944, 0
    %v949 = vsel %vm279, %v946, 0
    %951 = vmatprep.subr.mxu0 0.0
    %952 = vmatpush1.xpose.msra.mxu0 0.0
    %953 = vmatprep.subr.mxu0 0.0
    %954 = vmatpush1.xpose.msra.mxu0 0.0
    %955 = vmatprep.subr.mxu0 0.0
    %956 = vmatpush1.xpose.msra.mxu0 0.0
    %957 = vmatprep.subr.mxu0 0.0
    %958 = vmatpush1.xpose.msra.mxu0 0.0
    %959 = vmatprep.subr.mxu0 0.0
    %960 = vmatpush1.xpose.msra.mxu0 0.0
    %961 = vmatprep.subr.mxu0 0.0
    %962 = vmatpush1.xpose.msra.mxu0 0.0
    %963 = vmatprep.subr.mxu0 0.0
    %964 = vmatpush1.xpose.msra.mxu0 0.0
    %965 = vmatprep.subr.mxu0 0.0
    %966 = vmatpush1.xpose.msra.mxu0 0.0
    %967 = vmatprep.subr.mxu0 0.0
    %968 = vmatpush1.xpose.msra.mxu0 0.0
    %969 = vmatprep.subr.mxu0 0.0
    %970 = vmatpush1.xpose.msra.mxu0 0.0
    %971 = vmatprep.subr.mxu0 0.0
    %972 = vmatpush1.xpose.msra.mxu0 0.0
    %973 = vmatprep.subr.mxu0 0.0
    %974 = vmatpush1.xpose.msra.mxu0 0.0
    %975 = vmatprep.subr.mxu0 0.0
    %976 = vmatpush1.xpose.msra.mxu0 0.0
    %977 = vmatprep.subr.mxu0 0.0
    %978 = vmatpush1.xpose.msra.mxu0 0.0
    %979 = vmatprep.subr.mxu0 0.0
    %980 = vmatpush1.xpose.msra.mxu0 0.0
    %981 = vmatprep.subr.mxu0 0.0
    %982 = vmatpush1.xpose.msra.mxu0 %v949
    %983 = vmatprep.subr.mxu0 0.0
    %984 = vmatpush2.xpose.msra.mxu0 0.0
    %985 = vmatprep.subr.mxu0 0.0
    %986 = vmatpush2.xpose.msra.mxu0 0.0
    %987 = vmatprep.subr.mxu0 0.0
    %988 = vmatpush2.xpose.msra.mxu0 0.0
    %989 = vmatprep.subr.mxu0 0.0
    %990 = vmatpush2.xpose.msra.mxu0 0.0
    %991 = vmatprep.subr.mxu0 0.0
    %992 = vmatpush2.xpose.msra.mxu0 0.0
    %993 = vmatprep.subr.mxu0 0.0
    %994 = vmatpush2.xpose.msra.mxu0 0.0
    %995 = vmatprep.subr.mxu0 0.0
    %996 = vmatpush2.xpose.msra.mxu0 0.0
    %997 = vmatprep.subr.mxu0 0.0
    %998 = vmatpush2.xpose.msra.mxu0 0.0
    %999 = vmatprep.subr.mxu0 0.0
    %1000 = vmatpush2.xpose.msra.mxu0 0.0
    %1001 = vmatprep.subr.mxu0 0.0
    %1002 = vmatpush2.xpose.msra.mxu0 0.0
    %1003 = vmatprep.subr.mxu0 0.0
    %1004 = vmatpush2.xpose.msra.mxu0 0.0
    %1005 = vmatprep.subr.mxu0 0.0
    %1006 = vmatpush2.xpose.msra.mxu0 0.0
    %1007 = vmatprep.subr.mxu0 0.0
    %1008 = vmatpush2.xpose.msra.mxu0 0.0
    %1009 = vmatprep.subr.mxu0 0.0
    %1010 = vmatpush2.xpose.msra.mxu0 0.0
    %1011 = vmatprep.subr.mxu0 0.0
    %1012 = vmatpush2.xpose.msra.mxu0 0.0
    %1013 = vmatprep.subr.mxu0 0.0
    %1014 = vmatpush2.xpose.msra.mxu0 0.0
    %1015 = vmatprep.mubr.f32.mxu0 0.0
    %1016 = vmatmul.mubr.f32.gmra.mxu0 %v947
    %v1017 = vpop.f32.mrf.mxu0
    %v1018 = vadd.f32 0.0, %v1017
    %v1019 = vpop.f32.mrf.mxu0
    %1020 = vdwg.mxu0
    %1021 = vrot.lane.b32.xlu0 %v273, 112
    %v1022 = vpop.permute.xlu0 %1021
    %1023 = vrot.lane.b32.xlu0 %v273, 80
    %v1024 = vpop.permute.xlu0 %1023
    %v1025 = vsel %vm279, %v1022, 0
    %v1027 = vsel %vm279, %v1024, 0
    %1029 = vmatprep.subr.mxu0 0.0
    %1030 = vmatpush1.xpose.msra.mxu0 0.0
    %1031 = vmatprep.subr.mxu0 0.0
    %1032 = vmatpush1.xpose.msra.mxu0 0.0
    %1033 = vmatprep.subr.mxu0 0.0
    %1034 = vmatpush1.xpose.msra.mxu0 0.0
    %1035 = vmatprep.subr.mxu0 0.0
    %1036 = vmatpush1.xpose.msra.mxu0 0.0
    %1037 = vmatprep.subr.mxu0 0.0
    %1038 = vmatpush1.xpose.msra.mxu0 0.0
    %1039 = vmatprep.subr.mxu0 0.0
    %1040 = vmatpush1.xpose.msra.mxu0 0.0
    %1041 = vmatprep.subr.mxu0 0.0
    %1042 = vmatpush1.xpose.msra.mxu0 0.0
    %1043 = vmatprep.subr.mxu0 0.0
    %1044 = vmatpush1.xpose.msra.mxu0 0.0
    %1045 = vmatprep.subr.mxu0 0.0
    %1046 = vmatpush1.xpose.msra.mxu0 0.0
    %1047 = vmatprep.subr.mxu0 0.0
    %1048 = vmatpush1.xpose.msra.mxu0 0.0
    %1049 = vmatprep.subr.mxu0 0.0
    %1050 = vmatpush1.xpose.msra.mxu0 0.0
    %1051 = vmatprep.subr.mxu0 0.0
    %1052 = vmatpush1.xpose.msra.mxu0 0.0
    %1053 = vmatprep.subr.mxu0 0.0
    %1054 = vmatpush1.xpose.msra.mxu0 0.0
    %1055 = vmatprep.subr.mxu0 0.0
    %1056 = vmatpush1.xpose.msra.mxu0 0.0
    %1057 = vmatprep.subr.mxu0 0.0
    %1058 = vmatpush1.xpose.msra.mxu0 0.0
    %1059 = vmatprep.subr.mxu0 0.0
    %1060 = vmatpush1.xpose.msra.mxu0 %v1027
    %1061 = vmatprep.subr.mxu0 0.0
    %1062 = vmatpush2.xpose.msra.mxu0 0.0
    %1063 = vmatprep.subr.mxu0 0.0
    %1064 = vmatpush2.xpose.msra.mxu0 0.0
    %1065 = vmatprep.subr.mxu0 0.0
    %1066 = vmatpush2.xpose.msra.mxu0 0.0
    %1067 = vmatprep.subr.mxu0 0.0
    %1068 = vmatpush2.xpose.msra.mxu0 0.0
    %1069 = vmatprep.subr.mxu0 0.0
    %1070 = vmatpush2.xpose.msra.mxu0 0.0
    %1071 = vmatprep.subr.mxu0 0.0
    %1072 = vmatpush2.xpose.msra.mxu0 0.0
    %1073 = vmatprep.subr.mxu0 0.0
    %1074 = vmatpush2.xpose.msra.mxu0 0.0
    %1075 = vmatprep.subr.mxu0 0.0
    %1076 = vmatpush2.xpose.msra.mxu0 0.0
    %1077 = vmatprep.subr.mxu0 0.0
    %1078 = vmatpush2.xpose.msra.mxu0 0.0
    %1079 = vmatprep.subr.mxu0 0.0
    %1080 = vmatpush2.xpose.msra.mxu0 0.0
    %1081 = vmatprep.subr.mxu0 0.0
    %1082 = vmatpush2.xpose.msra.mxu0 0.0
    %1083 = vmatprep.subr.mxu0 0.0
    %1084 = vmatpush2.xpose.msra.mxu0 0.0
    %1085 = vmatprep.subr.mxu0 0.0
    %1086 = vmatpush2.xpose.msra.mxu0 0.0
    %1087 = vmatprep.subr.mxu0 0.0
    %1088 = vmatpush2.xpose.msra.mxu0 0.0
    %1089 = vmatprep.subr.mxu0 0.0
    %1090 = vmatpush2.xpose.msra.mxu0 0.0
    %1091 = vmatprep.subr.mxu0 0.0
    %1092 = vmatpush2.xpose.msra.mxu0 0.0
    %1093 = vmatprep.mubr.f32.mxu0 0.0
    %1094 = vmatmul.mubr.f32.gmra.mxu0 %v1025
    %v1095 = vpop.f32.mrf.mxu0
    %v1096 = vadd.f32 0.0, %v1095
    %v1097 = vpop.f32.mrf.mxu0
    %1098 = vdwg.mxu0
    %v1099 = vmul.f32 %v1018, 0.35355338
    %v1100 = vmul.f32 %v1096, 0.35355338
    %v1101 = vsel %vm279, %v1099, -inf
    %1102 = vmax.xlane.f32.xlu0 %v1101
    %v1103 = vpop.xlane.xlu0 %1102
    %v1104 = vsel %vm279, %v1100, -inf
    %1105 = vmax.xlane.f32.xlu0 %v1104
    %v1106 = vpop.xlane.xlu0 %1105
    %v1107 = vsub.f32 %v1099, %v1103
    %v1108 = vsub.f32 %v1100, %v1106
    %v1109 = vmul.f32 %v1107, 1.442695
    %v1110 = vpow.pop %v1109
    %v1111 = vmul.f32 %v1108, 1.442695
    %v1112 = vpow.pop %v1111
    %v1113 = vsel %vm279, %v1110, 0.0
    %1114 = vadd.xlane.f32.xlu0 %v1113
    %v1115 = vpop.xlane.xlu0 %1114
    %v1116 = vsel %vm279, %v1112, 0.0
    %1117 = vadd.xlane.f32.xlu0 %v1116
    %v1118 = vpop.xlane.xlu0 %1117
    %v1119 = vrcp.pop %v1115
    %v1120 = vmul.f32 %v1110, %v1119
    %v1121 = vrcp.pop %v1118
    %v1122 = vmul.f32 %v1112, %v1121
    %v1123 = vadd.f32 %v789, %v1120
    %v1124 = vadd.f32 %v790, %v1122
    %1125 = vrot.lane.b32.xlu0 %v268, 48
    %v1126 = vpop.permute.xlu0 %1125
    %v1129 = vsel %vm279, %v1120, 0
    %1131 = vmatprep.subr.mxu0 0.0
    %1132 = vmatpush1.msra.mxu0 0.0
    %1133 = vmatprep.subr.mxu0 0.0
    %1134 = vmatpush1.msra.mxu0 0.0
    %1135 = vmatprep.subr.mxu0 0.0
    %1136 = vmatpush1.msra.mxu0 0.0
    %1137 = vmatprep.subr.mxu0 0.0
    %1138 = vmatpush1.msra.mxu0 0.0
    %1139 = vmatprep.subr.mxu0 0.0
    %1140 = vmatpush1.msra.mxu0 0.0
    %1141 = vmatprep.subr.mxu0 0.0
    %1142 = vmatpush1.msra.mxu0 0.0
    %1143 = vmatprep.subr.mxu0 0.0
    %1144 = vmatpush1.msra.mxu0 0.0
    %1145 = vmatprep.subr.mxu0 0.0
    %1146 = vmatpush1.msra.mxu0 0.0
    %1147 = vmatprep.subr.mxu0 0.0
    %1148 = vmatpush1.msra.mxu0 0.0
    %1149 = vmatprep.subr.mxu0 0.0
    %1150 = vmatpush1.msra.mxu0 0.0
    %1151 = vmatprep.subr.mxu0 0.0
    %1152 = vmatpush1.msra.mxu0 0.0
    %1153 = vmatprep.subr.mxu0 0.0
    %1154 = vmatpush1.msra.mxu0 0.0
    %1155 = vmatprep.subr.mxu0 0.0
    %1156 = vmatpush1.msra.mxu0 0.0
    %1157 = vmatprep.subr.mxu0 0.0
    %1158 = vmatpush1.msra.mxu0 0.0
    %1159 = vmatprep.subr.mxu0 0.0
    %1160 = vmatpush1.msra.mxu0 0.0
    %1161 = vmatprep.subr.mxu0 0.0
    %1162 = vmatpush1.msra.mxu0 %v1126
    %1163 = vmatprep.subr.mxu0 0.0
    %1164 = vmatpush2.msra.mxu0 0.0
    %1165 = vmatprep.subr.mxu0 0.0
    %1166 = vmatpush2.msra.mxu0 0.0
    %1167 = vmatprep.subr.mxu0 0.0
    %1168 = vmatpush2.msra.mxu0 0.0
    %1169 = vmatprep.subr.mxu0 0.0
    %1170 = vmatpush2.msra.mxu0 0.0
    %1171 = vmatprep.subr.mxu0 0.0
    %1172 = vmatpush2.msra.mxu0 0.0
    %1173 = vmatprep.subr.mxu0 0.0
    %1174 = vmatpush2.msra.mxu0 0.0
    %1175 = vmatprep.subr.mxu0 0.0
    %1176 = vmatpush2.msra.mxu0 0.0
    %1177 = vmatprep.subr.mxu0 0.0
    %1178 = vmatpush2.msra.mxu0 0.0
    %1179 = vmatprep.subr.mxu0 0.0
    %1180 = vmatpush2.msra.mxu0 0.0
    %1181 = vmatprep.subr.mxu0 0.0
    %1182 = vmatpush2.msra.mxu0 0.0
    %1183 = vmatprep.subr.mxu0 0.0
    %1184 = vmatpush2.msra.mxu0 0.0
    %1185 = vmatprep.subr.mxu0 0.0
    %1186 = vmatpush2.msra.mxu0 0.0
    %1187 = vmatprep.subr.mxu0 0.0
    %1188 = vmatpush2.msra.mxu0 0.0
    %1189 = vmatprep.subr.mxu0 0.0
    %1190 = vmatpush2.msra.mxu0 0.0
    %1191 = vmatprep.subr.mxu0 0.0
    %1192 = vmatpush2.msra.mxu0 0.0
    %1193 = vmatprep.subr.mxu0 0.0
    %1194 = vmatpush2.msra.mxu0 0.0
    %1195 = vmatprep.mubr.f32.mxu0 0.0
    %1196 = vmatmul.mubr.f32.gmra.mxu0 %v1129
    %v1197 = vpop.f32.mrf.mxu0
    %v1198 = vadd.f32 0.0, %v1197
    %v1199 = vpop.f32.mrf.mxu0
    %1200 = vdwg.mxu0
    %1201 = vrot.lane.b32.xlu0 %v273, 48
    %v1202 = vpop.permute.xlu0 %1201
    %v1205 = vsel %vm279, %v1122, 0
    %1207 = vmatprep.subr.mxu0 0.0
    %1208 = vmatpush1.msra.mxu0 0.0
    %1209 = vmatprep.subr.mxu0 0.0
    %1210 = vmatpush1.msra.mxu0 0.0
    %1211 = vmatprep.subr.mxu0 0.0
    %1212 = vmatpush1.msra.mxu0 0.0
    %1213 = vmatprep.subr.mxu0 0.0
    %1214 = vmatpush1.msra.mxu0 0.0
    %1215 = vmatprep.subr.mxu0 0.0
    %1216 = vmatpush1.msra.mxu0 0.0
    %1217 = vmatprep.subr.mxu0 0.0
    %1218 = vmatpush1.msra.mxu0 0.0
    %1219 = vmatprep.subr.mxu0 0.0
    %1220 = vmatpush1.msra.mxu0 0.0
    %1221 = vmatprep.subr.mxu0 0.0
    %1222 = vmatpush1.msra.mxu0 0.0
    %1223 = vmatprep.subr.mxu0 0.0
    %1224 = vmatpush1.msra.mxu0 0.0
    %1225 = vmatprep.subr.mxu0 0.0
    %1226 = vmatpush1.msra.mxu0 0.0
    %1227 = vmatprep.subr.mxu0 0.0
    %1228 = vmatpush1.msra.mxu0 0.0
    %1229 = vmatprep.subr.mxu0 0.0
    %1230 = vmatpush1.msra.mxu0 0.0
    %1231 = vmatprep.subr.mxu0 0.0
    %1232 = vmatpush1.msra.mxu0 0.0
    %1233 = vmatprep.subr.mxu0 0.0
    %1234 = vmatpush1.msra.mxu0 0.0
    %1235 = vmatprep.subr.mxu0 0.0
    %1236 = vmatpush1.msra.mxu0 0.0
    %1237 = vmatprep.subr.mxu0 0.0
    %1238 = vmatpush1.msra.mxu0 %v1202
    %1239 = vmatprep.subr.mxu0 0.0
    %1240 = vmatpush2.msra.mxu0 0.0
    %1241 = vmatprep.subr.mxu0 0.0
    %1242 = vmatpush2.msra.mxu0 0.0
    %1243 = vmatprep.subr.mxu0 0.0
    %1244 = vmatpush2.msra.mxu0 0.0
    %1245 = vmatprep.subr.mxu0 0.0
    %1246 = vmatpush2.msra.mxu0 0.0
    %1247 = vmatprep.subr.mxu0 0.0
    %1248 = vmatpush2.msra.mxu0 0.0
    %1249 = vmatprep.subr.mxu0 0.0
    %1250 = vmatpush2.msra.mxu0 0.0
    %1251 = vmatprep.subr.mxu0 0.0
    %1252 = vmatpush2.msra.mxu0 0.0
    %1253 = vmatprep.subr.mxu0 0.0
    %1254 = vmatpush2.msra.mxu0 0.0
    %1255 = vmatprep.subr.mxu0 0.0
    %1256 = vmatpush2.msra.mxu0 0.0
    %1257 = vmatprep.subr.mxu0 0.0
    %1258 = vmatpush2.msra.mxu0 0.0
    %1259 = vmatprep.subr.mxu0 0.0
    %1260 = vmatpush2.msra.mxu0 0.0
    %1261 = vmatprep.subr.mxu0 0.0
    %1262 = vmatpush2.msra.mxu0 0.0
    %1263 = vmatprep.subr.mxu0 0.0
    %1264 = vmatpush2.msra.mxu0 0.0
    %1265 = vmatprep.subr.mxu0 0.0
    %1266 = vmatpush2.msra.mxu0 0.0
    %1267 = vmatprep.subr.mxu0 0.0
    %1268 = vmatpush2.msra.mxu0 0.0
    %1269 = vmatprep.subr.mxu0 0.0
    %1270 = vmatpush2.msra.mxu0 0.0
    %1271 = vmatprep.mubr.f32.mxu0 0.0
    %1272 = vmatmul.mubr.f32.gmra.mxu0 %v1205
    %v1273 = vpop.f32.mrf.mxu0
    %v1274 = vadd.f32 0.0, %v1273
    %v1275 = vpop.f32.mrf.mxu0
    %1276 = vdwg.mxu0
    %1277 = vrot.lane.b32.xlu0 %v268, 104
    %v1278 = vpop.permute.xlu0 %1277
    %1279 = vrot.lane.b32.xlu0 %v268, 72
    %v1280 = vpop.permute.xlu0 %1279
    %v1281 = vsel %vm279, %v1278, 0
    %v1283 = vsel %vm279, %v1280, 0
    %1285 = vmatprep.subr.mxu0 0.0
    %1286 = vmatpush1.xpose.msra.mxu0 0.0
    %1287 = vmatprep.subr.mxu0 0.0
    %1288 = vmatpush1.xpose.msra.mxu0 0.0
    %1289 = vmatprep.subr.mxu0 0.0
    %1290 = vmatpush1.xpose.msra.mxu0 0.0
    %1291 = vmatprep.subr.mxu0 0.0
    %1292 = vmatpush1.xpose.msra.mxu0 0.0
    %1293 = vmatprep.subr.mxu0 0.0
    %1294 = vmatpush1.xpose.msra.mxu0 0.0
    %1295 = vmatprep.subr.mxu0 0.0
    %1296 = vmatpush1.xpose.msra.mxu0 0.0
    %1297 = vmatprep.subr.mxu0 0.0
    %1298 = vmatpush1.xpose.msra.mxu0 0.0
    %1299 = vmatprep.subr.mxu0 0.0
    %1300 = vmatpush1.xpose.msra.mxu0 0.0
    %1301 = vmatprep.subr.mxu0 0.0
    %1302 = vmatpush1.xpose.msra.mxu0 0.0
    %1303 = vmatprep.subr.mxu0 0.0
    %1304 = vmatpush1.xpose.msra.mxu0 0.0
    %1305 = vmatprep.subr.mxu0 0.0
    %1306 = vmatpush1.xpose.msra.mxu0 0.0
    %1307 = vmatprep.subr.mxu0 0.0
    %1308 = vmatpush1.xpose.msra.mxu0 0.0
    %1309 = vmatprep.subr.mxu0 0.0
    %1310 = vmatpush1.xpose.msra.mxu0 0.0
    %1311 = vmatprep.subr.mxu0 0.0
    %1312 = vmatpush1.xpose.msra.mxu0 0.0
    %1313 = vmatprep.subr.mxu0 0.0
    %1314 = vmatpush1.xpose.msra.mxu0 0.0
    %1315 = vmatprep.subr.mxu0 0.0
    %1316 = vmatpush1.xpose.msra.mxu0 %v1283
    %1317 = vmatprep.subr.mxu0 0.0
    %1318 = vmatpush2.xpose.msra.mxu0 0.0
    %1319 = vmatprep.subr.mxu0 0.0
    %1320 = vmatpush2.xpose.msra.mxu0 0.0
    %1321 = vmatprep.subr.mxu0 0.0
    %1322 = vmatpush2.xpose.msra.mxu0 0.0
    %1323 = vmatprep.subr.mxu0 0.0
    %1324 = vmatpush2.xpose.msra.mxu0 0.0
    %1325 = vmatprep.subr.mxu0 0.0
    %1326 = vmatpush2.xpose.msra.mxu0 0.0
    %1327 = vmatprep.subr.mxu0 0.0
    %1328 = vmatpush2.xpose.msra.mxu0 0.0
    %1329 = vmatprep.subr.mxu0 0.0
    %1330 = vmatpush2.xpose.msra.mxu0 0.0
    %1331 = vmatprep.subr.mxu0 0.0
    %1332 = vmatpush2.xpose.msra.mxu0 0.0
    %1333 = vmatprep.subr.mxu0 0.0
    %1334 = vmatpush2.xpose.msra.mxu0 0.0
    %1335 = vmatprep.subr.mxu0 0.0
    %1336 = vmatpush2.xpose.msra.mxu0 0.0
    %1337 = vmatprep.subr.mxu0 0.0
    %1338 = vmatpush2.xpose.msra.mxu0 0.0
    %1339 = vmatprep.subr.mxu0 0.0
    %1340 = vmatpush2.xpose.msra.mxu0 0.0
    %1341 = vmatprep.subr.mxu0 0.0
    %1342 = vmatpush2.xpose.msra.mxu0 0.0
    %1343 = vmatprep.subr.mxu0 0.0
    %1344 = vmatpush2.xpose.msra.mxu0 0.0
    %1345 = vmatprep.subr.mxu0 0.0
    %1346 = vmatpush2.xpose.msra.mxu0 0.0
    %1347 = vmatprep.subr.mxu0 0.0
    %1348 = vmatpush2.xpose.msra.mxu0 0.0
    %1349 = vmatprep.mubr.f32.mxu0 0.0
    %1350 = vmatmul.mubr.f32.gmra.mxu0 %v1281
    %v1351 = vpop.f32.mrf.mxu0
    %v1352 = vadd.f32 0.0, %v1351
    %v1353 = vpop.f32.mrf.mxu0
    %1354 = vdwg.mxu0
    %1355 = vrot.lane.b32.xlu0 %v273, 104
    %v1356 = vpop.permute.xlu0 %1355
    %1357 = vrot.lane.b32.xlu0 %v273, 72
    %v1358 = vpop.permute.xlu0 %1357
    %v1359 = vsel %vm279, %v1356, 0
    %v1361 = vsel %vm279, %v1358, 0
    %1363 = vmatprep.subr.mxu0 0.0
    %1364 = vmatpush1.xpose.msra.mxu0 0.0
    %1365 = vmatprep.subr.mxu0 0.0
    %1366 = vmatpush1.xpose.msra.mxu0 0.0
    %1367 = vmatprep.subr.mxu0 0.0
    %1368 = vmatpush1.xpose.msra.mxu0 0.0
    %1369 = vmatprep.subr.mxu0 0.0
    %1370 = vmatpush1.xpose.msra.mxu0 0.0
    %1371 = vmatprep.subr.mxu0 0.0
    %1372 = vmatpush1.xpose.msra.mxu0 0.0
    %1373 = vmatprep.subr.mxu0 0.0
    %1374 = vmatpush1.xpose.msra.mxu0 0.0
    %1375 = vmatprep.subr.mxu0 0.0
    %1376 = vmatpush1.xpose.msra.mxu0 0.0
    %1377 = vmatprep.subr.mxu0 0.0
    %1378 = vmatpush1.xpose.msra.mxu0 0.0
    %1379 = vmatprep.subr.mxu0 0.0
    %1380 = vmatpush1.xpose.msra.mxu0 0.0
    %1381 = vmatprep.subr.mxu0 0.0
    %1382 = vmatpush1.xpose.msra.mxu0 0.0
    %1383 = vmatprep.subr.mxu0 0.0
    %1384 = vmatpush1.xpose.msra.mxu0 0.0
    %1385 = vmatprep.subr.mxu0 0.0
    %1386 = vmatpush1.xpose.msra.mxu0 0.0
    %1387 = vmatprep.subr.mxu0 0.0
    %1388 = vmatpush1.xpose.msra.mxu0 0.0
    %1389 = vmatprep.subr.mxu0 0.0
    %1390 = vmatpush1.xpose.msra.mxu0 0.0
    %1391 = vmatprep.subr.mxu0 0.0
    %1392 = vmatpush1.xpose.msra.mxu0 0.0
    %1393 = vmatprep.subr.mxu0 0.0
    %1394 = vmatpush1.xpose.msra.mxu0 %v1361
    %1395 = vmatprep.subr.mxu0 0.0
    %1396 = vmatpush2.xpose.msra.mxu0 0.0
    %1397 = vmatprep.subr.mxu0 0.0
    %1398 = vmatpush2.xpose.msra.mxu0 0.0
    %1399 = vmatprep.subr.mxu0 0.0
    %1400 = vmatpush2.xpose.msra.mxu0 0.0
    %1401 = vmatprep.subr.mxu0 0.0
    %1402 = vmatpush2.xpose.msra.mxu0 0.0
    %1403 = vmatprep.subr.mxu0 0.0
    %1404 = vmatpush2.xpose.msra.mxu0 0.0
    %1405 = vmatprep.subr.mxu0 0.0
    %1406 = vmatpush2.xpose.msra.mxu0 0.0
    %1407 = vmatprep.subr.mxu0 0.0
    %1408 = vmatpush2.xpose.msra.mxu0 0.0
    %1409 = vmatprep.subr.mxu0 0.0
    %1410 = vmatpush2.xpose.msra.mxu0 0.0
    %1411 = vmatprep.subr.mxu0 0.0
    %1412 = vmatpush2.xpose.msra.mxu0 0.0
    %1413 = vmatprep.subr.mxu0 0.0
    %1414 = vmatpush2.xpose.msra.mxu0 0.0
    %1415 = vmatprep.subr.mxu0 0.0
    %1416 = vmatpush2.xpose.msra.mxu0 0.0
    %1417 = vmatprep.subr.mxu0 0.0
    %1418 = vmatpush2.xpose.msra.mxu0 0.0
    %1419 = vmatprep.subr.mxu0 0.0
    %1420 = vmatpush2.xpose.msra.mxu0 0.0
    %1421 = vmatprep.subr.mxu0 0.0
    %1422 = vmatpush2.xpose.msra.mxu0 0.0
    %1423 = vmatprep.subr.mxu0 0.0
    %1424 = vmatpush2.xpose.msra.mxu0 0.0
    %1425 = vmatprep.subr.mxu0 0.0
    %1426 = vmatpush2.xpose.msra.mxu0 0.0
    %1427 = vmatprep.mubr.f32.mxu0 0.0
    %1428 = vmatmul.mubr.f32.gmra.mxu0 %v1359
    %v1429 = vpop.f32.mrf.mxu0
    %v1430 = vadd.f32 0.0, %v1429
    %v1431 = vpop.f32.mrf.mxu0
    %1432 = vdwg.mxu0
    %v1433 = vmul.f32 %v1352, 0.35355338
    %v1434 = vmul.f32 %v1430, 0.35355338
    %v1435 = vsel %vm279, %v1433, -inf
    %1436 = vmax.xlane.f32.xlu0 %v1435
    %v1437 = vpop.xlane.xlu0 %1436
    %v1438 = vsel %vm279, %v1434, -inf
    %1439 = vmax.xlane.f32.xlu0 %v1438
    %v1440 = vpop.xlane.xlu0 %1439
    %v1441 = vsub.f32 %v1433, %v1437
    %v1442 = vsub.f32 %v1434, %v1440
    %v1443 = vmul.f32 %v1441, 1.442695
    %v1444 = vpow.pop %v1443
    %v1445 = vmul.f32 %v1442, 1.442695
    %v1446 = vpow.pop %v1445
    %v1447 = vsel %vm279, %v1444, 0.0
    %1448 = vadd.xlane.f32.xlu0 %v1447
    %v1449 = vpop.xlane.xlu0 %1448
    %v1450 = vsel %vm279, %v1446, 0.0
    %1451 = vadd.xlane.f32.xlu0 %v1450
    %v1452 = vpop.xlane.xlu0 %1451
    %v1453 = vrcp.pop %v1449
    %v1454 = vmul.f32 %v1444, %v1453
    %v1455 = vrcp.pop %v1452
    %v1456 = vmul.f32 %v1446, %v1455
    %v1457 = vadd.f32 %v1123, %v1454
    %v1458 = vadd.f32 %v1124, %v1456
    %1459 = vrot.lane.b32.xlu0 %v268, 40
    %v1460 = vpop.permute.xlu0 %1459
    %v1463 = vsel %vm279, %v1454, 0
    %1465 = vmatprep.subr.mxu0 0.0
    %1466 = vmatpush1.msra.mxu0 0.0
    %1467 = vmatprep.subr.mxu0 0.0
    %1468 = vmatpush1.msra.mxu0 0.0
    %1469 = vmatprep.subr.mxu0 0.0
    %1470 = vmatpush1.msra.mxu0 0.0
    %1471 = vmatprep.subr.mxu0 0.0
    %1472 = vmatpush1.msra.mxu0 0.0
    %1473 = vmatprep.subr.mxu0 0.0
    %1474 = vmatpush1.msra.mxu0 0.0
    %1475 = vmatprep.subr.mxu0 0.0
    %1476 = vmatpush1.msra.mxu0 0.0
    %1477 = vmatprep.subr.mxu0 0.0
    %1478 = vmatpush1.msra.mxu0 0.0
    %1479 = vmatprep.subr.mxu0 0.0
    %1480 = vmatpush1.msra.mxu0 0.0
    %1481 = vmatprep.subr.mxu0 0.0
    %1482 = vmatpush1.msra.mxu0 0.0
    %1483 = vmatprep.subr.mxu0 0.0
    %1484 = vmatpush1.msra.mxu0 0.0
    %1485 = vmatprep.subr.mxu0 0.0
    %1486 = vmatpush1.msra.mxu0 0.0
    %1487 = vmatprep.subr.mxu0 0.0
    %1488 = vmatpush1.msra.mxu0 0.0
    %1489 = vmatprep.subr.mxu0 0.0
    %1490 = vmatpush1.msra.mxu0 0.0
    %1491 = vmatprep.subr.mxu0 0.0
    %1492 = vmatpush1.msra.mxu0 0.0
    %1493 = vmatprep.subr.mxu0 0.0
    %1494 = vmatpush1.msra.mxu0 0.0
    %1495 = vmatprep.subr.mxu0 0.0
    %1496 = vmatpush1.msra.mxu0 %v1460
    %1497 = vmatprep.subr.mxu0 0.0
    %1498 = vmatpush2.msra.mxu0 0.0
    %1499 = vmatprep.subr.mxu0 0.0
    %1500 = vmatpush2.msra.mxu0 0.0
    %1501 = vmatprep.subr.mxu0 0.0
    %1502 = vmatpush2.msra.mxu0 0.0
    %1503 = vmatprep.subr.mxu0 0.0
    %1504 = vmatpush2.msra.mxu0 0.0
    %1505 = vmatprep.subr.mxu0 0.0
    %1506 = vmatpush2.msra.mxu0 0.0
    %1507 = vmatprep.subr.mxu0 0.0
    %1508 = vmatpush2.msra.mxu0 0.0
    %1509 = vmatprep.subr.mxu0 0.0
    %1510 = vmatpush2.msra.mxu0 0.0
    %1511 = vmatprep.subr.mxu0 0.0
    %1512 = vmatpush2.msra.mxu0 0.0
    %1513 = vmatprep.subr.mxu0 0.0
    %1514 = vmatpush2.msra.mxu0 0.0
    %1515 = vmatprep.subr.mxu0 0.0
    %1516 = vmatpush2.msra.mxu0 0.0
    %1517 = vmatprep.subr.mxu0 0.0
    %1518 = vmatpush2.msra.mxu0 0.0
    %1519 = vmatprep.subr.mxu0 0.0
    %1520 = vmatpush2.msra.mxu0 0.0
    %1521 = vmatprep.subr.mxu0 0.0
    %1522 = vmatpush2.msra.mxu0 0.0
    %1523 = vmatprep.subr.mxu0 0.0
    %1524 = vmatpush2.msra.mxu0 0.0
    %1525 = vmatprep.subr.mxu0 0.0
    %1526 = vmatpush2.msra.mxu0 0.0
    %1527 = vmatprep.subr.mxu0 0.0
    %1528 = vmatpush2.msra.mxu0 0.0
    %1529 = vmatprep.mubr.f32.mxu0 0.0
    %1530 = vmatmul.mubr.f32.gmra.mxu0 %v1463
    %v1531 = vpop.f32.mrf.mxu0
    %v1532 = vadd.f32 0.0, %v1531
    %v1533 = vpop.f32.mrf.mxu0
    %1534 = vdwg.mxu0
    %1535 = vrot.lane.b32.xlu0 %v273, 40
    %v1536 = vpop.permute.xlu0 %1535
    %v1539 = vsel %vm279, %v1456, 0
    %1541 = vmatprep.subr.mxu0 0.0
    %1542 = vmatpush1.msra.mxu0 0.0
    %1543 = vmatprep.subr.mxu0 0.0
    %1544 = vmatpush1.msra.mxu0 0.0
    %1545 = vmatprep.subr.mxu0 0.0
    %1546 = vmatpush1.msra.mxu0 0.0
    %1547 = vmatprep.subr.mxu0 0.0
    %1548 = vmatpush1.msra.mxu0 0.0
    %1549 = vmatprep.subr.mxu0 0.0
    %1550 = vmatpush1.msra.mxu0 0.0
    %1551 = vmatprep.subr.mxu0 0.0
    %1552 = vmatpush1.msra.mxu0 0.0
    %1553 = vmatprep.subr.mxu0 0.0
    %1554 = vmatpush1.msra.mxu0 0.0
    %1555 = vmatprep.subr.mxu0 0.0
    %1556 = vmatpush1.msra.mxu0 0.0
    %1557 = vmatprep.subr.mxu0 0.0
    %1558 = vmatpush1.msra.mxu0 0.0
    %1559 = vmatprep.subr.mxu0 0.0
    %1560 = vmatpush1.msra.mxu0 0.0
    %1561 = vmatprep.subr.mxu0 0.0
    %1562 = vmatpush1.msra.mxu0 0.0
    %1563 = vmatprep.subr.mxu0 0.0
    %1564 = vmatpush1.msra.mxu0 0.0
    %1565 = vmatprep.subr.mxu0 0.0
    %1566 = vmatpush1.msra.mxu0 0.0
    %1567 = vmatprep.subr.mxu0 0.0
    %1568 = vmatpush1.msra.mxu0 0.0
    %1569 = vmatprep.subr.mxu0 0.0
    %1570 = vmatpush1.msra.mxu0 0.0
    %1571 = vmatprep.subr.mxu0 0.0
    %1572 = vmatpush1.msra.mxu0 %v1536
    %1573 = vmatprep.subr.mxu0 0.0
    %1574 = vmatpush2.msra.mxu0 0.0
    %1575 = vmatprep.subr.mxu0 0.0
    %1576 = vmatpush2.msra.mxu0 0.0
    %1577 = vmatprep.subr.mxu0 0.0
    %1578 = vmatpush2.msra.mxu0 0.0
    %1579 = vmatprep.subr.mxu0 0.0
    %1580 = vmatpush2.msra.mxu0 0.0
    %1581 = vmatprep.subr.mxu0 0.0
    %1582 = vmatpush2.msra.mxu0 0.0
    %1583 = vmatprep.subr.mxu0 0.0
    %1584 = vmatpush2.msra.mxu0 0.0
    %1585 = vmatprep.subr.mxu0 0.0
    %1586 = vmatpush2.msra.mxu0 0.0
    %1587 = vmatprep.subr.mxu0 0.0
    %1588 = vmatpush2.msra.mxu0 0.0
    %1589 = vmatprep.subr.mxu0 0.0
    %1590 = vmatpush2.msra.mxu0 0.0
    %1591 = vmatprep.subr.mxu0 0.0
    %1592 = vmatpush2.msra.mxu0 0.0
    %1593 = vmatprep.subr.mxu0 0.0
    %1594 = vmatpush2.msra.mxu0 0.0
    %1595 = vmatprep.subr.mxu0 0.0
    %1596 = vmatpush2.msra.mxu0 0.0
    %1597 = vmatprep.subr.mxu0 0.0
    %1598 = vmatpush2.msra.mxu0 0.0
    %1599 = vmatprep.subr.mxu0 0.0
    %1600 = vmatpush2.msra.mxu0 0.0
    %1601 = vmatprep.subr.mxu0 0.0
    %1602 = vmatpush2.msra.mxu0 0.0
    %1603 = vmatprep.subr.mxu0 0.0
    %1604 = vmatpush2.msra.mxu0 0.0
    %1605 = vmatprep.mubr.f32.mxu0 0.0
    %1606 = vmatmul.mubr.f32.gmra.mxu0 %v1539
    %v1607 = vpop.f32.mrf.mxu0
    %v1608 = vadd.f32 0.0, %v1607
    %v1609 = vpop.f32.mrf.mxu0
    %1610 = vdwg.mxu0
    %v1611 = vmul.f32 %v1457, 0.25
    %v1612 = vmul.f32 %v1458, 0.25
    %v1615 = vrot.slane %v1612, 7
    %vm1616 = vcmask 1041409
    %v1617 = vsel %vm1616, %v1615, %v1611
    %v1619 = vrot.slane %v1611, 1
    %v1620 = vsel %vm1616, %v1612, %v1619
    %1621 = vrot.lane.b32.xlu0 %v1620, 8
    %v1622 = vpop.permute.xlu0 %1621
    %v1624 = vrot.slane %v1611, 2
    %v1625 = vrot.slane %v1612, 1
    %v1626 = vsel %vm1616, %v1625, %v1624
    %1627 = vrot.lane.b32.xlu0 %v1626, 16
    %v1628 = vpop.permute.xlu0 %1627
    %v1630 = vrot.slane %v1611, 3
    %v1631 = vrot.slane %v1612, 2
    %v1632 = vsel %vm1616, %v1631, %v1630
    %1633 = vrot.lane.b32.xlu0 %v1632, 24
    %v1634 = vpop.permute.xlu0 %1633
    %v1636 = vrot.slane %v1611, 4
    %v1637 = vrot.slane %v1612, 3
    %v1638 = vsel %vm1616, %v1637, %v1636
    %1639 = vrot.lane.b32.xlu0 %v1638, 32
    %v1640 = vpop.permute.xlu0 %1639
    %v1642 = vrot.slane %v1611, 5
    %v1643 = vrot.slane %v1612, 4
    %v1644 = vsel %vm1616, %v1643, %v1642
    %1645 = vrot.lane.b32.xlu0 %v1644, 40
    %v1646 = vpop.permute.xlu0 %1645
    %v1648 = vrot.slane %v1611, 6
    %v1649 = vrot.slane %v1612, 5
    %v1650 = vsel %vm1616, %v1649, %v1648
    %1651 = vrot.lane.b32.xlu0 %v1650, 48
    %v1652 = vpop.permute.xlu0 %1651
    %v1654 = vrot.slane %v1611, 7
    %v1655 = vrot.slane %v1612, 6
    %v1656 = vsel %vm1616, %v1655, %v1654
    %1657 = vrot.lane.b32.xlu0 %v1656, 56
    %v1658 = vpop.permute.xlu0 %1657
    %v1660 = vsel %vm279, %v1617, %v1622
    %v1661 = vsel %vm101, %v1660, %v1628
    %vm1662 = vcmask 195584
    %v1663 = vsel %vm1662, %v1661, %v1634
    %v1664 = vsel %vm194, %v1663, %v1640
    %vm1665 = vcmask 326656
    %v1666 = vsel %vm1665, %v1664, %v1646
    %vm1667 = vcmask 392192
    %v1668 = vsel %vm1667, %v1666, %v1652
    %vm1669 = vcmask 457728
    %v1670 = vsel %vm1669, %v1668, %v1658
    %1673 = vrot.lane.b32.xlu0 %v864, 8
    %v1674 = vpop.permute.xlu0 %1673
    %1675 = vrot.lane.b32.xlu0 %v940, 8
    %v1676 = vpop.permute.xlu0 %1675
    %1681 = vrot.lane.b32.xlu0 %v1198, 16
    %v1682 = vpop.permute.xlu0 %1681
    %1683 = vrot.lane.b32.xlu0 %v1274, 16
    %v1684 = vpop.permute.xlu0 %1683
    %1689 = vrot.lane.b32.xlu0 %v1532, 24
    %v1690 = vpop.permute.xlu0 %1689
    %1691 = vrot.lane.b32.xlu0 %v1608, 24
    %v1692 = vpop.permute.xlu0 %1691
    %v1695 = vsel %vm279, %v530, %v1674
    %v1696 = vsel %vm279, %v606, %v1676
    %v1697 = vsel %vm101, %v1695, %v1682
    %v1698 = vsel %vm101, %v1696, %v1684
    %v1699 = vsel %vm1662, %v1697, %v1690
    %v1700 = vsel %vm1662, %v1698, %v1692
    %v1701 = vld [vmem:[%s5] sm:$0xff]
    %v1702 = vld [vmem:[%s5 + $0x8] sm:$0xff]
    %v1703 = vld [vmem:[%s5 + $0x10] sm:$0xff]
    %v1704 = vld [vmem:[%s5 + $0x18] sm:$0xff]
    %v1705 = vld [vmem:[%s6] sm:$0x1]
    %v1707 = vlaneseq
    %v1708 = vshrl.u32 %v1707, 7
    %v1709 = vsub.s32 0, %v1708
    %v1710 = vrot.slane %v1705, %v1709
    %v1713 = vsel %vm194, %v1699, 0
    %v1716 = vsel %vm194, %v1700, 0
    %1718 = vmatprep.subr.mxu0 0.0
    %1719 = vmatpush1.msra.mxu0 0.0
    %1720 = vmatprep.subr.mxu0 0.0
    %1721 = vmatpush1.msra.mxu0 0.0
    %1722 = vmatprep.subr.mxu0 0.0
    %1723 = vmatpush1.msra.mxu0 0.0
    %1724 = vmatprep.subr.mxu0 0.0
    %1725 = vmatpush1.msra.mxu0 0.0
    %1726 = vmatprep.subr.mxu0 0.0
    %1727 = vmatpush1.msra.mxu0 0.0
    %1728 = vmatprep.subr.mxu0 0.0
    %1729 = vmatpush1.msra.mxu0 0.0
    %1730 = vmatprep.subr.mxu0 0.0
    %1731 = vmatpush1.msra.mxu0 0.0
    %1732 = vmatprep.subr.mxu0 0.0
    %1733 = vmatpush1.msra.mxu0 0.0
    %1734 = vmatprep.subr.mxu0 0.0
    %1735 = vmatpush1.msra.mxu0 0.0
    %1736 = vmatprep.subr.mxu0 0.0
    %1737 = vmatpush1.msra.mxu0 0.0
    %1738 = vmatprep.subr.mxu0 0.0
    %1739 = vmatpush1.msra.mxu0 0.0
    %1740 = vmatprep.subr.mxu0 0.0
    %1741 = vmatpush1.msra.mxu0 0.0
    %1742 = vmatprep.subr.mxu0 0.0
    %1743 = vmatpush1.msra.mxu0 %v1704
    %1744 = vmatprep.subr.mxu0 0.0
    %1745 = vmatpush1.msra.mxu0 %v1703
    %1746 = vmatprep.subr.mxu0 0.0
    %1747 = vmatpush1.msra.mxu0 %v1702
    %1748 = vmatprep.subr.mxu0 0.0
    %1749 = vmatpush1.msra.mxu0 %v1701
    %1750 = vmatprep.subr.mxu0 0.0
    %1751 = vmatpush2.msra.mxu0 0.0
    %1752 = vmatprep.subr.mxu0 0.0
    %1753 = vmatpush2.msra.mxu0 0.0
    %1754 = vmatprep.subr.mxu0 0.0
    %1755 = vmatpush2.msra.mxu0 0.0
    %1756 = vmatprep.subr.mxu0 0.0
    %1757 = vmatpush2.msra.mxu0 0.0
    %1758 = vmatprep.subr.mxu0 0.0
    %1759 = vmatpush2.msra.mxu0 0.0
    %1760 = vmatprep.subr.mxu0 0.0
    %1761 = vmatpush2.msra.mxu0 0.0
    %1762 = vmatprep.subr.mxu0 0.0
    %1763 = vmatpush2.msra.mxu0 0.0
    %1764 = vmatprep.subr.mxu0 0.0
    %1765 = vmatpush2.msra.mxu0 0.0
    %1766 = vmatprep.subr.mxu0 0.0
    %1767 = vmatpush2.msra.mxu0 0.0
    %1768 = vmatprep.subr.mxu0 0.0
    %1769 = vmatpush2.msra.mxu0 0.0
    %1770 = vmatprep.subr.mxu0 0.0
    %1771 = vmatpush2.msra.mxu0 0.0
    %1772 = vmatprep.subr.mxu0 0.0
    %1773 = vmatpush2.msra.mxu0 0.0
    %1774 = vmatprep.subr.mxu0 0.0
    %1775 = vmatpush2.msra.mxu0 0.0
    %1776 = vmatprep.subr.mxu0 0.0
    %1777 = vmatpush2.msra.mxu0 0.0
    %1778 = vmatprep.subr.mxu0 0.0
    %1779 = vmatpush2.msra.mxu0 0.0
    %1780 = vmatprep.subr.mxu0 0.0
    %1781 = vmatpush2.msra.mxu0 0.0
    %1782 = vmatprep.mubr.f32.mxu0 0.0
    %1783 = vmatmul.mubr.f32.gmra.mxu0 %v1713
    %v1784 = vpop.f32.mrf.mxu0
    %v1785 = vadd.f32 %v1710, %v1784
    %v1786 = vpop.f32.mrf.mxu0
    %1787 = vmatprep.mubr.f32.mxu0 0.0
    %1788 = vmatmul.mubr.f32.gmra.mxu0 %v1716
    %v1789 = vpop.f32.mrf.mxu0
    %v1790 = vadd.f32 %v1710, %v1789
    %v1791 = vpop.f32.mrf.mxu0
    %1792 = vdwg.mxu0
    %v1793 = vadd.f32 %v175, %v1785
    %v1794 = vadd.f32 %v180, %v1790
    %v1795 = vld [vmem:[%s7] sm:$0x1]
    %v1796 = vld [vmem:[%s8] sm:$0x1]
    %v1797 = vsel %vm194, %v1793, 0.0
    %1798 = vadd.xlane.f32.xlu0 %v1797
    %v1799 = vpop.xlane.xlu0 %1798
    %v1800 = vsel %vm194, %v1794, 0.0
    %1801 = vadd.xlane.f32.xlu0 %v1800
    %v1802 = vpop.xlane.xlu0 %1801
    %v1803 = vrcp.pop 32.0
    %v1804 = vmul.f32 %v1799, %v1803
    %v1805 = vmul.f32 %v1802, %v1803
    %v1806 = vsub.f32 %v1793, %v1804
    %v1807 = vsub.f32 %v1794, %v1805
    %v1808 = vmul.f32 %v1806, %v1806
    %v1809 = vmul.f32 %v1807, %v1807
    %v1810 = vsel %vm194, %v1808, 0.0
    %1811 = vadd.xlane.f32.xlu0 %v1810
    %v1812 = vpop.xlane.xlu0 %1811
    %v1813 = vsel %vm194, %v1809, 0.0
    %1814 = vadd.xlane.f32.xlu0 %v1813
    %v1815 = vpop.xlane.xlu0 %1814
    %v1816 = vmul.f32 %v1812, %v1803
    %v1817 = vmul.f32 %v1815, %v1803
    %v1818 = vadd.f32 %v1816, 1e-05
    %v1819 = vadd.f32 %v1817, 1e-05
    %v1820 = vrsqrt.pop %v1818
    %v1821 = vrsqrt.pop %v1819
    %v1822 = vmul.f32 %v1806, %v1820
    %v1823 = vmul.f32 %v1807, %v1821
    %v1825 = vlaneseq
    %v1826 = vshrl.u32 %v1825, 7
    %v1827 = vsub.s32 0, %v1826
    %v1828 = vrot.slane %v1795, %v1827
    %v1830 = vmul.f32 %v1822, %v1828
    %v1831 = vmul.f32 %v1823, %v1828
    %v1833 = vlaneseq
    %v1834 = vshrl.u32 %v1833, 7
    %v1835 = vsub.s32 0, %v1834
    %v1836 = vrot.slane %v1796, %v1835
    %v1838 = vadd.f32 %v1830, %v1836
    %v1839 = vadd.f32 %v1831, %v1836
    %v1840 = vld [vmem:[%s9] sm:$0xff]
    %v1841 = vld [vmem:[%s9 + $0x8] sm:$0xff]
    %v1842 = vld [vmem:[%s9 + $0x10] sm:$0xff]
    %v1843 = vld [vmem:[%s9 + $0x18] sm:$0xff]
    %v1844 = vld [vmem:[%s10] sm:$0x1]
    %v1846 = vlaneseq
    %v1847 = vshrl.u32 %v1846, 7
    %v1848 = vsub.s32 0, %v1847
    %v1849 = vrot.slane %v1844, %v1848
    %v1852 = vsel %vm194, %v1838, 0
    %v1855 = vsel %vm194, %v1839, 0
    %1857 = vmatprep.subr.mxu0 0.0
    %1858 = vmatpush1.msra.mxu0 0.0
    %1859 = vmatprep.subr.mxu0 0.0
    %1860 = vmatpush1.msra.mxu0 0.0
    %1861 = vmatprep.subr.mxu0 0.0
    %1862 = vmatpush1.msra.mxu0 0.0
    %1863 = vmatprep.subr.mxu0 0.0
    %1864 = vmatpush1.msra.mxu0 0.0
    %1865 = vmatprep.subr.mxu0 0.0
    %1866 = vmatpush1.msra.mxu0 0.0
    %1867 = vmatprep.subr.mxu0 0.0
    %1868 = vmatpush1.msra.mxu0 0.0
    %1869 = vmatprep.subr.mxu0 0.0
    %1870 = vmatpush1.msra.mxu0 0.0
    %1871 = vmatprep.subr.mxu0 0.0
    %1872 = vmatpush1.msra.mxu0 0.0
    %1873 = vmatprep.subr.mxu0 0.0
    %1874 = vmatpush1.msra.mxu0 0.0
    %1875 = vmatprep.subr.mxu0 0.0
    %1876 = vmatpush1.msra.mxu0 0.0
    %1877 = vmatprep.subr.mxu0 0.0
    %1878 = vmatpush1.msra.mxu0 0.0
    %1879 = vmatprep.subr.mxu0 0.0
    %1880 = vmatpush1.msra.mxu0 0.0
    %1881 = vmatprep.subr.mxu0 0.0
    %1882 = vmatpush1.msra.mxu0 %v1843
    %1883 = vmatprep.subr.mxu0 0.0
    %1884 = vmatpush1.msra.mxu0 %v1842
    %1885 = vmatprep.subr.mxu0 0.0
    %1886 = vmatpush1.msra.mxu0 %v1841
    %1887 = vmatprep.subr.mxu0 0.0
    %1888 = vmatpush1.msra.mxu0 %v1840
    %1889 = vmatprep.subr.mxu0 0.0
    %1890 = vmatpush2.msra.mxu0 0.0
    %1891 = vmatprep.subr.mxu0 0.0
    %1892 = vmatpush2.msra.mxu0 0.0
    %1893 = vmatprep.subr.mxu0 0.0
    %1894 = vmatpush2.msra.mxu0 0.0
    %1895 = vmatprep.subr.mxu0 0.0
    %1896 = vmatpush2.msra.mxu0 0.0
    %1897 = vmatprep.subr.mxu0 0.0
    %1898 = vmatpush2.msra.mxu0 0.0
    %1899 = vmatprep.subr.mxu0 0.0
    %1900 = vmatpush2.msra.mxu0 0.0
    %1901 = vmatprep.subr.mxu0 0.0
    %1902 = vmatpush2.msra.mxu0 0.0
    %1903 = vmatprep.subr.mxu0 0.0
    %1904 = vmatpush2.msra.mxu0 0.0
    %1905 = vmatprep.subr.mxu0 0.0
    %1906 = vmatpush2.msra.mxu0 0.0
    %1907 = vmatprep.subr.mxu0 0.0
    %1908 = vmatpush2.msra.mxu0 0.0
    %1909 = vmatprep.subr.mxu0 0.0
    %1910 = vmatpush2.msra.mxu0 0.0
    %1911 = vmatprep.subr.mxu0 0.0
    %1912 = vmatpush2.msra.mxu0 0.0
    %1913 = vmatprep.subr.mxu0 0.0
    %1914 = vmatpush2.msra.mxu0 0.0
    %1915 = vmatprep.subr.mxu0 0.0
    %1916 = vmatpush2.msra.mxu0 0.0
    %1917 = vmatprep.subr.mxu0 0.0
    %1918 = vmatpush2.msra.mxu0 0.0
    %1919 = vmatprep.subr.mxu0 0.0
    %1920 = vmatpush2.msra.mxu0 0.0
    %1921 = vmatprep.mubr.f32.mxu0 0.0
    %1922 = vmatmul.mubr.f32.gmra.mxu0 %v1852
    %v1923 = vpop.f32.mrf.mxu0
    %v1924 = vadd.f32 %v1849, %v1923
    %v1925 = vpop.f32.mrf.mxu0
    %1926 = vmatprep.mubr.f32.mxu0 0.0
    %1927 = vmatmul.mubr.f32.gmra.mxu0 %v1855
    %v1928 = vpop.f32.mrf.mxu0
    %v1929 = vadd.f32 %v1849, %v1928
    %v1930 = vpop.f32.mrf.mxu0
    %1931 = vdwg.mxu0
    %v1932 = vmax.f32 %v1924, 0.0
    %v1933 = vmax.f32 %v1929, 0.0
    %v1934 = vld [vmem:[%s11] sm:$0xff]
    %v1935 = vld [vmem:[%s11 + $0x8] sm:$0xff]
    %v1936 = vld [vmem:[%s11 + $0x10] sm:$0xff]
    %v1937 = vld [vmem:[%s11 + $0x18] sm:$0xff]
    %v1938 = vld [vmem:[%s11 + $0x20] sm:$0xff]
    %v1939 = vld [vmem:[%s11 + $0x28] sm:$0xff]
    %v1940 = vld [vmem:[%s11 + $0x30] sm:$0xff]
    %v1941 = vld [vmem:[%s11 + $0x38] sm:$0xff]
    %v1942 = vld [vmem:[%s11 + $0x40] sm:$0xff]
    %v1943 = vld [vmem:[%s11 + $0x48] sm:$0xff]
    %v1944 = vld [vmem:[%s11 + $0x50] sm:$0xff]
    %v1945 = vld [vmem:[%s11 + $0x58] sm:$0xff]
    %v1946 = vld [vmem:[%s11 + $0x60] sm:$0xff]
    %v1947 = vld [vmem:[%s11 + $0x68] sm:$0xff]
    %v1948 = vld [vmem:[%s11 + $0x70] sm:$0xff]
    %v1949 = vld [vmem:[%s11 + $0x78] sm:$0xff]
    %v1950 = vld [vmem:[%s12] sm:$0x1]
    %v1952 = vlaneseq
    %v1953 = vshrl.u32 %v1952, 7
    %v1954 = vsub.s32 0, %v1953
    %v1955 = vrot.slane %v1950, %v1954
    %1957 = vmatprep.subr.mxu0 0.0
    %1958 = vmatpush1.msra.mxu0 %v1949
    %1959 = vmatprep.subr.mxu0 0.0
    %1960 = vmatpush1.msra.mxu0 %v1948
    %1961 = vmatprep.subr.mxu0 0.0
    %1962 = vmatpush1.msra.mxu0 %v1947
    %1963 = vmatprep.subr.mxu0 0.0
    %1964 = vmatpush1.msra.mxu0 %v1946
    %1965 = vmatprep.subr.mxu0 0.0
    %1966 = vmatpush1.msra.mxu0 %v1945
    %1967 = vmatprep.subr.mxu0 0.0
    %1968 = vmatpush1.msra.mxu0 %v1944
    %1969 = vmatprep.subr.mxu0 0.0
    %1970 = vmatpush1.msra.mxu0 %v1943
    %1971 = vmatprep.subr.mxu0 0.0
    %1972 = vmatpush1.msra.mxu0 %v1942
    %1973 = vmatprep.subr.mxu0 0.0
    %1974 = vmatpush1.msra.mxu0 %v1941
    %1975 = vmatprep.subr.mxu0 0.0
    %1976 = vmatpush1.msra.mxu0 %v1940
    %1977 = vmatprep.subr.mxu0 0.0
    %1978 = vmatpush1.msra.mxu0 %v1939
    %1979 = vmatprep.subr.mxu0 0.0
    %1980 = vmatpush1.msra.mxu0 %v1938
    %1981 = vmatprep.subr.mxu0 0.0
    %1982 = vmatpush1.msra.mxu0 %v1937
    %1983 = vmatprep.subr.mxu0 0.0
    %1984 = vmatpush1.msra.mxu0 %v1936
    %1985 = vmatprep.subr.mxu0 0.0
    %1986 = vmatpush1.msra.mxu0 %v1935
    %1987 = vmatprep.subr.mxu0 0.0
    %1988 = vmatpush1.msra.mxu0 %v1934
    %1989 = vmatprep.subr.mxu0 0.0
    %1990 = vmatpush2.msra.mxu0 0.0
    %1991 = vmatprep.subr.mxu0 0.0
    %1992 = vmatpush2.msra.mxu0 0.0
    %1993 = vmatprep.subr.mxu0 0.0
    %1994 = vmatpush2.msra.mxu0 0.0
    %1995 = vmatprep.subr.mxu0 0.0
    %1996 = vmatpush2.msra.mxu0 0.0
    %1997 = vmatprep.subr.mxu0 0.0
    %1998 = vmatpush2.msra.mxu0 0.0
    %1999 = vmatprep.subr.mxu0 0.0
    %2000 = vmatpush2.msra.mxu0 0.0
    %2001 = vmatprep.subr.mxu0 0.0
    %2002 = vmatpush2.msra.mxu0 0.0
    %2003 = vmatprep.subr.mxu0 0.0
    %2004 = vmatpush2.msra.mxu0 0.0
    %2005 = vmatprep.subr.mxu0 0.0
    %2006 = vmatpush2.msra.mxu0 0.0
    %2007 = vmatprep.subr.mxu0 0.0
    %2008 = vmatpush2.msra.mxu0 0.0
    %2009 = vmatprep.subr.mxu0 0.0
    %2010 = vmatpush2.msra.mxu0 0.0
    %2011 = vmatprep.subr.mxu0 0.0
    %2012 = vmatpush2.msra.mxu0 0.0
    %2013 = vmatprep.subr.mxu0 0.0
    %2014 = vmatpush2.msra.mxu0 0.0
    %2015 = vmatprep.subr.mxu0 0.0
    %2016 = vmatpush2.msra.mxu0 0.0
    %2017 = vmatprep.subr.mxu0 0.0
    %2018 = vmatpush2.msra.mxu0 0.0
    %2019 = vmatprep.subr.mxu0 0.0
    %2020 = vmatpush2.msra.mxu0 0.0
    %2021 = vmatprep.mubr.f32.mxu0 0.0
    %2022 = vmatmul.mubr.f32.gmra.mxu0 %v1932
    %v2023 = vpop.f32.mrf.mxu0
    %v2024 = vadd.f32 %v1955, %v2023
    %v2025 = vpop.f32.mrf.mxu0
    %2026 = vmatprep.mubr.f32.mxu0 0.0
    %2027 = vmatmul.mubr.f32.gmra.mxu0 %v1933
    %v2028 = vpop.f32.mrf.mxu0
    %v2029 = vadd.f32 %v1955, %v2028
    %v2030 = vpop.f32.mrf.mxu0
    %2031 = vdwg.mxu0
    %v2032 = vld [vmem:[%s13] sm:$0x1]
    %v2033 = vld [vmem:[%s14] sm:$0x1]
    %v2034 = vsel %vm194, %v2024, 0.0
    %2035 = vadd.xlane.f32.xlu0 %v2034
    %v2036 = vpop.xlane.xlu0 %2035
    %v2037 = vsel %vm194, %v2029, 0.0
    %2038 = vadd.xlane.f32.xlu0 %v2037
    %v2039 = vpop.xlane.xlu0 %2038
    %v2040 = vmul.f32 %v2036, %v1803
    %v2041 = vmul.f32 %v2039, %v1803
    %v2042 = vsub.f32 %v2024, %v2040
    %v2043 = vsub.f32 %v2029, %v2041
    %v2044 = vmul.f32 %v2042, %v2042
    %v2045 = vmul.f32 %v2043, %v2043
    %v2046 = vsel %vm194, %v2044, 0.0
    %2047 = vadd.xlane.f32.xlu0 %v2046
    %v2048 = vpop.xlane.xlu0 %2047
    %v2049 = vsel %vm194, %v2045, 0.0
    %2050 = vadd.xlane.f32.xlu0 %v2049
    %v2051 = vpop.xlane.xlu0 %2050
    %v2052 = vmul.f32 %v2048, %v1803
    %v2053 = vmul.f32 %v2051, %v1803
    %v2054 = vadd.f32 %v2052, 1e-05
    %v2055 = vadd.f32 %v2053, 1e-05
    %v2056 = vrsqrt.pop %v2054
    %v2057 = vrsqrt.pop %v2055
    %v2058 = vmul.f32 %v2042, %v2056
    %v2059 = vmul.f32 %v2043, %v2057
    %v2061 = vlaneseq
    %v2062 = vshrl.u32 %v2061, 7
    %v2063 = vsub.s32 0, %v2062
    %v2064 = vrot.slane %v2032, %v2063
    %v2066 = vmul.f32 %v2058, %v2064
    %v2067 = vmul.f32 %v2059, %v2064
    %v2069 = vlaneseq
    %v2070 = vshrl.u32 %v2069, 7
    %v2071 = vsub.s32 0, %v2070
    %v2072 = vrot.slane %v2033, %v2071
    %v2074 = vadd.f32 %v2066, %v2072
    %v2075 = vadd.f32 %v2067, %v2072
    %v2076 = vadd.f32 %v1838, %v2074
    %v2077 = vadd.f32 %v1839, %v2075
    %s2078 = scalar_lea.vmem %s3, 32
    %v2079 = vld [vmem:[%s2078] sm:$0xff]
    %v2080 = vld [vmem:[%s2078 + $0x8] sm:$0xff]
    %v2081 = vld [vmem:[%s2078 + $0x10] sm:$0xff]
    %v2082 = vld [vmem:[%s2078 + $0x18] sm:$0xff]
    %s2083 = scalar_lea.vmem %s4, 1
    %v2084 = vld [vmem:[%s2083] sm:$0x1]
    %v2086 = vlaneseq
    %v2087 = vshrl.u32 %v2086, 7
    %v2088 = vsub.s32 0, %v2087
    %v2089 = vrot.slane %v2084, %v2088
    %v2092 = vsel %vm194, %v2076, 0
    %v2095 = vsel %vm194, %v2077, 0
    %2097 = vmatprep.subr.mxu0 0.0
    %2098 = vmatpush1.msra.mxu0 0.0
    %2099 = vmatprep.subr.mxu0 0.0
    %2100 = vmatpush1.msra.mxu0 0.0
    %2101 = vmatprep.subr.mxu0 0.0
    %2102 = vmatpush1.msra.mxu0 0.0
    %2103 = vmatprep.subr.mxu0 0.0
    %2104 = vmatpush1.msra.mxu0 0.0
    %2105 = vmatprep.subr.mxu0 0.0
    %2106 = vmatpush1.msra.mxu0 0.0
    %2107 = vmatprep.subr.mxu0 0.0
    %2108 = vmatpush1.msra.mxu0 0.0
    %2109 = vmatprep.subr.mxu0 0.0
    %2110 = vmatpush1.msra.mxu0 0.0
    %2111 = vmatprep.subr.mxu0 0.0
    %2112 = vmatpush1.msra.mxu0 0.0
    %2113 = vmatprep.subr.mxu0 0.0
    %2114 = vmatpush1.msra.mxu0 0.0
    %2115 = vmatprep.subr.mxu0 0.0
    %2116 = vmatpush1.msra.mxu0 0.0
    %2117 = vmatprep.subr.mxu0 0.0
    %2118 = vmatpush1.msra.mxu0 0.0
    %2119 = vmatprep.subr.mxu0 0.0
    %2120 = vmatpush1.msra.mxu0 0.0
    %2121 = vmatprep.subr.mxu0 0.0
    %2122 = vmatpush1.msra.mxu0 %v2082
    %2123 = vmatprep.subr.mxu0 0.0
    %2124 = vmatpush1.msra.mxu0 %v2081
    %2125 = vmatprep.subr.mxu0 0.0
    %2126 = vmatpush1.msra.mxu0 %v2080
    %2127 = vmatprep.subr.mxu0 0.0
    %2128 = vmatpush1.msra.mxu0 %v2079
    %2129 = vmatprep.subr.mxu0 0.0
    %2130 = vmatpush2.msra.mxu0 0.0
    %2131 = vmatprep.subr.mxu0 0.0
    %2132 = vmatpush2.msra.mxu0 0.0
    %2133 = vmatprep.subr.mxu0 0.0
    %2134 = vmatpush2.msra.mxu0 0.0
    %2135 = vmatprep.subr.mxu0 0.0
    %2136 = vmatpush2.msra.mxu0 0.0
    %2137 = vmatprep.subr.mxu0 0.0
    %2138 = vmatpush2.msra.mxu0 0.0
    %2139 = vmatprep.subr.mxu0 0.0
    %2140 = vmatpush2.msra.mxu0 0.0
    %2141 = vmatprep.subr.mxu0 0.0
    %2142 = vmatpush2.msra.mxu0 0.0
    %2143 = vmatprep.subr.mxu0 0.0
    %2144 = vmatpush2.msra.mxu0 0.0
    %2145 = vmatprep.subr.mxu0 0.0
    %2146 = vmatpush2.msra.mxu0 0.0
    %2147 = vmatprep.subr.mxu0 0.0
    %2148 = vmatpush2.msra.mxu0 0.0
    %2149 = vmatprep.subr.mxu0 0.0
    %2150 = vmatpush2.msra.mxu0 0.0
    %2151 = vmatprep.subr.mxu0 0.0
    %2152 = vmatpush2.msra.mxu0 0.0
    %2153 = vmatprep.subr.mxu0 0.0
    %2154 = vmatpush2.msra.mxu0 0.0
    %2155 = vmatprep.subr.mxu0 0.0
    %2156 = vmatpush2.msra.mxu0 0.0
    %2157 = vmatprep.subr.mxu0 0.0
    %2158 = vmatpush2.msra.mxu0 0.0
    %2159 = vmatprep.subr.mxu0 0.0
    %2160 = vmatpush2.msra.mxu0 0.0
    %2161 = vmatprep.mubr.f32.mxu0 0.0
    %2162 = vmatmul.mubr.f32.gmra.mxu0 %v2092
    %v2163 = vpop.f32.mrf.mxu0
    %v2164 = vadd.f32 %v2089, %v2163
    %v2165 = vpop.f32.mrf.mxu0
    %2166 = vmatprep.mubr.f32.mxu0 0.0
    %2167 = vmatmul.mubr.f32.gmra.mxu0 %v2095
    %v2168 = vpop.f32.mrf.mxu0
    %v2169 = vadd.f32 %v2089, %v2168
    %v2170 = vpop.f32.mrf.mxu0
    %2171 = vdwg.mxu0
    %2173 = vrot.lane.b32.xlu0 %v2164, 96
    %v2174 = vpop.permute.xlu0 %2173
    %v2175 = vsel %vm279, %v2164, 0
    %v2177 = vsel %vm279, %v2174, 0
    %2179 = vmatprep.subr.mxu0 0.0
    %2180 = vmatpush1.xpose.msra.mxu0 0.0
    %2181 = vmatprep.subr.mxu0 0.0
    %2182 = vmatpush1.xpose.msra.mxu0 0.0
    %2183 = vmatprep.subr.mxu0 0.0
    %2184 = vmatpush1.xpose.msra.mxu0 0.0
    %2185 = vmatprep.subr.mxu0 0.0
    %2186 = vmatpush1.xpose.msra.mxu0 0.0
    %2187 = vmatprep.subr.mxu0 0.0
    %2188 = vmatpush1.xpose.msra.mxu0 0.0
    %2189 = vmatprep.subr.mxu0 0.0
    %2190 = vmatpush1.xpose.msra.mxu0 0.0
    %2191 = vmatprep.subr.mxu0 0.0
    %2192 = vmatpush1.xpose.msra.mxu0 0.0
    %2193 = vmatprep.subr.mxu0 0.0
    %2194 = vmatpush1.xpose.msra.mxu0 0.0
    %2195 = vmatprep.subr.mxu0 0.0
    %2196 = vmatpush1.xpose.msra.mxu0 0.0
    %2197 = vmatprep.subr.mxu0 0.0
    %2198 = vmatpush1.xpose.msra.mxu0 0.0
    %2199 = vmatprep.subr.mxu0 0.0
    %2200 = vmatpush1.xpose.msra.mxu0 0.0
    %2201 = vmatprep.subr.mxu0 0.0
    %2202 = vmatpush1.xpose.msra.mxu0 0.0
    %2203 = vmatprep.subr.mxu0 0.0
    %2204 = vmatpush1.xpose.msra.mxu0 0.0
    %2205 = vmatprep.subr.mxu0 0.0
    %2206 = vmatpush1.xpose.msra.mxu0 0.0
    %2207 = vmatprep.subr.mxu0 0.0
    %2208 = vmatpush1.xpose.msra.mxu0 0.0
    %2209 = vmatprep.subr.mxu0 0.0
    %2210 = vmatpush1.xpose.msra.mxu0 %v2177
    %2211 = vmatprep.subr.mxu0 0.0
    %2212 = vmatpush2.xpose.msra.mxu0 0.0
    %2213 = vmatprep.subr.mxu0 0.0
    %2214 = vmatpush2.xpose.msra.mxu0 0.0
    %2215 = vmatprep.subr.mxu0 0.0
    %2216 = vmatpush2.xpose.msra.mxu0 0.0
    %2217 = vmatprep.subr.mxu0 0.0
    %2218 = vmatpush2.xpose.msra.mxu0 0.0
    %2219 = vmatprep.subr.mxu0 0.0
    %2220 = vmatpush2.xpose.msra.mxu0 0.0
    %2221 = vmatprep.subr.mxu0 0.0
    %2222 = vmatpush2.xpose.msra.mxu0 0.0
    %2223 = vmatprep.subr.mxu0 0.0
    %2224 = vmatpush2.xpose.msra.mxu0 0.0
    %2225 = vmatprep.subr.mxu0 0.0
    %2226 = vmatpush2.xpose.msra.mxu0 0.0
    %2227 = vmatprep.subr.mxu0 0.0
    %2228 = vmatpush2.xpose.msra.mxu0 0.0
    %2229 = vmatprep.subr.mxu0 0.0
    %2230 = vmatpush2.xpose.msra.mxu0 0.0
    %2231 = vmatprep.subr.mxu0 0.0
    %2232 = vmatpush2.xpose.msra.mxu0 0.0
    %2233 = vmatprep.subr.mxu0 0.0
    %2234 = vmatpush2.xpose.msra.mxu0 0.0
    %2235 = vmatprep.subr.mxu0 0.0
    %2236 = vmatpush2.xpose.msra.mxu0 0.0
    %2237 = vmatprep.subr.mxu0 0.0
    %2238 = vmatpush2.xpose.msra.mxu0 0.0
    %2239 = vmatprep.subr.mxu0 0.0
    %2240 = vmatpush2.xpose.msra.mxu0 0.0
    %2241 = vmatprep.subr.mxu0 0.0
    %2242 = vmatpush2.xpose.msra.mxu0 0.0
    %2243 = vmatprep.mubr.f32.mxu0 0.0
    %2244 = vmatmul.mubr.f32.gmra.mxu0 %v2175
    %v2245 = vpop.f32.mrf.mxu0
    %v2246 = vadd.f32 0.0, %v2245
    %v2247 = vpop.f32.mrf.mxu0
    %2248 = vdwg.mxu0
    %2250 = vrot.lane.b32.xlu0 %v2169, 96
    %v2251 = vpop.permute.xlu0 %2250
    %v2252 = vsel %vm279, %v2169, 0
    %v2254 = vsel %vm279, %v2251, 0
    %2256 = vmatprep.subr.mxu0 0.0
    %2257 = vmatpush1.xpose.msra.mxu0 0.0
    %2258 = vmatprep.subr.mxu0 0.0
    %2259 = vmatpush1.xpose.msra.mxu0 0.0
    %2260 = vmatprep.subr.mxu0 0.0
    %2261 = vmatpush1.xpose.msra.mxu0 0.0
    %2262 = vmatprep.subr.mxu0 0.0
    %2263 = vmatpush1.xpose.msra.mxu0 0.0
    %2264 = vmatprep.subr.mxu0 0.0
    %2265 = vmatpush1.xpose.msra.mxu0 0.0
    %2266 = vmatprep.subr.mxu0 0.0
    %2267 = vmatpush1.xpose.msra.mxu0 0.0
    %2268 = vmatprep.subr.mxu0 0.0
    %2269 = vmatpush1.xpose.msra.mxu0 0.0
    %2270 = vmatprep.subr.mxu0 0.0
    %2271 = vmatpush1.xpose.msra.mxu0 0.0
    %2272 = vmatprep.subr.mxu0 0.0
    %2273 = vmatpush1.xpose.msra.mxu0 0.0
    %2274 = vmatprep.subr.mxu0 0.0
    %2275 = vmatpush1.xpose.msra.mxu0 0.0
    %2276 = vmatprep.subr.mxu0 0.0
    %2277 = vmatpush1.xpose.msra.mxu0 0.0
    %2278 = vmatprep.subr.mxu0 0.0
    %2279 = vmatpush1.xpose.msra.mxu0 0.0
    %2280 = vmatprep.subr.mxu0 0.0
    %2281 = vmatpush1.xpose.msra.mxu0 0.0
    %2282 = vmatprep.subr.mxu0 0.0
    %2283 = vmatpush1.xpose.msra.mxu0 0.0
    %2284 = vmatprep.subr.mxu0 0.0
    %2285 = vmatpush1.xpose.msra.mxu0 0.0
    %2286 = vmatprep.subr.mxu0 0.0
    %2287 = vmatpush1.xpose.msra.mxu0 %v2254
    %2288 = vmatprep.subr.mxu0 0.0
    %2289 = vmatpush2.xpose.msra.mxu0 0.0
    %2290 = vmatprep.subr.mxu0 0.0
    %2291 = vmatpush2.xpose.msra.mxu0 0.0
    %2292 = vmatprep.subr.mxu0 0.0
    %2293 = vmatpush2.xpose.msra.mxu0 0.0
    %2294 = vmatprep.subr.mxu0 0.0
    %2295 = vmatpush2.xpose.msra.mxu0 0.0
    %2296 = vmatprep.subr.mxu0 0.0
    %2297 = vmatpush2.xpose.msra.mxu0 0.0
    %2298 = vmatprep.subr.mxu0 0.0
    %2299 = vmatpush2.xpose.msra.mxu0 0.0
    %2300 = vmatprep.subr.mxu0 0.0
    %2301 = vmatpush2.xpose.msra.mxu0 0.0
    %2302 = vmatprep.subr.mxu0 0.0
    %2303 = vmatpush2.xpose.msra.mxu0 0.0
    %2304 = vmatprep.subr.mxu0 0.0
    %2305 = vmatpush2.xpose.msra.mxu0 0.0
    %2306 = vmatprep.subr.mxu0 0.0
    %2307 = vmatpush2.xpose.msra.mxu0 0.0
    %2308 = vmatprep.subr.mxu0 0.0
    %2309 = vmatpush2.xpose.msra.mxu0 0.0
    %2310 = vmatprep.subr.mxu0 0.0
    %2311 = vmatpush2.xpose.msra.mxu0 0.0
    %2312 = vmatprep.subr.mxu0 0.0
    %2313 = vmatpush2.xpose.msra.mxu0 0.0
    %2314 = vmatprep.subr.mxu0 0.0
    %2315 = vmatpush2.xpose.msra.mxu0 0.0
    %2316 = vmatprep.subr.mxu0 0.0
    %2317 = vmatpush2.xpose.msra.mxu0 0.0
    %2318 = vmatprep.subr.mxu0 0.0
    %2319 = vmatpush2.xpose.msra.mxu0 0.0
    %2320 = vmatprep.mubr.f32.mxu0 0.0
    %2321 = vmatmul.mubr.f32.gmra.mxu0 %v2252
    %v2322 = vpop.f32.mrf.mxu0
    %v2323 = vadd.f32 0.0, %v2322
    %v2324 = vpop.f32.mrf.mxu0
    %2325 = vdwg.mxu0
    %v2326 = vmul.f32 %v2246, 0.35355338
    %v2327 = vmul.f32 %v2323, 0.35355338
    %v2328 = vsel %vm279, %v2326, -inf
    %2329 = vmax.xlane.f32.xlu0 %v2328
    %v2330 = vpop.xlane.xlu0 %2329
    %v2331 = vsel %vm279, %v2327, -inf
    %2332 = vmax.xlane.f32.xlu0 %v2331
    %v2333 = vpop.xlane.xlu0 %2332
    %v2334 = vsub.f32 %v2326, %v2330
    %v2335 = vsub.f32 %v2327, %v2333
    %v2336 = vmul.f32 %v2334, 1.442695
    %v2337 = vpow.pop %v2336
    %v2338 = vmul.f32 %v2335, 1.442695
    %v2339 = vpow.pop %v2338
    %v2340 = vsel %vm279, %v2337, 0.0
    %2341 = vadd.xlane.f32.xlu0 %v2340
    %v2342 = vpop.xlane.xlu0 %2341
    %v2343 = vsel %vm279, %v2339, 0.0
    %2344 = vadd.xlane.f32.xlu0 %v2343
    %v2345 = vpop.xlane.xlu0 %2344
    %v2346 = vrcp.pop %v2342
    %v2347 = vmul.f32 %v2337, %v2346
    %v2348 = vrcp.pop %v2345
    %v2349 = vmul.f32 %v2339, %v2348
    %v2350 = vadd.f32 %v2347, 0.0
    %v2351 = vadd.f32 %v2349, 0.0
    %2352 = vrot.lane.b32.xlu0 %v2164, 64
    %v2353 = vpop.permute.xlu0 %2352
    %v2356 = vsel %vm279, %v2347, 0
    %2358 = vmatprep.subr.mxu0 0.0
    %2359 = vmatpush1.msra.mxu0 0.0
    %2360 = vmatprep.subr.mxu0 0.0
    %2361 = vmatpush1.msra.mxu0 0.0
    %2362 = vmatprep.subr.mxu0 0.0
    %2363 = vmatpush1.msra.mxu0 0.0
    %2364 = vmatprep.subr.mxu0 0.0
    %2365 = vmatpush1.msra.mxu0 0.0
    %2366 = vmatprep.subr.mxu0 0.0
    %2367 = vmatpush1.msra.mxu0 0.0
    %2368 = vmatprep.subr.mxu0 0.0
    %2369 = vmatpush1.msra.mxu0 0.0
    %2370 = vmatprep.subr.mxu0 0.0
    %2371 = vmatpush1.msra.mxu0 0.0
    %2372 = vmatprep.subr.mxu0 0.0
    %2373 = vmatpush1.msra.mxu0 0.0
    %2374 = vmatprep.subr.mxu0 0.0
    %2375 = vmatpush1.msra.mxu0 0.0
    %2376 = vmatprep.subr.mxu0 0.0
    %2377 = vmatpush1.msra.mxu0 0.0
    %2378 = vmatprep.subr.mxu0 0.0
    %2379 = vmatpush1.msra.mxu0 0.0
    %2380 = vmatprep.subr.mxu0 0.0
    %2381 = vmatpush1.msra.mxu0 0.0
    %2382 = vmatprep.subr.mxu0 0.0
    %2383 = vmatpush1.msra.mxu0 0.0
    %2384 = vmatprep.subr.mxu0 0.0
    %2385 = vmatpush1.msra.mxu0 0.0
    %2386 = vmatprep.subr.mxu0 0.0
    %2387 = vmatpush1.msra.mxu0 0.0
    %2388 = vmatprep.subr.mxu0 0.0
    %2389 = vmatpush1.msra.mxu0 %v2353
    %2390 = vmatprep.subr.mxu0 0.0
    %2391 = vmatpush2.msra.mxu0 0.0
    %2392 = vmatprep.subr.mxu0 0.0
    %2393 = vmatpush2.msra.mxu0 0.0
    %2394 = vmatprep.subr.mxu0 0.0
    %2395 = vmatpush2.msra.mxu0 0.0
    %2396 = vmatprep.subr.mxu0 0.0
    %2397 = vmatpush2.msra.mxu0 0.0
    %2398 = vmatprep.subr.mxu0 0.0
    %2399 = vmatpush2.msra.mxu0 0.0
    %2400 = vmatprep.subr.mxu0 0.0
    %2401 = vmatpush2.msra.mxu0 0.0
    %2402 = vmatprep.subr.mxu0 0.0
    %2403 = vmatpush2.msra.mxu0 0.0
    %2404 = vmatprep.subr.mxu0 0.0
    %2405 = vmatpush2.msra.mxu0 0.0
    %2406 = vmatprep.subr.mxu0 0.0
    %2407 = vmatpush2.msra.mxu0 0.0
    %2408 = vmatprep.subr.mxu0 0.0
    %2409 = vmatpush2.msra.mxu0 0.0
    %2410 = vmatprep.subr.mxu0 0.0
    %2411 = vmatpush2.msra.mxu0 0.0
    %2412 = vmatprep.subr.mxu0 0.0
    %2413 = vmatpush2.msra.mxu0 0.0
    %2414 = vmatprep.subr.mxu0 0.0
    %2415 = vmatpush2.msra.mxu0 0.0
    %2416 = vmatprep.subr.mxu0 0.0
    %2417 = vmatpush2.msra.mxu0 0.0
    %2418 = vmatprep.subr.mxu0 0.0
    %2419 = vmatpush2.msra.mxu0 0.0
    %2420 = vmatprep.subr.mxu0 0.0
    %2421 = vmatpush2.msra.mxu0 0.0
    %2422 = vmatprep.mubr.f32.mxu0 0.0
    %2423 = vmatmul.mubr.f32.gmra.mxu0 %v2356
    %v2424 = vpop.f32.mrf.mxu0
    %v2425 = vadd.f32 0.0, %v2424
    %v2426 = vpop.f32.mrf.mxu0
    %2427 = vdwg.mxu0
    %2428 = vrot.lane.b32.xlu0 %v2169, 64
    %v2429 = vpop.permute.xlu0 %2428
    %v2432 = vsel %vm279, %v2349, 0
    %2434 = vmatprep.subr.mxu0 0.0
    %2435 = vmatpush1.msra.mxu0 0.0
    %2436 = vmatprep.subr.mxu0 0.0
    %2437 = vmatpush1.msra.mxu0 0.0
    %2438 = vmatprep.subr.mxu0 0.0
    %2439 = vmatpush1.msra.mxu0 0.0
    %2440 = vmatprep.subr.mxu0 0.0
    %2441 = vmatpush1.msra.mxu0 0.0
    %2442 = vmatprep.subr.mxu0 0.0
    %2443 = vmatpush1.msra.mxu0 0.0
    %2444 = vmatprep.subr.mxu0 0.0
    %2445 = vmatpush1.msra.mxu0 0.0
    %2446 = vmatprep.subr.mxu0 0.0
    %2447 = vmatpush1.msra.mxu0 0.0
    %2448 = vmatprep.subr.mxu0 0.0
    %2449 = vmatpush1.msra.mxu0 0.0
    %2450 = vmatprep.subr.mxu0 0.0
    %2451 = vmatpush1.msra.mxu0 0.0
    %2452 = vmatprep.subr.mxu0 0.0
    %2453 = vmatpush1.msra.mxu0 0.0
    %2454 = vmatprep.subr.mxu0 0.0
    %2455 = vmatpush1.msra.mxu0 0.0
    %2456 = vmatprep.subr.mxu0 0.0
    %2457 = vmatpush1.msra.mxu0 0.0
    %2458 = vmatprep.subr.mxu0 0.0
    %2459 = vmatpush1.msra.mxu0 0.0
    %2460 = vmatprep.subr.mxu0 0.0
    %2461 = vmatpush1.msra.mxu0 0.0
    %2462 = vmatprep.subr.mxu0 0.0
    %2463 = vmatpush1.msra.mxu0 0.0
    %2464 = vmatprep.subr.mxu0 0.0
    %2465 = vmatpush1.msra.mxu0 %v2429
    %2466 = vmatprep.subr.mxu0 0.0
    %2467 = vmatpush2.msra.mxu0 0.0
    %2468 = vmatprep.subr.mxu0 0.0
    %2469 = vmatpush2.msra.mxu0 0.0
    %2470 = vmatprep.subr.mxu0 0.0
    %2471 = vmatpush2.msra.mxu0 0.0
    %2472 = vmatprep.subr.mxu0 0.0
    %2473 = vmatpush2.msra.mxu0 0.0
    %2474 = vmatprep.subr.mxu0 0.0
    %2475 = vmatpush2.msra.mxu0 0.0
    %2476 = vmatprep.subr.mxu0 0.0
    %2477 = vmatpush2.msra.mxu0 0.0
    %2478 = vmatprep.subr.mxu0 0.0
    %2479 = vmatpush2.msra.mxu0 0.0
    %2480 = vmatprep.subr.mxu0 0.0
    %2481 = vmatpush2.msra.mxu0 0.0
    %2482 = vmatprep.subr.mxu0 0.0
    %2483 = vmatpush2.msra.mxu0 0.0
    %2484 = vmatprep.subr.mxu0 0.0
    %2485 = vmatpush2.msra.mxu0 0.0
    %2486 = vmatprep.subr.mxu0 0.0
    %2487 = vmatpush2.msra.mxu0 0.0
    %2488 = vmatprep.subr.mxu0 0.0
    %2489 = vmatpush2.msra.mxu0 0.0
    %2490 = vmatprep.subr.mxu0 0.0
    %2491 = vmatpush2.msra.mxu0 0.0
    %2492 = vmatprep.subr.mxu0 0.0
    %2493 = vmatpush2.msra.mxu0 0.0
    %2494 = vmatprep.subr.mxu0 0.0
    %2495 = vmatpush2.msra.mxu0 0.0
    %2496 = vmatprep.subr.mxu0 0.0
    %2497 = vmatpush2.msra.mxu0 0.0
    %2498 = vmatprep.mubr.f32.mxu0 0.0
    %2499 = vmatmul.mubr.f32.gmra.mxu0 %v2432
    %v2500 = vpop.f32.mrf.mxu0
    %v2501 = vadd.f32 0.0, %v2500
    %v2502 = vpop.f32.mrf.mxu0
    %2503 = vdwg.mxu0
    %2504 = vrot.lane.b32.xlu0 %v2164, 120
    %v2505 = vpop.permute.xlu0 %2504
    %2506 = vrot.lane.b32.xlu0 %v2164, 88
    %v2507 = vpop.permute.xlu0 %2506
    %v2508 = vsel %vm279, %v2505, 0
    %v2510 = vsel %vm279, %v2507, 0
    %2512 = vmatprep.subr.mxu0 0.0
    %2513 = vmatpush1.xpose.msra.mxu0 0.0
    %2514 = vmatprep.subr.mxu0 0.0
    %2515 = vmatpush1.xpose.msra.mxu0 0.0
    %2516 = vmatprep.subr.mxu0 0.0
    %2517 = vmatpush1.xpose.msra.mxu0 0.0
    %2518 = vmatprep.subr.mxu0 0.0
    %2519 = vmatpush1.xpose.msra.mxu0 0.0
    %2520 = vmatprep.subr.mxu0 0.0
    %2521 = vmatpush1.xpose.msra.mxu0 0.0
    %2522 = vmatprep.subr.mxu0 0.0
    %2523 = vmatpush1.xpose.msra.mxu0 0.0
    %2524 = vmatprep.subr.mxu0 0.0
    %2525 = vmatpush1.xpose.msra.mxu0 0.0
    %2526 = vmatprep.subr.mxu0 0.0
    %2527 = vmatpush1.xpose.msra.mxu0 0.0
    %2528 = vmatprep.subr.mxu0 0.0
    %2529 = vmatpush1.xpose.msra.mxu0 0.0
    %2530 = vmatprep.subr.mxu0 0.0
    %2531 = vmatpush1.xpose.msra.mxu0 0.0
    %2532 = vmatprep.subr.mxu0 0.0
    %2533 = vmatpush1.xpose.msra.mxu0 0.0
    %2534 = vmatprep.subr.mxu0 0.0
    %2535 = vmatpush1.xpose.msra.mxu0 0.0
    %2536 = vmatprep.subr.mxu0 0.0
    %2537 = vmatpush1.xpose.msra.mxu0 0.0
    %2538 = vmatprep.subr.mxu0 0.0
    %2539 = vmatpush1.xpose.msra.mxu0 0.0
    %2540 = vmatprep.subr.mxu0 0.0
    %2541 = vmatpush1.xpose.msra.mxu0 0.0
    %2542 = vmatprep.subr.mxu0 0.0
    %2543 = vmatpush1.xpose.msra.mxu0 %v2510
    %2544 = vmatprep.subr.mxu0 0.0
    %2545 = vmatpush2.xpose.msra.mxu0 0.0
    %2546 = vmatprep.subr.mxu0 0.0
    %2547 = vmatpush2.xpose.msra.mxu0 0.0
    %2548 = vmatprep.subr.mxu0 0.0
    %2549 = vmatpush2.xpose.msra.mxu0 0.0
    %2550 = vmatprep.subr.mxu0 0.0
    %2551 = vmatpush2.xpose.msra.mxu0 0.0
    %2552 = vmatprep.subr.mxu0 0.0
    %2553 = vmatpush2.xpose.msra.mxu0 0.0
    %2554 = vmatprep.subr.mxu0 0.0
    %2555 = vmatpush2.xpose.msra.mxu0 0.0
    %2556 = vmatprep.subr.mxu0 0.0
    %2557 = vmatpush2.xpose.msra.mxu0 0.0
    %2558 = vmatprep.subr.mxu0 0.0
    %2559 = vmatpush2.xpose.msra.mxu0 0.0
    %2560 = vmatprep.subr.mxu0 0.0
    %2561 = vmatpush2.xpose.msra.mxu0 0.0
    %2562 = vmatprep.subr.mxu0 0.0
    %2563 = vmatpush2.xpose.msra.mxu0 0.0
    %2564 = vmatprep.subr.mxu0 0.0
    %2565 = vmatpush2.xpose.msra.mxu0 0.0
    %2566 = vmatprep.subr.mxu0 0.0
    %2567 = vmatpush2.xpose.msra.mxu0 0.0
    %2568 = vmatprep.subr.mxu0 0.0
    %2569 = vmatpush2.xpose.msra.mxu0 0.0
    %2570 = vmatprep.subr.mxu0 0.0
    %2571 = vmatpush2.xpose.msra.mxu0 0.0
    %2572 = vmatprep.subr.mxu0 0.0
    %2573 = vmatpush2.xpose.msra.mxu0 0.0
    %2574 = vmatprep.subr.mxu0 0.0
    %2575 = vmatpush2.xpose.msra.mxu0 0.0
    %2576 = vmatprep.mubr.f32.mxu0 0.0
    %2577 = vmatmul.mubr.f32.gmra.mxu0 %v2508
    %v2578 = vpop.f32.mrf.mxu0
    %v2579 = vadd.f32 0.0, %v2578
    %v2580 = vpop.f32.mrf.mxu0
    %2581 = vdwg.mxu0
    %2582 = vrot.lane.b32.xlu0 %v2169, 120
    %v2583 = vpop.permute.xlu0 %2582
    %2584 = vrot.lane.b32.xlu0 %v2169, 88
    %v2585 = vpop.permute.xlu0 %2584
    %v2586 = vsel %vm279, %v2583, 0
    %v2588 = vsel %vm279, %v2585, 0
    %2590 = vmatprep.subr.mxu0 0.0
    %2591 = vmatpush1.xpose.msra.mxu0 0.0
    %2592 = vmatprep.subr.mxu0 0.0
    %2593 = vmatpush1.xpose.msra.mxu0 0.0
    %2594 = vmatprep.subr.mxu0 0.0
    %2595 = vmatpush1.xpose.msra.mxu0 0.0
    %2596 = vmatprep.subr.mxu0 0.0
    %2597 = vmatpush1.xpose.msra.mxu0 0.0
    %2598 = vmatprep.subr.mxu0 0.0
    %2599 = vmatpush1.xpose.msra.mxu0 0.0
    %2600 = vmatprep.subr.mxu0 0.0
    %2601 = vmatpush1.xpose.msra.mxu0 0.0
    %2602 = vmatprep.subr.mxu0 0.0
    %2603 = vmatpush1.xpose.msra.mxu0 0.0
    %2604 = vmatprep.subr.mxu0 0.0
    %2605 = vmatpush1.xpose.msra.mxu0 0.0
    %2606 = vmatprep.subr.mxu0 0.0
    %2607 = vmatpush1.xpose.msra.mxu0 0.0
    %2608 = vmatprep.subr.mxu0 0.0
    %2609 = vmatpush1.xpose.msra.mxu0 0.0
    %2610 = vmatprep.subr.mxu0 0.0
    %2611 = vmatpush1.xpose.msra.mxu0 0.0
    %2612 = vmatprep.subr.mxu0 0.0
    %2613 = vmatpush1.xpose.msra.mxu0 0.0
    %2614 = vmatprep.subr.mxu0 0.0
    %2615 = vmatpush1.xpose.msra.mxu0 0.0
    %2616 = vmatprep.subr.mxu0 0.0
    %2617 = vmatpush1.xpose.msra.mxu0 0.0
    %2618 = vmatprep.subr.mxu0 0.0
    %2619 = vmatpush1.xpose.msra.mxu0 0.0
    %2620 = vmatprep.subr.mxu0 0.0
    %2621 = vmatpush1.xpose.msra.mxu0 %v2588
    %2622 = vmatprep.subr.mxu0 0.0
    %2623 = vmatpush2.xpose.msra.mxu0 0.0
    %2624 = vmatprep.subr.mxu0 0.0
    %2625 = vmatpush2.xpose.msra.mxu0 0.0
    %2626 = vmatprep.subr.mxu0 0.0
    %2627 = vmatpush2.xpose.msra.mxu0 0.0
    %2628 = vmatprep.subr.mxu0 0.0
    %2629 = vmatpush2.xpose.msra.mxu0 0.0
    %2630 = vmatprep.subr.mxu0 0.0
    %2631 = vmatpush2.xpose.msra.mxu0 0.0
    %2632 = vmatprep.subr.mxu0 0.0
    %2633 = vmatpush2.xpose.msra.mxu0 0.0
    %2634 = vmatprep.subr.mxu0 0.0
    %2635 = vmatpush2.xpose.msra.mxu0 0.0
    %2636 = vmatprep.subr.mxu0 0.0
    %2637 = vmatpush2.xpose.msra.mxu0 0.0
    %2638 = vmatprep.subr.mxu0 0.0
    %2639 = vmatpush2.xpose.msra.mxu0 0.0
    %2640 = vmatprep.subr.mxu0 0.0
    %2641 = vmatpush2.xpose.msra.mxu0 0.0
    %2642 = vmatprep.subr.mxu0 0.0
    %2643 = vmatpush2.xpose.msra.mxu0 0.0
    %2644 = vmatprep.subr.mxu0 0.0
    %2645 = vmatpush2.xpose.msra.mxu0 0.0
    %2646 = vmatprep.subr.mxu0 0.0
    %2647 = vmatpush2.xpose.msra.mxu0 0.0
    %2648 = vmatprep.subr.mxu0 0.0
    %2649 = vmatpush2.xpose.msra.mxu0 0.0
    %2650 = vmatprep.subr.mxu0 0.0
    %2651 = vmatpush2.xpose.msra.mxu0 0.0
    %2652 = vmatprep.subr.mxu0 0.0
    %2653 = vmatpush2.xpose.msra.mxu0 0.0
    %2654 = vmatprep.mubr.f32.mxu0 0.0
    %2655 = vmatmul.mubr.f32.gmra.mxu0 %v2586
    %v2656 = vpop.f32.mrf.mxu0
    %v2657 = vadd.f32 0.0, %v2656
    %v2658 = vpop.f32.mrf.mxu0
    %2659 = vdwg.mxu0
    %v2660 = vmul.f32 %v2579, 0.35355338
    %v2661 = vmul.f32 %v2657, 0.35355338
    %v2662 = vsel %vm279, %v2660, -inf
    %2663 = vmax.xlane.f32.xlu0 %v2662
    %v2664 = vpop.xlane.xlu0 %2663
    %v2665 = vsel %vm279, %v2661, -inf
    %2666 = vmax.xlane.f32.xlu0 %v2665
    %v2667 = vpop.xlane.xlu0 %2666
    %v2668 = vsub.f32 %v2660, %v2664
    %v2669 = vsub.f32 %v2661, %v2667
    %v2670 = vmul.f32 %v2668, 1.442695
    %v2671 = vpow.pop %v2670
    %v2672 = vmul.f32 %v2669, 1.442695
    %v2673 = vpow.pop %v2672
    %v2674 = vsel %vm279, %v2671, 0.0
    %2675 = vadd.xlane.f32.xlu0 %v2674
    %v2676 = vpop.xlane.xlu0 %2675
    %v2677 = vsel %vm279, %v2673, 0.0
    %2678 = vadd.xlane.f32.xlu0 %v2677
    %v2679 = vpop.xlane.xlu0 %2678
    %v2680 = vrcp.pop %v2676
    %v2681 = vmul.f32 %v2671, %v2680
    %v2682 = vrcp.pop %v2679
    %v2683 = vmul.f32 %v2673, %v2682
    %v2684 = vadd.f32 %v2350, %v2681
    %v2685 = vadd.f32 %v2351, %v2683
    %2686 = vrot.lane.b32.xlu0 %v2164, 56
    %v2687 = vpop.permute.xlu0 %2686
    %v2690 = vsel %vm279, %v2681, 0
    %2692 = vmatprep.subr.mxu0 0.0
    %2693 = vmatpush1.msra.mxu0 0.0
    %2694 = vmatprep.subr.mxu0 0.0
    %2695 = vmatpush1.msra.mxu0 0.0
    %2696 = vmatprep.subr.mxu0 0.0
    %2697 = vmatpush1.msra.mxu0 0.0
    %2698 = vmatprep.subr.mxu0 0.0
    %2699 = vmatpush1.msra.mxu0 0.0
    %2700 = vmatprep.subr.mxu0 0.0
    %2701 = vmatpush1.msra.mxu0 0.0
    %2702 = vmatprep.subr.mxu0 0.0
    %2703 = vmatpush1.msra.mxu0 0.0
    %2704 = vmatprep.subr.mxu0 0.0
    %2705 = vmatpush1.msra.mxu0 0.0
    %2706 = vmatprep.subr.mxu0 0.0
    %2707 = vmatpush1.msra.mxu0 0.0
    %2708 = vmatprep.subr.mxu0 0.0
    %2709 = vmatpush1.msra.mxu0 0.0
    %2710 = vmatprep.subr.mxu0 0.0
    %2711 = vmatpush1.msra.mxu0 0.0
    %2712 = vmatprep.subr.mxu0 0.0
    %2713 = vmatpush1.msra.mxu0 0.0
    %2714 = vmatprep.subr.mxu0 0.0
    %2715 = vmatpush1.msra.mxu0 0.0
    %2716 = vmatprep.subr.mxu0 0.0
    %2717 = vmatpush1.msra.mxu0 0.0
    %2718 = vmatprep.subr.mxu0 0.0
    %2719 = vmatpush1.msra.mxu0 0.0
    %2720 = vmatprep.subr.mxu0 0.0
    %2721 = vmatpush1.msra.mxu0 0.0
    %2722 = vmatprep.subr.mxu0 0.0
    %2723 = vmatpush1.msra.mxu0 %v2687
    %2724 = vmatprep.subr.mxu0 0.0
    %2725 = vmatpush2.msra.mxu0 0.0
    %2726 = vmatprep.subr.mxu0 0.0
    %2727 = vmatpush2.msra.mxu0 0.0
    %2728 = vmatprep.subr.mxu0 0.0
    %2729 = vmatpush2.msra.mxu0 0.0
    %2730 = vmatprep.subr.mxu0 0.0
    %2731 = vmatpush2.msra.mxu0 0.0
    %2732 = vmatprep.subr.mxu0 0.0
    %2733 = vmatpush2.msra.mxu0 0.0
    %2734 = vmatprep.subr.mxu0 0.0
    %2735 = vmatpush2.msra.mxu0 0.0
    %2736 = vmatprep.subr.mxu0 0.0
    %2737 = vmatpush2.msra.mxu0 0.0
    %2738 = vmatprep.subr.mxu0 0.0
    %2739 = vmatpush2.msra.mxu0 0.0
    %2740 = vmatprep.subr.mxu0 0.0
    %2741 = vmatpush2.msra.mxu0 0.0
    %2742 = vmatprep.subr.mxu0 0.0
    %2743 = vmatpush2.msra.mxu0 0.0
    %2744 = vmatprep.subr.mxu0 0.0
    %2745 = vmatpush2.msra.mxu0 0.0
    %2746 = vmatprep.subr.mxu0 0.0
    %2747 = vmatpush2.msra.mxu0 0.0
    %2748 = vmatprep.subr.mxu0 0.0
    %2749 = vmatpush2.msra.mxu0 0.0
    %2750 = vmatprep.subr.mxu0 0.0
    %2751 = vmatpush2.msra.mxu0 0.0
    %2752 = vmatprep.subr.mxu0 0.0
    %2753 = vmatpush2.msra.mxu0 0.0
    %2754 = vmatprep.subr.mxu0 0.0
    %2755 = vmatpush2.msra.mxu0 0.0
    %2756 = vmatprep.mubr.f32.mxu0 0.0
    %2757 = vmatmul.mubr.f32.gmra.mxu0 %v2690
    %v2758 = vpop.f32.mrf.mxu0
    %v2759 = vadd.f32 0.0, %v2758
    %v2760 = vpop.f32.mrf.mxu0
    %2761 = vdwg.mxu0
    %2762 = vrot.lane.b32.xlu0 %v2169, 56
    %v2763 = vpop.permute.xlu0 %2762
    %v2766 = vsel %vm279, %v2683, 0
    %2768 = vmatprep.subr.mxu0 0.0
    %2769 = vmatpush1.msra.mxu0 0.0
    %2770 = vmatprep.subr.mxu0 0.0
    %2771 = vmatpush1.msra.mxu0 0.0
    %2772 = vmatprep.subr.mxu0 0.0
    %2773 = vmatpush1.msra.mxu0 0.0
    %2774 = vmatprep.subr.mxu0 0.0
    %2775 = vmatpush1.msra.mxu0 0.0
    %2776 = vmatprep.subr.mxu0 0.0
    %2777 = vmatpush1.msra.mxu0 0.0
    %2778 = vmatprep.subr.mxu0 0.0
    %2779 = vmatpush1.msra.mxu0 0.0
    %2780 = vmatprep.subr.mxu0 0.0
    %2781 = vmatpush1.msra.mxu0 0.0
    %2782 = vmatprep.subr.mxu0 0.0
    %2783 = vmatpush1.msra.mxu0 0.0
    %2784 = vmatprep.subr.mxu0 0.0
    %2785 = vmatpush1.msra.mxu0 0.0
    %2786 = vmatprep.subr.mxu0 0.0
    %2787 = vmatpush1.msra.mxu0 0.0
    %2788 = vmatprep.subr.mxu0 0.0
    %2789 = vmatpush1.msra.mxu0 0.0
    %2790 = vmatprep.subr.mxu0 0.0
    %2791 = vmatpush1.msra.mxu0 0.0
    %2792 = vmatprep.subr.mxu0 0.0
    %2793 = vmatpush1.msra.mxu0 0.0
    %2794 = vmatprep.subr.mxu0 0.0
    %2795 = vmatpush1.msra.mxu0 0.0
    %2796 = vmatprep.subr.mxu0 0.0
    %2797 = vmatpush1.msra.mxu0 0.0
    %2798 = vmatprep.subr.mxu0 0.0
    %2799 = vmatpush1.msra.mxu0 %v2763
    %2800 = vmatprep.subr.mxu0 0.0
    %2801 = vmatpush2.msra.mxu0 0.0
    %2802 = vmatprep.subr.mxu0 0.0
    %2803 = vmatpush2.msra.mxu0 0.0
    %2804 = vmatprep.subr.mxu0 0.0
    %2805 = vmatpush2.msra.mxu0 0.0
    %2806 = vmatprep.subr.mxu0 0.0
    %2807 = vmatpush2.msra.mxu0 0.0
    %2808 = vmatprep.subr.mxu0 0.0
    %2809 = vmatpush2.msra.mxu0 0.0
    %2810 = vmatprep.subr.mxu0 0.0
    %2811 = vmatpush2.msra.mxu0 0.0
    %2812 = vmatprep.subr.mxu0 0.0
    %2813 = vmatpush2.msra.mxu0 0.0
    %2814 = vmatprep.subr.mxu0 0.0
    %2815 = vmatpush2.msra.mxu0 0.0
    %2816 = vmatprep.subr.mxu0 0.0
    %2817 = vmatpush2.msra.mxu0 0.0
    %2818 = vmatprep.subr.mxu0 0.0
    %2819 = vmatpush2.msra.mxu0 0.0
    %2820 = vmatprep.subr.mxu0 0.0
    %2821 = vmatpush2.msra.mxu0 0.0
    %2822 = vmatprep.subr.mxu0 0.0
    %2823 = vmatpush2.msra.mxu0 0.0
    %2824 = vmatprep.subr.mxu0 0.0
    %2825 = vmatpush2.msra.mxu0 0.0
    %2826 = vmatprep.subr.mxu0 0.0
    %2827 = vmatpush2.msra.mxu0 0.0
    %2828 = vmatprep.subr.mxu0 0.0
    %2829 = vmatpush2.msra.mxu0 0.0
    %2830 = vmatprep.subr.mxu0 0.0
    %2831 = vmatpush2.msra.mxu0 0.0
    %2832 = vmatprep.mubr.f32.mxu0 0.0
    %2833 = vmatmul.mubr.f32.gmra.mxu0 %v2766
    %v2834 = vpop.f32.mrf.mxu0
    %v2835 = vadd.f32 0.0, %v2834
    %v2836 = vpop.f32.mrf.mxu0
    %2837 = vdwg.mxu0
    %2838 = vrot.lane.b32.xlu0 %v2164, 112
    %v2839 = vpop.permute.xlu0 %2838
    %2840 = vrot.lane.b32.xlu0 %v2164, 80
    %v2841 = vpop.permute.xlu0 %2840
    %v2842 = vsel %vm279, %v2839, 0
    %v2844 = vsel %vm279, %v2841, 0
    %2846 = vmatprep.subr.mxu0 0.0
    %2847 = vmatpush1.xpose.msra.mxu0 0.0
    %2848 = vmatprep.subr.mxu0 0.0
    %2849 = vmatpush1.xpose.msra.mxu0 0.0
    %2850 = vmatprep.subr.mxu0 0.0
    %2851 = vmatpush1.xpose.msra.mxu0 0.0
    %2852 = vmatprep.subr.mxu0 0.0
    %2853 = vmatpush1.xpose.msra.mxu0 0.0
    %2854 = vmatprep.subr.mxu0 0.0
    %2855 = vmatpush1.xpose.msra.mxu0 0.0
    %2856 = vmatprep.subr.mxu0 0.0
    %2857 = vmatpush1.xpose.msra.mxu0 0.0
    %2858 = vmatprep.subr.mxu0 0.0
    %2859 = vmatpush1.xpose.msra.mxu0 0.0
    %2860 = vmatprep.subr.mxu0 0.0
    %2861 = vmatpush1.xpose.msra.mxu0 0.0
    %2862 = vmatprep.subr.mxu0 0.0
    %2863 = vmatpush1.xpose.msra.mxu0 0.0
    %2864 = vmatprep.subr.mxu0 0.0
    %2865 = vmatpush1.xpose.msra.mxu0 0.0
    %2866 = vmatprep.subr.mxu0 0.0
    %2867 = vmatpush1.xpose.msra.mxu0 0.0
    %2868 = vmatprep.subr.mxu0 0.0
    %2869 = vmatpush1.xpose.msra.mxu0 0.0
    %2870 = vmatprep.subr.mxu0 0.0
    %2871 = vmatpush1.xpose.msra.mxu0 0.0
    %2872 = vmatprep.subr.mxu0 0.0
    %2873 = vmatpush1.xpose.msra.mxu0 0.0
    %2874 = vmatprep.subr.mxu0 0.0
    %2875 = vmatpush1.xpose.msra.mxu0 0.0
    %2876 = vmatprep.subr.mxu0 0.0
    %2877 = vmatpush1.xpose.msra.mxu0 %v2844
    %2878 = vmatprep.subr.mxu0 0.0
    %2879 = vmatpush2.xpose.msra.mxu0 0.0
    %2880 = vmatprep.subr.mxu0 0.0
    %2881 = vmatpush2.xpose.msra.mxu0 0.0
    %2882 = vmatprep.subr.mxu0 0.0
    %2883 = vmatpush2.xpose.msra.mxu0 0.0
    %2884 = vmatprep.subr.mxu0 0.0
    %2885 = vmatpush2.xpose.msra.mxu0 0.0
    %2886 = vmatprep.subr.mxu0 0.0
    %2887 = vmatpush2.xpose.msra.mxu0 0.0
    %2888 = vmatprep.subr.mxu0 0.0
    %2889 = vmatpush2.xpose.msra.mxu0 0.0
    %2890 = vmatprep.subr.mxu0 0.0
    %2891 = vmatpush2.xpose.msra.mxu0 0.0
    %2892 = vmatprep.subr.mxu0 0.0
    %2893 = vmatpush2.xpose.msra.mxu0 0.0
    %2894 = vmatprep.subr.mxu0 0.0
    %2895 = vmatpush2.xpose.msra.mxu0 0.0
    %2896 = vmatprep.subr.mxu0 0.0
    %2897 = vmatpush2.xpose.msra.mxu0 0.0
    %2898 = vmatprep.subr.mxu0 0.0
    %2899 = vmatpush2.xpose.msra.mxu0 0.0
    %2900 = vmatprep.subr.mxu0 0.0
    %2901 = vmatpush2.xpose.msra.mxu0 0.0
    %2902 = vmatprep.subr.mxu0 0.0
    %2903 = vmatpush2.xpose.msra.mxu0 0.0
    %2904 = vmatprep.subr.mxu0 0.0
    %2905 = vmatpush2.xpose.msra.mxu0 0.0
    %2906 = vmatprep.subr.mxu0 0.0
    %2907 = vmatpush2.xpose.msra.mxu0 0.0
    %2908 = vmatprep.subr.mxu0 0.0
    %2909 = vmatpush2.xpose.msra.mxu0 0.0
    %2910 = vmatprep.mubr.f32.mxu0 0.0
    %2911 = vmatmul.mubr.f32.gmra.mxu0 %v2842
    %v2912 = vpop.f32.mrf.mxu0
    %v2913 = vadd.f32 0.0, %v2912
    %v2914 = vpop.f32.mrf.mxu0
    %2915 = vdwg.mxu0
    %2916 = vrot.lane.b32.xlu0 %v2169, 112
    %v2917 = vpop.permute.xlu0 %2916
    %2918 = vrot.lane.b32.xlu0 %v2169, 80
    %v2919 = vpop.permute.xlu0 %2918
    %v2920 = vsel %vm279, %v2917, 0
    %v2922 = vsel %vm279, %v2919, 0
    %2924 = vmatprep.subr.mxu0 0.0
    %2925 = vmatpush1.xpose.msra.mxu0 0.0
    %2926 = vmatprep.subr.mxu0 0.0
    %2927 = vmatpush1.xpose.msra.mxu0 0.0
    %2928 = vmatprep.subr.mxu0 0.0
    %2929 = vmatpush1.xpose.msra.mxu0 0.0
    %2930 = vmatprep.subr.mxu0 0.0
    %2931 = vmatpush1.xpose.msra.mxu0 0.0
    %2932 = vmatprep.subr.mxu0 0.0
    %2933 = vmatpush1.xpose.msra.mxu0 0.0
    %2934 = vmatprep.subr.mxu0 0.0
    %2935 = vmatpush1.xpose.msra.mxu0 0.0
    %2936 = vmatprep.subr.mxu0 0.0
    %2937 = vmatpush1.xpose.msra.mxu0 0.0
    %2938 = vmatprep.subr.mxu0 0.0
    %2939 = vmatpush1.xpose.msra.mxu0 0.0
    %2940 = vmatprep.subr.mxu0 0.0
    %2941 = vmatpush1.xpose.msra.mxu0 0.0
    %2942 = vmatprep.subr.mxu0 0.0
    %2943 = vmatpush1.xpose.msra.mxu0 0.0
    %2944 = vmatprep.subr.mxu0 0.0
    %2945 = vmatpush1.xpose.msra.mxu0 0.0
    %2946 = vmatprep.subr.mxu0 0.0
    %2947 = vmatpush1.xpose.msra.mxu0 0.0
    %2948 = vmatprep.subr.mxu0 0.0
    %2949 = vmatpush1.xpose.msra.mxu0 0.0
    %2950 = vmatprep.subr.mxu0 0.0
    %2951 = vmatpush1.xpose.msra.mxu0 0.0
    %2952 = vmatprep.subr.mxu0 0.0
    %2953 = vmatpush1.xpose.msra.mxu0 0.0
    %2954 = vmatprep.subr.mxu0 0.0
    %2955 = vmatpush1.xpose.msra.mxu0 %v2922
    %2956 = vmatprep.subr.mxu0 0.0
    %2957 = vmatpush2.xpose.msra.mxu0 0.0
    %2958 = vmatprep.subr.mxu0 0.0
    %2959 = vmatpush2.xpose.msra.mxu0 0.0
    %2960 = vmatprep.subr.mxu0 0.0
    %2961 = vmatpush2.xpose.msra.mxu0 0.0
    %2962 = vmatprep.subr.mxu0 0.0
    %2963 = vmatpush2.xpose.msra.mxu0 0.0
    %2964 = vmatprep.subr.mxu0 0.0
    %2965 = vmatpush2.xpose.msra.mxu0 0.0
    %2966 = vmatprep.subr.mxu0 0.0
    %2967 = vmatpush2.xpose.msra.mxu0 0.0
    %2968 = vmatprep.subr.mxu0 0.0
    %2969 = vmatpush2.xpose.msra.mxu0 0.0
    %2970 = vmatprep.subr.mxu0 0.0
    %2971 = vmatpush2.xpose.msra.mxu0 0.0
    %2972 = vmatprep.subr.mxu0 0.0
    %2973 = vmatpush2.xpose.msra.mxu0 0.0
    %2974 = vmatprep.subr.mxu0 0.0
    %2975 = vmatpush2.xpose.msra.mxu0 0.0
    %2976 = vmatprep.subr.mxu0 0.0
    %2977 = vmatpush2.xpose.msra.mxu0 0.0
    %2978 = vmatprep.subr.mxu0 0.0
    %2979 = vmatpush2.xpose.msra.mxu0 0.0
    %2980 = vmatprep.subr.mxu0 0.0
    %2981 = vmatpush2.xpose.msra.mxu0 0.0
    %2982 = vmatprep.subr.mxu0 0.0
    %2983 = vmatpush2.xpose.msra.mxu0 0.0
    %2984 = vmatprep.subr.mxu0 0.0
    %2985 = vmatpush2.xpose.msra.mxu0 0.0
    %2986 = vmatprep.subr.mxu0 0.0
    %2987 = vmatpush2.xpose.msra.mxu0 0.0
    %2988 = vmatprep.mubr.f32.mxu0 0.0
    %2989 = vmatmul.mubr.f32.gmra.mxu0 %v2920
    %v2990 = vpop.f32.mrf.mxu0
    %v2991 = vadd.f32 0.0, %v2990
    %v2992 = vpop.f32.mrf.mxu0
    %2993 = vdwg.mxu0
    %v2994 = vmul.f32 %v2913, 0.35355338
    %v2995 = vmul.f32 %v2991, 0.35355338
    %v2996 = vsel %vm279, %v2994, -inf
    %2997 = vmax.xlane.f32.xlu0 %v2996
    %v2998 = vpop.xlane.xlu0 %2997
    %v2999 = vsel %vm279, %v2995, -inf
    %3000 = vmax.xlane.f32.xlu0 %v2999
    %v3001 = vpop.xlane.xlu0 %3000
    %v3002 = vsub.f32 %v2994, %v2998
    %v3003 = vsub.f32 %v2995, %v3001
    %v3004 = vmul.f32 %v3002, 1.442695
    %v3005 = vpow.pop %v3004
    %v3006 = vmul.f32 %v3003, 1.442695
    %v3007 = vpow.pop %v3006
    %v3008 = vsel %vm279, %v3005, 0.0
    %3009 = vadd.xlane.f32.xlu0 %v3008
    %v3010 = vpop.xlane.xlu0 %3009
    %v3011 = vsel %vm279, %v3007, 0.0
    %3012 = vadd.xlane.f32.xlu0 %v3011
    %v3013 = vpop.xlane.xlu0 %3012
    %v3014 = vrcp.pop %v3010
    %v3015 = vmul.f32 %v3005, %v3014
    %v3016 = vrcp.pop %v3013
    %v3017 = vmul.f32 %v3007, %v3016
    %v3018 = vadd.f32 %v2684, %v3015
    %v3019 = vadd.f32 %v2685, %v3017
    %3020 = vrot.lane.b32.xlu0 %v2164, 48
    %v3021 = vpop.permute.xlu0 %3020
    %v3024 = vsel %vm279, %v3015, 0
    %3026 = vmatprep.subr.mxu0 0.0
    %3027 = vmatpush1.msra.mxu0 0.0
    %3028 = vmatprep.subr.mxu0 0.0
    %3029 = vmatpush1.msra.mxu0 0.0
    %3030 = vmatprep.subr.mxu0 0.0
    %3031 = vmatpush1.msra.mxu0 0.0
    %3032 = vmatprep.subr.mxu0 0.0
    %3033 = vmatpush1.msra.mxu0 0.0
    %3034 = vmatprep.subr.mxu0 0.0
    %3035 = vmatpush1.msra.mxu0 0.0
    %3036 = vmatprep.subr.mxu0 0.0
    %3037 = vmatpush1.msra.mxu0 0.0
    %3038 = vmatprep.subr.mxu0 0.0
    %3039 = vmatpush1.msra.mxu0 0.0
    %3040 = vmatprep.subr.mxu0 0.0
    %3041 = vmatpush1.msra.mxu0 0.0
    %3042 = vmatprep.subr.mxu0 0.0
    %3043 = vmatpush1.msra.mxu0 0.0
    %3044 = vmatprep.subr.mxu0 0.0
    %3045 = vmatpush1.msra.mxu0 0.0
    %3046 = vmatprep.subr.mxu0 0.0
    %3047 = vmatpush1.msra.mxu0 0.0
    %3048 = vmatprep.subr.mxu0 0.0
    %3049 = vmatpush1.msra.mxu0 0.0
    %3050 = vmatprep.subr.mxu0 0.0
    %3051 = vmatpush1.msra.mxu0 0.0
    %3052 = vmatprep.subr.mxu0 0.0
    %3053 = vmatpush1.msra.mxu0 0.0
    %3054 = vmatprep.subr.mxu0 0.0
    %3055 = vmatpush1.msra.mxu0 0.0
    %3056 = vmatprep.subr.mxu0 0.0
    %3057 = vmatpush1.msra.mxu0 %v3021
    %3058 = vmatprep.subr.mxu0 0.0
    %3059 = vmatpush2.msra.mxu0 0.0
    %3060 = vmatprep.subr.mxu0 0.0
    %3061 = vmatpush2.msra.mxu0 0.0
    %3062 = vmatprep.subr.mxu0 0.0
    %3063 = vmatpush2.msra.mxu0 0.0
    %3064 = vmatprep.subr.mxu0 0.0
    %3065 = vmatpush2.msra.mxu0 0.0
    %3066 = vmatprep.subr.mxu0 0.0
    %3067 = vmatpush2.msra.mxu0 0.0
    %3068 = vmatprep.subr.mxu0 0.0
    %3069 = vmatpush2.msra.mxu0 0.0
    %3070 = vmatprep.subr.mxu0 0.0
    %3071 = vmatpush2.msra.mxu0 0.0
    %3072 = vmatprep.subr.mxu0 0.0
    %3073 = vmatpush2.msra.mxu0 0.0
    %3074 = vmatprep.subr.mxu0 0.0
    %3075 = vmatpush2.msra.mxu0 0.0
    %3076 = vmatprep.subr.mxu0 0.0
    %3077 = vmatpush2.msra.mxu0 0.0
    %3078 = vmatprep.subr.mxu0 0.0
    %3079 = vmatpush2.msra.mxu0 0.0
    %3080 = vmatprep.subr.mxu0 0.0
    %3081 = vmatpush2.msra.mxu0 0.0
    %3082 = vmatprep.subr.mxu0 0.0
    %3083 = vmatpush2.msra.mxu0 0.0
    %3084 = vmatprep.subr.mxu0 0.0
    %3085 = vmatpush2.msra.mxu0 0.0
    %3086 = vmatprep.subr.mxu0 0.0
    %3087 = vmatpush2.msra.mxu0 0.0
    %3088 = vmatprep.subr.mxu0 0.0
    %3089 = vmatpush2.msra.mxu0 0.0
    %3090 = vmatprep.mubr.f32.mxu0 0.0
    %3091 = vmatmul.mubr.f32.gmra.mxu0 %v3024
    %v3092 = vpop.f32.mrf.mxu0
    %v3093 = vadd.f32 0.0, %v3092
    %v3094 = vpop.f32.mrf.mxu0
    %3095 = vdwg.mxu0
    %3096 = vrot.lane.b32.xlu0 %v2169, 48
    %v3097 = vpop.permute.xlu0 %3096
    %v3100 = vsel %vm279, %v3017, 0
    %3102 = vmatprep.subr.mxu0 0.0
    %3103 = vmatpush1.msra.mxu0 0.0
    %3104 = vmatprep.subr.mxu0 0.0
    %3105 = vmatpush1.msra.mxu0 0.0
    %3106 = vmatprep.subr.mxu0 0.0
    %3107 = vmatpush1.msra.mxu0 0.0
    %3108 = vmatprep.subr.mxu0 0.0
    %3109 = vmatpush1.msra.mxu0 0.0
    %3110 = vmatprep.subr.mxu0 0.0
    %3111 = vmatpush1.msra.mxu0 0.0
    %3112 = vmatprep.subr.mxu0 0.0
    %3113 = vmatpush1.msra.mxu0 0.0
    %3114 = vmatprep.subr.mxu0 0.0
    %3115 = vmatpush1.msra.mxu0 0.0
    %3116 = vmatprep.subr.mxu0 0.0
    %3117 = vmatpush1.msra.mxu0 0.0
    %3118 = vmatprep.subr.mxu0 0.0
    %3119 = vmatpush1.msra.mxu0 0.0
    %3120 = vmatprep.subr.mxu0 0.0
    %3121 = vmatpush1.msra.mxu0 0.0
    %3122 = vmatprep.subr.mxu0 0.0
    %3123 = vmatpush1.msra.mxu0 0.0
    %3124 = vmatprep.subr.mxu0 0.0
    %3125 = vmatpush1.msra.mxu0 0.0
    %3126 = vmatprep.subr.mxu0 0.0
    %3127 = vmatpush1.msra.mxu0 0.0
    %3128 = vmatprep.subr.mxu0 0.0
    %3129 = vmatpush1.msra.mxu0 0.0
    %3130 = vmatprep.subr.mxu0 0.0
    %3131 = vmatpush1.msra.mxu0 0.0
    %3132 = vmatprep.subr.mxu0 0.0
    %3133 = vmatpush1.msra.mxu0 %v3097
    %3134 = vmatprep.subr.mxu0 0.0
    %3135 = vmatpush2.msra.mxu0 0.0
    %3136 = vmatprep.subr.mxu0 0.0
    %3137 = vmatpush2.msra.mxu0 0.0
    %3138 = vmatprep.subr.mxu0 0.0
    %3139 = vmatpush2.msra.mxu0 0.0
    %3140 = vmatprep.subr.mxu0 0.0
    %3141 = vmatpush2.msra.mxu0 0.0
    %3142 = vmatprep.subr.mxu0 0.0
    %3143 = vmatpush2.msra.mxu0 0.0
    %3144 = vmatprep.subr.mxu0 0.0
    %3145 = vmatpush2.msra.mxu0 0.0
    %3146 = vmatprep.subr.mxu0 0.0
    %3147 = vmatpush2.msra.mxu0 0.0
    %3148 = vmatprep.subr.mxu0 0.0
    %3149 = vmatpush2.msra.mxu0 0.0
    %3150 = vmatprep.subr.mxu0 0.0
    %3151 = vmatpush2.msra.mxu0 0.0
    %3152 = vmatprep.subr.mxu0 0.0
    %3153 = vmatpush2.msra.mxu0 0.0
    %3154 = vmatprep.subr.mxu0 0.0
    %3155 = vmatpush2.msra.mxu0 0.0
    %3156 = vmatprep.subr.mxu0 0.0
    %3157 = vmatpush2.msra.mxu0 0.0
    %3158 = vmatprep.subr.mxu0 0.0
    %3159 = vmatpush2.msra.mxu0 0.0
    %3160 = vmatprep.subr.mxu0 0.0
    %3161 = vmatpush2.msra.mxu0 0.0
    %3162 = vmatprep.subr.mxu0 0.0
    %3163 = vmatpush2.msra.mxu0 0.0
    %3164 = vmatprep.subr.mxu0 0.0
    %3165 = vmatpush2.msra.mxu0 0.0
    %3166 = vmatprep.mubr.f32.mxu0 0.0
    %3167 = vmatmul.mubr.f32.gmra.mxu0 %v3100
    %v3168 = vpop.f32.mrf.mxu0
    %v3169 = vadd.f32 0.0, %v3168
    %v3170 = vpop.f32.mrf.mxu0
    %3171 = vdwg.mxu0
    %3172 = vrot.lane.b32.xlu0 %v2164, 104
    %v3173 = vpop.permute.xlu0 %3172
    %3174 = vrot.lane.b32.xlu0 %v2164, 72
    %v3175 = vpop.permute.xlu0 %3174
    %v3176 = vsel %vm279, %v3173, 0
    %v3178 = vsel %vm279, %v3175, 0
    %3180 = vmatprep.subr.mxu0 0.0
    %3181 = vmatpush1.xpose.msra.mxu0 0.0
    %3182 = vmatprep.subr.mxu0 0.0
    %3183 = vmatpush1.xpose.msra.mxu0 0.0
    %3184 = vmatprep.subr.mxu0 0.0
    %3185 = vmatpush1.xpose.msra.mxu0 0.0
    %3186 = vmatprep.subr.mxu0 0.0
    %3187 = vmatpush1.xpose.msra.mxu0 0.0
    %3188 = vmatprep.subr.mxu0 0.0
    %3189 = vmatpush1.xpose.msra.mxu0 0.0
    %3190 = vmatprep.subr.mxu0 0.0
    %3191 = vmatpush1.xpose.msra.mxu0 0.0
    %3192 = vmatprep.subr.mxu0 0.0
    %3193 = vmatpush1.xpose.msra.mxu0 0.0
    %3194 = vmatprep.subr.mxu0 0.0
    %3195 = vmatpush1.xpose.msra.mxu0 0.0
    %3196 = vmatprep.subr.mxu0 0.0
    %3197 = vmatpush1.xpose.msra.mxu0 0.0
    %3198 = vmatprep.subr.mxu0 0.0
    %3199 = vmatpush1.xpose.msra.mxu0 0.0
    %3200 = vmatprep.subr.mxu0 0.0
    %3201 = vmatpush1.xpose.msra.mxu0 0.0
    %3202 = vmatprep.subr.mxu0 0.0
    %3203 = vmatpush1.xpose.msra.mxu0 0.0
    %3204 = vmatprep.subr.mxu0 0.0
    %3205 = vmatpush1.xpose.msra.mxu0 0.0
    %3206 = vmatprep.subr.mxu0 0.0
    %3207 = vmatpush1.xpose.msra.mxu0 0.0
    %3208 = vmatprep.subr.mxu0 0.0
    %3209 = vmatpush1.xpose.msra.mxu0 0.0
    %3210 = vmatprep.subr.mxu0 0.0
    %3211 = vmatpush1.xpose.msra.mxu0 %v3178
    %3212 = vmatprep.subr.mxu0 0.0
    %3213 = vmatpush2.xpose.msra.mxu0 0.0
    %3214 = vmatprep.subr.mxu0 0.0
    %3215 = vmatpush2.xpose.msra.mxu0 0.0
    %3216 = vmatprep.subr.mxu0 0.0
    %3217 = vmatpush2.xpose.msra.mxu0 0.0
    %3218 = vmatprep.subr.mxu0 0.0
    %3219 = vmatpush2.xpose.msra.mxu0 0.0
    %3220 = vmatprep.subr.mxu0 0.0
    %3221 = vmatpush2.xpose.msra.mxu0 0.0
    %3222 = vmatprep.subr.mxu0 0.0
    %3223 = vmatpush2.xpose.msra.mxu0 0.0
    %3224 = vmatprep.subr.mxu0 0.0
    %3225 = vmatpush2.xpose.msra.mxu0 0.0
    %3226 = vmatprep.subr.mxu0 0.0
    %3227 = vmatpush2.xpose.msra.mxu0 0.0
    %3228 = vmatprep.subr.mxu0 0.0
    %3229 = vmatpush2.xpose.msra.mxu0 0.0
    %3230 = vmatprep.subr.mxu0 0.0
    %3231 = vmatpush2.xpose.msra.mxu0 0.0
    %3232 = vmatprep.subr.mxu0 0.0
    %3233 = vmatpush2.xpose.msra.mxu0 0.0
    %3234 = vmatprep.subr.mxu0 0.0
    %3235 = vmatpush2.xpose.msra.mxu0 0.0
    %3236 = vmatprep.subr.mxu0 0.0
    %3237 = vmatpush2.xpose.msra.mxu0 0.0
    %3238 = vmatprep.subr.mxu0 0.0
    %3239 = vmatpush2.xpose.msra.mxu0 0.0
    %3240 = vmatprep.subr.mxu0 0.0
    %3241 = vmatpush2.xpose.msra.mxu0 0.0
    %3242 = vmatprep.subr.mxu0 0.0
    %3243 = vmatpush2.xpose.msra.mxu0 0.0
    %3244 = vmatprep.mubr.f32.mxu0 0.0
    %3245 = vmatmul.mubr.f32.gmra.mxu0 %v3176
    %v3246 = vpop.f32.mrf.mxu0
    %v3247 = vadd.f32 0.0, %v3246
    %v3248 = vpop.f32.mrf.mxu0
    %3249 = vdwg.mxu0
    %3250 = vrot.lane.b32.xlu0 %v2169, 104
    %v3251 = vpop.permute.xlu0 %3250
    %3252 = vrot.lane.b32.xlu0 %v2169, 72
    %v3253 = vpop.permute.xlu0 %3252
    %v3254 = vsel %vm279, %v3251, 0
    %v3256 = vsel %vm279, %v3253, 0
    %3258 = vmatprep.subr.mxu0 0.0
    %3259 = vmatpush1.xpose.msra.mxu0 0.0
    %3260 = vmatprep.subr.mxu0 0.0
    %3261 = vmatpush1.xpose.msra.mxu0 0.0
    %3262 = vmatprep.subr.mxu0 0.0
    %3263 = vmatpush1.xpose.msra.mxu0 0.0
    %3264 = vmatprep.subr.mxu0 0.0
    %3265 = vmatpush1.xpose.msra.mxu0 0.0
    %3266 = vmatprep.subr.mxu0 0.0
    %3267 = vmatpush1.xpose.msra.mxu0 0.0
    %3268 = vmatprep.subr.mxu0 0.0
    %3269 = vmatpush1.xpose.msra.mxu0 0.0
    %3270 = vmatprep.subr.mxu0 0.0
    %3271 = vmatpush1.xpose.msra.mxu0 0.0
    %3272 = vmatprep.subr.mxu0 0.0
    %3273 = vmatpush1.xpose.msra.mxu0 0.0
    %3274 = vmatprep.subr.mxu0 0.0
    %3275 = vmatpush1.xpose.msra.mxu0 0.0
    %3276 = vmatprep.subr.mxu0 0.0
    %3277 = vmatpush1.xpose.msra.mxu0 0.0
    %3278 = vmatprep.subr.mxu0 0.0
    %3279 = vmatpush1.xpose.msra.mxu0 0.0
    %3280 = vmatprep.subr.mxu0 0.0
    %3281 = vmatpush1.xpose.msra.mxu0 0.0
    %3282 = vmatprep.subr.mxu0 0.0
    %3283 = vmatpush1.xpose.msra.mxu0 0.0
    %3284 = vmatprep.subr.mxu0 0.0
    %3285 = vmatpush1.xpose.msra.mxu0 0.0
    %3286 = vmatprep.subr.mxu0 0.0
    %3287 = vmatpush1.xpose.msra.mxu0 0.0
    %3288 = vmatprep.subr.mxu0 0.0
    %3289 = vmatpush1.xpose.msra.mxu0 %v3256
    %3290 = vmatprep.subr.mxu0 0.0
    %3291 = vmatpush2.xpose.msra.mxu0 0.0
    %3292 = vmatprep.subr.mxu0 0.0
    %3293 = vmatpush2.xpose.msra.mxu0 0.0
    %3294 = vmatprep.subr.mxu0 0.0
    %3295 = vmatpush2.xpose.msra.mxu0 0.0
    %3296 = vmatprep.subr.mxu0 0.0
    %3297 = vmatpush2.xpose.msra.mxu0 0.0
    %3298 = vmatprep.subr.mxu0 0.0
    %3299 = vmatpush2.xpose.msra.mxu0 0.0
    %3300 = vmatprep.subr.mxu0 0.0
    %3301 = vmatpush2.xpose.msra.mxu0 0.0
    %3302 = vmatprep.subr.mxu0 0.0
    %3303 = vmatpush2.xpose.msra.mxu0 0.0
    %3304 = vmatprep.subr.mxu0 0.0
    %3305 = vmatpush2.xpose.msra.mxu0 0.0
    %3306 = vmatprep.subr.mxu0 0.0
    %3307 = vmatpush2.xpose.msra.mxu0 0.0
    %3308 = vmatprep.subr.mxu0 0.0
    %3309 = vmatpush2.xpose.msra.mxu0 0.0
    %3310 = vmatprep.subr.mxu0 0.0
    %3311 = vmatpush2.xpose.msra.mxu0 0.0
    %3312 = vmatprep.subr.mxu0 0.0
    %3313 = vmatpush2.xpose.msra.mxu0 0.0
    %3314 = vmatprep.subr.mxu0 0.0
    %3315 = vmatpush2.xpose.msra.mxu0 0.0
    %3316 = vmatprep.subr.mxu0 0.0
    %3317 = vmatpush2.xpose.msra.mxu0 0.0
    %3318 = vmatprep.subr.mxu0 0.0
    %3319 = vmatpush2.xpose.msra.mxu0 0.0
    %3320 = vmatprep.subr.mxu0 0.0
    %3321 = vmatpush2.xpose.msra.mxu0 0.0
    %3322 = vmatprep.mubr.f32.mxu0 0.0
    %3323 = vmatmul.mubr.f32.gmra.mxu0 %v3254
    %v3324 = vpop.f32.mrf.mxu0
    %v3325 = vadd.f32 0.0, %v3324
    %v3326 = vpop.f32.mrf.mxu0
    %3327 = vdwg.mxu0
    %v3328 = vmul.f32 %v3247, 0.35355338
    %v3329 = vmul.f32 %v3325, 0.35355338
    %v3330 = vsel %vm279, %v3328, -inf
    %3331 = vmax.xlane.f32.xlu0 %v3330
    %v3332 = vpop.xlane.xlu0 %3331
    %v3333 = vsel %vm279, %v3329, -inf
    %3334 = vmax.xlane.f32.xlu0 %v3333
    %v3335 = vpop.xlane.xlu0 %3334
    %v3336 = vsub.f32 %v3328, %v3332
    %v3337 = vsub.f32 %v3329, %v3335
    %v3338 = vmul.f32 %v3336, 1.442695
    %v3339 = vpow.pop %v3338
    %v3340 = vmul.f32 %v3337, 1.442695
    %v3341 = vpow.pop %v3340
    %v3342 = vsel %vm279, %v3339, 0.0
    %3343 = vadd.xlane.f32.xlu0 %v3342
    %v3344 = vpop.xlane.xlu0 %3343
    %v3345 = vsel %vm279, %v3341, 0.0
    %3346 = vadd.xlane.f32.xlu0 %v3345
    %v3347 = vpop.xlane.xlu0 %3346
    %v3348 = vrcp.pop %v3344
    %v3349 = vmul.f32 %v3339, %v3348
    %v3350 = vrcp.pop %v3347
    %v3351 = vmul.f32 %v3341, %v3350
    %v3352 = vadd.f32 %v3018, %v3349
    %v3353 = vadd.f32 %v3019, %v3351
    %3354 = vrot.lane.b32.xlu0 %v2164, 40
    %v3355 = vpop.permute.xlu0 %3354
    %v3358 = vsel %vm279, %v3349, 0
    %3360 = vmatprep.subr.mxu0 0.0
    %3361 = vmatpush1.msra.mxu0 0.0
    %3362 = vmatprep.subr.mxu0 0.0
    %3363 = vmatpush1.msra.mxu0 0.0
    %3364 = vmatprep.subr.mxu0 0.0
    %3365 = vmatpush1.msra.mxu0 0.0
    %3366 = vmatprep.subr.mxu0 0.0
    %3367 = vmatpush1.msra.mxu0 0.0
    %3368 = vmatprep.subr.mxu0 0.0
    %3369 = vmatpush1.msra.mxu0 0.0
    %3370 = vmatprep.subr.mxu0 0.0
    %3371 = vmatpush1.msra.mxu0 0.0
    %3372 = vmatprep.subr.mxu0 0.0
    %3373 = vmatpush1.msra.mxu0 0.0
    %3374 = vmatprep.subr.mxu0 0.0
    %3375 = vmatpush1.msra.mxu0 0.0
    %3376 = vmatprep.subr.mxu0 0.0
    %3377 = vmatpush1.msra.mxu0 0.0
    %3378 = vmatprep.subr.mxu0 0.0
    %3379 = vmatpush1.msra.mxu0 0.0
    %3380 = vmatprep.subr.mxu0 0.0
    %3381 = vmatpush1.msra.mxu0 0.0
    %3382 = vmatprep.subr.mxu0 0.0
    %3383 = vmatpush1.msra.mxu0 0.0
    %3384 = vmatprep.subr.mxu0 0.0
    %3385 = vmatpush1.msra.mxu0 0.0
    %3386 = vmatprep.subr.mxu0 0.0
    %3387 = vmatpush1.msra.mxu0 0.0
    %3388 = vmatprep.subr.mxu0 0.0
    %3389 = vmatpush1.msra.mxu0 0.0
    %3390 = vmatprep.subr.mxu0 0.0
    %3391 = vmatpush1.msra.mxu0 %v3355
    %3392 = vmatprep.subr.mxu0 0.0
    %3393 = vmatpush2.msra.mxu0 0.0
    %3394 = vmatprep.subr.mxu0 0.0
    %3395 = vmatpush2.msra.mxu0 0.0
    %3396 = vmatprep.subr.mxu0 0.0
    %3397 = vmatpush2.msra.mxu0 0.0
    %3398 = vmatprep.subr.mxu0 0.0
    %3399 = vmatpush2.msra.mxu0 0.0
    %3400 = vmatprep.subr.mxu0 0.0
    %3401 = vmatpush2.msra.mxu0 0.0
    %3402 = vmatprep.subr.mxu0 0.0
    %3403 = vmatpush2.msra.mxu0 0.0
    %3404 = vmatprep.subr.mxu0 0.0
    %3405 = vmatpush2.msra.mxu0 0.0
    %3406 = vmatprep.subr.mxu0 0.0
    %3407 = vmatpush2.msra.mxu0 0.0
    %3408 = vmatprep.subr.mxu0 0.0
    %3409 = vmatpush2.msra.mxu0 0.0
    %3410 = vmatprep.subr.mxu0 0.0
    %3411 = vmatpush2.msra.mxu0 0.0
    %3412 = vmatprep.subr.mxu0 0.0
    %3413 = vmatpush2.msra.mxu0 0.0
    %3414 = vmatprep.subr.mxu0 0.0
    %3415 = vmatpush2.msra.mxu0 0.0
    %3416 = vmatprep.subr.mxu0 0.0
    %3417 = vmatpush2.msra.mxu0 0.0
    %3418 = vmatprep.subr.mxu0 0.0
    %3419 = vmatpush2.msra.mxu0 0.0
    %3420 = vmatprep.subr.mxu0 0.0
    %3421 = vmatpush2.msra.mxu0 0.0
    %3422 = vmatprep.subr.mxu0 0.0
    %3423 = vmatpush2.msra.mxu0 0.0
    %3424 = vmatprep.mubr.f32.mxu0 0.0
    %3425 = vmatmul.mubr.f32.gmra.mxu0 %v3358
    %v3426 = vpop.f32.mrf.mxu0
    %v3427 = vadd.f32 0.0, %v3426
    %v3428 = vpop.f32.mrf.mxu0
    %3429 = vdwg.mxu0
    %3430 = vrot.lane.b32.xlu0 %v2169, 40
    %v3431 = vpop.permute.xlu0 %3430
    %v3434 = vsel %vm279, %v3351, 0
    %3436 = vmatprep.subr.mxu0 0.0
    %3437 = vmatpush1.msra.mxu0 0.0
    %3438 = vmatprep.subr.mxu0 0.0
    %3439 = vmatpush1.msra.mxu0 0.0
    %3440 = vmatprep.subr.mxu0 0.0
    %3441 = vmatpush1.msra.mxu0 0.0
    %3442 = vmatprep.subr.mxu0 0.0
    %3443 = vmatpush1.msra.mxu0 0.0
    %3444 = vmatprep.subr.mxu0 0.0
    %3445 = vmatpush1.msra.mxu0 0.0
    %3446 = vmatprep.subr.mxu0 0.0
    %3447 = vmatpush1.msra.mxu0 0.0
    %3448 = vmatprep.subr.mxu0 0.0
    %3449 = vmatpush1.msra.mxu0 0.0
    %3450 = vmatprep.subr.mxu0 0.0
    %3451 = vmatpush1.msra.mxu0 0.0
    %3452 = vmatprep.subr.mxu0 0.0
    %3453 = vmatpush1.msra.mxu0 0.0
    %3454 = vmatprep.subr.mxu0 0.0
    %3455 = vmatpush1.msra.mxu0 0.0
    %3456 = vmatprep.subr.mxu0 0.0
    %3457 = vmatpush1.msra.mxu0 0.0
    %3458 = vmatprep.subr.mxu0 0.0
    %3459 = vmatpush1.msra.mxu0 0.0
    %3460 = vmatprep.subr.mxu0 0.0
    %3461 = vmatpush1.msra.mxu0 0.0
    %3462 = vmatprep.subr.mxu0 0.0
    %3463 = vmatpush1.msra.mxu0 0.0
    %3464 = vmatprep.subr.mxu0 0.0
    %3465 = vmatpush1.msra.mxu0 0.0
    %3466 = vmatprep.subr.mxu0 0.0
    %3467 = vmatpush1.msra.mxu0 %v3431
    %3468 = vmatprep.subr.mxu0 0.0
    %3469 = vmatpush2.msra.mxu0 0.0
    %3470 = vmatprep.subr.mxu0 0.0
    %3471 = vmatpush2.msra.mxu0 0.0
    %3472 = vmatprep.subr.mxu0 0.0
    %3473 = vmatpush2.msra.mxu0 0.0
    %3474 = vmatprep.subr.mxu0 0.0
    %3475 = vmatpush2.msra.mxu0 0.0
    %3476 = vmatprep.subr.mxu0 0.0
    %3477 = vmatpush2.msra.mxu0 0.0
    %3478 = vmatprep.subr.mxu0 0.0
    %3479 = vmatpush2.msra.mxu0 0.0
    %3480 = vmatprep.subr.mxu0 0.0
    %3481 = vmatpush2.msra.mxu0 0.0
    %3482 = vmatprep.subr.mxu0 0.0
    %3483 = vmatpush2.msra.mxu0 0.0
    %3484 = vmatprep.subr.mxu0 0.0
    %3485 = vmatpush2.msra.mxu0 0.0
    %3486 = vmatprep.subr.mxu0 0.0
    %3487 = vmatpush2.msra.mxu0 0.0
    %3488 = vmatprep.subr.mxu0 0.0
    %3489 = vmatpush2.msra.mxu0 0.0
    %3490 = vmatprep.subr.mxu0 0.0
    %3491 = vmatpush2.msra.mxu0 0.0
    %3492 = vmatprep.subr.mxu0 0.0
    %3493 = vmatpush2.msra.mxu0 0.0
    %3494 = vmatprep.subr.mxu0 0.0
    %3495 = vmatpush2.msra.mxu0 0.0
    %3496 = vmatprep.subr.mxu0 0.0
    %3497 = vmatpush2.msra.mxu0 0.0
    %3498 = vmatprep.subr.mxu0 0.0
    %3499 = vmatpush2.msra.mxu0 0.0
    %3500 = vmatprep.mubr.f32.mxu0 0.0
    %3501 = vmatmul.mubr.f32.gmra.mxu0 %v3434
    %v3502 = vpop.f32.mrf.mxu0
    %v3503 = vadd.f32 0.0, %v3502
    %v3504 = vpop.f32.mrf.mxu0
    %3505 = vdwg.mxu0
    %v3506 = vmul.f32 %v3352, 0.25
    %v3507 = vmul.f32 %v3353, 0.25
    %v3510 = vrot.slane %v3507, 7
    %v3511 = vsel %vm1616, %v3510, %v3506
    %v3513 = vrot.slane %v3506, 1
    %v3514 = vsel %vm1616, %v3507, %v3513
    %3515 = vrot.lane.b32.xlu0 %v3514, 8
    %v3516 = vpop.permute.xlu0 %3515
    %v3518 = vrot.slane %v3506, 2
    %v3519 = vrot.slane %v3507, 1
    %v3520 = vsel %vm1616, %v3519, %v3518
    %3521 = vrot.lane.b32.xlu0 %v3520, 16
    %v3522 = vpop.permute.xlu0 %3521
    %v3524 = vrot.slane %v3506, 3
    %v3525 = vrot.slane %v3507, 2
    %v3526 = vsel %vm1616, %v3525, %v3524
    %3527 = vrot.lane.b32.xlu0 %v3526, 24
    %v3528 = vpop.permute.xlu0 %3527
    %v3530 = vrot.slane %v3506, 4
    %v3531 = vrot.slane %v3507, 3
    %v3532 = vsel %vm1616, %v3531, %v3530
    %3533 = vrot.lane.b32.xlu0 %v3532, 32
    %v3534 = vpop.permute.xlu0 %3533
    %v3536 = vrot.slane %v3506, 5
    %v3537 = vrot.slane %v3507, 4
    %v3538 = vsel %vm1616, %v3537, %v3536
    %3539 = vrot.lane.b32.xlu0 %v3538, 40
    %v3540 = vpop.permute.xlu0 %3539
    %v3542 = vrot.slane %v3506, 6
    %v3543 = vrot.slane %v3507, 5
    %v3544 = vsel %vm1616, %v3543, %v3542
    %3545 = vrot.lane.b32.xlu0 %v3544, 48
    %v3546 = vpop.permute.xlu0 %3545
    %v3548 = vrot.slane %v3506, 7
    %v3549 = vrot.slane %v3507, 6
    %v3550 = vsel %vm1616, %v3549, %v3548
    %3551 = vrot.lane.b32.xlu0 %v3550, 56
    %v3552 = vpop.permute.xlu0 %3551
    %v3554 = vsel %vm279, %v3511, %v3516
    %v3555 = vsel %vm101, %v3554, %v3522
    %v3556 = vsel %vm1662, %v3555, %v3528
    %v3557 = vsel %vm194, %v3556, %v3534
    %v3558 = vsel %vm1665, %v3557, %v3540
    %v3559 = vsel %vm1667, %v3558, %v3546
    %v3560 = vsel %vm1669, %v3559, %v3552
    %3563 = vrot.lane.b32.xlu0 %v2759, 8
    %v3564 = vpop.permute.xlu0 %3563
    %3565 = vrot.lane.b32.xlu0 %v2835, 8
    %v3566 = vpop.permute.xlu0 %3565
    %3571 = vrot.lane.b32.xlu0 %v3093, 16
    %v3572 = vpop.permute.xlu0 %3571
    %3573 = vrot.lane.b32.xlu0 %v3169, 16
    %v3574 = vpop.permute.xlu0 %3573
    %3579 = vrot.lane.b32.xlu0 %v3427, 24
    %v3580 = vpop.permute.xlu0 %3579
    %3581 = vrot.lane.b32.xlu0 %v3503, 24
    %v3582 = vpop.permute.xlu0 %3581
    %v3585 = vsel %vm279, %v2425, %v3564
    %v3586 = vsel %vm279, %v2501, %v3566
    %v3587 = vsel %vm101, %v3585, %v3572
    %v3588 = vsel %vm101, %v3586, %v3574
    %v3589 = vsel %vm1662, %v3587, %v3580
    %v3590 = vsel %vm1662, %v3588, %v3582
    %s3591 = scalar_lea.vmem %s5, 32
    %v3592 = vld [vmem:[%s3591] sm:$0xff]
    %v3593 = vld [vmem:[%s3591 + $0x8] sm:$0xff]
    %v3594 = vld [vmem:[%s3591 + $0x10] sm:$0xff]
    %v3595 = vld [vmem:[%s3591 + $0x18] sm:$0xff]
    %s3596 = scalar_lea.vmem %s6, 1
    %v3597 = vld [vmem:[%s3596] sm:$0x1]
    %v3599 = vlaneseq
    %v3600 = vshrl.u32 %v3599, 7
    %v3601 = vsub.s32 0, %v3600
    %v3602 = vrot.slane %v3597, %v3601
    %v3605 = vsel %vm194, %v3589, 0
    %v3608 = vsel %vm194, %v3590, 0
    %3610 = vmatprep.subr.mxu0 0.0
    %3611 = vmatpush1.msra.mxu0 0.0
    %3612 = vmatprep.subr.mxu0 0.0
    %3613 = vmatpush1.msra.mxu0 0.0
    %3614 = vmatprep.subr.mxu0 0.0
    %3615 = vmatpush1.msra.mxu0 0.0
    %3616 = vmatprep.subr.mxu0 0.0
    %3617 = vmatpush1.msra.mxu0 0.0
    %3618 = vmatprep.subr.mxu0 0.0
    %3619 = vmatpush1.msra.mxu0 0.0
    %3620 = vmatprep.subr.mxu0 0.0
    %3621 = vmatpush1.msra.mxu0 0.0
    %3622 = vmatprep.subr.mxu0 0.0
    %3623 = vmatpush1.msra.mxu0 0.0
    %3624 = vmatprep.subr.mxu0 0.0
    %3625 = vmatpush1.msra.mxu0 0.0
    %3626 = vmatprep.subr.mxu0 0.0
    %3627 = vmatpush1.msra.mxu0 0.0
    %3628 = vmatprep.subr.mxu0 0.0
    %3629 = vmatpush1.msra.mxu0 0.0
    %3630 = vmatprep.subr.mxu0 0.0
    %3631 = vmatpush1.msra.mxu0 0.0
    %3632 = vmatprep.subr.mxu0 0.0
    %3633 = vmatpush1.msra.mxu0 0.0
    %3634 = vmatprep.subr.mxu0 0.0
    %3635 = vmatpush1.msra.mxu0 %v3595
    %3636 = vmatprep.subr.mxu0 0.0
    %3637 = vmatpush1.msra.mxu0 %v3594
    %3638 = vmatprep.subr.mxu0 0.0
    %3639 = vmatpush1.msra.mxu0 %v3593
    %3640 = vmatprep.subr.mxu0 0.0
    %3641 = vmatpush1.msra.mxu0 %v3592
    %3642 = vmatprep.subr.mxu0 0.0
    %3643 = vmatpush2.msra.mxu0 0.0
    %3644 = vmatprep.subr.mxu0 0.0
    %3645 = vmatpush2.msra.mxu0 0.0
    %3646 = vmatprep.subr.mxu0 0.0
    %3647 = vmatpush2.msra.mxu0 0.0
    %3648 = vmatprep.subr.mxu0 0.0
    %3649 = vmatpush2.msra.mxu0 0.0
    %3650 = vmatprep.subr.mxu0 0.0
    %3651 = vmatpush2.msra.mxu0 0.0
    %3652 = vmatprep.subr.mxu0 0.0
    %3653 = vmatpush2.msra.mxu0 0.0
    %3654 = vmatprep.subr.mxu0 0.0
    %3655 = vmatpush2.msra.mxu0 0.0
    %3656 = vmatprep.subr.mxu0 0.0
    %3657 = vmatpush2.msra.mxu0 0.0
    %3658 = vmatprep.subr.mxu0 0.0
    %3659 = vmatpush2.msra.mxu0 0.0
    %3660 = vmatprep.subr.mxu0 0.0
    %3661 = vmatpush2.msra.mxu0 0.0
    %3662 = vmatprep.subr.mxu0 0.0
    %3663 = vmatpush2.msra.mxu0 0.0
    %3664 = vmatprep.subr.mxu0 0.0
    %3665 = vmatpush2.msra.mxu0 0.0
    %3666 = vmatprep.subr.mxu0 0.0
    %3667 = vmatpush2.msra.mxu0 0.0
    %3668 = vmatprep.subr.mxu0 0.0
    %3669 = vmatpush2.msra.mxu0 0.0
    %3670 = vmatprep.subr.mxu0 0.0
    %3671 = vmatpush2.msra.mxu0 0.0
    %3672 = vmatprep.subr.mxu0 0.0
    %3673 = vmatpush2.msra.mxu0 0.0
    %3674 = vmatprep.mubr.f32.mxu0 0.0
    %3675 = vmatmul.mubr.f32.gmra.mxu0 %v3605
    %v3676 = vpop.f32.mrf.mxu0
    %v3677 = vadd.f32 %v3602, %v3676
    %v3678 = vpop.f32.mrf.mxu0
    %3679 = vmatprep.mubr.f32.mxu0 0.0
    %3680 = vmatmul.mubr.f32.gmra.mxu0 %v3608
    %v3681 = vpop.f32.mrf.mxu0
    %v3682 = vadd.f32 %v3602, %v3681
    %v3683 = vpop.f32.mrf.mxu0
    %3684 = vdwg.mxu0
    %v3685 = vadd.f32 %v2076, %v3677
    %v3686 = vadd.f32 %v2077, %v3682
    %s3687 = scalar_lea.vmem %s7, 1
    %v3688 = vld [vmem:[%s3687] sm:$0x1]
    %s3689 = scalar_lea.vmem %s8, 1
    %v3690 = vld [vmem:[%s3689] sm:$0x1]
    %v3691 = vsel %vm194, %v3685, 0.0
    %3692 = vadd.xlane.f32.xlu0 %v3691
    %v3693 = vpop.xlane.xlu0 %3692
    %v3694 = vsel %vm194, %v3686, 0.0
    %3695 = vadd.xlane.f32.xlu0 %v3694
    %v3696 = vpop.xlane.xlu0 %3695
    %v3697 = vmul.f32 %v3693, %v1803
    %v3698 = vmul.f32 %v3696, %v1803
    %v3699 = vsub.f32 %v3685, %v3697
    %v3700 = vsub.f32 %v3686, %v3698
    %v3701 = vmul.f32 %v3699, %v3699
    %v3702 = vmul.f32 %v3700, %v3700
    %v3703 = vsel %vm194, %v3701, 0.0
    %3704 = vadd.xlane.f32.xlu0 %v3703
    %v3705 = vpop.xlane.xlu0 %3704
    %v3706 = vsel %vm194, %v3702, 0.0
    %3707 = vadd.xlane.f32.xlu0 %v3706
    %v3708 = vpop.xlane.xlu0 %3707
    %v3709 = vmul.f32 %v3705, %v1803
    %v3710 = vmul.f32 %v3708, %v1803
    %v3711 = vadd.f32 %v3709, 1e-05
    %v3712 = vadd.f32 %v3710, 1e-05
    %v3713 = vrsqrt.pop %v3711
    %v3714 = vrsqrt.pop %v3712
    %v3715 = vmul.f32 %v3699, %v3713
    %v3716 = vmul.f32 %v3700, %v3714
    %v3718 = vlaneseq
    %v3719 = vshrl.u32 %v3718, 7
    %v3720 = vsub.s32 0, %v3719
    %v3721 = vrot.slane %v3688, %v3720
    %v3723 = vmul.f32 %v3715, %v3721
    %v3724 = vmul.f32 %v3716, %v3721
    %v3726 = vlaneseq
    %v3727 = vshrl.u32 %v3726, 7
    %v3728 = vsub.s32 0, %v3727
    %v3729 = vrot.slane %v3690, %v3728
    %v3731 = vadd.f32 %v3723, %v3729
    %v3732 = vadd.f32 %v3724, %v3729
    %s3733 = scalar_lea.vmem %s9, 32
    %v3734 = vld [vmem:[%s3733] sm:$0xff]
    %v3735 = vld [vmem:[%s3733 + $0x8] sm:$0xff]
    %v3736 = vld [vmem:[%s3733 + $0x10] sm:$0xff]
    %v3737 = vld [vmem:[%s3733 + $0x18] sm:$0xff]
    %s3738 = scalar_lea.vmem %s10, 1
    %v3739 = vld [vmem:[%s3738] sm:$0x1]
    %v3741 = vlaneseq
    %v3742 = vshrl.u32 %v3741, 7
    %v3743 = vsub.s32 0, %v3742
    %v3744 = vrot.slane %v3739, %v3743
    %v3747 = vsel %vm194, %v3731, 0
    %v3750 = vsel %vm194, %v3732, 0
    %3752 = vmatprep.subr.mxu0 0.0
    %3753 = vmatpush1.msra.mxu0 0.0
    %3754 = vmatprep.subr.mxu0 0.0
    %3755 = vmatpush1.msra.mxu0 0.0
    %3756 = vmatprep.subr.mxu0 0.0
    %3757 = vmatpush1.msra.mxu0 0.0
    %3758 = vmatprep.subr.mxu0 0.0
    %3759 = vmatpush1.msra.mxu0 0.0
    %3760 = vmatprep.subr.mxu0 0.0
    %3761 = vmatpush1.msra.mxu0 0.0
    %3762 = vmatprep.subr.mxu0 0.0
    %3763 = vmatpush1.msra.mxu0 0.0
    %3764 = vmatprep.subr.mxu0 0.0
    %3765 = vmatpush1.msra.mxu0 0.0
    %3766 = vmatprep.subr.mxu0 0.0
    %3767 = vmatpush1.msra.mxu0 0.0
    %3768 = vmatprep.subr.mxu0 0.0
    %3769 = vmatpush1.msra.mxu0 0.0
    %3770 = vmatprep.subr.mxu0 0.0
    %3771 = vmatpush1.msra.mxu0 0.0
    %3772 = vmatprep.subr.mxu0 0.0
    %3773 = vmatpush1.msra.mxu0 0.0
    %3774 = vmatprep.subr.mxu0 0.0
    %3775 = vmatpush1.msra.mxu0 0.0
    %3776 = vmatprep.subr.mxu0 0.0
    %3777 = vmatpush1.msra.mxu0 %v3737
    %3778 = vmatprep.subr.mxu0 0.0
    %3779 = vmatpush1.msra.mxu0 %v3736
    %3780 = vmatprep.subr.mxu0 0.0
    %3781 = vmatpush1.msra.mxu0 %v3735
    %3782 = vmatprep.subr.mxu0 0.0
    %3783 = vmatpush1.msra.mxu0 %v3734
    %3784 = vmatprep.subr.mxu0 0.0
    %3785 = vmatpush2.msra.mxu0 0.0
    %3786 = vmatprep.subr.mxu0 0.0
    %3787 = vmatpush2.msra.mxu0 0.0
    %3788 = vmatprep.subr.mxu0 0.0
    %3789 = vmatpush2.msra.mxu0 0.0
    %3790 = vmatprep.subr.mxu0 0.0
    %3791 = vmatpush2.msra.mxu0 0.0
    %3792 = vmatprep.subr.mxu0 0.0
    %3793 = vmatpush2.msra.mxu0 0.0
    %3794 = vmatprep.subr.mxu0 0.0
    %3795 = vmatpush2.msra.mxu0 0.0
    %3796 = vmatprep.subr.mxu0 0.0
    %3797 = vmatpush2.msra.mxu0 0.0
    %3798 = vmatprep.subr.mxu0 0.0
    %3799 = vmatpush2.msra.mxu0 0.0
    %3800 = vmatprep.subr.mxu0 0.0
    %3801 = vmatpush2.msra.mxu0 0.0
    %3802 = vmatprep.subr.mxu0 0.0
    %3803 = vmatpush2.msra.mxu0 0.0
    %3804 = vmatprep.subr.mxu0 0.0
    %3805 = vmatpush2.msra.mxu0 0.0
    %3806 = vmatprep.subr.mxu0 0.0
    %3807 = vmatpush2.msra.mxu0 0.0
    %3808 = vmatprep.subr.mxu0 0.0
    %3809 = vmatpush2.msra.mxu0 0.0
    %3810 = vmatprep.subr.mxu0 0.0
    %3811 = vmatpush2.msra.mxu0 0.0
    %3812 = vmatprep.subr.mxu0 0.0
    %3813 = vmatpush2.msra.mxu0 0.0
    %3814 = vmatprep.subr.mxu0 0.0
    %3815 = vmatpush2.msra.mxu0 0.0
    %3816 = vmatprep.mubr.f32.mxu0 0.0
    %3817 = vmatmul.mubr.f32.gmra.mxu0 %v3747
    %v3818 = vpop.f32.mrf.mxu0
    %v3819 = vadd.f32 %v3744, %v3818
    %v3820 = vpop.f32.mrf.mxu0
    %3821 = vmatprep.mubr.f32.mxu0 0.0
    %3822 = vmatmul.mubr.f32.gmra.mxu0 %v3750
    %v3823 = vpop.f32.mrf.mxu0
    %v3824 = vadd.f32 %v3744, %v3823
    %v3825 = vpop.f32.mrf.mxu0
    %3826 = vdwg.mxu0
    %v3827 = vmax.f32 %v3819, 0.0
    %v3828 = vmax.f32 %v3824, 0.0
    %s3829 = scalar_lea.vmem %s11, 128
    %v3830 = vld [vmem:[%s3829] sm:$0xff]
    %v3831 = vld [vmem:[%s3829 + $0x8] sm:$0xff]
    %v3832 = vld [vmem:[%s3829 + $0x10] sm:$0xff]
    %v3833 = vld [vmem:[%s3829 + $0x18] sm:$0xff]
    %v3834 = vld [vmem:[%s3829 + $0x20] sm:$0xff]
    %v3835 = vld [vmem:[%s3829 + $0x28] sm:$0xff]
    %v3836 = vld [vmem:[%s3829 + $0x30] sm:$0xff]
    %v3837 = vld [vmem:[%s3829 + $0x38] sm:$0xff]
    %v3838 = vld [vmem:[%s3829 + $0x40] sm:$0xff]
    %v3839 = vld [vmem:[%s3829 + $0x48] sm:$0xff]
    %v3840 = vld [vmem:[%s3829 + $0x50] sm:$0xff]
    %v3841 = vld [vmem:[%s3829 + $0x58] sm:$0xff]
    %v3842 = vld [vmem:[%s3829 + $0x60] sm:$0xff]
    %v3843 = vld [vmem:[%s3829 + $0x68] sm:$0xff]
    %v3844 = vld [vmem:[%s3829 + $0x70] sm:$0xff]
    %v3845 = vld [vmem:[%s3829 + $0x78] sm:$0xff]
    %s3846 = scalar_lea.vmem %s12, 1
    %v3847 = vld [vmem:[%s3846] sm:$0x1]
    %v3849 = vlaneseq
    %v3850 = vshrl.u32 %v3849, 7
    %v3851 = vsub.s32 0, %v3850
    %v3852 = vrot.slane %v3847, %v3851
    %3854 = vmatprep.subr.mxu0 0.0
    %3855 = vmatpush1.msra.mxu0 %v3845
    %3856 = vmatprep.subr.mxu0 0.0
    %3857 = vmatpush1.msra.mxu0 %v3844
    %3858 = vmatprep.subr.mxu0 0.0
    %3859 = vmatpush1.msra.mxu0 %v3843
    %3860 = vmatprep.subr.mxu0 0.0
    %3861 = vmatpush1.msra.mxu0 %v3842
    %3862 = vmatprep.subr.mxu0 0.0
    %3863 = vmatpush1.msra.mxu0 %v3841
    %3864 = vmatprep.subr.mxu0 0.0
    %3865 = vmatpush1.msra.mxu0 %v3840
    %3866 = vmatprep.subr.mxu0 0.0
    %3867 = vmatpush1.msra.mxu0 %v3839
    %3868 = vmatprep.subr.mxu0 0.0
    %3869 = vmatpush1.msra.mxu0 %v3838
    %3870 = vmatprep.subr.mxu0 0.0
    %3871 = vmatpush1.msra.mxu0 %v3837
    %3872 = vmatprep.subr.mxu0 0.0
    %3873 = vmatpush1.msra.mxu0 %v3836
    %3874 = vmatprep.subr.mxu0 0.0
    %3875 = vmatpush1.msra.mxu0 %v3835
    %3876 = vmatprep.subr.mxu0 0.0
    %3877 = vmatpush1.msra.mxu0 %v3834
    %3878 = vmatprep.subr.mxu0 0.0
    %3879 = vmatpush1.msra.mxu0 %v3833
    %3880 = vmatprep.subr.mxu0 0.0
    %3881 = vmatpush1.msra.mxu0 %v3832
    %3882 = vmatprep.subr.mxu0 0.0
    %3883 = vmatpush1.msra.mxu0 %v3831
    %3884 = vmatprep.subr.mxu0 0.0
    %3885 = vmatpush1.msra.mxu0 %v3830
    %3886 = vmatprep.subr.mxu0 0.0
    %3887 = vmatpush2.msra.mxu0 0.0
    %3888 = vmatprep.subr.mxu0 0.0
    %3889 = vmatpush2.msra.mxu0 0.0
    %3890 = vmatprep.subr.mxu0 0.0
    %3891 = vmatpush2.msra.mxu0 0.0
    %3892 = vmatprep.subr.mxu0 0.0
    %3893 = vmatpush2.msra.mxu0 0.0
    %3894 = vmatprep.subr.mxu0 0.0
    %3895 = vmatpush2.msra.mxu0 0.0
    %3896 = vmatprep.subr.mxu0 0.0
    %3897 = vmatpush2.msra.mxu0 0.0
    %3898 = vmatprep.subr.mxu0 0.0
    %3899 = vmatpush2.msra.mxu0 0.0
    %3900 = vmatprep.subr.mxu0 0.0
    %3901 = vmatpush2.msra.mxu0 0.0
    %3902 = vmatprep.subr.mxu0 0.0
    %3903 = vmatpush2.msra.mxu0 0.0
    %3904 = vmatprep.subr.mxu0 0.0
    %3905 = vmatpush2.msra.mxu0 0.0
    %3906 = vmatprep.subr.mxu0 0.0
    %3907 = vmatpush2.msra.mxu0 0.0
    %3908 = vmatprep.subr.mxu0 0.0
    %3909 = vmatpush2.msra.mxu0 0.0
    %3910 = vmatprep.subr.mxu0 0.0
    %3911 = vmatpush2.msra.mxu0 0.0
    %3912 = vmatprep.subr.mxu0 0.0
    %3913 = vmatpush2.msra.mxu0 0.0
    %3914 = vmatprep.subr.mxu0 0.0
    %3915 = vmatpush2.msra.mxu0 0.0
    %3916 = vmatprep.subr.mxu0 0.0
    %3917 = vmatpush2.msra.mxu0 0.0
    %3918 = vmatprep.mubr.f32.mxu0 0.0
    %3919 = vmatmul.mubr.f32.gmra.mxu0 %v3827
    %v3920 = vpop.f32.mrf.mxu0
    %v3921 = vadd.f32 %v3852, %v3920
    %v3922 = vpop.f32.mrf.mxu0
    %3923 = vmatprep.mubr.f32.mxu0 0.0
    %3924 = vmatmul.mubr.f32.gmra.mxu0 %v3828
    %v3925 = vpop.f32.mrf.mxu0
    %v3926 = vadd.f32 %v3852, %v3925
    %v3927 = vpop.f32.mrf.mxu0
    %3928 = vdwg.mxu0
    %s3929 = scalar_lea.vmem %s13, 1
    %v3930 = vld [vmem:[%s3929] sm:$0x1]
    %s3931 = scalar_lea.vmem %s14, 1
    %v3932 = vld [vmem:[%s3931] sm:$0x1]
    %v3933 = vsel %vm194, %v3921, 0.0
    %3934 = vadd.xlane.f32.xlu0 %v3933
    %v3935 = vpop.xlane.xlu0 %3934
    %v3936 = vsel %vm194, %v3926, 0.0
    %3937 = vadd.xlane.f32.xlu0 %v3936
    %v3938 = vpop.xlane.xlu0 %3937
    %v3939 = vmul.f32 %v3935, %v1803
    %v3940 = vmul.f32 %v3938, %v1803
    %v3941 = vsub.f32 %v3921, %v3939
    %v3942 = vsub.f32 %v3926, %v3940
    %v3943 = vmul.f32 %v3941, %v3941
    %v3944 = vmul.f32 %v3942, %v3942
    %v3945 = vsel %vm194, %v3943, 0.0
    %3946 = vadd.xlane.f32.xlu0 %v3945
    %v3947 = vpop.xlane.xlu0 %3946
    %v3948 = vsel %vm194, %v3944, 0.0
    %3949 = vadd.xlane.f32.xlu0 %v3948
    %v3950 = vpop.xlane.xlu0 %3949
    %v3951 = vmul.f32 %v3947, %v1803
    %v3952 = vmul.f32 %v3950, %v1803
    %v3953 = vadd.f32 %v3951, 1e-05
    %v3954 = vadd.f32 %v3952, 1e-05
    %v3955 = vrsqrt.pop %v3953
    %v3956 = vrsqrt.pop %v3954
    %v3957 = vmul.f32 %v3941, %v3955
    %v3958 = vmul.f32 %v3942, %v3956
    %v3960 = vlaneseq
    %v3961 = vshrl.u32 %v3960, 7
    %v3962 = vsub.s32 0, %v3961
    %v3963 = vrot.slane %v3930, %v3962
    %v3965 = vmul.f32 %v3957, %v3963
    %v3966 = vmul.f32 %v3958, %v3963
    %v3968 = vlaneseq
    %v3969 = vshrl.u32 %v3968, 7
    %v3970 = vsub.s32 0, %v3969
    %v3971 = vrot.slane %v3932, %v3970
    %v3973 = vadd.f32 %v3965, %v3971
    %v3974 = vadd.f32 %v3966, %v3971
    %v3975 = vadd.f32 %v3731, %v3973
    %v3976 = vadd.f32 %v3732, %v3974
    %3978 = vrot.lane.b32.xlu0 %v3560, 64
    %v3979 = vpop.permute.xlu0 %3978
    %vm3981 = vcmask 523264
    %v3982 = vsel %vm3981, %v1670, %v3979
    %3983 = vst [vmem:[#allocation2] sm:$0x3] %v3982
    %v3984 = vsel %vm194, %v3975, 0.0
    %v3985 = vrot.slane %v3984, 4
    %v3986 = vadd.f32 %v3984, %v3985
    %v3987 = vrot.slane %v3986, 2
    %v3988 = vadd.f32 %v3986, %v3987
    %v3989 = vrot.slane %v3988, 1
    %v3990 = vadd.f32 %v3988, %v3989
    %v3991 = vsel %vm194, %v3976, 0.0
    %v3992 = vrot.slane %v3991, 4
    %v3993 = vadd.f32 %v3991, %v3992
    %v3994 = vrot.slane %v3993, 2
    %v3995 = vadd.f32 %v3993, %v3994
    %v3996 = vrot.slane %v3995, 1
    %v3997 = vadd.f32 %v3995, %v3996
    %v3998 = vrcp.pop 8.0
    %v3999 = vmul.f32 %v3990, %v3998
    %v4000 = vmul.f32 %v3997, %v3998
    %v4001 = vld [vmem:[%s15] sm:$0xff]
    %v4002 = vld [vmem:[%s15 + $0x8] sm:$0xff]
    %v4003 = vld [vmem:[%s15 + $0x10] sm:$0xff]
    %v4004 = vld [vmem:[%s15 + $0x18] sm:$0xff]
    %v4005 = vld [vmem:[%s16] sm:$0x1]
    %v4007 = vlaneseq
    %v4008 = vshrl.u32 %v4007, 7
    %v4009 = vsub.s32 0, %v4008
    %v4010 = vrot.slane %v4005, %v4009
    %v4014 = vsel %vm1616, %v4000, %v3999
    %v4015 = vsel %vm194, %v4014, 0
    %4017 = vmatprep.subr.mxu0 0.0
    %4018 = vmatpush1.msra.mxu0 0.0
    %4019 = vmatprep.subr.mxu0 0.0
    %4020 = vmatpush1.msra.mxu0 0.0
    %4021 = vmatprep.subr.mxu0 0.0
    %4022 = vmatpush1.msra.mxu0 0.0
    %4023 = vmatprep.subr.mxu0 0.0
    %4024 = vmatpush1.msra.mxu0 0.0
    %4025 = vmatprep.subr.mxu0 0.0
    %4026 = vmatpush1.msra.mxu0 0.0
    %4027 = vmatprep.subr.mxu0 0.0
    %4028 = vmatpush1.msra.mxu0 0.0
    %4029 = vmatprep.subr.mxu0 0.0
    %4030 = vmatpush1.msra.mxu0 0.0
    %4031 = vmatprep.subr.mxu0 0.0
    %4032 = vmatpush1.msra.mxu0 0.0
    %4033 = vmatprep.subr.mxu0 0.0
    %4034 = vmatpush1.msra.mxu0 0.0
    %4035 = vmatprep.subr.mxu0 0.0
    %4036 = vmatpush1.msra.mxu0 0.0
    %4037 = vmatprep.subr.mxu0 0.0
    %4038 = vmatpush1.msra.mxu0 0.0
    %4039 = vmatprep.subr.mxu0 0.0
    %4040 = vmatpush1.msra.mxu0 0.0
    %4041 = vmatprep.subr.mxu0 0.0
    %4042 = vmatpush1.msra.mxu0 %v4004
    %4043 = vmatprep.subr.mxu0 0.0
    %4044 = vmatpush1.msra.mxu0 %v4003
    %4045 = vmatprep.subr.mxu0 0.0
    %4046 = vmatpush1.msra.mxu0 %v4002
    %4047 = vmatprep.subr.mxu0 0.0
    %4048 = vmatpush1.msra.mxu0 %v4001
    %4049 = vmatprep.subr.mxu0 0.0
    %4050 = vmatpush2.msra.mxu0 0.0
    %4051 = vmatprep.subr.mxu0 0.0
    %4052 = vmatpush2.msra.mxu0 0.0
    %4053 = vmatprep.subr.mxu0 0.0
    %4054 = vmatpush2.msra.mxu0 0.0
    %4055 = vmatprep.subr.mxu0 0.0
    %4056 = vmatpush2.msra.mxu0 0.0
    %4057 = vmatprep.subr.mxu0 0.0
    %4058 = vmatpush2.msra.mxu0 0.0
    %4059 = vmatprep.subr.mxu0 0.0
    %4060 = vmatpush2.msra.mxu0 0.0
    %4061 = vmatprep.subr.mxu0 0.0
    %4062 = vmatpush2.msra.mxu0 0.0
    %4063 = vmatprep.subr.mxu0 0.0
    %4064 = vmatpush2.msra.mxu0 0.0
    %4065 = vmatprep.subr.mxu0 0.0
    %4066 = vmatpush2.msra.mxu0 0.0
    %4067 = vmatprep.subr.mxu0 0.0
    %4068 = vmatpush2.msra.mxu0 0.0
    %4069 = vmatprep.subr.mxu0 0.0
    %4070 = vmatpush2.msra.mxu0 0.0
    %4071 = vmatprep.subr.mxu0 0.0
    %4072 = vmatpush2.msra.mxu0 0.0
    %4073 = vmatprep.subr.mxu0 0.0
    %4074 = vmatpush2.msra.mxu0 0.0
    %4075 = vmatprep.subr.mxu0 0.0
    %4076 = vmatpush2.msra.mxu0 0.0
    %4077 = vmatprep.subr.mxu0 0.0
    %4078 = vmatpush2.msra.mxu0 0.0
    %4079 = vmatprep.subr.mxu0 0.0
    %4080 = vmatpush2.msra.mxu0 0.0
    %4081 = vmatprep.mubr.f32.mxu0 0.0
    %4082 = vmatmul.mubr.f32.gmra.mxu0 %v4015
    %v4083 = vpop.f32.mrf.mxu0
    %v4084 = vadd.f32 %v4010, %v4083
    %v4085 = vpop.f32.mrf.mxu0
    %4086 = vdwg.mxu0
    %v4087 = vld [vmem:[%s17] sm:$0xff]
    %v4088 = vld [vmem:[%s17 + $0x8] sm:$0xff]
    %v4089 = vld [vmem:[%s17 + $0x10] sm:$0xff]
    %v4090 = vld [vmem:[%s17 + $0x18] sm:$0xff]
    %v4091 = vld [vmem:[%s18] sm:$0x1]
    %v4093 = vlaneseq
    %v4094 = vshrl.u32 %v4093, 7
    %v4095 = vsub.s32 0, %v4094
    %v4096 = vrot.slane %v4091, %v4095
    %v4099 = vsel %vm194, %v3975, 0
    %v4102 = vsel %vm194, %v3976, 0
    %4104 = vmatprep.subr.mxu0 0.0
    %4105 = vmatpush1.msra.mxu0 0.0
    %4106 = vmatprep.subr.mxu0 0.0
    %4107 = vmatpush1.msra.mxu0 0.0
    %4108 = vmatprep.subr.mxu0 0.0
    %4109 = vmatpush1.msra.mxu0 0.0
    %4110 = vmatprep.subr.mxu0 0.0
    %4111 = vmatpush1.msra.mxu0 0.0
    %4112 = vmatprep.subr.mxu0 0.0
    %4113 = vmatpush1.msra.mxu0 0.0
    %4114 = vmatprep.subr.mxu0 0.0
    %4115 = vmatpush1.msra.mxu0 0.0
    %4116 = vmatprep.subr.mxu0 0.0
    %4117 = vmatpush1.msra.mxu0 0.0
    %4118 = vmatprep.subr.mxu0 0.0
    %4119 = vmatpush1.msra.mxu0 0.0
    %4120 = vmatprep.subr.mxu0 0.0
    %4121 = vmatpush1.msra.mxu0 0.0
    %4122 = vmatprep.subr.mxu0 0.0
    %4123 = vmatpush1.msra.mxu0 0.0
    %4124 = vmatprep.subr.mxu0 0.0
    %4125 = vmatpush1.msra.mxu0 0.0
    %4126 = vmatprep.subr.mxu0 0.0
    %4127 = vmatpush1.msra.mxu0 0.0
    %4128 = vmatprep.subr.mxu0 0.0
    %4129 = vmatpush1.msra.mxu0 %v4090
    %4130 = vmatprep.subr.mxu0 0.0
    %4131 = vmatpush1.msra.mxu0 %v4089
    %4132 = vmatprep.subr.mxu0 0.0
    %4133 = vmatpush1.msra.mxu0 %v4088
    %4134 = vmatprep.subr.mxu0 0.0
    %4135 = vmatpush1.msra.mxu0 %v4087
    %4136 = vmatprep.subr.mxu0 0.0
    %4137 = vmatpush2.msra.mxu0 0.0
    %4138 = vmatprep.subr.mxu0 0.0
    %4139 = vmatpush2.msra.mxu0 0.0
    %4140 = vmatprep.subr.mxu0 0.0
    %4141 = vmatpush2.msra.mxu0 0.0
    %4142 = vmatprep.subr.mxu0 0.0
    %4143 = vmatpush2.msra.mxu0 0.0
    %4144 = vmatprep.subr.mxu0 0.0
    %4145 = vmatpush2.msra.mxu0 0.0
    %4146 = vmatprep.subr.mxu0 0.0
    %4147 = vmatpush2.msra.mxu0 0.0
    %4148 = vmatprep.subr.mxu0 0.0
    %4149 = vmatpush2.msra.mxu0 0.0
    %4150 = vmatprep.subr.mxu0 0.0
    %4151 = vmatpush2.msra.mxu0 0.0
    %4152 = vmatprep.subr.mxu0 0.0
    %4153 = vmatpush2.msra.mxu0 0.0
    %4154 = vmatprep.subr.mxu0 0.0
    %4155 = vmatpush2.msra.mxu0 0.0
    %4156 = vmatprep.subr.mxu0 0.0
    %4157 = vmatpush2.msra.mxu0 0.0
    %4158 = vmatprep.subr.mxu0 0.0
    %4159 = vmatpush2.msra.mxu0 0.0
    %4160 = vmatprep.subr.mxu0 0.0
    %4161 = vmatpush2.msra.mxu0 0.0
    %4162 = vmatprep.subr.mxu0 0.0
    %4163 = vmatpush2.msra.mxu0 0.0
    %4164 = vmatprep.subr.mxu0 0.0
    %4165 = vmatpush2.msra.mxu0 0.0
    %4166 = vmatprep.subr.mxu0 0.0
    %4167 = vmatpush2.msra.mxu0 0.0
    %4168 = vmatprep.mubr.f32.mxu0 0.0
    %4169 = vmatmul.mubr.f32.gmra.mxu0 %v4099
    %v4170 = vpop.f32.mrf.mxu0
    %v4171 = vadd.f32 %v4096, %v4170
    %v4172 = vpop.f32.mrf.mxu0
    %4173 = vmatprep.mubr.f32.mxu0 0.0
    %4174 = vmatmul.mubr.f32.gmra.mxu0 %v4102
    %v4175 = vpop.f32.mrf.mxu0
    %v4176 = vadd.f32 %v4096, %v4175
    %v4177 = vpop.f32.mrf.mxu0
    %4178 = vdwg.mxu0
    %v4181 = vunpack.c.l.s4 1966171168
    %v4182 = vunpack.c.0.s8 %v4181
    %v4183 = vlaneseq
    %v4184 = vshrl.u32 %v4183, 7
    %v4185 = vsub.s32 %v4182, %v4184
    %v4186 = vrot.slane %v4084, %v4185
    %v4187 = vcombine.high %v4186, %v4186
    %v4189 = vunpack.c.l.s4 1966171168
    %v4190 = vunpack.c.0.s8 %v4189
    %v4191 = vlaneseq
    %v4192 = vshrl.u32 %v4191, 7
    %v4193 = vsub.s32 %v4190, %v4192
    %v4194 = vrot.slane %v4186, %v4193
    %v4196 = vunpack.c.l.s4 1966171168
    %v4197 = vunpack.c.0.s8 %v4196
    %v4198 = vlaneseq
    %v4199 = vshrl.u32 %v4198, 7
    %v4200 = vsub.s32 %v4197, %v4199
    %v4201 = vrot.slane %v4187, %v4200
    %v4202 = vsel %vm279, %v4194, 0
    %v4205 = vsel %vm279, %v4171, 0
    %4207 = vmatprep.subr.mxu0 0.0
    %4208 = vmatpush1.xpose.msra.mxu0 0.0
    %4209 = vmatprep.subr.mxu0 0.0
    %4210 = vmatpush1.xpose.msra.mxu0 0.0
    %4211 = vmatprep.subr.mxu0 0.0
    %4212 = vmatpush1.xpose.msra.mxu0 0.0
    %4213 = vmatprep.subr.mxu0 0.0
    %4214 = vmatpush1.xpose.msra.mxu0 0.0
    %4215 = vmatprep.subr.mxu0 0.0
    %4216 = vmatpush1.xpose.msra.mxu0 0.0
    %4217 = vmatprep.subr.mxu0 0.0
    %4218 = vmatpush1.xpose.msra.mxu0 0.0
    %4219 = vmatprep.subr.mxu0 0.0
    %4220 = vmatpush1.xpose.msra.mxu0 0.0
    %4221 = vmatprep.subr.mxu0 0.0
    %4222 = vmatpush1.xpose.msra.mxu0 0.0
    %4223 = vmatprep.subr.mxu0 0.0
    %4224 = vmatpush1.xpose.msra.mxu0 0.0
    %4225 = vmatprep.subr.mxu0 0.0
    %4226 = vmatpush1.xpose.msra.mxu0 0.0
    %4227 = vmatprep.subr.mxu0 0.0
    %4228 = vmatpush1.xpose.msra.mxu0 0.0
    %4229 = vmatprep.subr.mxu0 0.0
    %4230 = vmatpush1.xpose.msra.mxu0 0.0
    %4231 = vmatprep.subr.mxu0 0.0
    %4232 = vmatpush1.xpose.msra.mxu0 0.0
    %4233 = vmatprep.subr.mxu0 0.0
    %4234 = vmatpush1.xpose.msra.mxu0 0.0
    %4235 = vmatprep.subr.mxu0 0.0
    %4236 = vmatpush1.xpose.msra.mxu0 0.0
    %4237 = vmatprep.subr.mxu0 0.0
    %4238 = vmatpush1.xpose.msra.mxu0 %v4205
    %4239 = vmatprep.subr.mxu0 0.0
    %4240 = vmatpush2.xpose.msra.mxu0 0.0
    %4241 = vmatprep.subr.mxu0 0.0
    %4242 = vmatpush2.xpose.msra.mxu0 0.0
    %4243 = vmatprep.subr.mxu0 0.0
    %4244 = vmatpush2.xpose.msra.mxu0 0.0
    %4245 = vmatprep.subr.mxu0 0.0
    %4246 = vmatpush2.xpose.msra.mxu0 0.0
    %4247 = vmatprep.subr.mxu0 0.0
    %4248 = vmatpush2.xpose.msra.mxu0 0.0
    %4249 = vmatprep.subr.mxu0 0.0
    %4250 = vmatpush2.xpose.msra.mxu0 0.0
    %4251 = vmatprep.subr.mxu0 0.0
    %4252 = vmatpush2.xpose.msra.mxu0 0.0
    %4253 = vmatprep.subr.mxu0 0.0
    %4254 = vmatpush2.xpose.msra.mxu0 0.0
    %4255 = vmatprep.subr.mxu0 0.0
    %4256 = vmatpush2.xpose.msra.mxu0 0.0
    %4257 = vmatprep.subr.mxu0 0.0
    %4258 = vmatpush2.xpose.msra.mxu0 0.0
    %4259 = vmatprep.subr.mxu0 0.0
    %4260 = vmatpush2.xpose.msra.mxu0 0.0
    %4261 = vmatprep.subr.mxu0 0.0
    %4262 = vmatpush2.xpose.msra.mxu0 0.0
    %4263 = vmatprep.subr.mxu0 0.0
    %4264 = vmatpush2.xpose.msra.mxu0 0.0
    %4265 = vmatprep.subr.mxu0 0.0
    %4266 = vmatpush2.xpose.msra.mxu0 0.0
    %4267 = vmatprep.subr.mxu0 0.0
    %4268 = vmatpush2.xpose.msra.mxu0 0.0
    %4269 = vmatprep.subr.mxu0 0.0
    %4270 = vmatpush2.xpose.msra.mxu0 0.0
    %4271 = vmatprep.mubr.f32.mxu0 0.0
    %4272 = vmatmul.mubr.f32.gmra.mxu0 %v4202
    %v4273 = vpop.f32.mrf.mxu0
    %v4274 = vadd.f32 0.0, %v4273
    %v4275 = vpop.f32.mrf.mxu0
    %4276 = vdwg.mxu0
    %v4277 = vsel %vm279, %v4201, 0
    %v4280 = vsel %vm279, %v4176, 0
    %4282 = vmatprep.subr.mxu0 0.0
    %4283 = vmatpush1.xpose.msra.mxu0 0.0
    %4284 = vmatprep.subr.mxu0 0.0
    %4285 = vmatpush1.xpose.msra.mxu0 0.0
    %4286 = vmatprep.subr.mxu0 0.0
    %4287 = vmatpush1.xpose.msra.mxu0 0.0
    %4288 = vmatprep.subr.mxu0 0.0
    %4289 = vmatpush1.xpose.msra.mxu0 0.0
    %4290 = vmatprep.subr.mxu0 0.0
    %4291 = vmatpush1.xpose.msra.mxu0 0.0
    %4292 = vmatprep.subr.mxu0 0.0
    %4293 = vmatpush1.xpose.msra.mxu0 0.0
    %4294 = vmatprep.subr.mxu0 0.0
    %4295 = vmatpush1.xpose.msra.mxu0 0.0
    %4296 = vmatprep.subr.mxu0 0.0
    %4297 = vmatpush1.xpose.msra.mxu0 0.0
    %4298 = vmatprep.subr.mxu0 0.0
    %4299 = vmatpush1.xpose.msra.mxu0 0.0
    %4300 = vmatprep.subr.mxu0 0.0
    %4301 = vmatpush1.xpose.msra.mxu0 0.0
    %4302 = vmatprep.subr.mxu0 0.0
    %4303 = vmatpush1.xpose.msra.mxu0 0.0
    %4304 = vmatprep.subr.mxu0 0.0
    %4305 = vmatpush1.xpose.msra.mxu0 0.0
    %4306 = vmatprep.subr.mxu0 0.0
    %4307 = vmatpush1.xpose.msra.mxu0 0.0
    %4308 = vmatprep.subr.mxu0 0.0
    %4309 = vmatpush1.xpose.msra.mxu0 0.0
    %4310 = vmatprep.subr.mxu0 0.0
    %4311 = vmatpush1.xpose.msra.mxu0 0.0
    %4312 = vmatprep.subr.mxu0 0.0
    %4313 = vmatpush1.xpose.msra.mxu0 %v4280
    %4314 = vmatprep.subr.mxu0 0.0
    %4315 = vmatpush2.xpose.msra.mxu0 0.0
    %4316 = vmatprep.subr.mxu0 0.0
    %4317 = vmatpush2.xpose.msra.mxu0 0.0
    %4318 = vmatprep.subr.mxu0 0.0
    %4319 = vmatpush2.xpose.msra.mxu0 0.0
    %4320 = vmatprep.subr.mxu0 0.0
    %4321 = vmatpush2.xpose.msra.mxu0 0.0
    %4322 = vmatprep.subr.mxu0 0.0
    %4323 = vmatpush2.xpose.msra.mxu0 0.0
    %4324 = vmatprep.subr.mxu0 0.0
    %4325 = vmatpush2.xpose.msra.mxu0 0.0
    %4326 = vmatprep.subr.mxu0 0.0
    %4327 = vmatpush2.xpose.msra.mxu0 0.0
    %4328 = vmatprep.subr.mxu0 0.0
    %4329 = vmatpush2.xpose.msra.mxu0 0.0
    %4330 = vmatprep.subr.mxu0 0.0
    %4331 = vmatpush2.xpose.msra.mxu0 0.0
    %4332 = vmatprep.subr.mxu0 0.0
    %4333 = vmatpush2.xpose.msra.mxu0 0.0
    %4334 = vmatprep.subr.mxu0 0.0
    %4335 = vmatpush2.xpose.msra.mxu0 0.0
    %4336 = vmatprep.subr.mxu0 0.0
    %4337 = vmatpush2.xpose.msra.mxu0 0.0
    %4338 = vmatprep.subr.mxu0 0.0
    %4339 = vmatpush2.xpose.msra.mxu0 0.0
    %4340 = vmatprep.subr.mxu0 0.0
    %4341 = vmatpush2.xpose.msra.mxu0 0.0
    %4342 = vmatprep.subr.mxu0 0.0
    %4343 = vmatpush2.xpose.msra.mxu0 0.0
    %4344 = vmatprep.subr.mxu0 0.0
    %4345 = vmatpush2.xpose.msra.mxu0 0.0
    %4346 = vmatprep.mubr.f32.mxu0 0.0
    %4347 = vmatmul.mubr.f32.gmra.mxu0 %v4277
    %v4348 = vpop.f32.mrf.mxu0
    %v4349 = vadd.f32 0.0, %v4348
    %v4350 = vpop.f32.mrf.mxu0
    %4351 = vdwg.mxu0
    %v4352 = vmul.f32 %v4274, 0.35355338
    %v4353 = vmul.f32 %v4349, 0.35355338
    %vm4354 = vcmask 57344
    %v4355 = vsel %vm4354, %v4352, -inf
    %4356 = vmax.xlane.f32.xlu0 %v4355
    %v4357 = vpop.xlane.xlu0 %4356
    %v4358 = vsel %vm4354, %v4353, -inf
    %4359 = vmax.xlane.f32.xlu0 %v4358
    %v4360 = vpop.xlane.xlu0 %4359
    %v4361 = vsub.f32 %v4352, %v4357
    %v4362 = vsub.f32 %v4353, %v4360
    %v4363 = vmul.f32 %v4361, 1.442695
    %v4364 = vpow.pop %v4363
    %v4365 = vmul.f32 %v4362, 1.442695
    %v4366 = vpow.pop %v4365
    %v4367 = vsel %vm4354, %v4364, 0.0
    %4368 = vadd.xlane.f32.xlu0 %v4367
    %v4369 = vpop.xlane.xlu0 %4368
    %v4370 = vsel %vm4354, %v4366, 0.0
    %4371 = vadd.xlane.f32.xlu0 %v4370
    %v4372 = vpop.xlane.xlu0 %4371
    %v4373 = vrcp.pop %v4369
    %v4374 = vmul.f32 %v4364, %v4373
    %v4375 = vrcp.pop %v4372
    %v4376 = vmul.f32 %v4366, %v4375
    %v4377 = vadd.f32 %v4374, 0.0
    %v4378 = vadd.f32 %v4376, 0.0
    %4379 = vrot.lane.b32.xlu0 %v4171, 96
    %v4380 = vpop.permute.xlu0 %4379
    %v4383 = vsel %vm279, %v4374, 0
    %4385 = vmatprep.subr.mxu0 0.0
    %4386 = vmatpush1.msra.mxu0 0.0
    %4387 = vmatprep.subr.mxu0 0.0
    %4388 = vmatpush1.msra.mxu0 0.0
    %4389 = vmatprep.subr.mxu0 0.0
    %4390 = vmatpush1.msra.mxu0 0.0
    %4391 = vmatprep.subr.mxu0 0.0
    %4392 = vmatpush1.msra.mxu0 0.0
    %4393 = vmatprep.subr.mxu0 0.0
    %4394 = vmatpush1.msra.mxu0 0.0
    %4395 = vmatprep.subr.mxu0 0.0
    %4396 = vmatpush1.msra.mxu0 0.0
    %4397 = vmatprep.subr.mxu0 0.0
    %4398 = vmatpush1.msra.mxu0 0.0
    %4399 = vmatprep.subr.mxu0 0.0
    %4400 = vmatpush1.msra.mxu0 0.0
    %4401 = vmatprep.subr.mxu0 0.0
    %4402 = vmatpush1.msra.mxu0 0.0
    %4403 = vmatprep.subr.mxu0 0.0
    %4404 = vmatpush1.msra.mxu0 0.0
    %4405 = vmatprep.subr.mxu0 0.0
    %4406 = vmatpush1.msra.mxu0 0.0
    %4407 = vmatprep.subr.mxu0 0.0
    %4408 = vmatpush1.msra.mxu0 0.0
    %4409 = vmatprep.subr.mxu0 0.0
    %4410 = vmatpush1.msra.mxu0 0.0
    %4411 = vmatprep.subr.mxu0 0.0
    %4412 = vmatpush1.msra.mxu0 0.0
    %4413 = vmatprep.subr.mxu0 0.0
    %4414 = vmatpush1.msra.mxu0 0.0
    %4415 = vmatprep.subr.mxu0 0.0
    %4416 = vmatpush1.msra.mxu0 %v4380
    %4417 = vmatprep.subr.mxu0 0.0
    %4418 = vmatpush2.msra.mxu0 0.0
    %4419 = vmatprep.subr.mxu0 0.0
    %4420 = vmatpush2.msra.mxu0 0.0
    %4421 = vmatprep.subr.mxu0 0.0
    %4422 = vmatpush2.msra.mxu0 0.0
    %4423 = vmatprep.subr.mxu0 0.0
    %4424 = vmatpush2.msra.mxu0 0.0
    %4425 = vmatprep.subr.mxu0 0.0
    %4426 = vmatpush2.msra.mxu0 0.0
    %4427 = vmatprep.subr.mxu0 0.0
    %4428 = vmatpush2.msra.mxu0 0.0
    %4429 = vmatprep.subr.mxu0 0.0
    %4430 = vmatpush2.msra.mxu0 0.0
    %4431 = vmatprep.subr.mxu0 0.0
    %4432 = vmatpush2.msra.mxu0 0.0
    %4433 = vmatprep.subr.mxu0 0.0
    %4434 = vmatpush2.msra.mxu0 0.0
    %4435 = vmatprep.subr.mxu0 0.0
    %4436 = vmatpush2.msra.mxu0 0.0
    %4437 = vmatprep.subr.mxu0 0.0
    %4438 = vmatpush2.msra.mxu0 0.0
    %4439 = vmatprep.subr.mxu0 0.0
    %4440 = vmatpush2.msra.mxu0 0.0
    %4441 = vmatprep.subr.mxu0 0.0
    %4442 = vmatpush2.msra.mxu0 0.0
    %4443 = vmatprep.subr.mxu0 0.0
    %4444 = vmatpush2.msra.mxu0 0.0
    %4445 = vmatprep.subr.mxu0 0.0
    %4446 = vmatpush2.msra.mxu0 0.0
    %4447 = vmatprep.subr.mxu0 0.0
    %4448 = vmatpush2.msra.mxu0 0.0
    %4449 = vmatprep.mubr.f32.mxu0 0.0
    %4450 = vmatmul.mubr.f32.gmra.mxu0 %v4383
    %v4451 = vpop.f32.mrf.mxu0
    %v4452 = vadd.f32 0.0, %v4451
    %v4453 = vpop.f32.mrf.mxu0
    %4454 = vdwg.mxu0
    %4455 = vrot.lane.b32.xlu0 %v4176, 96
    %v4456 = vpop.permute.xlu0 %4455
    %v4459 = vsel %vm279, %v4376, 0
    %4461 = vmatprep.subr.mxu0 0.0
    %4462 = vmatpush1.msra.mxu0 0.0
    %4463 = vmatprep.subr.mxu0 0.0
    %4464 = vmatpush1.msra.mxu0 0.0
    %4465 = vmatprep.subr.mxu0 0.0
    %4466 = vmatpush1.msra.mxu0 0.0
    %4467 = vmatprep.subr.mxu0 0.0
    %4468 = vmatpush1.msra.mxu0 0.0
    %4469 = vmatprep.subr.mxu0 0.0
    %4470 = vmatpush1.msra.mxu0 0.0
    %4471 = vmatprep.subr.mxu0 0.0
    %4472 = vmatpush1.msra.mxu0 0.0
    %4473 = vmatprep.subr.mxu0 0.0
    %4474 = vmatpush1.msra.mxu0 0.0
    %4475 = vmatprep.subr.mxu0 0.0
    %4476 = vmatpush1.msra.mxu0 0.0
    %4477 = vmatprep.subr.mxu0 0.0
    %4478 = vmatpush1.msra.mxu0 0.0
    %4479 = vmatprep.subr.mxu0 0.0
    %4480 = vmatpush1.msra.mxu0 0.0
    %4481 = vmatprep.subr.mxu0 0.0
    %4482 = vmatpush1.msra.mxu0 0.0
    %4483 = vmatprep.subr.mxu0 0.0
    %4484 = vmatpush1.msra.mxu0 0.0
    %4485 = vmatprep.subr.mxu0 0.0
    %4486 = vmatpush1.msra.mxu0 0.0
    %4487 = vmatprep.subr.mxu0 0.0
    %4488 = vmatpush1.msra.mxu0 0.0
    %4489 = vmatprep.subr.mxu0 0.0
    %4490 = vmatpush1.msra.mxu0 0.0
    %4491 = vmatprep.subr.mxu0 0.0
    %4492 = vmatpush1.msra.mxu0 %v4456
    %4493 = vmatprep.subr.mxu0 0.0
    %4494 = vmatpush2.msra.mxu0 0.0
    %4495 = vmatprep.subr.mxu0 0.0
    %4496 = vmatpush2.msra.mxu0 0.0
    %4497 = vmatprep.subr.mxu0 0.0
    %4498 = vmatpush2.msra.mxu0 0.0
    %4499 = vmatprep.subr.mxu0 0.0
    %4500 = vmatpush2.msra.mxu0 0.0
    %4501 = vmatprep.subr.mxu0 0.0
    %4502 = vmatpush2.msra.mxu0 0.0
    %4503 = vmatprep.subr.mxu0 0.0
    %4504 = vmatpush2.msra.mxu0 0.0
    %4505 = vmatprep.subr.mxu0 0.0
    %4506 = vmatpush2.msra.mxu0 0.0
    %4507 = vmatprep.subr.mxu0 0.0
    %4508 = vmatpush2.msra.mxu0 0.0
    %4509 = vmatprep.subr.mxu0 0.0
    %4510 = vmatpush2.msra.mxu0 0.0
    %4511 = vmatprep.subr.mxu0 0.0
    %4512 = vmatpush2.msra.mxu0 0.0
    %4513 = vmatprep.subr.mxu0 0.0
    %4514 = vmatpush2.msra.mxu0 0.0
    %4515 = vmatprep.subr.mxu0 0.0
    %4516 = vmatpush2.msra.mxu0 0.0
    %4517 = vmatprep.subr.mxu0 0.0
    %4518 = vmatpush2.msra.mxu0 0.0
    %4519 = vmatprep.subr.mxu0 0.0
    %4520 = vmatpush2.msra.mxu0 0.0
    %4521 = vmatprep.subr.mxu0 0.0
    %4522 = vmatpush2.msra.mxu0 0.0
    %4523 = vmatprep.subr.mxu0 0.0
    %4524 = vmatpush2.msra.mxu0 0.0
    %4525 = vmatprep.mubr.f32.mxu0 0.0
    %4526 = vmatmul.mubr.f32.gmra.mxu0 %v4459
    %v4527 = vpop.f32.mrf.mxu0
    %v4528 = vadd.f32 0.0, %v4527
    %v4529 = vpop.f32.mrf.mxu0
    %4530 = vdwg.mxu0
    %v4531 = vlaneseq
    %v4532 = vshrl.u32 %v4531, 7
    %v4533 = vsub.s32 0, %v4532
    %v4534 = vrot.slane %v4194, %v4533
    %4535 = vrot.lane.b32.xlu0 %v4534, 120
    %v4536 = vpop.permute.xlu0 %4535
    %4537 = vrot.lane.b32.xlu0 %v4171, 120
    %v4538 = vpop.permute.xlu0 %4537
    %v4539 = vsel %vm279, %v4536, 0
    %v4541 = vsel %vm279, %v4538, 0
    %4543 = vmatprep.subr.mxu0 0.0
    %4544 = vmatpush1.xpose.msra.mxu0 0.0
    %4545 = vmatprep.subr.mxu0 0.0
    %4546 = vmatpush1.xpose.msra.mxu0 0.0
    %4547 = vmatprep.subr.mxu0 0.0
    %4548 = vmatpush1.xpose.msra.mxu0 0.0
    %4549 = vmatprep.subr.mxu0 0.0
    %4550 = vmatpush1.xpose.msra.mxu0 0.0
    %4551 = vmatprep.subr.mxu0 0.0
    %4552 = vmatpush1.xpose.msra.mxu0 0.0
    %4553 = vmatprep.subr.mxu0 0.0
    %4554 = vmatpush1.xpose.msra.mxu0 0.0
    %4555 = vmatprep.subr.mxu0 0.0
    %4556 = vmatpush1.xpose.msra.mxu0 0.0
    %4557 = vmatprep.subr.mxu0 0.0
    %4558 = vmatpush1.xpose.msra.mxu0 0.0
    %4559 = vmatprep.subr.mxu0 0.0
    %4560 = vmatpush1.xpose.msra.mxu0 0.0
    %4561 = vmatprep.subr.mxu0 0.0
    %4562 = vmatpush1.xpose.msra.mxu0 0.0
    %4563 = vmatprep.subr.mxu0 0.0
    %4564 = vmatpush1.xpose.msra.mxu0 0.0
    %4565 = vmatprep.subr.mxu0 0.0
    %4566 = vmatpush1.xpose.msra.mxu0 0.0
    %4567 = vmatprep.subr.mxu0 0.0
    %4568 = vmatpush1.xpose.msra.mxu0 0.0
    %4569 = vmatprep.subr.mxu0 0.0
    %4570 = vmatpush1.xpose.msra.mxu0 0.0
    %4571 = vmatprep.subr.mxu0 0.0
    %4572 = vmatpush1.xpose.msra.mxu0 0.0
    %4573 = vmatprep.subr.mxu0 0.0
    %4574 = vmatpush1.xpose.msra.mxu0 %v4541
    %4575 = vmatprep.subr.mxu0 0.0
    %4576 = vmatpush2.xpose.msra.mxu0 0.0
    %4577 = vmatprep.subr.mxu0 0.0
    %4578 = vmatpush2.xpose.msra.mxu0 0.0
    %4579 = vmatprep.subr.mxu0 0.0
    %4580 = vmatpush2.xpose.msra.mxu0 0.0
    %4581 = vmatprep.subr.mxu0 0.0
    %4582 = vmatpush2.xpose.msra.mxu0 0.0
    %4583 = vmatprep.subr.mxu0 0.0
    %4584 = vmatpush2.xpose.msra.mxu0 0.0
    %4585 = vmatprep.subr.mxu0 0.0
    %4586 = vmatpush2.xpose.msra.mxu0 0.0
    %4587 = vmatprep.subr.mxu0 0.0
    %4588 = vmatpush2.xpose.msra.mxu0 0.0
    %4589 = vmatprep.subr.mxu0 0.0
    %4590 = vmatpush2.xpose.msra.mxu0 0.0
    %4591 = vmatprep.subr.mxu0 0.0
    %4592 = vmatpush2.xpose.msra.mxu0 0.0
    %4593 = vmatprep.subr.mxu0 0.0
    %4594 = vmatpush2.xpose.msra.mxu0 0.0
    %4595 = vmatprep.subr.mxu0 0.0
    %4596 = vmatpush2.xpose.msra.mxu0 0.0
    %4597 = vmatprep.subr.mxu0 0.0
    %4598 = vmatpush2.xpose.msra.mxu0 0.0
    %4599 = vmatprep.subr.mxu0 0.0
    %4600 = vmatpush2.xpose.msra.mxu0 0.0
    %4601 = vmatprep.subr.mxu0 0.0
    %4602 = vmatpush2.xpose.msra.mxu0 0.0
    %4603 = vmatprep.subr.mxu0 0.0
    %4604 = vmatpush2.xpose.msra.mxu0 0.0
    %4605 = vmatprep.subr.mxu0 0.0
    %4606 = vmatpush2.xpose.msra.mxu0 0.0
    %4607 = vmatprep.mubr.f32.mxu0 0.0
    %4608 = vmatmul.mubr.f32.gmra.mxu0 %v4539
    %v4609 = vpop.f32.mrf.mxu0
    %v4610 = vadd.f32 0.0, %v4609
    %v4611 = vpop.f32.mrf.mxu0
    %4612 = vdwg.mxu0
    %v4613 = vlaneseq
    %v4614 = vshrl.u32 %v4613, 7
    %v4615 = vsub.s32 0, %v4614
    %v4616 = vrot.slane %v4201, %v4615
    %4617 = vrot.lane.b32.xlu0 %v4616, 120
    %v4618 = vpop.permute.xlu0 %4617
    %4619 = vrot.lane.b32.xlu0 %v4176, 120
    %v4620 = vpop.permute.xlu0 %4619
    %v4621 = vsel %vm279, %v4618, 0
    %v4623 = vsel %vm279, %v4620, 0
    %4625 = vmatprep.subr.mxu0 0.0
    %4626 = vmatpush1.xpose.msra.mxu0 0.0
    %4627 = vmatprep.subr.mxu0 0.0
    %4628 = vmatpush1.xpose.msra.mxu0 0.0
    %4629 = vmatprep.subr.mxu0 0.0
    %4630 = vmatpush1.xpose.msra.mxu0 0.0
    %4631 = vmatprep.subr.mxu0 0.0
    %4632 = vmatpush1.xpose.msra.mxu0 0.0
    %4633 = vmatprep.subr.mxu0 0.0
    %4634 = vmatpush1.xpose.msra.mxu0 0.0
    %4635 = vmatprep.subr.mxu0 0.0
    %4636 = vmatpush1.xpose.msra.mxu0 0.0
    %4637 = vmatprep.subr.mxu0 0.0
    %4638 = vmatpush1.xpose.msra.mxu0 0.0
    %4639 = vmatprep.subr.mxu0 0.0
    %4640 = vmatpush1.xpose.msra.mxu0 0.0
    %4641 = vmatprep.subr.mxu0 0.0
    %4642 = vmatpush1.xpose.msra.mxu0 0.0
    %4643 = vmatprep.subr.mxu0 0.0
    %4644 = vmatpush1.xpose.msra.mxu0 0.0
    %4645 = vmatprep.subr.mxu0 0.0
    %4646 = vmatpush1.xpose.msra.mxu0 0.0
    %4647 = vmatprep.subr.mxu0 0.0
    %4648 = vmatpush1.xpose.msra.mxu0 0.0
    %4649 = vmatprep.subr.mxu0 0.0
    %4650 = vmatpush1.xpose.msra.mxu0 0.0
    %4651 = vmatprep.subr.mxu0 0.0
    %4652 = vmatpush1.xpose.msra.mxu0 0.0
    %4653 = vmatprep.subr.mxu0 0.0
    %4654 = vmatpush1.xpose.msra.mxu0 0.0
    %4655 = vmatprep.subr.mxu0 0.0
    %4656 = vmatpush1.xpose.msra.mxu0 %v4623
    %4657 = vmatprep.subr.mxu0 0.0
    %4658 = vmatpush2.xpose.msra.mxu0 0.0
    %4659 = vmatprep.subr.mxu0 0.0
    %4660 = vmatpush2.xpose.msra.mxu0 0.0
    %4661 = vmatprep.subr.mxu0 0.0
    %4662 = vmatpush2.xpose.msra.mxu0 0.0
    %4663 = vmatprep.subr.mxu0 0.0
    %4664 = vmatpush2.xpose.msra.mxu0 0.0
    %4665 = vmatprep.subr.mxu0 0.0
    %4666 = vmatpush2.xpose.msra.mxu0 0.0
    %4667 = vmatprep.subr.mxu0 0.0
    %4668 = vmatpush2.xpose.msra.mxu0 0.0
    %4669 = vmatprep.subr.mxu0 0.0
    %4670 = vmatpush2.xpose.msra.mxu0 0.0
    %4671 = vmatprep.subr.mxu0 0.0
    %4672 = vmatpush2.xpose.msra.mxu0 0.0
    %4673 = vmatprep.subr.mxu0 0.0
    %4674 = vmatpush2.xpose.msra.mxu0 0.0
    %4675 = vmatprep.subr.mxu0 0.0
    %4676 = vmatpush2.xpose.msra.mxu0 0.0
    %4677 = vmatprep.subr.mxu0 0.0
    %4678 = vmatpush2.xpose.msra.mxu0 0.0
    %4679 = vmatprep.subr.mxu0 0.0
    %4680 = vmatpush2.xpose.msra.mxu0 0.0
    %4681 = vmatprep.subr.mxu0 0.0
    %4682 = vmatpush2.xpose.msra.mxu0 0.0
    %4683 = vmatprep.subr.mxu0 0.0
    %4684 = vmatpush2.xpose.msra.mxu0 0.0
    %4685 = vmatprep.subr.mxu0 0.0
    %4686 = vmatpush2.xpose.msra.mxu0 0.0
    %4687 = vmatprep.subr.mxu0 0.0
    %4688 = vmatpush2.xpose.msra.mxu0 0.0
    %4689 = vmatprep.mubr.f32.mxu0 0.0
    %4690 = vmatmul.mubr.f32.gmra.mxu0 %v4621
    %v4691 = vpop.f32.mrf.mxu0
    %v4692 = vadd.f32 0.0, %v4691
    %v4693 = vpop.f32.mrf.mxu0
    %4694 = vdwg.mxu0
    %v4695 = vmul.f32 %v4610, 0.35355338
    %v4696 = vmul.f32 %v4692, 0.35355338
    %v4697 = vsel %vm4354, %v4695, -inf
    %4698 = vmax.xlane.f32.xlu0 %v4697
    %v4699 = vpop.xlane.xlu0 %4698
    %v4700 = vsel %vm4354, %v4696, -inf
    %4701 = vmax.xlane.f32.xlu0 %v4700
    %v4702 = vpop.xlane.xlu0 %4701
    %v4703 = vsub.f32 %v4695, %v4699
    %v4704 = vsub.f32 %v4696, %v4702
    %v4705 = vmul.f32 %v4703, 1.442695
    %v4706 = vpow.pop %v4705
    %v4707 = vmul.f32 %v4704, 1.442695
    %v4708 = vpow.pop %v4707
    %v4709 = vsel %vm4354, %v4706, 0.0
    %4710 = vadd.xlane.f32.xlu0 %v4709
    %v4711 = vpop.xlane.xlu0 %4710
    %v4712 = vsel %vm4354, %v4708, 0.0
    %4713 = vadd.xlane.f32.xlu0 %v4712
    %v4714 = vpop.xlane.xlu0 %4713
    %v4715 = vrcp.pop %v4711
    %v4716 = vmul.f32 %v4706, %v4715
    %v4717 = vrcp.pop %v4714
    %v4718 = vmul.f32 %v4708, %v4717
    %v4719 = vadd.f32 %v4377, %v4716
    %v4720 = vadd.f32 %v4378, %v4718
    %4721 = vrot.lane.b32.xlu0 %v4171, 88
    %v4722 = vpop.permute.xlu0 %4721
    %v4725 = vsel %vm279, %v4716, 0
    %4727 = vmatprep.subr.mxu0 0.0
    %4728 = vmatpush1.msra.mxu0 0.0
    %4729 = vmatprep.subr.mxu0 0.0
    %4730 = vmatpush1.msra.mxu0 0.0
    %4731 = vmatprep.subr.mxu0 0.0
    %4732 = vmatpush1.msra.mxu0 0.0
    %4733 = vmatprep.subr.mxu0 0.0
    %4734 = vmatpush1.msra.mxu0 0.0
    %4735 = vmatprep.subr.mxu0 0.0
    %4736 = vmatpush1.msra.mxu0 0.0
    %4737 = vmatprep.subr.mxu0 0.0
    %4738 = vmatpush1.msra.mxu0 0.0
    %4739 = vmatprep.subr.mxu0 0.0
    %4740 = vmatpush1.msra.mxu0 0.0
    %4741 = vmatprep.subr.mxu0 0.0
    %4742 = vmatpush1.msra.mxu0 0.0
    %4743 = vmatprep.subr.mxu0 0.0
    %4744 = vmatpush1.msra.mxu0 0.0
    %4745 = vmatprep.subr.mxu0 0.0
    %4746 = vmatpush1.msra.mxu0 0.0
    %4747 = vmatprep.subr.mxu0 0.0
    %4748 = vmatpush1.msra.mxu0 0.0
    %4749 = vmatprep.subr.mxu0 0.0
    %4750 = vmatpush1.msra.mxu0 0.0
    %4751 = vmatprep.subr.mxu0 0.0
    %4752 = vmatpush1.msra.mxu0 0.0
    %4753 = vmatprep.subr.mxu0 0.0
    %4754 = vmatpush1.msra.mxu0 0.0
    %4755 = vmatprep.subr.mxu0 0.0
    %4756 = vmatpush1.msra.mxu0 0.0
    %4757 = vmatprep.subr.mxu0 0.0
    %4758 = vmatpush1.msra.mxu0 %v4722
    %4759 = vmatprep.subr.mxu0 0.0
    %4760 = vmatpush2.msra.mxu0 0.0
    %4761 = vmatprep.subr.mxu0 0.0
    %4762 = vmatpush2.msra.mxu0 0.0
    %4763 = vmatprep.subr.mxu0 0.0
    %4764 = vmatpush2.msra.mxu0 0.0
    %4765 = vmatprep.subr.mxu0 0.0
    %4766 = vmatpush2.msra.mxu0 0.0
    %4767 = vmatprep.subr.mxu0 0.0
    %4768 = vmatpush2.msra.mxu0 0.0
    %4769 = vmatprep.subr.mxu0 0.0
    %4770 = vmatpush2.msra.mxu0 0.0
    %4771 = vmatprep.subr.mxu0 0.0
    %4772 = vmatpush2.msra.mxu0 0.0
    %4773 = vmatprep.subr.mxu0 0.0
    %4774 = vmatpush2.msra.mxu0 0.0
    %4775 = vmatprep.subr.mxu0 0.0
    %4776 = vmatpush2.msra.mxu0 0.0
    %4777 = vmatprep.subr.mxu0 0.0
    %4778 = vmatpush2.msra.mxu0 0.0
    %4779 = vmatprep.subr.mxu0 0.0
    %4780 = vmatpush2.msra.mxu0 0.0
    %4781 = vmatprep.subr.mxu0 0.0
    %4782 = vmatpush2.msra.mxu0 0.0
    %4783 = vmatprep.subr.mxu0 0.0
    %4784 = vmatpush2.msra.mxu0 0.0
    %4785 = vmatprep.subr.mxu0 0.0
    %4786 = vmatpush2.msra.mxu0 0.0
    %4787 = vmatprep.subr.mxu0 0.0
    %4788 = vmatpush2.msra.mxu0 0.0
    %4789 = vmatprep.subr.mxu0 0.0
    %4790 = vmatpush2.msra.mxu0 0.0
    %4791 = vmatprep.mubr.f32.mxu0 0.0
    %4792 = vmatmul.mubr.f32.gmra.mxu0 %v4725
    %v4793 = vpop.f32.mrf.mxu0
    %v4794 = vadd.f32 0.0, %v4793
    %v4795 = vpop.f32.mrf.mxu0
    %4796 = vdwg.mxu0
    %4797 = vrot.lane.b32.xlu0 %v4176, 88
    %v4798 = vpop.permute.xlu0 %4797
    %v4801 = vsel %vm279, %v4718, 0
    %4803 = vmatprep.subr.mxu0 0.0
    %4804 = vmatpush1.msra.mxu0 0.0
    %4805 = vmatprep.subr.mxu0 0.0
    %4806 = vmatpush1.msra.mxu0 0.0
    %4807 = vmatprep.subr.mxu0 0.0
    %4808 = vmatpush1.msra.mxu0 0.0
    %4809 = vmatprep.subr.mxu0 0.0
    %4810 = vmatpush1.msra.mxu0 0.0
    %4811 = vmatprep.subr.mxu0 0.0
    %4812 = vmatpush1.msra.mxu0 0.0
    %4813 = vmatprep.subr.mxu0 0.0
    %4814 = vmatpush1.msra.mxu0 0.0
    %4815 = vmatprep.subr.mxu0 0.0
    %4816 = vmatpush1.msra.mxu0 0.0
    %4817 = vmatprep.subr.mxu0 0.0
    %4818 = vmatpush1.msra.mxu0 0.0
    %4819 = vmatprep.subr.mxu0 0.0
    %4820 = vmatpush1.msra.mxu0 0.0
    %4821 = vmatprep.subr.mxu0 0.0
    %4822 = vmatpush1.msra.mxu0 0.0
    %4823 = vmatprep.subr.mxu0 0.0
    %4824 = vmatpush1.msra.mxu0 0.0
    %4825 = vmatprep.subr.mxu0 0.0
    %4826 = vmatpush1.msra.mxu0 0.0
    %4827 = vmatprep.subr.mxu0 0.0
    %4828 = vmatpush1.msra.mxu0 0.0
    %4829 = vmatprep.subr.mxu0 0.0
    %4830 = vmatpush1.msra.mxu0 0.0
    %4831 = vmatprep.subr.mxu0 0.0
    %4832 = vmatpush1.msra.mxu0 0.0
    %4833 = vmatprep.subr.mxu0 0.0
    %4834 = vmatpush1.msra.mxu0 %v4798
    %4835 = vmatprep.subr.mxu0 0.0
    %4836 = vmatpush2.msra.mxu0 0.0
    %4837 = vmatprep.subr.mxu0 0.0
    %4838 = vmatpush2.msra.mxu0 0.0
    %4839 = vmatprep.subr.mxu0 0.0
    %4840 = vmatpush2.msra.mxu0 0.0
    %4841 = vmatprep.subr.mxu0 0.0
    %4842 = vmatpush2.msra.mxu0 0.0
    %4843 = vmatprep.subr.mxu0 0.0
    %4844 = vmatpush2.msra.mxu0 0.0
    %4845 = vmatprep.subr.mxu0 0.0
    %4846 = vmatpush2.msra.mxu0 0.0
    %4847 = vmatprep.subr.mxu0 0.0
    %4848 = vmatpush2.msra.mxu0 0.0
    %4849 = vmatprep.subr.mxu0 0.0
    %4850 = vmatpush2.msra.mxu0 0.0
    %4851 = vmatprep.subr.mxu0 0.0
    %4852 = vmatpush2.msra.mxu0 0.0
    %4853 = vmatprep.subr.mxu0 0.0
    %4854 = vmatpush2.msra.mxu0 0.0
    %4855 = vmatprep.subr.mxu0 0.0
    %4856 = vmatpush2.msra.mxu0 0.0
    %4857 = vmatprep.subr.mxu0 0.0
    %4858 = vmatpush2.msra.mxu0 0.0
    %4859 = vmatprep.subr.mxu0 0.0
    %4860 = vmatpush2.msra.mxu0 0.0
    %4861 = vmatprep.subr.mxu0 0.0
    %4862 = vmatpush2.msra.mxu0 0.0
    %4863 = vmatprep.subr.mxu0 0.0
    %4864 = vmatpush2.msra.mxu0 0.0
    %4865 = vmatprep.subr.mxu0 0.0
    %4866 = vmatpush2.msra.mxu0 0.0
    %4867 = vmatprep.mubr.f32.mxu0 0.0
    %4868 = vmatmul.mubr.f32.gmra.mxu0 %v4801
    %v4869 = vpop.f32.mrf.mxu0
    %v4870 = vadd.f32 0.0, %v4869
    %v4871 = vpop.f32.mrf.mxu0
    %4872 = vdwg.mxu0
    %4873 = vrot.lane.b32.xlu0 %v4534, 112
    %v4874 = vpop.permute.xlu0 %4873
    %4875 = vrot.lane.b32.xlu0 %v4171, 112
    %v4876 = vpop.permute.xlu0 %4875
    %v4877 = vsel %vm279, %v4874, 0
    %v4879 = vsel %vm279, %v4876, 0
    %4881 = vmatprep.subr.mxu0 0.0
    %4882 = vmatpush1.xpose.msra.mxu0 0.0
    %4883 = vmatprep.subr.mxu0 0.0
    %4884 = vmatpush1.xpose.msra.mxu0 0.0
    %4885 = vmatprep.subr.mxu0 0.0
    %4886 = vmatpush1.xpose.msra.mxu0 0.0
    %4887 = vmatprep.subr.mxu0 0.0
    %4888 = vmatpush1.xpose.msra.mxu0 0.0
    %4889 = vmatprep.subr.mxu0 0.0
    %4890 = vmatpush1.xpose.msra.mxu0 0.0
    %4891 = vmatprep.subr.mxu0 0.0
    %4892 = vmatpush1.xpose.msra.mxu0 0.0
    %4893 = vmatprep.subr.mxu0 0.0
    %4894 = vmatpush1.xpose.msra.mxu0 0.0
    %4895 = vmatprep.subr.mxu0 0.0
    %4896 = vmatpush1.xpose.msra.mxu0 0.0
    %4897 = vmatprep.subr.mxu0 0.0
    %4898 = vmatpush1.xpose.msra.mxu0 0.0
    %4899 = vmatprep.subr.mxu0 0.0
    %4900 = vmatpush1.xpose.msra.mxu0 0.0
    %4901 = vmatprep.subr.mxu0 0.0
    %4902 = vmatpush1.xpose.msra.mxu0 0.0
    %4903 = vmatprep.subr.mxu0 0.0
    %4904 = vmatpush1.xpose.msra.mxu0 0.0
    %4905 = vmatprep.subr.mxu0 0.0
    %4906 = vmatpush1.xpose.msra.mxu0 0.0
    %4907 = vmatprep.subr.mxu0 0.0
    %4908 = vmatpush1.xpose.msra.mxu0 0.0
    %4909 = vmatprep.subr.mxu0 0.0
    %4910 = vmatpush1.xpose.msra.mxu0 0.0
    %4911 = vmatprep.subr.mxu0 0.0
    %4912 = vmatpush1.xpose.msra.mxu0 %v4879
    %4913 = vmatprep.subr.mxu0 0.0
    %4914 = vmatpush2.xpose.msra.mxu0 0.0
    %4915 = vmatprep.subr.mxu0 0.0
    %4916 = vmatpush2.xpose.msra.mxu0 0.0
    %4917 = vmatprep.subr.mxu0 0.0
    %4918 = vmatpush2.xpose.msra.mxu0 0.0
    %4919 = vmatprep.subr.mxu0 0.0
    %4920 = vmatpush2.xpose.msra.mxu0 0.0
    %4921 = vmatprep.subr.mxu0 0.0
    %4922 = vmatpush2.xpose.msra.mxu0 0.0
    %4923 = vmatprep.subr.mxu0 0.0
    %4924 = vmatpush2.xpose.msra.mxu0 0.0
    %4925 = vmatprep.subr.mxu0 0.0
    %4926 = vmatpush2.xpose.msra.mxu0 0.0
    %4927 = vmatprep.subr.mxu0 0.0
    %4928 = vmatpush2.xpose.msra.mxu0 0.0
    %4929 = vmatprep.subr.mxu0 0.0
    %4930 = vmatpush2.xpose.msra.mxu0 0.0
    %4931 = vmatprep.subr.mxu0 0.0
    %4932 = vmatpush2.xpose.msra.mxu0 0.0
    %4933 = vmatprep.subr.mxu0 0.0
    %4934 = vmatpush2.xpose.msra.mxu0 0.0
    %4935 = vmatprep.subr.mxu0 0.0
    %4936 = vmatpush2.xpose.msra.mxu0 0.0
    %4937 = vmatprep.subr.mxu0 0.0
    %4938 = vmatpush2.xpose.msra.mxu0 0.0
    %4939 = vmatprep.subr.mxu0 0.0
    %4940 = vmatpush2.xpose.msra.mxu0 0.0
    %4941 = vmatprep.subr.mxu0 0.0
    %4942 = vmatpush2.xpose.msra.mxu0 0.0
    %4943 = vmatprep.subr.mxu0 0.0
    %4944 = vmatpush2.xpose.msra.mxu0 0.0
    %4945 = vmatprep.mubr.f32.mxu0 0.0
    %4946 = vmatmul.mubr.f32.gmra.mxu0 %v4877
    %v4947 = vpop.f32.mrf.mxu0
    %v4948 = vadd.f32 0.0, %v4947
    %v4949 = vpop.f32.mrf.mxu0
    %4950 = vdwg.mxu0
    %4951 = vrot.lane.b32.xlu0 %v4616, 112
    %v4952 = vpop.permute.xlu0 %4951
    %4953 = vrot.lane.b32.xlu0 %v4176, 112
    %v4954 = vpop.permute.xlu0 %4953
    %v4955 = vsel %vm279, %v4952, 0
    %v4957 = vsel %vm279, %v4954, 0
    %4959 = vmatprep.subr.mxu0 0.0
    %4960 = vmatpush1.xpose.msra.mxu0 0.0
    %4961 = vmatprep.subr.mxu0 0.0
    %4962 = vmatpush1.xpose.msra.mxu0 0.0
    %4963 = vmatprep.subr.mxu0 0.0
    %4964 = vmatpush1.xpose.msra.mxu0 0.0
    %4965 = vmatprep.subr.mxu0 0.0
    %4966 = vmatpush1.xpose.msra.mxu0 0.0
    %4967 = vmatprep.subr.mxu0 0.0
    %4968 = vmatpush1.xpose.msra.mxu0 0.0
    %4969 = vmatprep.subr.mxu0 0.0
    %4970 = vmatpush1.xpose.msra.mxu0 0.0
    %4971 = vmatprep.subr.mxu0 0.0
    %4972 = vmatpush1.xpose.msra.mxu0 0.0
    %4973 = vmatprep.subr.mxu0 0.0
    %4974 = vmatpush1.xpose.msra.mxu0 0.0
    %4975 = vmatprep.subr.mxu0 0.0
    %4976 = vmatpush1.xpose.msra.mxu0 0.0
    %4977 = vmatprep.subr.mxu0 0.0
    %4978 = vmatpush1.xpose.msra.mxu0 0.0
    %4979 = vmatprep.subr.mxu0 0.0
    %4980 = vmatpush1.xpose.msra.mxu0 0.0
    %4981 = vmatprep.subr.mxu0 0.0
    %4982 = vmatpush1.xpose.msra.mxu0 0.0
    %4983 = vmatprep.subr.mxu0 0.0
    %4984 = vmatpush1.xpose.msra.mxu0 0.0
    %4985 = vmatprep.subr.mxu0 0.0
    %4986 = vmatpush1.xpose.msra.mxu0 0.0
    %4987 = vmatprep.subr.mxu0 0.0
    %4988 = vmatpush1.xpose.msra.mxu0 0.0
    %4989 = vmatprep.subr.mxu0 0.0
    %4990 = vmatpush1.xpose.msra.mxu0 %v4957
    %4991 = vmatprep.subr.mxu0 0.0
    %4992 = vmatpush2.xpose.msra.mxu0 0.0
    %4993 = vmatprep.subr.mxu0 0.0
    %4994 = vmatpush2.xpose.msra.mxu0 0.0
    %4995 = vmatprep.subr.mxu0 0.0
    %4996 = vmatpush2.xpose.msra.mxu0 0.0
    %4997 = vmatprep.subr.mxu0 0.0
    %4998 = vmatpush2.xpose.msra.mxu0 0.0
    %4999 = vmatprep.subr.mxu0 0.0
    %5000 = vmatpush2.xpose.msra.mxu0 0.0
    %5001 = vmatprep.subr.mxu0 0.0
    %5002 = vmatpush2.xpose.msra.mxu0 0.0
    %5003 = vmatprep.subr.mxu0 0.0
    %5004 = vmatpush2.xpose.msra.mxu0 0.0
    %5005 = vmatprep.subr.mxu0 0.0
    %5006 = vmatpush2.xpose.msra.mxu0 0.0
    %5007 = vmatprep.subr.mxu0 0.0
    %5008 = vmatpush2.xpose.msra.mxu0 0.0
    %5009 = vmatprep.subr.mxu0 0.0
    %5010 = vmatpush2.xpose.msra.mxu0 0.0
    %5011 = vmatprep.subr.mxu0 0.0
    %5012 = vmatpush2.xpose.msra.mxu0 0.0
    %5013 = vmatprep.subr.mxu0 0.0
    %5014 = vmatpush2.xpose.msra.mxu0 0.0
    %5015 = vmatprep.subr.mxu0 0.0
    %5016 = vmatpush2.xpose.msra.mxu0 0.0
    %5017 = vmatprep.subr.mxu0 0.0
    %5018 = vmatpush2.xpose.msra.mxu0 0.0
    %5019 = vmatprep.subr.mxu0 0.0
    %5020 = vmatpush2.xpose.msra.mxu0 0.0
    %5021 = vmatprep.subr.mxu0 0.0
    %5022 = vmatpush2.xpose.msra.mxu0 0.0
    %5023 = vmatprep.mubr.f32.mxu0 0.0
    %5024 = vmatmul.mubr.f32.gmra.mxu0 %v4955
    %v5025 = vpop.f32.mrf.mxu0
    %v5026 = vadd.f32 0.0, %v5025
    %v5027 = vpop.f32.mrf.mxu0
    %5028 = vdwg.mxu0
    %v5029 = vmul.f32 %v4948, 0.35355338
    %v5030 = vmul.f32 %v5026, 0.35355338
    %v5031 = vsel %vm4354, %v5029, -inf
    %5032 = vmax.xlane.f32.xlu0 %v5031
    %v5033 = vpop.xlane.xlu0 %5032
    %v5034 = vsel %vm4354, %v5030, -inf
    %5035 = vmax.xlane.f32.xlu0 %v5034
    %v5036 = vpop.xlane.xlu0 %5035
    %v5037 = vsub.f32 %v5029, %v5033
    %v5038 = vsub.f32 %v5030, %v5036
    %v5039 = vmul.f32 %v5037, 1.442695
    %v5040 = vpow.pop %v5039
    %v5041 = vmul.f32 %v5038, 1.442695
    %v5042 = vpow.pop %v5041
    %v5043 = vsel %vm4354, %v5040, 0.0
    %5044 = vadd.xlane.f32.xlu0 %v5043
    %v5045 = vpop.xlane.xlu0 %5044
    %v5046 = vsel %vm4354, %v5042, 0.0
    %5047 = vadd.xlane.f32.xlu0 %v5046
    %v5048 = vpop.xlane.xlu0 %5047
    %v5049 = vrcp.pop %v5045
    %v5050 = vmul.f32 %v5040, %v5049
    %v5051 = vrcp.pop %v5048
    %v5052 = vmul.f32 %v5042, %v5051
    %v5053 = vadd.f32 %v4719, %v5050
    %v5054 = vadd.f32 %v4720, %v5052
    %5055 = vrot.lane.b32.xlu0 %v4171, 80
    %v5056 = vpop.permute.xlu0 %5055
    %v5059 = vsel %vm279, %v5050, 0
    %5061 = vmatprep.subr.mxu0 0.0
    %5062 = vmatpush1.msra.mxu0 0.0
    %5063 = vmatprep.subr.mxu0 0.0
    %5064 = vmatpush1.msra.mxu0 0.0
    %5065 = vmatprep.subr.mxu0 0.0
    %5066 = vmatpush1.msra.mxu0 0.0
    %5067 = vmatprep.subr.mxu0 0.0
    %5068 = vmatpush1.msra.mxu0 0.0
    %5069 = vmatprep.subr.mxu0 0.0
    %5070 = vmatpush1.msra.mxu0 0.0
    %5071 = vmatprep.subr.mxu0 0.0
    %5072 = vmatpush1.msra.mxu0 0.0
    %5073 = vmatprep.subr.mxu0 0.0
    %5074 = vmatpush1.msra.mxu0 0.0
    %5075 = vmatprep.subr.mxu0 0.0
    %5076 = vmatpush1.msra.mxu0 0.0
    %5077 = vmatprep.subr.mxu0 0.0
    %5078 = vmatpush1.msra.mxu0 0.0
    %5079 = vmatprep.subr.mxu0 0.0
    %5080 = vmatpush1.msra.mxu0 0.0
    %5081 = vmatprep.subr.mxu0 0.0
    %5082 = vmatpush1.msra.mxu0 0.0
    %5083 = vmatprep.subr.mxu0 0.0
    %5084 = vmatpush1.msra.mxu0 0.0
    %5085 = vmatprep.subr.mxu0 0.0
    %5086 = vmatpush1.msra.mxu0 0.0
    %5087 = vmatprep.subr.mxu0 0.0
    %5088 = vmatpush1.msra.mxu0 0.0
    %5089 = vmatprep.subr.mxu0 0.0
    %5090 = vmatpush1.msra.mxu0 0.0
    %5091 = vmatprep.subr.mxu0 0.0
    %5092 = vmatpush1.msra.mxu0 %v5056
    %5093 = vmatprep.subr.mxu0 0.0
    %5094 = vmatpush2.msra.mxu0 0.0
    %5095 = vmatprep.subr.mxu0 0.0
    %5096 = vmatpush2.msra.mxu0 0.0
    %5097 = vmatprep.subr.mxu0 0.0
    %5098 = vmatpush2.msra.mxu0 0.0
    %5099 = vmatprep.subr.mxu0 0.0
    %5100 = vmatpush2.msra.mxu0 0.0
    %5101 = vmatprep.subr.mxu0 0.0
    %5102 = vmatpush2.msra.mxu0 0.0
    %5103 = vmatprep.subr.mxu0 0.0
    %5104 = vmatpush2.msra.mxu0 0.0
    %5105 = vmatprep.subr.mxu0 0.0
    %5106 = vmatpush2.msra.mxu0 0.0
    %5107 = vmatprep.subr.mxu0 0.0
    %5108 = vmatpush2.msra.mxu0 0.0
    %5109 = vmatprep.subr.mxu0 0.0
    %5110 = vmatpush2.msra.mxu0 0.0
    %5111 = vmatprep.subr.mxu0 0.0
    %5112 = vmatpush2.msra.mxu0 0.0
    %5113 = vmatprep.subr.mxu0 0.0
    %5114 = vmatpush2.msra.mxu0 0.0
    %5115 = vmatprep.subr.mxu0 0.0
    %5116 = vmatpush2.msra.mxu0 0.0
    %5117 = vmatprep.subr.mxu0 0.0
    %5118 = vmatpush2.msra.mxu0 0.0
    %5119 = vmatprep.subr.mxu0 0.0
    %5120 = vmatpush2.msra.mxu0 0.0
    %5121 = vmatprep.subr.mxu0 0.0
    %5122 = vmatpush2.msra.mxu0 0.0
    %5123 = vmatprep.subr.mxu0 0.0
    %5124 = vmatpush2.msra.mxu0 0.0
    %5125 = vmatprep.mubr.f32.mxu0 0.0
    %5126 = vmatmul.mubr.f32.gmra.mxu0 %v5059
    %v5127 = vpop.f32.mrf.mxu0
    %v5128 = vadd.f32 0.0, %v5127
    %v5129 = vpop.f32.mrf.mxu0
    %5130 = vdwg.mxu0
    %5131 = vrot.lane.b32.xlu0 %v4176, 80
    %v5132 = vpop.permute.xlu0 %5131
    %v5135 = vsel %vm279, %v5052, 0
    %5137 = vmatprep.subr.mxu0 0.0
    %5138 = vmatpush1.msra.mxu0 0.0
    %5139 = vmatprep.subr.mxu0 0.0
    %5140 = vmatpush1.msra.mxu0 0.0
    %5141 = vmatprep.subr.mxu0 0.0
    %5142 = vmatpush1.msra.mxu0 0.0
    %5143 = vmatprep.subr.mxu0 0.0
    %5144 = vmatpush1.msra.mxu0 0.0
    %5145 = vmatprep.subr.mxu0 0.0
    %5146 = vmatpush1.msra.mxu0 0.0
    %5147 = vmatprep.subr.mxu0 0.0
    %5148 = vmatpush1.msra.mxu0 0.0
    %5149 = vmatprep.subr.mxu0 0.0
    %5150 = vmatpush1.msra.mxu0 0.0
    %5151 = vmatprep.subr.mxu0 0.0
    %5152 = vmatpush1.msra.mxu0 0.0
    %5153 = vmatprep.subr.mxu0 0.0
    %5154 = vmatpush1.msra.mxu0 0.0
    %5155 = vmatprep.subr.mxu0 0.0
    %5156 = vmatpush1.msra.mxu0 0.0
    %5157 = vmatprep.subr.mxu0 0.0
    %5158 = vmatpush1.msra.mxu0 0.0
    %5159 = vmatprep.subr.mxu0 0.0
    %5160 = vmatpush1.msra.mxu0 0.0
    %5161 = vmatprep.subr.mxu0 0.0
    %5162 = vmatpush1.msra.mxu0 0.0
    %5163 = vmatprep.subr.mxu0 0.0
    %5164 = vmatpush1.msra.mxu0 0.0
    %5165 = vmatprep.subr.mxu0 0.0
    %5166 = vmatpush1.msra.mxu0 0.0
    %5167 = vmatprep.subr.mxu0 0.0
    %5168 = vmatpush1.msra.mxu0 %v5132
    %5169 = vmatprep.subr.mxu0 0.0
    %5170 = vmatpush2.msra.mxu0 0.0
    %5171 = vmatprep.subr.mxu0 0.0
    %5172 = vmatpush2.msra.mxu0 0.0
    %5173 = vmatprep.subr.mxu0 0.0
    %5174 = vmatpush2.msra.mxu0 0.0
    %5175 = vmatprep.subr.mxu0 0.0
    %5176 = vmatpush2.msra.mxu0 0.0
    %5177 = vmatprep.subr.mxu0 0.0
    %5178 = vmatpush2.msra.mxu0 0.0
    %5179 = vmatprep.subr.mxu0 0.0
    %5180 = vmatpush2.msra.mxu0 0.0
    %5181 = vmatprep.subr.mxu0 0.0
    %5182 = vmatpush2.msra.mxu0 0.0
    %5183 = vmatprep.subr.mxu0 0.0
    %5184 = vmatpush2.msra.mxu0 0.0
    %5185 = vmatprep.subr.mxu0 0.0
    %5186 = vmatpush2.msra.mxu0 0.0
    %5187 = vmatprep.subr.mxu0 0.0
    %5188 = vmatpush2.msra.mxu0 0.0
    %5189 = vmatprep.subr.mxu0 0.0
    %5190 = vmatpush2.msra.mxu0 0.0
    %5191 = vmatprep.subr.mxu0 0.0
    %5192 = vmatpush2.msra.mxu0 0.0
    %5193 = vmatprep.subr.mxu0 0.0
    %5194 = vmatpush2.msra.mxu0 0.0
    %5195 = vmatprep.subr.mxu0 0.0
    %5196 = vmatpush2.msra.mxu0 0.0
    %5197 = vmatprep.subr.mxu0 0.0
    %5198 = vmatpush2.msra.mxu0 0.0
    %5199 = vmatprep.subr.mxu0 0.0
    %5200 = vmatpush2.msra.mxu0 0.0
    %5201 = vmatprep.mubr.f32.mxu0 0.0
    %5202 = vmatmul.mubr.f32.gmra.mxu0 %v5135
    %v5203 = vpop.f32.mrf.mxu0
    %v5204 = vadd.f32 0.0, %v5203
    %v5205 = vpop.f32.mrf.mxu0
    %5206 = vdwg.mxu0
    %5207 = vrot.lane.b32.xlu0 %v4534, 104
    %v5208 = vpop.permute.xlu0 %5207
    %5209 = vrot.lane.b32.xlu0 %v4171, 104
    %v5210 = vpop.permute.xlu0 %5209
    %v5211 = vsel %vm279, %v5208, 0
    %v5213 = vsel %vm279, %v5210, 0
    %5215 = vmatprep.subr.mxu0 0.0
    %5216 = vmatpush1.xpose.msra.mxu0 0.0
    %5217 = vmatprep.subr.mxu0 0.0
    %5218 = vmatpush1.xpose.msra.mxu0 0.0
    %5219 = vmatprep.subr.mxu0 0.0
    %5220 = vmatpush1.xpose.msra.mxu0 0.0
    %5221 = vmatprep.subr.mxu0 0.0
    %5222 = vmatpush1.xpose.msra.mxu0 0.0
    %5223 = vmatprep.subr.mxu0 0.0
    %5224 = vmatpush1.xpose.msra.mxu0 0.0
    %5225 = vmatprep.subr.mxu0 0.0
    %5226 = vmatpush1.xpose.msra.mxu0 0.0
    %5227 = vmatprep.subr.mxu0 0.0
    %5228 = vmatpush1.xpose.msra.mxu0 0.0
    %5229 = vmatprep.subr.mxu0 0.0
    %5230 = vmatpush1.xpose.msra.mxu0 0.0
    %5231 = vmatprep.subr.mxu0 0.0
    %5232 = vmatpush1.xpose.msra.mxu0 0.0
    %5233 = vmatprep.subr.mxu0 0.0
    %5234 = vmatpush1.xpose.msra.mxu0 0.0
    %5235 = vmatprep.subr.mxu0 0.0
    %5236 = vmatpush1.xpose.msra.mxu0 0.0
    %5237 = vmatprep.subr.mxu0 0.0
    %5238 = vmatpush1.xpose.msra.mxu0 0.0
    %5239 = vmatprep.subr.mxu0 0.0
    %5240 = vmatpush1.xpose.msra.mxu0 0.0
    %5241 = vmatprep.subr.mxu0 0.0
    %5242 = vmatpush1.xpose.msra.mxu0 0.0
    %5243 = vmatprep.subr.mxu0 0.0
    %5244 = vmatpush1.xpose.msra.mxu0 0.0
    %5245 = vmatprep.subr.mxu0 0.0
    %5246 = vmatpush1.xpose.msra.mxu0 %v5213
    %5247 = vmatprep.subr.mxu0 0.0
    %5248 = vmatpush2.xpose.msra.mxu0 0.0
    %5249 = vmatprep.subr.mxu0 0.0
    %5250 = vmatpush2.xpose.msra.mxu0 0.0
    %5251 = vmatprep.subr.mxu0 0.0
    %5252 = vmatpush2.xpose.msra.mxu0 0.0
    %5253 = vmatprep.subr.mxu0 0.0
    %5254 = vmatpush2.xpose.msra.mxu0 0.0
    %5255 = vmatprep.subr.mxu0 0.0
    %5256 = vmatpush2.xpose.msra.mxu0 0.0
    %5257 = vmatprep.subr.mxu0 0.0
    %5258 = vmatpush2.xpose.msra.mxu0 0.0
    %5259 = vmatprep.subr.mxu0 0.0
    %5260 = vmatpush2.xpose.msra.mxu0 0.0
    %5261 = vmatprep.subr.mxu0 0.0
    %5262 = vmatpush2.xpose.msra.mxu0 0.0
    %5263 = vmatprep.subr.mxu0 0.0
    %5264 = vmatpush2.xpose.msra.mxu0 0.0
    %5265 = vmatprep.subr.mxu0 0.0
    %5266 = vmatpush2.xpose.msra.mxu0 0.0
    %5267 = vmatprep.subr.mxu0 0.0
    %5268 = vmatpush2.xpose.msra.mxu0 0.0
    %5269 = vmatprep.subr.mxu0 0.0
    %5270 = vmatpush2.xpose.msra.mxu0 0.0
    %5271 = vmatprep.subr.mxu0 0.0
    %5272 = vmatpush2.xpose.msra.mxu0 0.0
    %5273 = vmatprep.subr.mxu0 0.0
    %5274 = vmatpush2.xpose.msra.mxu0 0.0
    %5275 = vmatprep.subr.mxu0 0.0
    %5276 = vmatpush2.xpose.msra.mxu0 0.0
    %5277 = vmatprep.subr.mxu0 0.0
    %5278 = vmatpush2.xpose.msra.mxu0 0.0
    %5279 = vmatprep.mubr.f32.mxu0 0.0
    %5280 = vmatmul.mubr.f32.gmra.mxu0 %v5211
    %v5281 = vpop.f32.mrf.mxu0
    %v5282 = vadd.f32 0.0, %v5281
    %v5283 = vpop.f32.mrf.mxu0
    %5284 = vdwg.mxu0
    %5285 = vrot.lane.b32.xlu0 %v4616, 104
    %v5286 = vpop.permute.xlu0 %5285
    %5287 = vrot.lane.b32.xlu0 %v4176, 104
    %v5288 = vpop.permute.xlu0 %5287
    %v5289 = vsel %vm279, %v5286, 0
    %v5291 = vsel %vm279, %v5288, 0
    %5293 = vmatprep.subr.mxu0 0.0
    %5294 = vmatpush1.xpose.msra.mxu0 0.0
    %5295 = vmatprep.subr.mxu0 0.0
    %5296 = vmatpush1.xpose.msra.mxu0 0.0
    %5297 = vmatprep.subr.mxu0 0.0
    %5298 = vmatpush1.xpose.msra.mxu0 0.0
    %5299 = vmatprep.subr.mxu0 0.0
    %5300 = vmatpush1.xpose.msra.mxu0 0.0
    %5301 = vmatprep.subr.mxu0 0.0
    %5302 = vmatpush1.xpose.msra.mxu0 0.0
    %5303 = vmatprep.subr.mxu0 0.0
    %5304 = vmatpush1.xpose.msra.mxu0 0.0
    %5305 = vmatprep.subr.mxu0 0.0
    %5306 = vmatpush1.xpose.msra.mxu0 0.0
    %5307 = vmatprep.subr.mxu0 0.0
    %5308 = vmatpush1.xpose.msra.mxu0 0.0
    %5309 = vmatprep.subr.mxu0 0.0
    %5310 = vmatpush1.xpose.msra.mxu0 0.0
    %5311 = vmatprep.subr.mxu0 0.0
    %5312 = vmatpush1.xpose.msra.mxu0 0.0
    %5313 = vmatprep.subr.mxu0 0.0
    %5314 = vmatpush1.xpose.msra.mxu0 0.0
    %5315 = vmatprep.subr.mxu0 0.0
    %5316 = vmatpush1.xpose.msra.mxu0 0.0
    %5317 = vmatprep.subr.mxu0 0.0
    %5318 = vmatpush1.xpose.msra.mxu0 0.0
    %5319 = vmatprep.subr.mxu0 0.0
    %5320 = vmatpush1.xpose.msra.mxu0 0.0
    %5321 = vmatprep.subr.mxu0 0.0
    %5322 = vmatpush1.xpose.msra.mxu0 0.0
    %5323 = vmatprep.subr.mxu0 0.0
    %5324 = vmatpush1.xpose.msra.mxu0 %v5291
    %5325 = vmatprep.subr.mxu0 0.0
    %5326 = vmatpush2.xpose.msra.mxu0 0.0
    %5327 = vmatprep.subr.mxu0 0.0
    %5328 = vmatpush2.xpose.msra.mxu0 0.0
    %5329 = vmatprep.subr.mxu0 0.0
    %5330 = vmatpush2.xpose.msra.mxu0 0.0
    %5331 = vmatprep.subr.mxu0 0.0
    %5332 = vmatpush2.xpose.msra.mxu0 0.0
    %5333 = vmatprep.subr.mxu0 0.0
    %5334 = vmatpush2.xpose.msra.mxu0 0.0
    %5335 = vmatprep.subr.mxu0 0.0
    %5336 = vmatpush2.xpose.msra.mxu0 0.0
    %5337 = vmatprep.subr.mxu0 0.0
    %5338 = vmatpush2.xpose.msra.mxu0 0.0
    %5339 = vmatprep.subr.mxu0 0.0
    %5340 = vmatpush2.xpose.msra.mxu0 0.0
    %5341 = vmatprep.subr.mxu0 0.0
    %5342 = vmatpush2.xpose.msra.mxu0 0.0
    %5343 = vmatprep.subr.mxu0 0.0
    %5344 = vmatpush2.xpose.msra.mxu0 0.0
    %5345 = vmatprep.subr.mxu0 0.0
    %5346 = vmatpush2.xpose.msra.mxu0 0.0
    %5347 = vmatprep.subr.mxu0 0.0
    %5348 = vmatpush2.xpose.msra.mxu0 0.0
    %5349 = vmatprep.subr.mxu0 0.0
    %5350 = vmatpush2.xpose.msra.mxu0 0.0
    %5351 = vmatprep.subr.mxu0 0.0
    %5352 = vmatpush2.xpose.msra.mxu0 0.0
    %5353 = vmatprep.subr.mxu0 0.0
    %5354 = vmatpush2.xpose.msra.mxu0 0.0
    %5355 = vmatprep.subr.mxu0 0.0
    %5356 = vmatpush2.xpose.msra.mxu0 0.0
    %5357 = vmatprep.mubr.f32.mxu0 0.0
    %5358 = vmatmul.mubr.f32.gmra.mxu0 %v5289
    %v5359 = vpop.f32.mrf.mxu0
    %v5360 = vadd.f32 0.0, %v5359
    %v5361 = vpop.f32.mrf.mxu0
    %5362 = vdwg.mxu0
    %v5363 = vmul.f32 %v5282, 0.35355338
    %v5364 = vmul.f32 %v5360, 0.35355338
    %v5365 = vsel %vm4354, %v5363, -inf
    %5366 = vmax.xlane.f32.xlu0 %v5365
    %v5367 = vpop.xlane.xlu0 %5366
    %v5368 = vsel %vm4354, %v5364, -inf
    %5369 = vmax.xlane.f32.xlu0 %v5368
    %v5370 = vpop.xlane.xlu0 %5369
    %v5371 = vsub.f32 %v5363, %v5367
    %v5372 = vsub.f32 %v5364, %v5370
    %v5373 = vmul.f32 %v5371, 1.442695
    %v5374 = vpow.pop %v5373
    %v5375 = vmul.f32 %v5372, 1.442695
    %v5376 = vpow.pop %v5375
    %v5377 = vsel %vm4354, %v5374, 0.0
    %5378 = vadd.xlane.f32.xlu0 %v5377
    %v5379 = vpop.xlane.xlu0 %5378
    %v5380 = vsel %vm4354, %v5376, 0.0
    %5381 = vadd.xlane.f32.xlu0 %v5380
    %v5382 = vpop.xlane.xlu0 %5381
    %v5383 = vrcp.pop %v5379
    %v5384 = vmul.f32 %v5374, %v5383
    %v5385 = vrcp.pop %v5382
    %v5386 = vmul.f32 %v5376, %v5385
    %v5387 = vadd.f32 %v5053, %v5384
    %v5388 = vadd.f32 %v5054, %v5386
    %5389 = vrot.lane.b32.xlu0 %v4171, 72
    %v5390 = vpop.permute.xlu0 %5389
    %v5393 = vsel %vm279, %v5384, 0
    %5395 = vmatprep.subr.mxu0 0.0
    %5396 = vmatpush1.msra.mxu0 0.0
    %5397 = vmatprep.subr.mxu0 0.0
    %5398 = vmatpush1.msra.mxu0 0.0
    %5399 = vmatprep.subr.mxu0 0.0
    %5400 = vmatpush1.msra.mxu0 0.0
    %5401 = vmatprep.subr.mxu0 0.0
    %5402 = vmatpush1.msra.mxu0 0.0
    %5403 = vmatprep.subr.mxu0 0.0
    %5404 = vmatpush1.msra.mxu0 0.0
    %5405 = vmatprep.subr.mxu0 0.0
    %5406 = vmatpush1.msra.mxu0 0.0
    %5407 = vmatprep.subr.mxu0 0.0
    %5408 = vmatpush1.msra.mxu0 0.0
    %5409 = vmatprep.subr.mxu0 0.0
    %5410 = vmatpush1.msra.mxu0 0.0
    %5411 = vmatprep.subr.mxu0 0.0
    %5412 = vmatpush1.msra.mxu0 0.0
    %5413 = vmatprep.subr.mxu0 0.0
    %5414 = vmatpush1.msra.mxu0 0.0
    %5415 = vmatprep.subr.mxu0 0.0
    %5416 = vmatpush1.msra.mxu0 0.0
    %5417 = vmatprep.subr.mxu0 0.0
    %5418 = vmatpush1.msra.mxu0 0.0
    %5419 = vmatprep.subr.mxu0 0.0
    %5420 = vmatpush1.msra.mxu0 0.0
    %5421 = vmatprep.subr.mxu0 0.0
    %5422 = vmatpush1.msra.mxu0 0.0
    %5423 = vmatprep.subr.mxu0 0.0
    %5424 = vmatpush1.msra.mxu0 0.0
    %5425 = vmatprep.subr.mxu0 0.0
    %5426 = vmatpush1.msra.mxu0 %v5390
    %5427 = vmatprep.subr.mxu0 0.0
    %5428 = vmatpush2.msra.mxu0 0.0
    %5429 = vmatprep.subr.mxu0 0.0
    %5430 = vmatpush2.msra.mxu0 0.0
    %5431 = vmatprep.subr.mxu0 0.0
    %5432 = vmatpush2.msra.mxu0 0.0
    %5433 = vmatprep.subr.mxu0 0.0
    %5434 = vmatpush2.msra.mxu0 0.0
    %5435 = vmatprep.subr.mxu0 0.0
    %5436 = vmatpush2.msra.mxu0 0.0
    %5437 = vmatprep.subr.mxu0 0.0
    %5438 = vmatpush2.msra.mxu0 0.0
    %5439 = vmatprep.subr.mxu0 0.0
    %5440 = vmatpush2.msra.mxu0 0.0
    %5441 = vmatprep.subr.mxu0 0.0
    %5442 = vmatpush2.msra.mxu0 0.0
    %5443 = vmatprep.subr.mxu0 0.0
    %5444 = vmatpush2.msra.mxu0 0.0
    %5445 = vmatprep.subr.mxu0 0.0
    %5446 = vmatpush2.msra.mxu0 0.0
    %5447 = vmatprep.subr.mxu0 0.0
    %5448 = vmatpush2.msra.mxu0 0.0
    %5449 = vmatprep.subr.mxu0 0.0
    %5450 = vmatpush2.msra.mxu0 0.0
    %5451 = vmatprep.subr.mxu0 0.0
    %5452 = vmatpush2.msra.mxu0 0.0
    %5453 = vmatprep.subr.mxu0 0.0
    %5454 = vmatpush2.msra.mxu0 0.0
    %5455 = vmatprep.subr.mxu0 0.0
    %5456 = vmatpush2.msra.mxu0 0.0
    %5457 = vmatprep.subr.mxu0 0.0
    %5458 = vmatpush2.msra.mxu0 0.0
    %5459 = vmatprep.mubr.f32.mxu0 0.0
    %5460 = vmatmul.mubr.f32.gmra.mxu0 %v5393
    %v5461 = vpop.f32.mrf.mxu0
    %v5462 = vadd.f32 0.0, %v5461
    %v5463 = vpop.f32.mrf.mxu0
    %5464 = vdwg.mxu0
    %5465 = vrot.lane.b32.xlu0 %v4176, 72
    %v5466 = vpop.permute.xlu0 %5465
    %v5469 = vsel %vm279, %v5386, 0
    %5471 = vmatprep.subr.mxu0 0.0
    %5472 = vmatpush1.msra.mxu0 0.0
    %5473 = vmatprep.subr.mxu0 0.0
    %5474 = vmatpush1.msra.mxu0 0.0
    %5475 = vmatprep.subr.mxu0 0.0
    %5476 = vmatpush1.msra.mxu0 0.0
    %5477 = vmatprep.subr.mxu0 0.0
    %5478 = vmatpush1.msra.mxu0 0.0
    %5479 = vmatprep.subr.mxu0 0.0
    %5480 = vmatpush1.msra.mxu0 0.0
    %5481 = vmatprep.subr.mxu0 0.0
    %5482 = vmatpush1.msra.mxu0 0.0
    %5483 = vmatprep.subr.mxu0 0.0
    %5484 = vmatpush1.msra.mxu0 0.0
    %5485 = vmatprep.subr.mxu0 0.0
    %5486 = vmatpush1.msra.mxu0 0.0
    %5487 = vmatprep.subr.mxu0 0.0
    %5488 = vmatpush1.msra.mxu0 0.0
    %5489 = vmatprep.subr.mxu0 0.0
    %5490 = vmatpush1.msra.mxu0 0.0
    %5491 = vmatprep.subr.mxu0 0.0
    %5492 = vmatpush1.msra.mxu0 0.0
    %5493 = vmatprep.subr.mxu0 0.0
    %5494 = vmatpush1.msra.mxu0 0.0
    %5495 = vmatprep.subr.mxu0 0.0
    %5496 = vmatpush1.msra.mxu0 0.0
    %5497 = vmatprep.subr.mxu0 0.0
    %5498 = vmatpush1.msra.mxu0 0.0
    %5499 = vmatprep.subr.mxu0 0.0
    %5500 = vmatpush1.msra.mxu0 0.0
    %5501 = vmatprep.subr.mxu0 0.0
    %5502 = vmatpush1.msra.mxu0 %v5466
    %5503 = vmatprep.subr.mxu0 0.0
    %5504 = vmatpush2.msra.mxu0 0.0
    %5505 = vmatprep.subr.mxu0 0.0
    %5506 = vmatpush2.msra.mxu0 0.0
    %5507 = vmatprep.subr.mxu0 0.0
    %5508 = vmatpush2.msra.mxu0 0.0
    %5509 = vmatprep.subr.mxu0 0.0
    %5510 = vmatpush2.msra.mxu0 0.0
    %5511 = vmatprep.subr.mxu0 0.0
    %5512 = vmatpush2.msra.mxu0 0.0
    %5513 = vmatprep.subr.mxu0 0.0
    %5514 = vmatpush2.msra.mxu0 0.0
    %5515 = vmatprep.subr.mxu0 0.0
    %5516 = vmatpush2.msra.mxu0 0.0
    %5517 = vmatprep.subr.mxu0 0.0
    %5518 = vmatpush2.msra.mxu0 0.0
    %5519 = vmatprep.subr.mxu0 0.0
    %5520 = vmatpush2.msra.mxu0 0.0
    %5521 = vmatprep.subr.mxu0 0.0
    %5522 = vmatpush2.msra.mxu0 0.0
    %5523 = vmatprep.subr.mxu0 0.0
    %5524 = vmatpush2.msra.mxu0 0.0
    %5525 = vmatprep.subr.mxu0 0.0
    %5526 = vmatpush2.msra.mxu0 0.0
    %5527 = vmatprep.subr.mxu0 0.0
    %5528 = vmatpush2.msra.mxu0 0.0
    %5529 = vmatprep.subr.mxu0 0.0
    %5530 = vmatpush2.msra.mxu0 0.0
    %5531 = vmatprep.subr.mxu0 0.0
    %5532 = vmatpush2.msra.mxu0 0.0
    %5533 = vmatprep.subr.mxu0 0.0
    %5534 = vmatpush2.msra.mxu0 0.0
    %5535 = vmatprep.mubr.f32.mxu0 0.0
    %5536 = vmatmul.mubr.f32.gmra.mxu0 %v5469
    %v5537 = vpop.f32.mrf.mxu0
    %v5538 = vadd.f32 0.0, %v5537
    %v5539 = vpop.f32.mrf.mxu0
    %5540 = vdwg.mxu0
    %v5541 = vmul.f32 %v5387, 0.25
    %v5542 = vmul.f32 %v5388, 0.25
    %5545 = vrot.lane.b32.xlu0 %v4794, 8
    %v5546 = vpop.permute.xlu0 %5545
    %5547 = vrot.lane.b32.xlu0 %v4870, 8
    %v5548 = vpop.permute.xlu0 %5547
    %5553 = vrot.lane.b32.xlu0 %v5128, 16
    %v5554 = vpop.permute.xlu0 %5553
    %5555 = vrot.lane.b32.xlu0 %v5204, 16
    %v5556 = vpop.permute.xlu0 %5555
    %5561 = vrot.lane.b32.xlu0 %v5462, 24
    %v5562 = vpop.permute.xlu0 %5561
    %5563 = vrot.lane.b32.xlu0 %v5538, 24
    %v5564 = vpop.permute.xlu0 %5563
    %v5567 = vsel %vm279, %v4452, %v5546
    %v5568 = vsel %vm279, %v4528, %v5548
    %v5569 = vsel %vm101, %v5567, %v5554
    %v5570 = vsel %vm101, %v5568, %v5556
    %v5571 = vsel %vm1662, %v5569, %v5562
    %v5572 = vsel %vm1662, %v5570, %v5564
    %v5573 = vld [vmem:[%s19] sm:$0xff]
    %v5574 = vld [vmem:[%s19 + $0x8] sm:$0xff]
    %v5575 = vld [vmem:[%s19 + $0x10] sm:$0xff]
    %v5576 = vld [vmem:[%s19 + $0x18] sm:$0xff]
    %v5577 = vld [vmem:[%s20] sm:$0x1]
    %v5579 = vlaneseq
    %v5580 = vshrl.u32 %v5579, 7
    %v5581 = vsub.s32 0, %v5580
    %v5582 = vrot.slane %v5577, %v5581
    %v5586 = vrot.slane %v5572, 7
    %v5587 = vsel %vm1616, %v5586, %v5571
    %v5588 = vsel %vm194, %v5587, 0
    %5590 = vmatprep.subr.mxu0 0.0
    %5591 = vmatpush1.msra.mxu0 0.0
    %5592 = vmatprep.subr.mxu0 0.0
    %5593 = vmatpush1.msra.mxu0 0.0
    %5594 = vmatprep.subr.mxu0 0.0
    %5595 = vmatpush1.msra.mxu0 0.0
    %5596 = vmatprep.subr.mxu0 0.0
    %5597 = vmatpush1.msra.mxu0 0.0
    %5598 = vmatprep.subr.mxu0 0.0
    %5599 = vmatpush1.msra.mxu0 0.0
    %5600 = vmatprep.subr.mxu0 0.0
    %5601 = vmatpush1.msra.mxu0 0.0
    %5602 = vmatprep.subr.mxu0 0.0
    %5603 = vmatpush1.msra.mxu0 0.0
    %5604 = vmatprep.subr.mxu0 0.0
    %5605 = vmatpush1.msra.mxu0 0.0
    %5606 = vmatprep.subr.mxu0 0.0
    %5607 = vmatpush1.msra.mxu0 0.0
    %5608 = vmatprep.subr.mxu0 0.0
    %5609 = vmatpush1.msra.mxu0 0.0
    %5610 = vmatprep.subr.mxu0 0.0
    %5611 = vmatpush1.msra.mxu0 0.0
    %5612 = vmatprep.subr.mxu0 0.0
    %5613 = vmatpush1.msra.mxu0 0.0
    %5614 = vmatprep.subr.mxu0 0.0
    %5615 = vmatpush1.msra.mxu0 %v5576
    %5616 = vmatprep.subr.mxu0 0.0
    %5617 = vmatpush1.msra.mxu0 %v5575
    %5618 = vmatprep.subr.mxu0 0.0
    %5619 = vmatpush1.msra.mxu0 %v5574
    %5620 = vmatprep.subr.mxu0 0.0
    %5621 = vmatpush1.msra.mxu0 %v5573
    %5622 = vmatprep.subr.mxu0 0.0
    %5623 = vmatpush2.msra.mxu0 0.0
    %5624 = vmatprep.subr.mxu0 0.0
    %5625 = vmatpush2.msra.mxu0 0.0
    %5626 = vmatprep.subr.mxu0 0.0
    %5627 = vmatpush2.msra.mxu0 0.0
    %5628 = vmatprep.subr.mxu0 0.0
    %5629 = vmatpush2.msra.mxu0 0.0
    %5630 = vmatprep.subr.mxu0 0.0
    %5631 = vmatpush2.msra.mxu0 0.0
    %5632 = vmatprep.subr.mxu0 0.0
    %5633 = vmatpush2.msra.mxu0 0.0
    %5634 = vmatprep.subr.mxu0 0.0
    %5635 = vmatpush2.msra.mxu0 0.0
    %5636 = vmatprep.subr.mxu0 0.0
    %5637 = vmatpush2.msra.mxu0 0.0
    %5638 = vmatprep.subr.mxu0 0.0
    %5639 = vmatpush2.msra.mxu0 0.0
    %5640 = vmatprep.subr.mxu0 0.0
    %5641 = vmatpush2.msra.mxu0 0.0
    %5642 = vmatprep.subr.mxu0 0.0
    %5643 = vmatpush2.msra.mxu0 0.0
    %5644 = vmatprep.subr.mxu0 0.0
    %5645 = vmatpush2.msra.mxu0 0.0
    %5646 = vmatprep.subr.mxu0 0.0
    %5647 = vmatpush2.msra.mxu0 0.0
    %5648 = vmatprep.subr.mxu0 0.0
    %5649 = vmatpush2.msra.mxu0 0.0
    %5650 = vmatprep.subr.mxu0 0.0
    %5651 = vmatpush2.msra.mxu0 0.0
    %5652 = vmatprep.subr.mxu0 0.0
    %5653 = vmatpush2.msra.mxu0 0.0
    %5654 = vmatprep.mubr.f32.mxu0 0.0
    %5655 = vmatmul.mubr.f32.gmra.mxu0 %v5588
    %v5656 = vpop.f32.mrf.mxu0
    %v5657 = vadd.f32 %v5582, %v5656
    %v5658 = vpop.f32.mrf.mxu0
    %5659 = vdwg.mxu0
    %v5660 = vld [vmem:[%s21] sm:$0xff]
    %v5661 = vld [vmem:[%s21 + $0x8] sm:$0xff]
    %v5662 = vld [vmem:[%s21 + $0x10] sm:$0xff]
    %v5663 = vld [vmem:[%s21 + $0x18] sm:$0xff]
    %v5664 = vld [vmem:[%s22] sm:$0x1]
    %v5666 = vlaneseq
    %v5667 = vshrl.u32 %v5666, 7
    %v5668 = vsub.s32 0, %v5667
    %v5669 = vrot.slane %v5664, %v5668
    %v5672 = vsel %vm194, %v5657, 0
    %5674 = vmatprep.subr.mxu0 0.0
    %5675 = vmatpush1.msra.mxu0 0.0
    %5676 = vmatprep.subr.mxu0 0.0
    %5677 = vmatpush1.msra.mxu0 0.0
    %5678 = vmatprep.subr.mxu0 0.0
    %5679 = vmatpush1.msra.mxu0 0.0
    %5680 = vmatprep.subr.mxu0 0.0
    %5681 = vmatpush1.msra.mxu0 0.0
    %5682 = vmatprep.subr.mxu0 0.0
    %5683 = vmatpush1.msra.mxu0 0.0
    %5684 = vmatprep.subr.mxu0 0.0
    %5685 = vmatpush1.msra.mxu0 0.0
    %5686 = vmatprep.subr.mxu0 0.0
    %5687 = vmatpush1.msra.mxu0 0.0
    %5688 = vmatprep.subr.mxu0 0.0
    %5689 = vmatpush1.msra.mxu0 0.0
    %5690 = vmatprep.subr.mxu0 0.0
    %5691 = vmatpush1.msra.mxu0 0.0
    %5692 = vmatprep.subr.mxu0 0.0
    %5693 = vmatpush1.msra.mxu0 0.0
    %5694 = vmatprep.subr.mxu0 0.0
    %5695 = vmatpush1.msra.mxu0 0.0
    %5696 = vmatprep.subr.mxu0 0.0
    %5697 = vmatpush1.msra.mxu0 0.0
    %5698 = vmatprep.subr.mxu0 0.0
    %5699 = vmatpush1.msra.mxu0 %v5663
    %5700 = vmatprep.subr.mxu0 0.0
    %5701 = vmatpush1.msra.mxu0 %v5662
    %5702 = vmatprep.subr.mxu0 0.0
    %5703 = vmatpush1.msra.mxu0 %v5661
    %5704 = vmatprep.subr.mxu0 0.0
    %5705 = vmatpush1.msra.mxu0 %v5660
    %5706 = vmatprep.subr.mxu0 0.0
    %5707 = vmatpush2.msra.mxu0 0.0
    %5708 = vmatprep.subr.mxu0 0.0
    %5709 = vmatpush2.msra.mxu0 0.0
    %5710 = vmatprep.subr.mxu0 0.0
    %5711 = vmatpush2.msra.mxu0 0.0
    %5712 = vmatprep.subr.mxu0 0.0
    %5713 = vmatpush2.msra.mxu0 0.0
    %5714 = vmatprep.subr.mxu0 0.0
    %5715 = vmatpush2.msra.mxu0 0.0
    %5716 = vmatprep.subr.mxu0 0.0
    %5717 = vmatpush2.msra.mxu0 0.0
    %5718 = vmatprep.subr.mxu0 0.0
    %5719 = vmatpush2.msra.mxu0 0.0
    %5720 = vmatprep.subr.mxu0 0.0
    %5721 = vmatpush2.msra.mxu0 0.0
    %5722 = vmatprep.subr.mxu0 0.0
    %5723 = vmatpush2.msra.mxu0 0.0
    %5724 = vmatprep.subr.mxu0 0.0
    %5725 = vmatpush2.msra.mxu0 0.0
    %5726 = vmatprep.subr.mxu0 0.0
    %5727 = vmatpush2.msra.mxu0 0.0
    %5728 = vmatprep.subr.mxu0 0.0
    %5729 = vmatpush2.msra.mxu0 0.0
    %5730 = vmatprep.subr.mxu0 0.0
    %5731 = vmatpush2.msra.mxu0 0.0
    %5732 = vmatprep.subr.mxu0 0.0
    %5733 = vmatpush2.msra.mxu0 0.0
    %5734 = vmatprep.subr.mxu0 0.0
    %5735 = vmatpush2.msra.mxu0 0.0
    %5736 = vmatprep.subr.mxu0 0.0
    %5737 = vmatpush2.msra.mxu0 0.0
    %5738 = vmatprep.mubr.f32.mxu0 0.0
    %5739 = vmatmul.mubr.f32.gmra.mxu0 %v5672
    %v5740 = vpop.f32.mrf.mxu0
    %v5741 = vadd.f32 %v5669, %v5740
    %v5742 = vpop.f32.mrf.mxu0
    %5743 = vdwg.mxu0
    %v5744 = vmax.f32 %v5741, 0.0
    %v5745 = vld [vmem:[%s23] sm:$0xff]
    %v5746 = vld [vmem:[%s23 + $0x8] sm:$0xff]
    %v5747 = vld [vmem:[%s24] sm:$0x1]
    %v5749 = vlaneseq
    %v5750 = vshrl.u32 %v5749, 7
    %v5751 = vsub.s32 0, %v5750
    %v5752 = vrot.slane %v5747, %v5751
    %v5755 = vsel %vm101, %v5744, 0
    %5757 = vmatprep.subr.mxu0 0.0
    %5758 = vmatpush1.msra.mxu0 0.0
    %5759 = vmatprep.subr.mxu0 0.0
    %5760 = vmatpush1.msra.mxu0 0.0
    %5761 = vmatprep.subr.mxu0 0.0
    %5762 = vmatpush1.msra.mxu0 0.0
    %5763 = vmatprep.subr.mxu0 0.0
    %5764 = vmatpush1.msra.mxu0 0.0
    %5765 = vmatprep.subr.mxu0 0.0
    %5766 = vmatpush1.msra.mxu0 0.0
    %5767 = vmatprep.subr.mxu0 0.0
    %5768 = vmatpush1.msra.mxu0 0.0
    %5769 = vmatprep.subr.mxu0 0.0
    %5770 = vmatpush1.msra.mxu0 0.0
    %5771 = vmatprep.subr.mxu0 0.0
    %5772 = vmatpush1.msra.mxu0 0.0
    %5773 = vmatprep.subr.mxu0 0.0
    %5774 = vmatpush1.msra.mxu0 0.0
    %5775 = vmatprep.subr.mxu0 0.0
    %5776 = vmatpush1.msra.mxu0 0.0
    %5777 = vmatprep.subr.mxu0 0.0
    %5778 = vmatpush1.msra.mxu0 0.0
    %5779 = vmatprep.subr.mxu0 0.0
    %5780 = vmatpush1.msra.mxu0 0.0
    %5781 = vmatprep.subr.mxu0 0.0
    %5782 = vmatpush1.msra.mxu0 0.0
    %5783 = vmatprep.subr.mxu0 0.0
    %5784 = vmatpush1.msra.mxu0 0.0
    %5785 = vmatprep.subr.mxu0 0.0
    %5786 = vmatpush1.msra.mxu0 %v5746
    %5787 = vmatprep.subr.mxu0 0.0
    %5788 = vmatpush1.msra.mxu0 %v5745
    %5789 = vmatprep.subr.mxu0 0.0
    %5790 = vmatpush2.msra.mxu0 0.0
    %5791 = vmatprep.subr.mxu0 0.0
    %5792 = vmatpush2.msra.mxu0 0.0
    %5793 = vmatprep.subr.mxu0 0.0
    %5794 = vmatpush2.msra.mxu0 0.0
    %5795 = vmatprep.subr.mxu0 0.0
    %5796 = vmatpush2.msra.mxu0 0.0
    %5797 = vmatprep.subr.mxu0 0.0
    %5798 = vmatpush2.msra.mxu0 0.0
    %5799 = vmatprep.subr.mxu0 0.0
    %5800 = vmatpush2.msra.mxu0 0.0
    %5801 = vmatprep.subr.mxu0 0.0
    %5802 = vmatpush2.msra.mxu0 0.0
    %5803 = vmatprep.subr.mxu0 0.0
    %5804 = vmatpush2.msra.mxu0 0.0
    %5805 = vmatprep.subr.mxu0 0.0
    %5806 = vmatpush2.msra.mxu0 0.0
    %5807 = vmatprep.subr.mxu0 0.0
    %5808 = vmatpush2.msra.mxu0 0.0
    %5809 = vmatprep.subr.mxu0 0.0
    %5810 = vmatpush2.msra.mxu0 0.0
    %5811 = vmatprep.subr.mxu0 0.0
    %5812 = vmatpush2.msra.mxu0 0.0
    %5813 = vmatprep.subr.mxu0 0.0
    %5814 = vmatpush2.msra.mxu0 0.0
    %5815 = vmatprep.subr.mxu0 0.0
    %5816 = vmatpush2.msra.mxu0 0.0
    %5817 = vmatprep.subr.mxu0 0.0
    %5818 = vmatpush2.msra.mxu0 0.0
    %5819 = vmatprep.subr.mxu0 0.0
    %5820 = vmatpush2.msra.mxu0 0.0
    %5821 = vmatprep.mubr.f32.mxu0 0.0
    %5822 = vmatmul.mubr.f32.gmra.mxu0 %v5755
    %v5823 = vpop.f32.mrf.mxu0
    %v5824 = vadd.f32 %v5752, %v5823
    %v5825 = vpop.f32.mrf.mxu0
    %5826 = vdwg.mxu0
    %vm5827 = vcmask 25600
    %v5828 = vsel %vm5827, %v5824, -inf
    %5829 = vmax.xlane.f32.xlu0 %v5828
    %v5830 = vpop.xlane.xlu0 %5829
    %v5831 = vsub.f32 %v5824, %v5830
    %v5832 = vmul.f32 %v5831, 1.442695
    %v5833 = vpow.pop %v5832
    %v5834 = vsel %vm5827, %v5833, 0.0
    %5835 = vadd.xlane.f32.xlu0 %v5834
    %v5836 = vpop.xlane.xlu0 %5835
    %v5837 = vrcp.pop %v5836
    %v5838 = vmul.f32 %v5833, %v5837
    %v5839 = vld [vmem:[%s25] sm:$0xff]
    %v5840 = vld [vmem:[%s25 + $0x8] sm:$0xff]
    %v5841 = vld [vmem:[%s25 + $0x10] sm:$0xff]
    %v5842 = vld [vmem:[%s25 + $0x18] sm:$0xff]
    %v5843 = vld [vmem:[%s26] sm:$0x1]
    %v5845 = vlaneseq
    %v5846 = vshrl.u32 %v5845, 7
    %v5847 = vsub.s32 0, %v5846
    %v5848 = vrot.slane %v5843, %v5847
    %5850 = vmatprep.subr.mxu0 0.0
    %5851 = vmatpush1.msra.mxu0 0.0
    %5852 = vmatprep.subr.mxu0 0.0
    %5853 = vmatpush1.msra.mxu0 0.0
    %5854 = vmatprep.subr.mxu0 0.0
    %5855 = vmatpush1.msra.mxu0 0.0
    %5856 = vmatprep.subr.mxu0 0.0
    %5857 = vmatpush1.msra.mxu0 0.0
    %5858 = vmatprep.subr.mxu0 0.0
    %5859 = vmatpush1.msra.mxu0 0.0
    %5860 = vmatprep.subr.mxu0 0.0
    %5861 = vmatpush1.msra.mxu0 0.0
    %5862 = vmatprep.subr.mxu0 0.0
    %5863 = vmatpush1.msra.mxu0 0.0
    %5864 = vmatprep.subr.mxu0 0.0
    %5865 = vmatpush1.msra.mxu0 0.0
    %5866 = vmatprep.subr.mxu0 0.0
    %5867 = vmatpush1.msra.mxu0 0.0
    %5868 = vmatprep.subr.mxu0 0.0
    %5869 = vmatpush1.msra.mxu0 0.0
    %5870 = vmatprep.subr.mxu0 0.0
    %5871 = vmatpush1.msra.mxu0 0.0
    %5872 = vmatprep.subr.mxu0 0.0
    %5873 = vmatpush1.msra.mxu0 0.0
    %5874 = vmatprep.subr.mxu0 0.0
    %5875 = vmatpush1.msra.mxu0 %v5842
    %5876 = vmatprep.subr.mxu0 0.0
    %5877 = vmatpush1.msra.mxu0 %v5841
    %5878 = vmatprep.subr.mxu0 0.0
    %5879 = vmatpush1.msra.mxu0 %v5840
    %5880 = vmatprep.subr.mxu0 0.0
    %5881 = vmatpush1.msra.mxu0 %v5839
    %5882 = vmatprep.subr.mxu0 0.0
    %5883 = vmatpush2.msra.mxu0 0.0
    %5884 = vmatprep.subr.mxu0 0.0
    %5885 = vmatpush2.msra.mxu0 0.0
    %5886 = vmatprep.subr.mxu0 0.0
    %5887 = vmatpush2.msra.mxu0 0.0
    %5888 = vmatprep.subr.mxu0 0.0
    %5889 = vmatpush2.msra.mxu0 0.0
    %5890 = vmatprep.subr.mxu0 0.0
    %5891 = vmatpush2.msra.mxu0 0.0
    %5892 = vmatprep.subr.mxu0 0.0
    %5893 = vmatpush2.msra.mxu0 0.0
    %5894 = vmatprep.subr.mxu0 0.0
    %5895 = vmatpush2.msra.mxu0 0.0
    %5896 = vmatprep.subr.mxu0 0.0
    %5897 = vmatpush2.msra.mxu0 0.0
    %5898 = vmatprep.subr.mxu0 0.0
    %5899 = vmatpush2.msra.mxu0 0.0
    %5900 = vmatprep.subr.mxu0 0.0
    %5901 = vmatpush2.msra.mxu0 0.0
    %5902 = vmatprep.subr.mxu0 0.0
    %5903 = vmatpush2.msra.mxu0 0.0
    %5904 = vmatprep.subr.mxu0 0.0
    %5905 = vmatpush2.msra.mxu0 0.0
    %5906 = vmatprep.subr.mxu0 0.0
    %5907 = vmatpush2.msra.mxu0 0.0
    %5908 = vmatprep.subr.mxu0 0.0
    %5909 = vmatpush2.msra.mxu0 0.0
    %5910 = vmatprep.subr.mxu0 0.0
    %5911 = vmatpush2.msra.mxu0 0.0
    %5912 = vmatprep.subr.mxu0 0.0
    %5913 = vmatpush2.msra.mxu0 0.0
    %5914 = vmatprep.mubr.f32.mxu0 0.0
    %5915 = vmatmul.mubr.f32.gmra.mxu0 %v5672
    %v5916 = vpop.f32.mrf.mxu0
    %v5917 = vadd.f32 %v5848, %v5916
    %v5918 = vpop.f32.mrf.mxu0
    %5919 = vdwg.mxu0
    %v5920 = vxor.u32 %v5917, 2147483648
    %v5921 = vmul.f32 %v5920, 1.442695
    %v5922 = vpow.pop %v5921
    %v5923 = vadd.f32 %v5922, 1.0
    %v5924 = vrcp.pop %v5923
    %v5925 = vmul.f32 1.0, %v5924
    %v5928 = vrot.slane %v5542, 7
    %v5929 = vsel %vm1616, %v5928, %v5541
    %5931 = vrot.lane.b32.xlu0 %v5657, 8
    %v5932 = vpop.permute.xlu0 %5931
    %5935 = vrot.lane.b32.xlu0 %v5824, 40
    %v5936 = vpop.permute.xlu0 %5935
    %5939 = vrot.lane.b32.xlu0 %v5838, 44
    %v5940 = vpop.permute.xlu0 %5939
    %5943 = vrot.lane.b32.xlu0 %v5925, 48
    %v5944 = vpop.permute.xlu0 %5943
    %v5946 = vsel %vm279, %v5929, %v5932
    %v5947 = vsel %vm1665, %v5946, %v5936
    %vm5948 = vcmask 359424
    %v5949 = vsel %vm5948, %v5947, %v5940
    %v5950 = vsel %vm1667, %v5949, %v5944
    %v5951 = vsel %vm3981, %v5950, 0.0
    %5952 = vst [vmem:[#allocation4] sm:$0x3] %v5951
    // Predicated region
    $region110: #{tpu_custom_call.1} parent=1 // pred_check
      _
    $region111: #{tpu_custom_call.1} parent=1 // pred_check_branch
      %5954 = sbr.rel (0) target = $region113
    $region112: #{tpu_custom_call.1} parent=1 // pred_region
      %s5956 = ssub.s32 32, 32
      %5957 = vsyncadd [#allocation3], %s5956
      %s5959 = sshll.u32 [#allocation2], 4
      %s5960 = int_to_ptr.vmem [resolvable:$true] %s5959
      %5962 = dma.vmem_to_hbm [thread:$0]  %s5960, 32, %s27, [#allocation3]
    $region113: #{tpu_custom_call.1} parent=1 // pred_fallthru
      _
    // Predicated region
    $region114: #{tpu_custom_call.1} parent=1 // pred_check
      _
    $region115: #{tpu_custom_call.1} parent=1 // pred_check_branch
      %5964 = sbr.rel (0) target = $region117
    $region116: #{tpu_custom_call.1} parent=1 // pred_region
      %s5966 = ssub.s32 32, 32
      %5967 = vsyncadd [#allocation5], %s5966
      %s5969 = sshll.u32 [#allocation4], 4
      %s5970 = int_to_ptr.vmem [resolvable:$true] %s5969
      %5972 = dma.vmem_to_hbm [thread:$0]  %s5970, 32, %s28, [#allocation5]
    $region117: #{tpu_custom_call.1} parent=1 // pred_fallthru
      _
    // Predicated region
    $region118: #{tpu_custom_call.1} parent=1 // pred_check
      _
    $region119: #{tpu_custom_call.1} parent=1 // pred_check_branch
      %5974 = sbr.rel (0) target = $region121
    $region120: #{tpu_custom_call.1} parent=1 // pred_region
      %5975 = dma.done [#allocation3], 32
    $region121: #{tpu_custom_call.1} parent=1 // pred_fallthru
      _
    // Predicated region
    $region122: #{tpu_custom_call.1} parent=1 // pred_check
      _
    $region123: #{tpu_custom_call.1} parent=1 // pred_check_branch
      %5977 = sbr.rel (0) target = $region125
    $region124: #{tpu_custom_call.1} parent=1 // pred_region
      %5978 = dma.done [#allocation5], 32
    $region125: #{tpu_custom_call.1} parent=1 // pred_fallthru
      _
    %5979 = vsyncpa [#allocation3], 1
    %5980 = vsyncpa [#allocation5], 1

</llo_original>
